<compile_context>
chip_gen: v7x
topology: tpu7x:2x2x1
jax: 0.10.0
libtpu: 0.0.40
codegen_flags: <defaults>
</compile_context>

<pallas_src>
import functools

import jax
import jax.numpy as jnp
from jax.experimental import pallas as pl
from jax.experimental.pallas import tpu as pltpu


# --------------------------- host-side weight prep ---------------------------

def _fold_bn(w_hwio, bn, eps=1e-5):
    """Fold eval-mode BatchNorm into conv weights / bias."""
    scale = bn["gamma"] / jnp.sqrt(bn["var"] + eps)
    shift = bn["beta"] - bn["mean"] * scale
    return w_hwio * scale, shift


def _toeplitz_weights(w_hwio, W):
    """Expand a 3x3 conv weight (3,3,Cin,Cout) into 3 block-Toeplitz matrices
    of shape (W*Cin, W*Cout) (one per kernel row di), such that with rows laid
    out as (W*Cin) lane slabs:
        out_row(h) = sum_di  x_row(h + di - 1) @ T[di]
    implements the stride-1 / pad-1 conv; the W-direction zero padding is
    encoded by the zero blocks of T."""
    Cin, Cout = w_hwio.shape[2], w_hwio.shape[3]
    w_in = jnp.arange(W)[:, None]
    w_out = jnp.arange(W)[None, :]
    dj = w_in - w_out + 1                      # kernel column index
    valid = (dj >= 0) & (dj <= 2)
    djc = jnp.clip(dj, 0, 2)
    mats = []
    for di in range(3):
        blk = jnp.where(valid[:, :, None, None], w_hwio[di][djc], 0.0)
        mats.append(blk.transpose(0, 2, 1, 3).reshape(W * Cin, W * Cout))
    return jnp.stack(mats, axis=0)             # (3, W*Cin, W*Cout)


# ----------------------------- Pallas kernels ------------------------------

def _conv3x3_bn_kernel(x_ref, t_ref, b_ref, o_ref, *, H, relu):
    """3x3 conv (stride 1, pad 1) + folded BN as 3 deep lane-dense matmuls.

    x_ref: (B, H+2, W*Cin)     bf16  row-padded input slab
    t_ref: (3, W*Cin, W*Cout)  bf16  block-Toeplitz BN-folded weights
    b_ref: (1, W*Cout)         f32   BN shift, tiled along W
    o_ref: (B, H+2, W*Cout)    bf16  row-padded output slab
    """
    B = x_ref.shape[0]
    wcin = x_ref.shape[2]
    wcout = o_ref.shape[2]
    x = x_ref[...]
    acc = jnp.zeros((B * H, wcout), jnp.float32)
    for di in range(3):                 # 3 row taps; W / Cin taps live inside T
        rows = x[:, di:di + H, :].reshape(B * H, wcin)
        acc += jnp.dot(rows, t_ref[di], preferred_element_type=jnp.float32)
    y = acc + b_ref[...]
    if relu:
        y = jnp.maximum(y, 0.0)
    o_ref[:, 1:H + 1, :] = y.reshape(B, H, wcout).astype(o_ref.dtype)
    zrow = jnp.zeros((B, 1, wcout), o_ref.dtype)
    o_ref[:, 0:1, :] = zrow             # maintain the zero border rows
    o_ref[:, H + 1:H + 2, :] = zrow


def conv3x3_bn(x_slab, w_hwio, bn, *, W, relu):
    """x_slab: (B, H+2, W*Cin) bf16 row-padded slab -> (B, H+2, W*Cout) bf16."""
    B, Hp2, WCin = x_slab.shape
    H = Hp2 - 2
    Cout = w_hwio.shape[-1]
    WCout = W * Cout
    w_folded, shift = _fold_bn(w_hwio, bn)
    t = _toeplitz_weights(w_folded, W).astype(jnp.bfloat16)
    bias = jnp.tile(shift, (W,)).reshape(1, WCout).astype(jnp.float32)
    return pl.pallas_call(
        functools.partial(_conv3x3_bn_kernel, H=H, relu=relu),
        out_shape=jax.ShapeDtypeStruct((B, Hp2, WCout), jnp.bfloat16),
        grid=(1,),
        in_specs=[
            pl.BlockSpec((B, Hp2, WCin), lambda i: (0, 0, 0)),
            pl.BlockSpec(t.shape, lambda i: (0, 0, 0)),
            pl.BlockSpec((1, WCout), lambda i: (0, 0)),
        ],
        out_specs=pl.BlockSpec((B, Hp2, WCout), lambda i: (0, 0, 0)),
        compiler_params=pltpu.CompilerParams(
            dimension_semantics=("arbitrary",)),
    )(x_slab, t, bias)


def _conv_se_res_gap_kernel(x_ref, res_ref, t_ref, b_ref,
                            w1_ref, b1_ref, w2_ref, b2_ref, pooled_ref,
                            *, H, W, C):
    """conv2+BN -> SE rescale -> +residual -> ReLU -> global average pool.

    Only the pooled (B, C) feature is written back to HBM; the full post-SE
    activation never leaves VMEM/vregs.
    """
    B = x_ref.shape[0]
    WC = W * C
    x = x_ref[...]                                          # (B, H+2, WC) bf16
    acc = jnp.zeros((B * H, WC), jnp.float32)
    for di in range(3):
        rows = x[:, di:di + H, :].reshape(B * H, WC)
        acc += jnp.dot(rows, t_ref[di], preferred_element_type=jnp.float32)
    u = (acc + b_ref[...]).reshape(B, H, WC)                # conv2 + BN (f32)

    # --- SE squeeze / excite, batched across the whole batch ---
    inv_hw = 1.0 / (H * W)
    pooled_u = jnp.sum(u, axis=1).reshape(B, W, C).sum(axis=1) * inv_hw  # (B,C)
    h1 = jnp.maximum(
        jnp.dot(pooled_u, w1_ref[...], preferred_element_type=jnp.float32)
        + b1_ref[...], 0.0)                                 # (B, Cr)
    s = jax.nn.sigmoid(
        jnp.dot(h1, w2_ref[...], preferred_element_type=jnp.float32)
        + b2_ref[...])                                      # (B, C)
    s_slab = jnp.tile(s, (1, W))                            # (B, W*C)

    # --- excite * u + residual -> ReLU -> global average pool ---
    res = res_ref[:, 1:H + 1, :].astype(jnp.float32)        # (B, H, WC)
    out = jnp.maximum(u * s_slab[:, None, :] + res, 0.0)
    pooled_ref[...] = (jnp.sum(out, axis=1).reshape(B, W, C).sum(axis=1)
                       * inv_hw)


def conv_se_res_gap(x_slab, res_slab, w_hwio, bn, w1, b1, w2, b2, *, W, C):
    B, Hp2, WC = x_slab.shape
    H = Hp2 - 2
    Cr = w1.shape[1]
    w_folded, shift = _fold_bn(w_hwio, bn)
    t = _toeplitz_weights(w_folded, W).astype(jnp.bfloat16)
    bias = jnp.tile(shift, (W,)).reshape(1, WC).astype(jnp.float32)
    return pl.pallas_call(
        functools.partial(_conv_se_res_gap_kernel, H=H, W=W, C=C),
        out_shape=jax.ShapeDtypeStruct((B, C), jnp.float32),
        grid=(1,),
        in_specs=[
            pl.BlockSpec((B, Hp2, WC), lambda i: (0, 0, 0)),
            pl.BlockSpec((B, Hp2, WC), lambda i: (0, 0, 0)),
            pl.BlockSpec(t.shape, lambda i: (0, 0, 0)),
            pl.BlockSpec((1, WC), lambda i: (0, 0)),
            pl.BlockSpec((C, Cr), lambda i: (0, 0)),
            pl.BlockSpec((1, Cr), lambda i: (0, 0)),
            pl.BlockSpec((Cr, C), lambda i: (0, 0)),
            pl.BlockSpec((1, C), lambda i: (0, 0)),
        ],
        out_specs=pl.BlockSpec((B, C), lambda i: (0, 0)),
        compiler_params=pltpu.CompilerParams(
            dimension_semantics=("arbitrary",)),
    )(x_slab, res_slab, t, bias, w1, b1.reshape(1, Cr), w2, b2.reshape(1, C))


def _head_kernel(p_ref, llw_ref, llb_ref, a_ref, hw_ref, hb_ref, o_ref):
    """Fused tail: last_linear -> PReLU -> net_head (input is pooled (B, C))."""
    feat = jnp.dot(p_ref[...], llw_ref[...],
                   preferred_element_type=jnp.float32) + llb_ref[...]
    a = a_ref[0]                                            # PReLU scalar (SMEM)
    y = jnp.maximum(feat, 0.0) + a * jnp.minimum(feat, 0.0)
    o_ref[...] = jnp.dot(y, hw_ref[...],
                         preferred_element_type=jnp.float32) + hb_ref[...]


def fused_head(pooled, ll_w, ll_b, prelu_a, head_w, head_b):
    B, C = pooled.shape
    NC = ll_w.shape[1]
    NO = head_w.shape[1]
    return pl.pallas_call(
        _head_kernel,
        out_shape=jax.ShapeDtypeStruct((B, NO), jnp.float32),
        grid=(1,),
        in_specs=[
            pl.BlockSpec((B, C), lambda i: (0, 0)),
            pl.BlockSpec((C, NC), lambda i: (0, 0)),
            pl.BlockSpec((1, NC), lambda i: (0, 0)),
            pl.BlockSpec(memory_space=pltpu.MemorySpace.SMEM),   # PReLU scalar
            pl.BlockSpec((NC, NO), lambda i: (0, 0)),
            pl.BlockSpec((1, NO), lambda i: (0, 0)),
        ],
        out_specs=pl.BlockSpec((B, NO), lambda i: (0, 0)),
    )(pooled, ll_w, ll_b.reshape(1, NC), prelu_a, head_w, head_b.reshape(1, NO))


# ------------------------------ forward pass --------------------------------

def seresnet_forward(x_nchw, p):
    B, Cin, H, W = x_nchw.shape
    C1 = p["conv_stem"].shape[-1]

    # NCHW -> NHWC -> lane-dense bf16 row slab (B, H+2, W*Cin); the single tiny
    # row-pad here is the only host-side pad (conv kernels keep it themselves).
    x = jnp.transpose(x_nchw, (0, 2, 3, 1)).reshape(B, H, W * Cin)
    x = jnp.pad(x, ((0, 0), (1, 1), (0, 0))).astype(jnp.bfloat16)

    # --- backbone stem (conv + folded BN + ReLU) ---
    # TODO(synk): real timm legacy_seresnet18 uses a 7x7/stride-2 stem + maxpool
    # and 4 stages; a 3x3 stem + one SE basic block stands in at this scale.
    x = conv3x3_bn(x, p["conv_stem"], p["bn_stem"], W=W, relu=True)

    # --- SE basic block: conv-bn-relu, then fused conv-bn + SE + residual
    #     + ReLU + global-average-pool (emits only the pooled feature) ---
    residual = x
    y = conv3x3_bn(x, p["conv1"], p["bn1"], W=W, relu=True)
    pooled = conv_se_res_gap(y, residual, p["conv2"], p["bn2"],
                             p["se_w1"], p["se_b1"], p["se_w2"], p["se_b2"],
                             W=W, C=C1)                          # (B, C1)

    # --- fused tail: last_linear -> PReLU -> net_head ---
    # (self.linear_layer / self.batch_norm_layer are defined but unused in the
    #  PyTorch forward; config.DROPOUT assumed False -> return net_head output.)
    return fused_head(pooled, p["ll_w"], p["ll_b"], p["prelu_a"],
                      p["head_w"], p["head_b"])                  # (B, 1)


# --------------------------- deterministic params ---------------------------

def _bn_init(c):
    return dict(gamma=jnp.ones((c,), jnp.float32),
                beta=jnp.zeros((c,), jnp.float32),
                mean=jnp.zeros((c,), jnp.float32),
                var=jnp.ones((c,), jnp.float32))


def init_params(key, c_in=4, c1=32, num_classes=16, net_out_features=1):
    ks = jax.random.split(key, 8)

    def w(k, shape, scale=0.05):
        return scale * jax.random.normal(k, shape, jnp.float32)

    cr = c1 // 8  # SE reduction ratio 8
    return {
        "conv_stem": w(ks[0], (3, 3, c_in, c1)),
        "bn_stem": _bn_init(c1),
        "conv1": w(ks[1], (3, 3, c1, c1)),
        "bn1": _bn_init(c1),
        "conv2": w(ks[2], (3, 3, c1, c1)),
        "bn2": _bn_init(c1),
        "se_w1": w(ks[3], (c1, cr)), "se_b1": jnp.zeros((cr,), jnp.float32),
        "se_w2": w(ks[4], (cr, c1)), "se_b2": jnp.zeros((c1,), jnp.float32),
        "ll_w": w(ks[5], (c1, num_classes)),
        "ll_b": jnp.zeros((num_classes,), jnp.float32),
        "prelu_a": jnp.full((1,), 0.25, jnp.float32),   # nn.PReLU() default init
        "head_w": w(ks[6], (num_classes, net_out_features)),
        "head_b": jnp.zeros((net_out_features,), jnp.float32),
    }


if __name__ == "__main__":
    key = jax.random.PRNGKey(0)
    kx, kp = jax.random.split(key)
    # batch=2, in_chans=4 (config.CHANNELS), spatial=16x16
    x = jax.random.normal(kx, (2, 4, 16, 16), jnp.float32)
    params = init_params(kp)

    out = jax.jit(seresnet_forward)(x, params)
    out = jax.block_until_ready(out)
    assert out.shape == (2, 1) and out.dtype == jnp.float32
    print("KERNEL_OK")
</pallas_src>

<mosaic_0001>
module attributes {stable_mosaic.version = 11 : i64} {
  func.func @_conv3x3_bn_kernel(%arg0: i32, %arg1: memref<2x18x64xbf16, #tpu.memory_space<vmem>>, %arg2: memref<3x64x512xbf16, #tpu.memory_space<vmem>>, %arg3: memref<1x512xf32, #tpu.memory_space<vmem>>, %arg4: memref<2x18x512xbf16, #tpu.memory_space<vmem>>) attributes {dimension_semantics = [#tpu.dimension_semantics<arbitrary>], iteration_bounds = array<i64: 1>, scalar_prefetch = 0 : i64, scratch_operands = 0 : i64, tpu.core_type = #tpu.core_type<tc>, window_params = [{pipeline_mode = #tpu.pipeline_mode<synchronous>, transform_indices = @transform_0, window_bounds = array<i64: 2, 18, 64>}, {pipeline_mode = #tpu.pipeline_mode<synchronous>, transform_indices = @transform_1, window_bounds = array<i64: 3, 64, 512>}, {pipeline_mode = #tpu.pipeline_mode<synchronous>, transform_indices = @transform_2, window_bounds = array<i64: 1, 512>}, {pipeline_mode = #tpu.pipeline_mode<synchronous>, transform_indices = @transform_3, window_bounds = array<i64: 2, 18, 512>}]} {
    %c0 = arith.constant 0 : index
    %c0_0 = arith.constant 0 : index
    %c0_1 = arith.constant 0 : index
    %0 = vector.load %arg1[%c0, %c0_0, %c0_1] : memref<2x18x64xbf16, #tpu.memory_space<vmem>>, vector<2x18x64xbf16>
    %cst = arith.constant 0.000000e+00 : f32
    %1 = vector.broadcast %cst : f32 to vector<32x512xf32>
    %2 = vector.extract_strided_slice %0 {offsets = [0, 0, 0], sizes = [2, 16, 64], strides = [1, 1, 1]} : vector<2x18x64xbf16> to vector<2x16x64xbf16>
    %3 = vector.shape_cast %2 : vector<2x16x64xbf16> to vector<32x64xbf16>
    %c0_2 = arith.constant 0 : index
    %c0_3 = arith.constant 0 : index
    %c0_4 = arith.constant 0 : index
    %4 = vector.load %arg2[%c0_2, %c0_3, %c0_4] : memref<3x64x512xbf16, #tpu.memory_space<vmem>>, vector<1x64x512xbf16>
    %5 = vector.shape_cast %4 : vector<1x64x512xbf16> to vector<64x512xbf16>
    %cst_5 = arith.constant dense<0.000000e+00> : vector<32x512xf32>
    %6 = tpu.matmul %3, %5, %cst_5 {dimension_numbers = #tpu.dot_dimension_numbers<[1], [0], [0], [1], [0, 0, 1, 1], [], []>} : vector<32x64xbf16>, vector<64x512xbf16>, vector<32x512xf32> -> vector<32x512xf32>
    %7 = arith.addf %1, %6 : vector<32x512xf32>
    %8 = vector.extract_strided_slice %0 {offsets = [0, 1, 0], sizes = [2, 16, 64], strides = [1, 1, 1]} : vector<2x18x64xbf16> to vector<2x16x64xbf16>
    %9 = vector.shape_cast %8 : vector<2x16x64xbf16> to vector<32x64xbf16>
    %c1 = arith.constant 1 : index
    %c0_6 = arith.constant 0 : index
    %c0_7 = arith.constant 0 : index
    %10 = vector.load %arg2[%c1, %c0_6, %c0_7] : memref<3x64x512xbf16, #tpu.memory_space<vmem>>, vector<1x64x512xbf16>
    %11 = vector.shape_cast %10 : vector<1x64x512xbf16> to vector<64x512xbf16>
    %cst_8 = arith.constant dense<0.000000e+00> : vector<32x512xf32>
    %12 = tpu.matmul %9, %11, %cst_8 {dimension_numbers = #tpu.dot_dimension_numbers<[1], [0], [0], [1], [0, 0, 1, 1], [], []>} : vector<32x64xbf16>, vector<64x512xbf16>, vector<32x512xf32> -> vector<32x512xf32>
    %13 = arith.addf %7, %12 : vector<32x512xf32>
    %14 = vector.extract_strided_slice %0 {offsets = [0, 2, 0], sizes = [2, 16, 64], strides = [1, 1, 1]} : vector<2x18x64xbf16> to vector<2x16x64xbf16>
    %15 = vector.shape_cast %14 : vector<2x16x64xbf16> to vector<32x64xbf16>
    %c2 = arith.constant 2 : index
    %c0_9 = arith.constant 0 : index
    %c0_10 = arith.constant 0 : index
    %16 = vector.load %arg2[%c2, %c0_9, %c0_10] : memref<3x64x512xbf16, #tpu.memory_space<vmem>>, vector<1x64x512xbf16>
    %17 = vector.shape_cast %16 : vector<1x64x512xbf16> to vector<64x512xbf16>
    %cst_11 = arith.constant dense<0.000000e+00> : vector<32x512xf32>
    %18 = tpu.matmul %15, %17, %cst_11 {dimension_numbers = #tpu.dot_dimension_numbers<[1], [0], [0], [1], [0, 0, 1, 1], [], []>} : vector<32x64xbf16>, vector<64x512xbf16>, vector<32x512xf32> -> vector<32x512xf32>
    %19 = arith.addf %13, %18 : vector<32x512xf32>
    %c0_12 = arith.constant 0 : index
    %c0_13 = arith.constant 0 : index
    %20 = vector.load %arg3[%c0_12, %c0_13] : memref<1x512xf32, #tpu.memory_space<vmem>>, vector<1x512xf32>
    %21 = vector.broadcast %20 : vector<1x512xf32> to vector<32x512xf32>
    %22 = arith.addf %19, %21 : vector<32x512xf32>
    %cst_14 = arith.constant 0.000000e+00 : f32
    %23 = vector.broadcast %cst_14 : f32 to vector<32x512xf32>
    %24 = arith.maximumf %22, %23 : vector<32x512xf32>
    %25 = vector.shape_cast %24 : vector<32x512xf32> to vector<2x16x512xf32>
    %26 = arith.truncf %25 : vector<2x16x512xf32> to vector<2x16x512xbf16>
    %c0_15 = arith.constant 0 : index
    %c1_16 = arith.constant 1 : index
    %c0_17 = arith.constant 0 : index
    %27 = vector.load %arg4[%c0_15, %c1_16, %c0_17] : memref<2x18x512xbf16, #tpu.memory_space<vmem>>, vector<2x16x512xbf16>
    tpu.vector_store %arg4[%c0_15, %c1_16, %c0_17], %26 {strides = array<i32>} : memref<2x18x512xbf16, #tpu.memory_space<vmem>>, vector<2x16x512xbf16>,
    %cst_18 = arith.constant 0.000000e+00 : bf16
    %28 = vector.broadcast %cst_18 : bf16 to vector<2x1x512xbf16>
    %c0_19 = arith.constant 0 : index
    %c0_20 = arith.constant 0 : index
    %c0_21 = arith.constant 0 : index
    %29 = vector.load %arg4[%c0_19, %c0_20, %c0_21] : memref<2x18x512xbf16, #tpu.memory_space<vmem>>, vector<2x1x512xbf16>
    tpu.vector_store %arg4[%c0_19, %c0_20, %c0_21], %28 {strides = array<i32>} : memref<2x18x512xbf16, #tpu.memory_space<vmem>>, vector<2x1x512xbf16>,
    %c0_22 = arith.constant 0 : index
    %c17 = arith.constant 17 : index
    %c0_23 = arith.constant 0 : index
    %30 = vector.load %arg4[%c0_22, %c17, %c0_23] : memref<2x18x512xbf16, #tpu.memory_space<vmem>>, vector<2x1x512xbf16>
    tpu.vector_store %arg4[%c0_22, %c17, %c0_23], %28 {strides = array<i32>} : memref<2x18x512xbf16, #tpu.memory_space<vmem>>, vector<2x1x512xbf16>,
    return
  }
  func.func @transform_0(%arg0: i32) -> (i32, i32, i32) {
    %c0_i32 = arith.constant 0 : i32
    %c0_i32_0 = arith.constant 0 : i32
    %c0_i32_1 = arith.constant 0 : i32
    %c0_i32_2 = arith.constant 0 : i32
    return %c0_i32, %c0_i32_0, %c0_i32_1 : i32, i32, i32
  }
  func.func @transform_1(%arg0: i32) -> (i32, i32, i32) {
    %c0_i32 = arith.constant 0 : i32
    %c0_i32_0 = arith.constant 0 : i32
    %c0_i32_1 = arith.constant 0 : i32
    %c0_i32_2 = arith.constant 0 : i32
    return %c0_i32, %c0_i32_0, %c0_i32_1 : i32, i32, i32
  }
  func.func @transform_2(%arg0: i32) -> (i32, i32) {
    %c0_i32 = arith.constant 0 : i32
    %c0_i32_0 = arith.constant 0 : i32
    %c0_i32_1 = arith.constant 0 : i32
    return %c0_i32, %c0_i32_0 : i32, i32
  }
  func.func @transform_3(%arg0: i32) -> (i32, i32, i32) {
    %c0_i32 = arith.constant 0 : i32
    %c0_i32_0 = arith.constant 0 : i32
    %c0_i32_1 = arith.constant 0 : i32
    %c0_i32_2 = arith.constant 0 : i32
    return %c0_i32, %c0_i32_0, %c0_i32_1 : i32, i32, i32
  }
}

module attributes {stable_mosaic.version = 11 : i64} {
  func.func @_conv3x3_bn_kernel(%arg0: i32, %arg1: memref<2x18x512xbf16, #tpu.memory_space<vmem>>, %arg2: memref<3x512x512xbf16, #tpu.memory_space<vmem>>, %arg3: memref<1x512xf32, #tpu.memory_space<vmem>>, %arg4: memref<2x18x512xbf16, #tpu.memory_space<vmem>>) attributes {dimension_semantics = [#tpu.dimension_semantics<arbitrary>], iteration_bounds = array<i64: 1>, scalar_prefetch = 0 : i64, scratch_operands = 0 : i64, tpu.core_type = #tpu.core_type<tc>, window_params = [{pipeline_mode = #tpu.pipeline_mode<synchronous>, transform_indices = @transform_0, window_bounds = array<i64: 2, 18, 512>}, {pipeline_mode = #tpu.pipeline_mode<synchronous>, transform_indices = @transform_1, window_bounds = array<i64: 3, 512, 512>}, {pipeline_mode = #tpu.pipeline_mode<synchronous>, transform_indices = @transform_2, window_bounds = array<i64: 1, 512>}, {pipeline_mode = #tpu.pipeline_mode<synchronous>, transform_indices = @transform_3, window_bounds = array<i64: 2, 18, 512>}]} {
    %c0 = arith.constant 0 : index
    %c0_0 = arith.constant 0 : index
    %c0_1 = arith.constant 0 : index
    %0 = vector.load %arg1[%c0, %c0_0, %c0_1] : memref<2x18x512xbf16, #tpu.memory_space<vmem>>, vector<2x18x512xbf16>
    %cst = arith.constant 0.000000e+00 : f32
    %1 = vector.broadcast %cst : f32 to vector<32x512xf32>
    %2 = vector.extract_strided_slice %0 {offsets = [0, 0, 0], sizes = [2, 16, 512], strides = [1, 1, 1]} : vector<2x18x512xbf16> to vector<2x16x512xbf16>
    %3 = vector.shape_cast %2 : vector<2x16x512xbf16> to vector<32x512xbf16>
    %c0_2 = arith.constant 0 : index
    %c0_3 = arith.constant 0 : index
    %c0_4 = arith.constant 0 : index
    %4 = vector.load %arg2[%c0_2, %c0_3, %c0_4] : memref<3x512x512xbf16, #tpu.memory_space<vmem>>, vector<1x512x512xbf16>
    %5 = vector.shape_cast %4 : vector<1x512x512xbf16> to vector<512x512xbf16>
    %cst_5 = arith.constant dense<0.000000e+00> : vector<32x512xf32>
    %6 = tpu.matmul %3, %5, %cst_5 {dimension_numbers = #tpu.dot_dimension_numbers<[1], [0], [0], [1], [0, 0, 1, 1], [], []>} : vector<32x512xbf16>, vector<512x512xbf16>, vector<32x512xf32> -> vector<32x512xf32>
    %7 = arith.addf %1, %6 : vector<32x512xf32>
    %8 = vector.extract_strided_slice %0 {offsets = [0, 1, 0], sizes = [2, 16, 512], strides = [1, 1, 1]} : vector<2x18x512xbf16> to vector<2x16x512xbf16>
    %9 = vector.shape_cast %8 : vector<2x16x512xbf16> to vector<32x512xbf16>
    %c1 = arith.constant 1 : index
    %c0_6 = arith.constant 0 : index
    %c0_7 = arith.constant 0 : index
    %10 = vector.load %arg2[%c1, %c0_6, %c0_7] : memref<3x512x512xbf16, #tpu.memory_space<vmem>>, vector<1x512x512xbf16>
    %11 = vector.shape_cast %10 : vector<1x512x512xbf16> to vector<512x512xbf16>
    %cst_8 = arith.constant dense<0.000000e+00> : vector<32x512xf32>
    %12 = tpu.matmul %9, %11, %cst_8 {dimension_numbers = #tpu.dot_dimension_numbers<[1], [0], [0], [1], [0, 0, 1, 1], [], []>} : vector<32x512xbf16>, vector<512x512xbf16>, vector<32x512xf32> -> vector<32x512xf32>
    %13 = arith.addf %7, %12 : vector<32x512xf32>
    %14 = vector.extract_strided_slice %0 {offsets = [0, 2, 0], sizes = [2, 16, 512], strides = [1, 1, 1]} : vector<2x18x512xbf16> to vector<2x16x512xbf16>
    %15 = vector.shape_cast %14 : vector<2x16x512xbf16> to vector<32x512xbf16>
    %c2 = arith.constant 2 : index
    %c0_9 = arith.constant 0 : index
    %c0_10 = arith.constant 0 : index
    %16 = vector.load %arg2[%c2, %c0_9, %c0_10] : memref<3x512x512xbf16, #tpu.memory_space<vmem>>, vector<1x512x512xbf16>
    %17 = vector.shape_cast %16 : vector<1x512x512xbf16> to vector<512x512xbf16>
    %cst_11 = arith.constant dense<0.000000e+00> : vector<32x512xf32>
    %18 = tpu.matmul %15, %17, %cst_11 {dimension_numbers = #tpu.dot_dimension_numbers<[1], [0], [0], [1], [0, 0, 1, 1], [], []>} : vector<32x512xbf16>, vector<512x512xbf16>, vector<32x512xf32> -> vector<32x512xf32>
    %19 = arith.addf %13, %18 : vector<32x512xf32>
    %c0_12 = arith.constant 0 : index
    %c0_13 = arith.constant 0 : index
    %20 = vector.load %arg3[%c0_12, %c0_13] : memref<1x512xf32, #tpu.memory_space<vmem>>, vector<1x512xf32>
    %21 = vector.broadcast %20 : vector<1x512xf32> to vector<32x512xf32>
    %22 = arith.addf %19, %21 : vector<32x512xf32>
    %cst_14 = arith.constant 0.000000e+00 : f32
    %23 = vector.broadcast %cst_14 : f32 to vector<32x512xf32>
    %24 = arith.maximumf %22, %23 : vector<32x512xf32>
    %25 = vector.shape_cast %24 : vector<32x512xf32> to vector<2x16x512xf32>
    %26 = arith.truncf %25 : vector<2x16x512xf32> to vector<2x16x512xbf16>
    %c0_15 = arith.constant 0 : index
    %c1_16 = arith.constant 1 : index
    %c0_17 = arith.constant 0 : index
    %27 = vector.load %arg4[%c0_15, %c1_16, %c0_17] : memref<2x18x512xbf16, #tpu.memory_space<vmem>>, vector<2x16x512xbf16>
    tpu.vector_store %arg4[%c0_15, %c1_16, %c0_17], %26 {strides = array<i32>} : memref<2x18x512xbf16, #tpu.memory_space<vmem>>, vector<2x16x512xbf16>,
    %cst_18 = arith.constant 0.000000e+00 : bf16
    %28 = vector.broadcast %cst_18 : bf16 to vector<2x1x512xbf16>
    %c0_19 = arith.constant 0 : index
    %c0_20 = arith.constant 0 : index
    %c0_21 = arith.constant 0 : index
    %29 = vector.load %arg4[%c0_19, %c0_20, %c0_21] : memref<2x18x512xbf16, #tpu.memory_space<vmem>>, vector<2x1x512xbf16>
    tpu.vector_store %arg4[%c0_19, %c0_20, %c0_21], %28 {strides = array<i32>} : memref<2x18x512xbf16, #tpu.memory_space<vmem>>, vector<2x1x512xbf16>,
    %c0_22 = arith.constant 0 : index
    %c17 = arith.constant 17 : index
    %c0_23 = arith.constant 0 : index
    %30 = vector.load %arg4[%c0_22, %c17, %c0_23] : memref<2x18x512xbf16, #tpu.memory_space<vmem>>, vector<2x1x512xbf16>
    tpu.vector_store %arg4[%c0_22, %c17, %c0_23], %28 {strides = array<i32>} : memref<2x18x512xbf16, #tpu.memory_space<vmem>>, vector<2x1x512xbf16>,
    return
  }
  func.func @transform_0(%arg0: i32) -> (i32, i32, i32) {
    %c0_i32 = arith.constant 0 : i32
    %c0_i32_0 = arith.constant 0 : i32
    %c0_i32_1 = arith.constant 0 : i32
    %c0_i32_2 = arith.constant 0 : i32
    return %c0_i32, %c0_i32_0, %c0_i32_1 : i32, i32, i32
  }
  func.func @transform_1(%arg0: i32) -> (i32, i32, i32) {
    %c0_i32 = arith.constant 0 : i32
    %c0_i32_0 = arith.constant 0 : i32
    %c0_i32_1 = arith.constant 0 : i32
    %c0_i32_2 = arith.constant 0 : i32
    return %c0_i32, %c0_i32_0, %c0_i32_1 : i32, i32, i32
  }
  func.func @transform_2(%arg0: i32) -> (i32, i32) {
    %c0_i32 = arith.constant 0 : i32
    %c0_i32_0 = arith.constant 0 : i32
    %c0_i32_1 = arith.constant 0 : i32
    return %c0_i32, %c0_i32_0 : i32, i32
  }
  func.func @transform_3(%arg0: i32) -> (i32, i32, i32) {
    %c0_i32 = arith.constant 0 : i32
    %c0_i32_0 = arith.constant 0 : i32
    %c0_i32_1 = arith.constant 0 : i32
    %c0_i32_2 = arith.constant 0 : i32
    return %c0_i32, %c0_i32_0, %c0_i32_1 : i32, i32, i32
  }
}

module attributes {stable_mosaic.version = 11 : i64} {
  func.func @_conv_se_res_gap_kernel(%arg0: i32, %arg1: memref<2x18x512xbf16, #tpu.memory_space<vmem>>, %arg2: memref<2x18x512xbf16, #tpu.memory_space<vmem>>, %arg3: memref<3x512x512xbf16, #tpu.memory_space<vmem>>, %arg4: memref<1x512xf32, #tpu.memory_space<vmem>>, %arg5: memref<32x4xf32, #tpu.memory_space<vmem>>, %arg6: memref<1x4xf32, #tpu.memory_space<vmem>>, %arg7: memref<4x32xf32, #tpu.memory_space<vmem>>, %arg8: memref<1x32xf32, #tpu.memory_space<vmem>>, %arg9: memref<2x32xf32, #tpu.memory_space<vmem>>) attributes {dimension_semantics = [#tpu.dimension_semantics<arbitrary>], iteration_bounds = array<i64: 1>, scalar_prefetch = 0 : i64, scratch_operands = 0 : i64, tpu.core_type = #tpu.core_type<tc>, window_params = [{pipeline_mode = #tpu.pipeline_mode<synchronous>, transform_indices = @transform_0, window_bounds = array<i64: 2, 18, 512>}, {pipeline_mode = #tpu.pipeline_mode<synchronous>, transform_indices = @transform_1, window_bounds = array<i64: 2, 18, 512>}, {pipeline_mode = #tpu.pipeline_mode<synchronous>, transform_indices = @transform_2, window_bounds = array<i64: 3, 512, 512>}, {pipeline_mode = #tpu.pipeline_mode<synchronous>, transform_indices = @transform_3, window_bounds = array<i64: 1, 512>}, {pipeline_mode = #tpu.pipeline_mode<synchronous>, transform_indices = @transform_4, window_bounds = array<i64: 32, 4>}, {pipeline_mode = #tpu.pipeline_mode<synchronous>, transform_indices = @transform_5, window_bounds = array<i64: 1, 4>}, {pipeline_mode = #tpu.pipeline_mode<synchronous>, transform_indices = @transform_6, window_bounds = array<i64: 4, 32>}, {pipeline_mode = #tpu.pipeline_mode<synchronous>, transform_indices = @transform_7, window_bounds = array<i64: 1, 32>}, {pipeline_mode = #tpu.pipeline_mode<synchronous>, transform_indices = @transform_8, window_bounds = array<i64: 2, 32>}]} {
    %c0 = arith.constant 0 : index
    %c0_0 = arith.constant 0 : index
    %c0_1 = arith.constant 0 : index
    %0 = vector.load %arg1[%c0, %c0_0, %c0_1] : memref<2x18x512xbf16, #tpu.memory_space<vmem>>, vector<2x18x512xbf16>
    %cst = arith.constant 0.000000e+00 : f32
    %1 = vector.broadcast %cst : f32 to vector<32x512xf32>
    %2 = vector.extract_strided_slice %0 {offsets = [0, 0, 0], sizes = [2, 16, 512], strides = [1, 1, 1]} : vector<2x18x512xbf16> to vector<2x16x512xbf16>
    %3 = vector.shape_cast %2 : vector<2x16x512xbf16> to vector<32x512xbf16>
    %c0_2 = arith.constant 0 : index
    %c0_3 = arith.constant 0 : index
    %c0_4 = arith.constant 0 : index
    %4 = vector.load %arg3[%c0_2, %c0_3, %c0_4] : memref<3x512x512xbf16, #tpu.memory_space<vmem>>, vector<1x512x512xbf16>
    %5 = vector.shape_cast %4 : vector<1x512x512xbf16> to vector<512x512xbf16>
    %cst_5 = arith.constant dense<0.000000e+00> : vector<32x512xf32>
    %6 = tpu.matmul %3, %5, %cst_5 {dimension_numbers = #tpu.dot_dimension_numbers<[1], [0], [0], [1], [0, 0, 1, 1], [], []>} : vector<32x512xbf16>, vector<512x512xbf16>, vector<32x512xf32> -> vector<32x512xf32>
    %7 = arith.addf %1, %6 : vector<32x512xf32>
    %8 = vector.extract_strided_slice %0 {offsets = [0, 1, 0], sizes = [2, 16, 512], strides = [1, 1, 1]} : vector<2x18x512xbf16> to vector<2x16x512xbf16>
    %9 = vector.shape_cast %8 : vector<2x16x512xbf16> to vector<32x512xbf16>
    %c1 = arith.constant 1 : index
    %c0_6 = arith.constant 0 : index
    %c0_7 = arith.constant 0 : index
    %10 = vector.load %arg3[%c1, %c0_6, %c0_7] : memref<3x512x512xbf16, #tpu.memory_space<vmem>>, vector<1x512x512xbf16>
    %11 = vector.shape_cast %10 : vector<1x512x512xbf16> to vector<512x512xbf16>
    %cst_8 = arith.constant dense<0.000000e+00> : vector<32x512xf32>
    %12 = tpu.matmul %9, %11, %cst_8 {dimension_numbers = #tpu.dot_dimension_numbers<[1], [0], [0], [1], [0, 0, 1, 1], [], []>} : vector<32x512xbf16>, vector<512x512xbf16>, vector<32x512xf32> -> vector<32x512xf32>
    %13 = arith.addf %7, %12 : vector<32x512xf32>
    %14 = vector.extract_strided_slice %0 {offsets = [0, 2, 0], sizes = [2, 16, 512], strides = [1, 1, 1]} : vector<2x18x512xbf16> to vector<2x16x512xbf16>
    %15 = vector.shape_cast %14 : vector<2x16x512xbf16> to vector<32x512xbf16>
    %c2 = arith.constant 2 : index
    %c0_9 = arith.constant 0 : index
    %c0_10 = arith.constant 0 : index
    %16 = vector.load %arg3[%c2, %c0_9, %c0_10] : memref<3x512x512xbf16, #tpu.memory_space<vmem>>, vector<1x512x512xbf16>
    %17 = vector.shape_cast %16 : vector<1x512x512xbf16> to vector<512x512xbf16>
    %cst_11 = arith.constant dense<0.000000e+00> : vector<32x512xf32>
    %18 = tpu.matmul %15, %17, %cst_11 {dimension_numbers = #tpu.dot_dimension_numbers<[1], [0], [0], [1], [0, 0, 1, 1], [], []>} : vector<32x512xbf16>, vector<512x512xbf16>, vector<32x512xf32> -> vector<32x512xf32>
    %19 = arith.addf %13, %18 : vector<32x512xf32>
    %c0_12 = arith.constant 0 : index
    %c0_13 = arith.constant 0 : index
    %20 = vector.load %arg4[%c0_12, %c0_13] : memref<1x512xf32, #tpu.memory_space<vmem>>, vector<1x512xf32>
    %21 = vector.broadcast %20 : vector<1x512xf32> to vector<32x512xf32>
    %22 = arith.addf %19, %21 : vector<32x512xf32>
    %23 = vector.shape_cast %22 : vector<32x512xf32> to vector<2x16x512xf32>
    %cst_14 = arith.constant dense<0.000000e+00> : vector<2x512xf32>
    %24 = vector.multi_reduction <add>, %23, %cst_14 [1] : vector<2x16x512xf32> to vector<2x512xf32>
    %25 = vector.shape_cast %24 : vector<2x512xf32> to vector<2x16x32xf32>
    %cst_15 = arith.constant dense<0.000000e+00> : vector<2x32xf32>
    %26 = vector.multi_reduction <add>, %25, %cst_15 [1] : vector<2x16x32xf32> to vector<2x32xf32>
    %cst_16 = arith.constant 3.906250e-03 : f32
    %27 = vector.broadcast %cst_16 : f32 to vector<2x32xf32>
    %28 = arith.mulf %26, %27 : vector<2x32xf32>
    %c0_17 = arith.constant 0 : index
    %c0_18 = arith.constant 0 : index
    %29 = vector.load %arg5[%c0_17, %c0_18] : memref<32x4xf32, #tpu.memory_space<vmem>>, vector<32x4xf32>
    %cst_19 = arith.constant dense<0.000000e+00> : vector<2x4xf32>
    %30 = tpu.matmul %28, %29, %cst_19 {dimension_numbers = #tpu.dot_dimension_numbers<[1], [0], [0], [1], [0, 0, 1, 1], [], []>} : vector<2x32xf32>, vector<32x4xf32>, vector<2x4xf32> -> vector<2x4xf32>
    %c0_20 = arith.constant 0 : index
    %c0_21 = arith.constant 0 : index
    %31 = vector.load %arg6[%c0_20, %c0_21] : memref<1x4xf32, #tpu.memory_space<vmem>>, vector<1x4xf32>
    %32 = vector.broadcast %31 : vector<1x4xf32> to vector<2x4xf32>
    %33 = arith.addf %30, %32 : vector<2x4xf32>
    %cst_22 = arith.constant 0.000000e+00 : f32
    %34 = vector.broadcast %cst_22 : f32 to vector<2x4xf32>
    %35 = arith.maximumf %33, %34 : vector<2x4xf32>
    %c0_23 = arith.constant 0 : index
    %c0_24 = arith.constant 0 : index
    %36 = vector.load %arg7[%c0_23, %c0_24] : memref<4x32xf32, #tpu.memory_space<vmem>>, vector<4x32xf32>
    %cst_25 = arith.constant dense<0.000000e+00> : vector<2x32xf32>
    %37 = tpu.matmul %35, %36, %cst_25 {dimension_numbers = #tpu.dot_dimension_numbers<[1], [0], [0], [1], [0, 0, 1, 1], [], []>} : vector<2x4xf32>, vector<4x32xf32>, vector<2x32xf32> -> vector<2x32xf32>
    %c0_26 = arith.constant 0 : index
    %c0_27 = arith.constant 0 : index
    %38 = vector.load %arg8[%c0_26, %c0_27] : memref<1x32xf32, #tpu.memory_space<vmem>>, vector<1x32xf32>
    %39 = vector.broadcast %38 : vector<1x32xf32> to vector<2x32xf32>
    %40 = arith.addf %37, %39 : vector<2x32xf32>
    %41 = arith.negf %40 : vector<2x32xf32>
    %42 = math.exp %41 : vector<2x32xf32>
    %cst_28 = arith.constant 1.000000e+00 : f32
    %43 = vector.broadcast %cst_28 : f32 to vector<2x32xf32>
    %44 = arith.addf %43, %42 : vector<2x32xf32>
    %45 = arith.divf %43, %44 : vector<2x32xf32>
    %46 = tpu.concatenate %45, %45, %45, %45, %45, %45, %45, %45, %45, %45, %45, %45, %45, %45, %45, %45 in 1 : vector<2x32xf32>, vector<2x32xf32>, vector<2x32xf32>, vector<2x32xf32>, vector<2x32xf32>, vector<2x32xf32>, vector<2x32xf32>, vector<2x32xf32>, vector<2x32xf32>, vector<2x32xf32>, vector<2x32xf32>, vector<2x32xf32>, vector<2x32xf32>, vector<2x32xf32>, vector<2x32xf32>, vector<2x32xf32> -> vector<2x512xf32>
    %c0_29 = arith.constant 0 : index
    %c1_30 = arith.constant 1 : index
    %c0_31 = arith.constant 0 : index
    %47 = vector.load %arg2[%c0_29, %c1_30, %c0_31] : memref<2x18x512xbf16, #tpu.memory_space<vmem>>, vector<2x16x512xbf16>
    %48 = arith.extf %47 : vector<2x16x512xbf16> to vector<2x16x512xf32>
    %49 = vector.shape_cast %46 : vector<2x512xf32> to vector<2x1x512xf32>
    %50 = vector.broadcast %49 : vector<2x1x512xf32> to vector<2x16x512xf32>
    %51 = arith.mulf %23, %50 : vector<2x16x512xf32>
    %52 = arith.addf %51, %48 : vector<2x16x512xf32>
    %cst_32 = arith.constant 0.000000e+00 : f32
    %53 = vector.broadcast %cst_32 : f32 to vector<2x16x512xf32>
    %54 = arith.maximumf %52, %53 : vector<2x16x512xf32>
    %cst_33 = arith.constant dense<0.000000e+00> : vector<2x512xf32>
    %55 = vector.multi_reduction <add>, %54, %cst_33 [1] : vector<2x16x512xf32> to vector<2x512xf32>
    %56 = vector.shape_cast %55 : vector<2x512xf32> to vector<2x16x32xf32>
    %cst_34 = arith.constant dense<0.000000e+00> : vector<2x32xf32>
    %57 = vector.multi_reduction <add>, %56, %cst_34 [1] : vector<2x16x32xf32> to vector<2x32xf32>
    %cst_35 = arith.constant 3.906250e-03 : f32
    %58 = vector.broadcast %cst_35 : f32 to vector<2x32xf32>
    %59 = arith.mulf %57, %58 : vector<2x32xf32>
    %c0_36 = arith.constant 0 : index
    %c0_37 = arith.constant 0 : index
    %60 = vector.load %arg9[%c0_36, %c0_37] : memref<2x32xf32, #tpu.memory_space<vmem>>, vector<2x32xf32>
    tpu.vector_store %arg9[%c0_36, %c0_37], %59 {strides = array<i32>} : memref<2x32xf32, #tpu.memory_space<vmem>>, vector<2x32xf32>,
    return
  }
  func.func @transform_0(%arg0: i32) -> (i32, i32, i32) {
    %c0_i32 = arith.constant 0 : i32
    %c0_i32_0 = arith.constant 0 : i32
    %c0_i32_1 = arith.constant 0 : i32
    %c0_i32_2 = arith.constant 0 : i32
    return %c0_i32, %c0_i32_0, %c0_i32_1 : i32, i32, i32
  }
  func.func @transform_1(%arg0: i32) -> (i32, i32, i32) {
    %c0_i32 = arith.constant 0 : i32
    %c0_i32_0 = arith.constant 0 : i32
    %c0_i32_1 = arith.constant 0 : i32
    %c0_i32_2 = arith.constant 0 : i32
    return %c0_i32, %c0_i32_0, %c0_i32_1 : i32, i32, i32
  }
  func.func @transform_2(%arg0: i32) -> (i32, i32, i32) {
    %c0_i32 = arith.constant 0 : i32
    %c0_i32_0 = arith.constant 0 : i32
    %c0_i32_1 = arith.constant 0 : i32
    %c0_i32_2 = arith.constant 0 : i32
    return %c0_i32, %c0_i32_0, %c0_i32_1 : i32, i32, i32
  }
  func.func @transform_3(%arg0: i32) -> (i32, i32) {
    %c0_i32 = arith.constant 0 : i32
    %c0_i32_0 = arith.constant 0 : i32
    %c0_i32_1 = arith.constant 0 : i32
    return %c0_i32, %c0_i32_0 : i32, i32
  }
  func.func @transform_4(%arg0: i32) -> (i32, i32) {
    %c0_i32 = arith.constant 0 : i32
    %c0_i32_0 = arith.constant 0 : i32
    %c0_i32_1 = arith.constant 0 : i32
    return %c0_i32, %c0_i32_0 : i32, i32
  }
  func.func @transform_5(%arg0: i32) -> (i32, i32) {
    %c0_i32 = arith.constant 0 : i32
    %c0_i32_0 = arith.constant 0 : i32
    %c0_i32_1 = arith.constant 0 : i32
    return %c0_i32, %c0_i32_0 : i32, i32
  }
  func.func @transform_6(%arg0: i32) -> (i32, i32) {
    %c0_i32 = arith.constant 0 : i32
    %c0_i32_0 = arith.constant 0 : i32
    %c0_i32_1 = arith.constant 0 : i32
    return %c0_i32, %c0_i32_0 : i32, i32
  }
  func.func @transform_7(%arg0: i32) -> (i32, i32) {
    %c0_i32 = arith.constant 0 : i32
    %c0_i32_0 = arith.constant 0 : i32
    %c0_i32_1 = arith.constant 0 : i32
    return %c0_i32, %c0_i32_0 : i32, i32
  }
  func.func @transform_8(%arg0: i32) -> (i32, i32) {
    %c0_i32 = arith.constant 0 : i32
    %c0_i32_0 = arith.constant 0 : i32
    %c0_i32_1 = arith.constant 0 : i32
    return %c0_i32, %c0_i32_0 : i32, i32
  }
}

module attributes {stable_mosaic.version = 11 : i64} {
  func.func @_head_kernel(%arg0: i32, %arg1: memref<2x32xf32, #tpu.memory_space<vmem>>, %arg2: memref<32x16xf32, #tpu.memory_space<vmem>>, %arg3: memref<1x16xf32, #tpu.memory_space<vmem>>, %arg4: memref<1xf32, #tpu.memory_space<smem>>, %arg5: memref<16x1xf32, #tpu.memory_space<vmem>>, %arg6: memref<1x1xf32, #tpu.memory_space<vmem>>, %arg7: memref<2x1xf32, #tpu.memory_space<vmem>>) attributes {dimension_semantics = [#tpu.dimension_semantics<arbitrary>], iteration_bounds = array<i64: 1>, scalar_prefetch = 0 : i64, scratch_operands = 0 : i64, tpu.core_type = #tpu.core_type<tc>, window_params = [{pipeline_mode = #tpu.pipeline_mode<synchronous>, transform_indices = @transform_0, window_bounds = array<i64: 2, 32>}, {pipeline_mode = #tpu.pipeline_mode<synchronous>, transform_indices = @transform_1, window_bounds = array<i64: 32, 16>}, {pipeline_mode = #tpu.pipeline_mode<synchronous>, transform_indices = @transform_2, window_bounds = array<i64: 1, 16>}, {transform_indices = @transform_3, window_bounds = array<i64: 1>}, {pipeline_mode = #tpu.pipeline_mode<synchronous>, transform_indices = @transform_4, window_bounds = array<i64: 16, 1>}, {pipeline_mode = #tpu.pipeline_mode<synchronous>, transform_indices = @transform_5, window_bounds = array<i64: 1, 1>}, {pipeline_mode = #tpu.pipeline_mode<synchronous>, transform_indices = @transform_6, window_bounds = array<i64: 2, 1>}]} {
    %c0 = arith.constant 0 : index
    %c0_0 = arith.constant 0 : index
    %0 = vector.load %arg1[%c0, %c0_0] : memref<2x32xf32, #tpu.memory_space<vmem>>, vector<2x32xf32>
    %c0_1 = arith.constant 0 : index
    %c0_2 = arith.constant 0 : index
    %1 = vector.load %arg2[%c0_1, %c0_2] : memref<32x16xf32, #tpu.memory_space<vmem>>, vector<32x16xf32>
    %cst = arith.constant dense<0.000000e+00> : vector<2x16xf32>
    %2 = tpu.matmul %0, %1, %cst {dimension_numbers = #tpu.dot_dimension_numbers<[1], [0], [0], [1], [0, 0, 1, 1], [], []>} : vector<2x32xf32>, vector<32x16xf32>, vector<2x16xf32> -> vector<2x16xf32>
    %c0_3 = arith.constant 0 : index
    %c0_4 = arith.constant 0 : index
    %3 = vector.load %arg3[%c0_3, %c0_4] : memref<1x16xf32, #tpu.memory_space<vmem>>, vector<1x16xf32>
    %4 = vector.broadcast %3 : vector<1x16xf32> to vector<2x16xf32>
    %5 = arith.addf %2, %4 : vector<2x16xf32>
    %c0_5 = arith.constant 0 : index
    %6 = memref.load %arg4[%c0_5] : memref<1xf32, #tpu.memory_space<smem>>
    %cst_6 = arith.constant 0.000000e+00 : f32
    %7 = vector.broadcast %cst_6 : f32 to vector<2x16xf32>
    %8 = arith.maximumf %5, %7 : vector<2x16xf32>
    %cst_7 = arith.constant 0.000000e+00 : f32
    %9 = vector.broadcast %cst_7 : f32 to vector<2x16xf32>
    %10 = arith.minimumf %5, %9 : vector<2x16xf32>
    %11 = vector.broadcast %6 : f32 to vector<2x16xf32>
    %12 = arith.mulf %11, %10 : vector<2x16xf32>
    %13 = arith.addf %8, %12 : vector<2x16xf32>
    %c0_8 = arith.constant 0 : index
    %c0_9 = arith.constant 0 : index
    %14 = vector.load %arg5[%c0_8, %c0_9] : memref<16x1xf32, #tpu.memory_space<vmem>>, vector<16x1xf32>
    %cst_10 = arith.constant dense<0.000000e+00> : vector<2x1xf32>
    %15 = tpu.matmul %13, %14, %cst_10 {dimension_numbers = #tpu.dot_dimension_numbers<[1], [0], [0], [1], [0, 0, 1, 1], [], []>} : vector<2x16xf32>, vector<16x1xf32>, vector<2x1xf32> -> vector<2x1xf32>
    %c0_11 = arith.constant 0 : index
    %c0_12 = arith.constant 0 : index
    %16 = vector.load %arg6[%c0_11, %c0_12] : memref<1x1xf32, #tpu.memory_space<vmem>>, vector<1x1xf32>
    %17 = vector.broadcast %16 : vector<1x1xf32> to vector<2x1xf32>
    %18 = arith.addf %15, %17 : vector<2x1xf32>
    %c0_13 = arith.constant 0 : index
    %c0_14 = arith.constant 0 : index
    %19 = vector.load %arg7[%c0_13, %c0_14] : memref<2x1xf32, #tpu.memory_space<vmem>>, vector<2x1xf32>
    tpu.vector_store %arg7[%c0_13, %c0_14], %18 {strides = array<i32>} : memref<2x1xf32, #tpu.memory_space<vmem>>, vector<2x1xf32>,
    return
  }
  func.func @transform_0(%arg0: i32) -> (i32, i32) {
    %c0_i32 = arith.constant 0 : i32
    %c0_i32_0 = arith.constant 0 : i32
    %c0_i32_1 = arith.constant 0 : i32
    return %c0_i32, %c0_i32_0 : i32, i32
  }
  func.func @transform_1(%arg0: i32) -> (i32, i32) {
    %c0_i32 = arith.constant 0 : i32
    %c0_i32_0 = arith.constant 0 : i32
    %c0_i32_1 = arith.constant 0 : i32
    return %c0_i32, %c0_i32_0 : i32, i32
  }
  func.func @transform_2(%arg0: i32) -> (i32, i32) {
    %c0_i32 = arith.constant 0 : i32
    %c0_i32_0 = arith.constant 0 : i32
    %c0_i32_1 = arith.constant 0 : i32
    return %c0_i32, %c0_i32_0 : i32, i32
  }
  func.func @transform_3(%arg0: i32) -> i32 {
    %c0_i32 = arith.constant 0 : i32
    %c0_i32_0 = arith.constant 0 : i32
    return %c0_i32 : i32
  }
  func.func @transform_4(%arg0: i32) -> (i32, i32) {
    %c0_i32 = arith.constant 0 : i32
    %c0_i32_0 = arith.constant 0 : i32
    %c0_i32_1 = arith.constant 0 : i32
    return %c0_i32, %c0_i32_0 : i32, i32
  }
  func.func @transform_5(%arg0: i32) -> (i32, i32) {
    %c0_i32 = arith.constant 0 : i32
    %c0_i32_0 = arith.constant 0 : i32
    %c0_i32_1 = arith.constant 0 : i32
    return %c0_i32, %c0_i32_0 : i32, i32
  }
  func.func @transform_6(%arg0: i32) -> (i32, i32) {
    %c0_i32 = arith.constant 0 : i32
    %c0_i32_0 = arith.constant 0 : i32
    %c0_i32_1 = arith.constant 0 : i32
    return %c0_i32, %c0_i32_0 : i32, i32
  }
}

</mosaic_0001>

<llo_original>
// kernel: tile.18
$region0: #{tile.18}
  #allocation0 [shape = 's32[1]{0}', space=sflag, size = 0x4, scoped, tag = 'scoped memory for tile.18']
  %s0 = inlined_call_operand.vmem [shape: f32[32], index: 0, kind: input, shape index: {}]
  %s1 = inlined_call_operand.vmem [shape: f32[16,32], index: 1, kind: output, shape index: {}]
  // Predicated region
  $region2: #{tile.18} parent=0 // pred_check
    _
  $region3: #{tile.18} parent=0 // pred_check_branch
    %3 = sbr.rel (0) target = $region5
  $region4: #{tile.18} parent=0 // pred_region
    _
  $region5: #{tile.18} parent=0 // pred_fallthru
    _
  %v4 = vld [vmem:[%s0] ss:$0 sm:$0xff]
  %5 = vst [vmem:[%s1] sm:$0xff] %v4
  %s6 = scalar_lea.vmem %s1, 8
  %7 = vst [vmem:[%s6] sm:$0xff] %v4

// kernel: tile.19
$region0: #{tile.19}
  %s0 = inlined_call_operand.vmem [shape: f32[16,32], index: 0, kind: input, shape index: {}]
  %s1 = inlined_call_operand.vmem [shape: f32[1,512], index: 1, kind: output, shape index: {}]
  $region1: #{tile.19} parent=0
    #allocation0 [shape = 'u8[16384]{0}', space=vmem, size = 0x4000, scoped, tag = 'scoped mem for output reshape']
    %v2 = vld [vmem:[%s0] ss:$4 sm:$0xf]
    %vm3 = vcmask 261120
    %4 = vst.msk [vmem:[#allocation0] ss:$8 sm:$0xf] %vm3, %v2
    %s5 = scalar_lea.vmem %s0, 3
    %v6 = vld [vmem:[%s5] ss:$4 sm:$0xf]
    %7 = vrot.lane.b32.xlu0 %v6, 96
    %v8 = vpop.permute.xlu0 %7
    %vm9 = vcmask 1048320
    %10 = vst.msk [vmem:[#allocation0] ss:$8 sm:$0xf] %vm9, %v8
    %s11 = scalar_lea.vmem %s0, 2
    %v12 = vld [vmem:[%s11] ss:$4 sm:$0xf]
    %13 = vrot.lane.b32.xlu0 %v12, 64
    %v14 = vpop.permute.xlu0 %13
    %vm15 = vcmask 785920
    %16 = vst.msk [vmem:[#allocation0] ss:$8 sm:$0xf] %vm15, %v14
    %s17 = scalar_lea.vmem %s0, 1
    %v18 = vld [vmem:[%s17] ss:$4 sm:$0xf]
    %19 = vrot.lane.b32.xlu0 %v18, 32
    %v20 = vpop.permute.xlu0 %19
    %vm21 = vcmask 523520
    %22 = vst.msk [vmem:[#allocation0] ss:$8 sm:$0xf] %vm21, %v20
    %s24 = sshllo.u32 0, 1
    %v26 = vld [vmem:[#allocation0] sm:%s24]
    %s27 = sshllo.u32 0, 1
    %28 = vst [vmem:[%s1] sm:%s27] %v26
    %s29 = scalar_lea.vmem [#allocation0], 8
    %v30 = vld [vmem:[%s29] sm:%s24]
    %s31 = sshllo.u32 0, 1
    %s32 = scalar_lea.vmem %s1, 1
    %33 = vst [vmem:[%s32] sm:%s31] %v30
    %s34 = scalar_lea.vmem [#allocation0], 16
    %v35 = vld [vmem:[%s34] sm:%s24]
    %s36 = sshllo.u32 0, 1
    %s37 = smul.addr 1, 2
    %s38 = scalar_lea.vmem %s1, %s37
    %39 = vst [vmem:[%s38] sm:%s36] %v35
    %s40 = scalar_lea.vmem [#allocation0], 24
    %v41 = vld [vmem:[%s40] sm:%s24]
    %s42 = sshllo.u32 0, 1
    %s43 = smul.addr 1, 3
    %s44 = scalar_lea.vmem %s1, %s43
    %45 = vst [vmem:[%s44] sm:%s42] %v41

// kernel: seresnet_forward.4
$region0: #{seresnet_forward.4}
  #allocation0 [shape = 'u32[]', space=smem, size = 0x4, offset = 0x4, fixed_abs, tag = 'smem constant byte address 0x4 - core index']
  #allocation1 [shape = 'u32[144,128]{1,0:T(1,128)}', space=vmem, size = 0x12000, scoped, tag = 'internal scratch']
  %s0 = inlined_call_operand.vmem [shape: bf16[2,18,64], index: 0, kind: input, shape index: {}]
  %s1 = inlined_call_operand.vmem [shape: bf16[3,64,512], index: 1, kind: input, shape index: {}]
  %s2 = inlined_call_operand.vmem [shape: f32[1,512], index: 2, kind: input, shape index: {}]
  %s3 = inlined_call_operand.vmem [shape: bf16[2,18,512], index: 3, kind: output, shape index: {}]
  %s4 = sld [smem:[#allocation0]]
  $region22: #{seresnet_forward.4} parent=0
    _
  %s6 = ssub.s32 1, %s4
  %s7 = scalar_select 0, %s6, %s4
  // Predicated region
  $region2: #{seresnet_forward.4} parent=0 // pred_check
    _
  $region3: #{seresnet_forward.4} parent=0 // pred_check_branch
    %9 = sbr.rel (0) target = $region5
  $region4: #{seresnet_forward.4} parent=0 // pred_region
    _
  $region5: #{seresnet_forward.4} parent=0 // pred_fallthru
    _
  // Predicated region
  $region6: #{seresnet_forward.4} parent=0 // pred_check
    _
  $region7: #{seresnet_forward.4} parent=0 // pred_check_branch
    %11 = sbr.rel (0) target = $region9
  $region8: #{seresnet_forward.4} parent=0 // pred_region
    _
  $region9: #{seresnet_forward.4} parent=0 // pred_fallthru
    _
  // Predicated region
  $region10: #{seresnet_forward.4} parent=0 // pred_check
    _
  $region11: #{seresnet_forward.4} parent=0 // pred_check_branch
    %13 = sbr.rel (0) target = $region13
  $region12: #{seresnet_forward.4} parent=0 // pred_region
    _
  $region13: #{seresnet_forward.4} parent=0 // pred_fallthru
    _
  %v15 = vld [vmem:[%s0] sm:$0xf]
  %v16 = vld [vmem:[%s0 + $0x4] sm:$0xf]
  %v17 = vld [vmem:[%s0 + $0x8] sm:$0x1]
  %v18 = vld [vmem:[%s0 + $0xc] sm:$0xf]
  %v19 = vld [vmem:[%s0 + $0x10] sm:$0xf]
  %v20 = vld [vmem:[%s0 + $0x14] sm:$0x1]
  %v21 = vld [vmem:[%s1] sm:$0xff]
  %v22 = vld [vmem:[%s1 + $0x8] sm:$0xff]
  %v23 = vld [vmem:[%s1 + $0x10] sm:$0xff]
  %v24 = vld [vmem:[%s1 + $0x18] sm:$0xff]
  %v25 = vld [vmem:[%s1 + $0x20] sm:$0xff]
  %v26 = vld [vmem:[%s1 + $0x28] sm:$0xff]
  %v27 = vld [vmem:[%s1 + $0x30] sm:$0xff]
  %v28 = vld [vmem:[%s1 + $0x38] sm:$0xff]
  %v29 = vld [vmem:[%s1 + $0x40] sm:$0xff]
  %v30 = vld [vmem:[%s1 + $0x48] sm:$0xff]
  %v31 = vld [vmem:[%s1 + $0x50] sm:$0xff]
  %v32 = vld [vmem:[%s1 + $0x58] sm:$0xff]
  %v33 = vld [vmem:[%s1 + $0x60] sm:$0xff]
  %v34 = vld [vmem:[%s1 + $0x68] sm:$0xff]
  %v35 = vld [vmem:[%s1 + $0x70] sm:$0xff]
  %v36 = vld [vmem:[%s1 + $0x78] sm:$0xff]
  %vm37 = vsmask.f32 3328
  %vm38 = vsmask.f32 7440
  %vm39 = vmor %vm37, %vm38
  %v41 = vshrl.u32 %v15, 16
  %v43 = vrot.slane %v41, 4
  %v44 = vshll.u32 %v15, 16
  %v46 = vrot.slane %v44, 5
  %v47 = vor.u32 %v43, %v46
  %v48 = vrot.slane %v47, 4
  %v50 = vshll.u32 %v16, 16
  %v52 = vrot.slane %v50, 5
  %v53 = vsel %vm39, %v48, %v52
  %v54 = vshrl.u32 %v16, 16
  %v56 = vrot.slane %v54, 4
  %v57 = vor.u32 %v56, %v52
  %v58 = vrot.slane %v57, 4
  %v60 = vshll.u32 %v17, 16
  %v62 = vrot.slane %v60, 5
  %v63 = vsel %vm39, %v58, %v62
  %v65 = vshrl.u32 %v18, 16
  %v67 = vrot.slane %v65, 4
  %v68 = vshll.u32 %v18, 16
  %v70 = vrot.slane %v68, 5
  %v71 = vor.u32 %v67, %v70
  %v72 = vrot.slane %v71, 4
  %v74 = vshll.u32 %v19, 16
  %v76 = vrot.slane %v74, 5
  %v77 = vsel %vm39, %v72, %v76
  %v78 = vshrl.u32 %v19, 16
  %v80 = vrot.slane %v78, 4
  %v81 = vor.u32 %v80, %v76
  %v82 = vrot.slane %v81, 4
  %v84 = vshll.u32 %v20, 16
  %v86 = vrot.slane %v84, 5
  %v87 = vsel %vm39, %v82, %v86
  %s88 = scalar_lea.vmem %s1, 128
  %v89 = vld [vmem:[%s88] sm:$0xff]
  %v90 = vld [vmem:[%s88 + $0x8] sm:$0xff]
  %v91 = vld [vmem:[%s88 + $0x10] sm:$0xff]
  %v92 = vld [vmem:[%s88 + $0x18] sm:$0xff]
  %v93 = vld [vmem:[%s88 + $0x20] sm:$0xff]
  %v94 = vld [vmem:[%s88 + $0x28] sm:$0xff]
  %v95 = vld [vmem:[%s88 + $0x30] sm:$0xff]
  %v96 = vld [vmem:[%s88 + $0x38] sm:$0xff]
  %v97 = vld [vmem:[%s88 + $0x40] sm:$0xff]
  %v98 = vld [vmem:[%s88 + $0x48] sm:$0xff]
  %v99 = vld [vmem:[%s88 + $0x50] sm:$0xff]
  %v100 = vld [vmem:[%s88 + $0x58] sm:$0xff]
  %v101 = vld [vmem:[%s88 + $0x60] sm:$0xff]
  %v102 = vld [vmem:[%s88 + $0x68] sm:$0xff]
  %v103 = vld [vmem:[%s88 + $0x70] sm:$0xff]
  %v104 = vld [vmem:[%s88 + $0x78] sm:$0xff]
  %v105 = vunpack.c.l.b16 %v53
  %v106 = vunpack.c.l.b16 %v63
  %v107 = vunpack.c.l.b16 %v77
  %v108 = vunpack.c.l.b16 %v87
  %v109 = vpack.c.b16 %v106, %v105
  %v110 = vpack.c.b16 %v108, %v107
  %v127 = vunpack.c.l.b16 %v89
  %v128 = vunpack.c.h.b16 %v89
  %v129 = vunpack.c.l.b16 %v90
  %v130 = vunpack.c.h.b16 %v90
  %v131 = vunpack.c.l.b16 %v91
  %v132 = vunpack.c.h.b16 %v91
  %v133 = vunpack.c.l.b16 %v92
  %v134 = vunpack.c.h.b16 %v92
  %v135 = vunpack.c.l.b16 %v93
  %v136 = vunpack.c.h.b16 %v93
  %v137 = vunpack.c.l.b16 %v94
  %v138 = vunpack.c.h.b16 %v94
  %v139 = vunpack.c.l.b16 %v95
  %v140 = vunpack.c.h.b16 %v95
  %v141 = vunpack.c.l.b16 %v96
  %v142 = vunpack.c.h.b16 %v96
  %v143 = vunpack.c.l.b16 %v97
  %v144 = vunpack.c.h.b16 %v97
  %v145 = vunpack.c.l.b16 %v98
  %v146 = vunpack.c.h.b16 %v98
  %v147 = vunpack.c.l.b16 %v99
  %v148 = vunpack.c.h.b16 %v99
  %v149 = vunpack.c.l.b16 %v100
  %v150 = vunpack.c.h.b16 %v100
  %v151 = vunpack.c.l.b16 %v101
  %v152 = vunpack.c.h.b16 %v101
  %v153 = vunpack.c.l.b16 %v102
  %v154 = vunpack.c.h.b16 %v102
  %v155 = vunpack.c.l.b16 %v103
  %v156 = vunpack.c.h.b16 %v103
  %v157 = vunpack.c.l.b16 %v104
  %v158 = vunpack.c.h.b16 %v104
  %v159 = vpack.c.b16 %v131, %v127
  %v160 = vpack.c.b16 %v132, %v128
  %v161 = vpack.c.b16 %v133, %v129
  %v162 = vpack.c.b16 %v134, %v130
  %v163 = vpack.c.b16 %v139, %v135
  %v164 = vpack.c.b16 %v140, %v136
  %v165 = vpack.c.b16 %v141, %v137
  %v166 = vpack.c.b16 %v142, %v138
  %v167 = vpack.c.b16 %v147, %v143
  %v168 = vpack.c.b16 %v148, %v144
  %v169 = vpack.c.b16 %v149, %v145
  %v170 = vpack.c.b16 %v150, %v146
  %v171 = vpack.c.b16 %v155, %v151
  %v172 = vpack.c.b16 %v156, %v152
  %v173 = vpack.c.b16 %v157, %v153
  %v174 = vpack.c.b16 %v158, %v154
  %vm191 = vcmask 523264
  %v193 = vsel %vm191, %v109, 0
  %v196 = vsel %vm191, %v110, 0
  %198 = vmatprep.subr.bf16.mxu0 %v160
  %199 = vmatpush1.bf16.msra.mxu0 %v159
  %200 = vmatprep.subr.bf16.mxu0 %v164
  %201 = vmatpush1.bf16.msra.mxu0 %v163
  %202 = vmatprep.subr.bf16.mxu0 %v168
  %203 = vmatpush1.bf16.msra.mxu0 %v167
  %204 = vmatprep.subr.bf16.mxu0 %v172
  %205 = vmatpush1.bf16.msra.mxu0 %v171
  %206 = vmatprep.subr.bf16.mxu0 0
  %207 = vmatpush1.bf16.msra.mxu0 0
  %208 = vmatprep.subr.bf16.mxu0 0
  %209 = vmatpush1.bf16.msra.mxu0 0
  %210 = vmatprep.subr.bf16.mxu0 0
  %211 = vmatpush1.bf16.msra.mxu0 0
  %212 = vmatprep.subr.bf16.mxu0 0
  %213 = vmatpush1.bf16.msra.mxu0 0
  %214 = vmatprep.subr.bf16.mxu0 0
  %215 = vmatpush1.bf16.msra.mxu0 0
  %216 = vmatprep.subr.bf16.mxu0 0
  %217 = vmatpush1.bf16.msra.mxu0 0
  %218 = vmatprep.subr.bf16.mxu0 0
  %219 = vmatpush1.bf16.msra.mxu0 0
  %220 = vmatprep.subr.bf16.mxu0 0
  %221 = vmatpush1.bf16.msra.mxu0 0
  %222 = vmatprep.subr.bf16.mxu0 0
  %223 = vmatpush1.bf16.msra.mxu0 0
  %224 = vmatprep.subr.bf16.mxu0 0
  %225 = vmatpush1.bf16.msra.mxu0 0
  %226 = vmatprep.subr.bf16.mxu0 0
  %227 = vmatpush1.bf16.msra.mxu0 0
  %228 = vmatprep.subr.bf16.mxu0 0
  %229 = vmatpush1.bf16.msra.mxu0 0
  %230 = vmatprep.mubr.bf16.mxu0 0
  %231 = vmatmul.mubr.bf16.gmra.mrb[0].mxu0 %v193
  %v232 = vpop.f32.mrb[0].mxu0
  %v233 = vadd.f32 0.0, %v232
  %v234 = vpop.f32.mrb[0].mxu0
  %v235 = vadd.f32 0.0, %v234
  %v236 = vpop.f32.mrb[0].mxu0
  %v237 = vadd.f32 0.0, %v236
  %v238 = vpop.f32.mrb[0].mxu0
  %v239 = vadd.f32 0.0, %v238
  %240 = vmatprep.mubr.bf16.mxu0 0
  %241 = vmatmul.mubr.bf16.gmra.mrb[0].mxu0 %v196
  %v242 = vpop.f32.mrb[0].mxu0
  %v243 = vadd.f32 0.0, %v242
  %v244 = vpop.f32.mrb[0].mxu0
  %v245 = vadd.f32 0.0, %v244
  %v246 = vpop.f32.mrb[0].mxu0
  %v247 = vadd.f32 0.0, %v246
  %v248 = vpop.f32.mrb[0].mxu0
  %v249 = vadd.f32 0.0, %v248
  %250 = vdwg.mxu0
  %251 = vmatprep.subr.bf16.mxu0 %v162
  %252 = vmatpush1.bf16.msra.mxu0 %v161
  %253 = vmatprep.subr.bf16.mxu0 %v166
  %254 = vmatpush1.bf16.msra.mxu0 %v165
  %255 = vmatprep.subr.bf16.mxu0 %v170
  %256 = vmatpush1.bf16.msra.mxu0 %v169
  %257 = vmatprep.subr.bf16.mxu0 %v174
  %258 = vmatpush1.bf16.msra.mxu0 %v173
  %259 = vmatprep.subr.bf16.mxu0 0
  %260 = vmatpush1.bf16.msra.mxu0 0
  %261 = vmatprep.subr.bf16.mxu0 0
  %262 = vmatpush1.bf16.msra.mxu0 0
  %263 = vmatprep.subr.bf16.mxu0 0
  %264 = vmatpush1.bf16.msra.mxu0 0
  %265 = vmatprep.subr.bf16.mxu0 0
  %266 = vmatpush1.bf16.msra.mxu0 0
  %267 = vmatprep.subr.bf16.mxu0 0
  %268 = vmatpush1.bf16.msra.mxu0 0
  %269 = vmatprep.subr.bf16.mxu0 0
  %270 = vmatpush1.bf16.msra.mxu0 0
  %271 = vmatprep.subr.bf16.mxu0 0
  %272 = vmatpush1.bf16.msra.mxu0 0
  %273 = vmatprep.subr.bf16.mxu0 0
  %274 = vmatpush1.bf16.msra.mxu0 0
  %275 = vmatprep.subr.bf16.mxu0 0
  %276 = vmatpush1.bf16.msra.mxu0 0
  %277 = vmatprep.subr.bf16.mxu0 0
  %278 = vmatpush1.bf16.msra.mxu0 0
  %279 = vmatprep.subr.bf16.mxu0 0
  %280 = vmatpush1.bf16.msra.mxu0 0
  %281 = vmatprep.subr.bf16.mxu0 0
  %282 = vmatpush1.bf16.msra.mxu0 0
  %283 = vmatprep.mubr.bf16.mxu0 0
  %284 = vmatmul.mubr.bf16.gmra.mrb[0].mxu0 %v193
  %v285 = vpop.f32.mrb[0].mxu0
  %v286 = vadd.f32 0.0, %v285
  %v287 = vpop.f32.mrb[0].mxu0
  %v288 = vadd.f32 0.0, %v287
  %v289 = vpop.f32.mrb[0].mxu0
  %v290 = vadd.f32 0.0, %v289
  %v291 = vpop.f32.mrb[0].mxu0
  %v292 = vadd.f32 0.0, %v291
  %293 = vmatprep.mubr.bf16.mxu0 0
  %294 = vmatmul.mubr.bf16.gmra.mrb[0].mxu0 %v196
  %v295 = vpop.f32.mrb[0].mxu0
  %v296 = vadd.f32 0.0, %v295
  %v297 = vpop.f32.mrb[0].mxu0
  %v298 = vadd.f32 0.0, %v297
  %v299 = vpop.f32.mrb[0].mxu0
  %v300 = vadd.f32 0.0, %v299
  %v301 = vpop.f32.mrb[0].mxu0
  %v302 = vadd.f32 0.0, %v301
  %303 = vdwg.mxu0
  %v308 = vunpack.c.l.b16 %v15
  %v309 = vunpack.c.l.b16 %v16
  %v310 = vunpack.c.l.b16 %v18
  %v311 = vunpack.c.l.b16 %v19
  %v312 = vpack.c.b16 %v309, %v308
  %v313 = vpack.c.b16 %v311, %v310
  %v330 = vunpack.c.l.b16 %v21
  %v331 = vunpack.c.h.b16 %v21
  %v332 = vunpack.c.l.b16 %v22
  %v333 = vunpack.c.h.b16 %v22
  %v334 = vunpack.c.l.b16 %v23
  %v335 = vunpack.c.h.b16 %v23
  %v336 = vunpack.c.l.b16 %v24
  %v337 = vunpack.c.h.b16 %v24
  %v338 = vunpack.c.l.b16 %v25
  %v339 = vunpack.c.h.b16 %v25
  %v340 = vunpack.c.l.b16 %v26
  %v341 = vunpack.c.h.b16 %v26
  %v342 = vunpack.c.l.b16 %v27
  %v343 = vunpack.c.h.b16 %v27
  %v344 = vunpack.c.l.b16 %v28
  %v345 = vunpack.c.h.b16 %v28
  %v346 = vunpack.c.l.b16 %v29
  %v347 = vunpack.c.h.b16 %v29
  %v348 = vunpack.c.l.b16 %v30
  %v349 = vunpack.c.h.b16 %v30
  %v350 = vunpack.c.l.b16 %v31
  %v351 = vunpack.c.h.b16 %v31
  %v352 = vunpack.c.l.b16 %v32
  %v353 = vunpack.c.h.b16 %v32
  %v354 = vunpack.c.l.b16 %v33
  %v355 = vunpack.c.h.b16 %v33
  %v356 = vunpack.c.l.b16 %v34
  %v357 = vunpack.c.h.b16 %v34
  %v358 = vunpack.c.l.b16 %v35
  %v359 = vunpack.c.h.b16 %v35
  %v360 = vunpack.c.l.b16 %v36
  %v361 = vunpack.c.h.b16 %v36
  %v362 = vpack.c.b16 %v334, %v330
  %v363 = vpack.c.b16 %v335, %v331
  %v364 = vpack.c.b16 %v336, %v332
  %v365 = vpack.c.b16 %v337, %v333
  %v366 = vpack.c.b16 %v342, %v338
  %v367 = vpack.c.b16 %v343, %v339
  %v368 = vpack.c.b16 %v344, %v340
  %v369 = vpack.c.b16 %v345, %v341
  %v370 = vpack.c.b16 %v350, %v346
  %v371 = vpack.c.b16 %v351, %v347
  %v372 = vpack.c.b16 %v352, %v348
  %v373 = vpack.c.b16 %v353, %v349
  %v374 = vpack.c.b16 %v358, %v354
  %v375 = vpack.c.b16 %v359, %v355
  %v376 = vpack.c.b16 %v360, %v356
  %v377 = vpack.c.b16 %v361, %v357
  %v395 = vsel %vm191, %v312, 0
  %v398 = vsel %vm191, %v313, 0
  %400 = vmatprep.subr.bf16.mxu0 %v363
  %401 = vmatpush1.bf16.msra.mxu0 %v362
  %402 = vmatprep.subr.bf16.mxu0 %v367
  %403 = vmatpush1.bf16.msra.mxu0 %v366
  %404 = vmatprep.subr.bf16.mxu0 %v371
  %405 = vmatpush1.bf16.msra.mxu0 %v370
  %406 = vmatprep.subr.bf16.mxu0 %v375
  %407 = vmatpush1.bf16.msra.mxu0 %v374
  %408 = vmatprep.subr.bf16.mxu0 0
  %409 = vmatpush1.bf16.msra.mxu0 0
  %410 = vmatprep.subr.bf16.mxu0 0
  %411 = vmatpush1.bf16.msra.mxu0 0
  %412 = vmatprep.subr.bf16.mxu0 0
  %413 = vmatpush1.bf16.msra.mxu0 0
  %414 = vmatprep.subr.bf16.mxu0 0
  %415 = vmatpush1.bf16.msra.mxu0 0
  %416 = vmatprep.subr.bf16.mxu0 0
  %417 = vmatpush1.bf16.msra.mxu0 0
  %418 = vmatprep.subr.bf16.mxu0 0
  %419 = vmatpush1.bf16.msra.mxu0 0
  %420 = vmatprep.subr.bf16.mxu0 0
  %421 = vmatpush1.bf16.msra.mxu0 0
  %422 = vmatprep.subr.bf16.mxu0 0
  %423 = vmatpush1.bf16.msra.mxu0 0
  %424 = vmatprep.subr.bf16.mxu0 0
  %425 = vmatpush1.bf16.msra.mxu0 0
  %426 = vmatprep.subr.bf16.mxu0 0
  %427 = vmatpush1.bf16.msra.mxu0 0
  %428 = vmatprep.subr.bf16.mxu0 0
  %429 = vmatpush1.bf16.msra.mxu0 0
  %430 = vmatprep.subr.bf16.mxu0 0
  %431 = vmatpush1.bf16.msra.mxu0 0
  %432 = vmatprep.mubr.bf16.mxu0 0
  %433 = vmatmul.mubr.bf16.gmra.mrb[0].mxu0 %v395
  %v434 = vpop.f32.mrb[0].mxu0
  %v435 = vadd.f32 %v233, %v434
  %v436 = vpop.f32.mrb[0].mxu0
  %v437 = vadd.f32 %v235, %v436
  %v438 = vpop.f32.mrb[0].mxu0
  %v439 = vadd.f32 %v237, %v438
  %v440 = vpop.f32.mrb[0].mxu0
  %v441 = vadd.f32 %v239, %v440
  %442 = vmatprep.mubr.bf16.mxu0 0
  %443 = vmatmul.mubr.bf16.gmra.mrb[0].mxu0 %v398
  %v444 = vpop.f32.mrb[0].mxu0
  %v445 = vadd.f32 %v243, %v444
  %v446 = vpop.f32.mrb[0].mxu0
  %v447 = vadd.f32 %v245, %v446
  %v448 = vpop.f32.mrb[0].mxu0
  %v449 = vadd.f32 %v247, %v448
  %v450 = vpop.f32.mrb[0].mxu0
  %v451 = vadd.f32 %v249, %v450
  %452 = vdwg.mxu0
  %453 = vmatprep.subr.bf16.mxu0 %v365
  %454 = vmatpush1.bf16.msra.mxu0 %v364
  %455 = vmatprep.subr.bf16.mxu0 %v369
  %456 = vmatpush1.bf16.msra.mxu0 %v368
  %457 = vmatprep.subr.bf16.mxu0 %v373
  %458 = vmatpush1.bf16.msra.mxu0 %v372
  %459 = vmatprep.subr.bf16.mxu0 %v377
  %460 = vmatpush1.bf16.msra.mxu0 %v376
  %461 = vmatprep.subr.bf16.mxu0 0
  %462 = vmatpush1.bf16.msra.mxu0 0
  %463 = vmatprep.subr.bf16.mxu0 0
  %464 = vmatpush1.bf16.msra.mxu0 0
  %465 = vmatprep.subr.bf16.mxu0 0
  %466 = vmatpush1.bf16.msra.mxu0 0
  %467 = vmatprep.subr.bf16.mxu0 0
  %468 = vmatpush1.bf16.msra.mxu0 0
  %469 = vmatprep.subr.bf16.mxu0 0
  %470 = vmatpush1.bf16.msra.mxu0 0
  %471 = vmatprep.subr.bf16.mxu0 0
  %472 = vmatpush1.bf16.msra.mxu0 0
  %473 = vmatprep.subr.bf16.mxu0 0
  %474 = vmatpush1.bf16.msra.mxu0 0
  %475 = vmatprep.subr.bf16.mxu0 0
  %476 = vmatpush1.bf16.msra.mxu0 0
  %477 = vmatprep.subr.bf16.mxu0 0
  %478 = vmatpush1.bf16.msra.mxu0 0
  %479 = vmatprep.subr.bf16.mxu0 0
  %480 = vmatpush1.bf16.msra.mxu0 0
  %481 = vmatprep.subr.bf16.mxu0 0
  %482 = vmatpush1.bf16.msra.mxu0 0
  %483 = vmatprep.subr.bf16.mxu0 0
  %484 = vmatpush1.bf16.msra.mxu0 0
  %485 = vmatprep.mubr.bf16.mxu0 0
  %486 = vmatmul.mubr.bf16.gmra.mrb[0].mxu0 %v395
  %v487 = vpop.f32.mrb[0].mxu0
  %v488 = vadd.f32 %v286, %v487
  %v489 = vpop.f32.mrb[0].mxu0
  %v490 = vadd.f32 %v288, %v489
  %v491 = vpop.f32.mrb[0].mxu0
  %v492 = vadd.f32 %v290, %v491
  %v493 = vpop.f32.mrb[0].mxu0
  %v494 = vadd.f32 %v292, %v493
  %495 = vmatprep.mubr.bf16.mxu0 0
  %496 = vmatmul.mubr.bf16.gmra.mrb[0].mxu0 %v398
  %v497 = vpop.f32.mrb[0].mxu0
  %v498 = vadd.f32 %v296, %v497
  %v499 = vpop.f32.mrb[0].mxu0
  %v500 = vadd.f32 %v298, %v499
  %v501 = vpop.f32.mrb[0].mxu0
  %v502 = vadd.f32 %v300, %v501
  %v503 = vpop.f32.mrb[0].mxu0
  %v504 = vadd.f32 %v302, %v503
  %505 = vdwg.mxu0
  %vm508 = vcmask 1042432
  %vm509 = vcmask 1046532
  %vm510 = vmor %vm508, %vm509
  %v511 = vrot.slane %v15, 5
  %v512 = vrot.slane %v511, 4
  %v513 = vrot.slane %v16, 5
  %v514 = vsel %vm510, %v512, %v513
  %v515 = vrot.slane %v513, 4
  %v516 = vrot.slane %v17, 5
  %v517 = vsel %vm510, %v515, %v516
  %v518 = vrot.slane %v18, 5
  %v519 = vrot.slane %v518, 4
  %v520 = vrot.slane %v19, 5
  %v521 = vsel %vm510, %v519, %v520
  %v522 = vrot.slane %v520, 4
  %v523 = vrot.slane %v20, 5
  %v524 = vsel %vm510, %v522, %v523
  %s525 = scalar_lea.vmem %s1, 256
  %v526 = vld [vmem:[%s525] sm:$0xff]
  %v527 = vld [vmem:[%s525 + $0x8] sm:$0xff]
  %v528 = vld [vmem:[%s525 + $0x10] sm:$0xff]
  %v529 = vld [vmem:[%s525 + $0x18] sm:$0xff]
  %v530 = vld [vmem:[%s525 + $0x20] sm:$0xff]
  %v531 = vld [vmem:[%s525 + $0x28] sm:$0xff]
  %v532 = vld [vmem:[%s525 + $0x30] sm:$0xff]
  %v533 = vld [vmem:[%s525 + $0x38] sm:$0xff]
  %v534 = vld [vmem:[%s525 + $0x40] sm:$0xff]
  %v535 = vld [vmem:[%s525 + $0x48] sm:$0xff]
  %v536 = vld [vmem:[%s525 + $0x50] sm:$0xff]
  %v537 = vld [vmem:[%s525 + $0x58] sm:$0xff]
  %v538 = vld [vmem:[%s525 + $0x60] sm:$0xff]
  %v539 = vld [vmem:[%s525 + $0x68] sm:$0xff]
  %v540 = vld [vmem:[%s525 + $0x70] sm:$0xff]
  %v541 = vld [vmem:[%s525 + $0x78] sm:$0xff]
  %v542 = vunpack.c.l.b16 %v514
  %v543 = vunpack.c.l.b16 %v517
  %v544 = vunpack.c.l.b16 %v521
  %v545 = vunpack.c.l.b16 %v524
  %v546 = vpack.c.b16 %v543, %v542
  %v547 = vpack.c.b16 %v545, %v544
  %v564 = vunpack.c.l.b16 %v526
  %v565 = vunpack.c.h.b16 %v526
  %v566 = vunpack.c.l.b16 %v527
  %v567 = vunpack.c.h.b16 %v527
  %v568 = vunpack.c.l.b16 %v528
  %v569 = vunpack.c.h.b16 %v528
  %v570 = vunpack.c.l.b16 %v529
  %v571 = vunpack.c.h.b16 %v529
  %v572 = vunpack.c.l.b16 %v530
  %v573 = vunpack.c.h.b16 %v530
  %v574 = vunpack.c.l.b16 %v531
  %v575 = vunpack.c.h.b16 %v531
  %v576 = vunpack.c.l.b16 %v532
  %v577 = vunpack.c.h.b16 %v532
  %v578 = vunpack.c.l.b16 %v533
  %v579 = vunpack.c.h.b16 %v533
  %v580 = vunpack.c.l.b16 %v534
  %v581 = vunpack.c.h.b16 %v534
  %v582 = vunpack.c.l.b16 %v535
  %v583 = vunpack.c.h.b16 %v535
  %v584 = vunpack.c.l.b16 %v536
  %v585 = vunpack.c.h.b16 %v536
  %v586 = vunpack.c.l.b16 %v537
  %v587 = vunpack.c.h.b16 %v537
  %v588 = vunpack.c.l.b16 %v538
  %v589 = vunpack.c.h.b16 %v538
  %v590 = vunpack.c.l.b16 %v539
  %v591 = vunpack.c.h.b16 %v539
  %v592 = vunpack.c.l.b16 %v540
  %v593 = vunpack.c.h.b16 %v540
  %v594 = vunpack.c.l.b16 %v541
  %v595 = vunpack.c.h.b16 %v541
  %v596 = vpack.c.b16 %v568, %v564
  %v597 = vpack.c.b16 %v569, %v565
  %v598 = vpack.c.b16 %v570, %v566
  %v599 = vpack.c.b16 %v571, %v567
  %v600 = vpack.c.b16 %v576, %v572
  %v601 = vpack.c.b16 %v577, %v573
  %v602 = vpack.c.b16 %v578, %v574
  %v603 = vpack.c.b16 %v579, %v575
  %v604 = vpack.c.b16 %v584, %v580
  %v605 = vpack.c.b16 %v585, %v581
  %v606 = vpack.c.b16 %v586, %v582
  %v607 = vpack.c.b16 %v587, %v583
  %v608 = vpack.c.b16 %v592, %v588
  %v609 = vpack.c.b16 %v593, %v589
  %v610 = vpack.c.b16 %v594, %v590
  %v611 = vpack.c.b16 %v595, %v591
  %v629 = vsel %vm191, %v546, 0
  %v632 = vsel %vm191, %v547, 0
  %634 = vmatprep.subr.bf16.mxu0 %v597
  %635 = vmatpush1.bf16.msra.mxu0 %v596
  %636 = vmatprep.subr.bf16.mxu0 %v601
  %637 = vmatpush1.bf16.msra.mxu0 %v600
  %638 = vmatprep.subr.bf16.mxu0 %v605
  %639 = vmatpush1.bf16.msra.mxu0 %v604
  %640 = vmatprep.subr.bf16.mxu0 %v609
  %641 = vmatpush1.bf16.msra.mxu0 %v608
  %642 = vmatprep.subr.bf16.mxu0 0
  %643 = vmatpush1.bf16.msra.mxu0 0
  %644 = vmatprep.subr.bf16.mxu0 0
  %645 = vmatpush1.bf16.msra.mxu0 0
  %646 = vmatprep.subr.bf16.mxu0 0
  %647 = vmatpush1.bf16.msra.mxu0 0
  %648 = vmatprep.subr.bf16.mxu0 0
  %649 = vmatpush1.bf16.msra.mxu0 0
  %650 = vmatprep.subr.bf16.mxu0 0
  %651 = vmatpush1.bf16.msra.mxu0 0
  %652 = vmatprep.subr.bf16.mxu0 0
  %653 = vmatpush1.bf16.msra.mxu0 0
  %654 = vmatprep.subr.bf16.mxu0 0
  %655 = vmatpush1.bf16.msra.mxu0 0
  %656 = vmatprep.subr.bf16.mxu0 0
  %657 = vmatpush1.bf16.msra.mxu0 0
  %658 = vmatprep.subr.bf16.mxu0 0
  %659 = vmatpush1.bf16.msra.mxu0 0
  %660 = vmatprep.subr.bf16.mxu0 0
  %661 = vmatpush1.bf16.msra.mxu0 0
  %662 = vmatprep.subr.bf16.mxu0 0
  %663 = vmatpush1.bf16.msra.mxu0 0
  %664 = vmatprep.subr.bf16.mxu0 0
  %665 = vmatpush1.bf16.msra.mxu0 0
  %666 = vmatprep.mubr.bf16.mxu0 0
  %667 = vmatmul.mubr.bf16.gmra.mrb[0].mxu0 %v629
  %v668 = vpop.f32.mrb[0].mxu0
  %v669 = vadd.f32 0.0, %v668
  %v670 = vpop.f32.mrb[0].mxu0
  %v671 = vadd.f32 0.0, %v670
  %v672 = vpop.f32.mrb[0].mxu0
  %v673 = vadd.f32 0.0, %v672
  %v674 = vpop.f32.mrb[0].mxu0
  %v675 = vadd.f32 0.0, %v674
  %676 = vmatprep.mubr.bf16.mxu0 0
  %677 = vmatmul.mubr.bf16.gmra.mrb[0].mxu0 %v632
  %v678 = vpop.f32.mrb[0].mxu0
  %v679 = vadd.f32 0.0, %v678
  %v680 = vpop.f32.mrb[0].mxu0
  %v681 = vadd.f32 0.0, %v680
  %v682 = vpop.f32.mrb[0].mxu0
  %v683 = vadd.f32 0.0, %v682
  %v684 = vpop.f32.mrb[0].mxu0
  %v685 = vadd.f32 0.0, %v684
  %686 = vdwg.mxu0
  %687 = vmatprep.subr.bf16.mxu0 %v599
  %688 = vmatpush1.bf16.msra.mxu0 %v598
  %689 = vmatprep.subr.bf16.mxu0 %v603
  %690 = vmatpush1.bf16.msra.mxu0 %v602
  %691 = vmatprep.subr.bf16.mxu0 %v607
  %692 = vmatpush1.bf16.msra.mxu0 %v606
  %693 = vmatprep.subr.bf16.mxu0 %v611
  %694 = vmatpush1.bf16.msra.mxu0 %v610
  %695 = vmatprep.subr.bf16.mxu0 0
  %696 = vmatpush1.bf16.msra.mxu0 0
  %697 = vmatprep.subr.bf16.mxu0 0
  %698 = vmatpush1.bf16.msra.mxu0 0
  %699 = vmatprep.subr.bf16.mxu0 0
  %700 = vmatpush1.bf16.msra.mxu0 0
  %701 = vmatprep.subr.bf16.mxu0 0
  %702 = vmatpush1.bf16.msra.mxu0 0
  %703 = vmatprep.subr.bf16.mxu0 0
  %704 = vmatpush1.bf16.msra.mxu0 0
  %705 = vmatprep.subr.bf16.mxu0 0
  %706 = vmatpush1.bf16.msra.mxu0 0
  %707 = vmatprep.subr.bf16.mxu0 0
  %708 = vmatpush1.bf16.msra.mxu0 0
  %709 = vmatprep.subr.bf16.mxu0 0
  %710 = vmatpush1.bf16.msra.mxu0 0
  %711 = vmatprep.subr.bf16.mxu0 0
  %712 = vmatpush1.bf16.msra.mxu0 0
  %713 = vmatprep.subr.bf16.mxu0 0
  %714 = vmatpush1.bf16.msra.mxu0 0
  %715 = vmatprep.subr.bf16.mxu0 0
  %716 = vmatpush1.bf16.msra.mxu0 0
  %717 = vmatprep.subr.bf16.mxu0 0
  %718 = vmatpush1.bf16.msra.mxu0 0
  %719 = vmatprep.mubr.bf16.mxu0 0
  %720 = vmatmul.mubr.bf16.gmra.mrb[0].mxu0 %v629
  %v721 = vpop.f32.mrb[0].mxu0
  %v722 = vadd.f32 0.0, %v721
  %v723 = vpop.f32.mrb[0].mxu0
  %v724 = vadd.f32 0.0, %v723
  %v725 = vpop.f32.mrb[0].mxu0
  %v726 = vadd.f32 0.0, %v725
  %v727 = vpop.f32.mrb[0].mxu0
  %v728 = vadd.f32 0.0, %v727
  %729 = vmatprep.mubr.bf16.mxu0 0
  %730 = vmatmul.mubr.bf16.gmra.mrb[0].mxu0 %v632
  %v731 = vpop.f32.mrb[0].mxu0
  %v732 = vadd.f32 0.0, %v731
  %v733 = vpop.f32.mrb[0].mxu0
  %v734 = vadd.f32 0.0, %v733
  %v735 = vpop.f32.mrb[0].mxu0
  %v736 = vadd.f32 0.0, %v735
  %v737 = vpop.f32.mrb[0].mxu0
  %v738 = vadd.f32 0.0, %v737
  %739 = vdwg.mxu0
  %v740 = vadd.f32 %v435, %v669
  %v741 = vadd.f32 %v437, %v671
  %v742 = vadd.f32 %v488, %v722
  %v743 = vadd.f32 %v490, %v724
  %v744 = vadd.f32 %v439, %v673
  %v745 = vadd.f32 %v441, %v675
  %v746 = vadd.f32 %v492, %v726
  %v747 = vadd.f32 %v494, %v728
  %v748 = vadd.f32 %v445, %v679
  %v749 = vadd.f32 %v447, %v681
  %v750 = vadd.f32 %v498, %v732
  %v751 = vadd.f32 %v500, %v734
  %v752 = vadd.f32 %v449, %v683
  %v753 = vadd.f32 %v451, %v685
  %v754 = vadd.f32 %v502, %v736
  %v755 = vadd.f32 %v504, %v738
  %v756 = vld [vmem:[%s2] sm:$0xf]
  %v758 = vlaneseq
  %v759 = vshrl.u32 %v758, 7
  %v760 = vsub.s32 0, %v759
  %v761 = vrot.slane %v756, %v760
  %v762 = vlaneseq
  %v763 = vshrl.u32 %v762, 7
  %v764 = vsub.s32 1, %v763
  %v765 = vrot.slane %v756, %v764
  %v766 = vlaneseq
  %v767 = vshrl.u32 %v766, 7
  %v768 = vsub.s32 2, %v767
  %v769 = vrot.slane %v756, %v768
  %v770 = vlaneseq
  %v771 = vshrl.u32 %v770, 7
  %v772 = vsub.s32 3, %v771
  %v773 = vrot.slane %v756, %v772
  %v778 = vadd.f32 %v740, %v761
  %v779 = vadd.f32 %v741, %v765
  %v780 = vadd.f32 %v742, %v769
  %v781 = vadd.f32 %v743, %v773
  %v782 = vadd.f32 %v744, %v761
  %v783 = vadd.f32 %v745, %v765
  %v784 = vadd.f32 %v746, %v769
  %v785 = vadd.f32 %v747, %v773
  %v786 = vadd.f32 %v748, %v761
  %v787 = vadd.f32 %v749, %v765
  %v788 = vadd.f32 %v750, %v769
  %v789 = vadd.f32 %v751, %v773
  %v790 = vadd.f32 %v752, %v761
  %v791 = vadd.f32 %v753, %v765
  %v792 = vadd.f32 %v754, %v769
  %v793 = vadd.f32 %v755, %v773
  %v794 = vmax.f32 %v778, 0.0
  %v795 = vmax.f32 %v779, 0.0
  %v796 = vmax.f32 %v780, 0.0
  %v797 = vmax.f32 %v781, 0.0
  %v798 = vmax.f32 %v782, 0.0
  %v799 = vmax.f32 %v783, 0.0
  %v800 = vmax.f32 %v784, 0.0
  %v801 = vmax.f32 %v785, 0.0
  %v802 = vmax.f32 %v786, 0.0
  %v803 = vmax.f32 %v787, 0.0
  %v804 = vmax.f32 %v788, 0.0
  %v805 = vmax.f32 %v789, 0.0
  %v806 = vmax.f32 %v790, 0.0
  %v807 = vmax.f32 %v791, 0.0
  %v808 = vmax.f32 %v792, 0.0
  %v809 = vmax.f32 %v793, 0.0
  %v810 = vpack.c.bf16 %v798, %v794
  %v811 = vpack.c.bf16 %v799, %v795
  %v812 = vpack.c.bf16 %v800, %v796
  %v813 = vpack.c.bf16 %v801, %v797
  %v814 = vpack.c.bf16 %v806, %v802
  %v815 = vpack.c.bf16 %v807, %v803
  %v816 = vpack.c.bf16 %v808, %v804
  %v817 = vpack.c.bf16 %v809, %v805
  %v826 = vunpack.c.l.b16 %v810
  %v827 = vunpack.c.l.b16 %v811
  %v828 = vunpack.c.l.b16 %v812
  %v829 = vunpack.c.l.b16 %v813
  %v830 = vunpack.c.h.b16 %v810
  %v831 = vunpack.c.h.b16 %v811
  %v832 = vunpack.c.h.b16 %v812
  %v833 = vunpack.c.h.b16 %v813
  %v834 = vunpack.c.l.b16 %v814
  %v835 = vunpack.c.l.b16 %v815
  %v836 = vunpack.c.l.b16 %v816
  %v837 = vunpack.c.l.b16 %v817
  %v838 = vunpack.c.h.b16 %v814
  %v839 = vunpack.c.h.b16 %v815
  %v840 = vunpack.c.h.b16 %v816
  %v841 = vunpack.c.h.b16 %v817
  %v842 = vpack.c.b16 %v827, %v826
  %v843 = vpack.c.b16 %v829, %v828
  %v844 = vpack.c.b16 %v831, %v830
  %v845 = vpack.c.b16 %v833, %v832
  %v846 = vpack.c.b16 %v835, %v834
  %v847 = vpack.c.b16 %v837, %v836
  %v848 = vpack.c.b16 %v839, %v838
  %v849 = vpack.c.b16 %v841, %v840
  %vm850 = vsmask.f32 256
  %vm851 = vsmask.f32 4368
  %vm852 = vmor %vm850, %vm851
  %v854 = vshrl.u32 %v842, 16
  %v856 = vrot.slane %v854, 7
  %v857 = vshll.u32 %v842, 16
  %v859 = vor.u32 %v856, %v857
  %v861 = vshrl.u32 %v843, 16
  %v863 = vrot.slane %v861, 7
  %v864 = vshll.u32 %v843, 16
  %v866 = vor.u32 %v863, %v864
  %v867 = vrot.slane %v856, 4
  %v869 = vshrl.u32 %v844, 16
  %v871 = vrot.slane %v869, 7
  %v872 = vshll.u32 %v844, 16
  %v874 = vor.u32 %v871, %v872
  %v875 = vsel %vm852, %v867, %v874
  %v876 = vrot.slane %v863, 4
  %v878 = vshrl.u32 %v845, 16
  %v880 = vrot.slane %v878, 7
  %v881 = vshll.u32 %v845, 16
  %v883 = vor.u32 %v880, %v881
  %v884 = vsel %vm852, %v876, %v883
  %v885 = vrot.slane %v871, 4
  %v886 = vrot.slane %v880, 4
  %v888 = vshrl.u32 %v846, 16
  %v890 = vrot.slane %v888, 7
  %v891 = vshll.u32 %v846, 16
  %v893 = vor.u32 %v890, %v891
  %v895 = vshrl.u32 %v847, 16
  %v897 = vrot.slane %v895, 7
  %v898 = vshll.u32 %v847, 16
  %v900 = vor.u32 %v897, %v898
  %v901 = vrot.slane %v890, 4
  %v903 = vshrl.u32 %v848, 16
  %v905 = vrot.slane %v903, 7
  %v906 = vshll.u32 %v848, 16
  %v908 = vor.u32 %v905, %v906
  %v909 = vsel %vm852, %v901, %v908
  %v910 = vrot.slane %v897, 4
  %v912 = vshrl.u32 %v849, 16
  %v914 = vrot.slane %v912, 7
  %v915 = vshll.u32 %v849, 16
  %v917 = vor.u32 %v914, %v915
  %v918 = vsel %vm852, %v910, %v917
  %v919 = vrot.slane %v905, 4
  %v920 = vrot.slane %v914, 4
  %vm933 = vcmask 1043456
  %vm934 = vsmask.f32 7938
  %vm935 = vmand %vm933, %vm934
  %vm936 = vcmask 1047556
  %vm937 = vsmask.f32 7954
  %vm938 = vmand %vm936, %vm937
  %vm939 = vmor %vm938, %vm935
  %v940 = vld [vmem:[%s3] sm:$0xff]
  %v941 = vsel %vm939, %v859, %v940
  %942 = vst [vmem:[%s3] sm:$0xff] %v941
  %v943 = vld [vmem:[%s3 + $0x8] sm:$0xff]
  %v944 = vsel %vm939, %v866, %v943
  %945 = vst [vmem:[%s3 + $0x8] sm:$0xff] %v944
  %946 = vst [vmem:[%s3 + $0x10] sm:$0xff] %v875
  %947 = vst [vmem:[%s3 + $0x18] sm:$0xff] %v884
  %vm948 = vcmask 1040384
  %vm949 = vmand %vm948, %vm850
  %vm950 = vcmask 1044484
  %vm951 = vsmask.f32 4352
  %vm952 = vmand %vm950, %vm951
  %vm953 = vmor %vm952, %vm949
  %v954 = vld [vmem:[%s3 + $0x20] sm:$0x11]
  %v955 = vsel %vm953, %v885, %v954
  %956 = vst [vmem:[%s3 + $0x20] sm:$0x11] %v955
  %v957 = vld [vmem:[%s3 + $0x28] sm:$0x11]
  %v958 = vsel %vm953, %v886, %v957
  %959 = vst [vmem:[%s3 + $0x28] sm:$0x11] %v958
  %v960 = vld [vmem:[%s3 + $0x30] sm:$0xff]
  %v961 = vsel %vm939, %v893, %v960
  %962 = vst [vmem:[%s3 + $0x30] sm:$0xff] %v961
  %v963 = vld [vmem:[%s3 + $0x38] sm:$0xff]
  %v964 = vsel %vm939, %v900, %v963
  %965 = vst [vmem:[%s3 + $0x38] sm:$0xff] %v964
  %966 = vst [vmem:[%s3 + $0x40] sm:$0xff] %v909
  %967 = vst [vmem:[%s3 + $0x48] sm:$0xff] %v918
  %v968 = vld [vmem:[%s3 + $0x50] sm:$0x11]
  %v969 = vsel %vm953, %v919, %v968
  %970 = vst [vmem:[%s3 + $0x50] sm:$0x11] %v969
  %v971 = vld [vmem:[%s3 + $0x58] sm:$0x11]
  %v972 = vsel %vm953, %v920, %v971
  %973 = vst [vmem:[%s3 + $0x58] sm:$0x11] %v972
  %v974 = vld [vmem:[%s3] sm:$0x11]
  %v975 = vsel %vm953, 0, %v974
  %976 = vst [vmem:[%s3] sm:$0x11] %v975
  %v977 = vld [vmem:[%s3 + $0x8] sm:$0x11]
  %v978 = vsel %vm953, 0, %v977
  %979 = vst [vmem:[%s3 + $0x8] sm:$0x11] %v978
  %v980 = vld [vmem:[%s3 + $0x30] sm:$0x11]
  %v981 = vsel %vm953, 0, %v980
  %982 = vst [vmem:[%s3 + $0x30] sm:$0x11] %v981
  %v983 = vld [vmem:[%s3 + $0x38] sm:$0x11]
  %v984 = vsel %vm953, 0, %v983
  %985 = vst [vmem:[%s3 + $0x38] sm:$0x11] %v984
  %vm986 = vmand %vm948, %vm934
  %vm987 = vmand %vm950, %vm937
  %vm988 = vmor %vm987, %vm986
  %v989 = vld [vmem:[%s3 + $0x20] sm:$0x11]
  %v990 = vsel %vm988, 0, %v989
  %991 = vst [vmem:[%s3 + $0x20] sm:$0x11] %v990
  %v992 = vld [vmem:[%s3 + $0x28] sm:$0x11]
  %v993 = vsel %vm988, 0, %v992
  %994 = vst [vmem:[%s3 + $0x28] sm:$0x11] %v993
  %v995 = vld [vmem:[%s3 + $0x50] sm:$0x11]
  %v996 = vsel %vm988, 0, %v995
  %997 = vst [vmem:[%s3 + $0x50] sm:$0x11] %v996
  %v998 = vld [vmem:[%s3 + $0x58] sm:$0x11]
  %v999 = vsel %vm988, 0, %v998
  %1000 = vst [vmem:[%s3 + $0x58] sm:$0x11] %v999
  // Predicated region
  $region14: #{seresnet_forward.4} parent=0 // pred_check
    _
  $region15: #{seresnet_forward.4} parent=0 // pred_check_branch
    %1002 = sbr.rel (0) target = $region17
  $region16: #{seresnet_forward.4} parent=0 // pred_region
    _
  $region17: #{seresnet_forward.4} parent=0 // pred_fallthru
    _
  // Predicated region
  $region18: #{seresnet_forward.4} parent=0 // pred_check
    _
  $region19: #{seresnet_forward.4} parent=0 // pred_check_branch
    %1004 = sbr.rel (0) target = $region21
  $region20: #{seresnet_forward.4} parent=0 // pred_region
    _
  $region21: #{seresnet_forward.4} parent=0 // pred_fallthru
    _

// kernel: seresnet_forward.5
$region0: #{seresnet_forward.5}
  #allocation0 [shape = 'u32[]', space=smem, size = 0x4, offset = 0x4, fixed_abs, tag = 'smem constant byte address 0x4 - core index']
  #allocation1 [shape = 'u32[144,128]{1,0:T(1,128)}', space=vmem, size = 0x12000, scoped, tag = 'internal scratch']
  %s0 = inlined_call_operand.vmem [shape: bf16[2,18,512], index: 0, kind: input, shape index: {}]
  %s1 = inlined_call_operand.vmem [shape: bf16[3,512,512], index: 1, kind: input, shape index: {}]
  %s2 = inlined_call_operand.vmem [shape: f32[1,512], index: 2, kind: input, shape index: {}]
  %s3 = inlined_call_operand.vmem [shape: bf16[2,18,512], index: 3, kind: output, shape index: {}]
  %s4 = sld [smem:[#allocation0]]
  $region22: #{seresnet_forward.5} parent=0
    _
  %s6 = ssub.s32 1, %s4
  %s7 = scalar_select 0, %s6, %s4
  // Predicated region
  $region2: #{seresnet_forward.5} parent=0 // pred_check
    _
  $region3: #{seresnet_forward.5} parent=0 // pred_check_branch
    %9 = sbr.rel (0) target = $region5
  $region4: #{seresnet_forward.5} parent=0 // pred_region
    _
  $region5: #{seresnet_forward.5} parent=0 // pred_fallthru
    _
  // Predicated region
  $region6: #{seresnet_forward.5} parent=0 // pred_check
    _
  $region7: #{seresnet_forward.5} parent=0 // pred_check_branch
    %11 = sbr.rel (0) target = $region9
  $region8: #{seresnet_forward.5} parent=0 // pred_region
    _
  $region9: #{seresnet_forward.5} parent=0 // pred_fallthru
    _
  // Predicated region
  $region10: #{seresnet_forward.5} parent=0 // pred_check
    _
  $region11: #{seresnet_forward.5} parent=0 // pred_check_branch
    %13 = sbr.rel (0) target = $region13
  $region12: #{seresnet_forward.5} parent=0 // pred_region
    _
  $region13: #{seresnet_forward.5} parent=0 // pred_fallthru
    _
  %v15 = vld [vmem:[%s0] sm:$0xff]
  %v16 = vld [vmem:[%s0 + $0x8] sm:$0xff]
  %v17 = vld [vmem:[%s0 + $0x10] sm:$0xff]
  %v18 = vld [vmem:[%s0 + $0x18] sm:$0xff]
  %v19 = vld [vmem:[%s0 + $0x20] sm:$0x11]
  %v20 = vld [vmem:[%s0 + $0x28] sm:$0x11]
  %v21 = vld [vmem:[%s0 + $0x30] sm:$0xff]
  %v22 = vld [vmem:[%s0 + $0x38] sm:$0xff]
  %v23 = vld [vmem:[%s0 + $0x40] sm:$0xff]
  %v24 = vld [vmem:[%s0 + $0x48] sm:$0xff]
  %v25 = vld [vmem:[%s0 + $0x50] sm:$0x11]
  %v26 = vld [vmem:[%s0 + $0x58] sm:$0x11]
  %v27 = vld [vmem:[%s1] sm:$0xff]
  %v28 = vld [vmem:[%s1 + $0x8] sm:$0xff]
  %v29 = vld [vmem:[%s1 + $0x10] sm:$0xff]
  %v30 = vld [vmem:[%s1 + $0x18] sm:$0xff]
  %v31 = vld [vmem:[%s1 + $0x20] sm:$0xff]
  %v32 = vld [vmem:[%s1 + $0x28] sm:$0xff]
  %v33 = vld [vmem:[%s1 + $0x30] sm:$0xff]
  %v34 = vld [vmem:[%s1 + $0x38] sm:$0xff]
  %v35 = vld [vmem:[%s1 + $0x40] sm:$0xff]
  %v36 = vld [vmem:[%s1 + $0x48] sm:$0xff]
  %v37 = vld [vmem:[%s1 + $0x50] sm:$0xff]
  %v38 = vld [vmem:[%s1 + $0x58] sm:$0xff]
  %v39 = vld [vmem:[%s1 + $0x60] sm:$0xff]
  %v40 = vld [vmem:[%s1 + $0x68] sm:$0xff]
  %v41 = vld [vmem:[%s1 + $0x70] sm:$0xff]
  %v42 = vld [vmem:[%s1 + $0x78] sm:$0xff]
  %v43 = vld [vmem:[%s1 + $0x80] sm:$0xff]
  %v44 = vld [vmem:[%s1 + $0x88] sm:$0xff]
  %v45 = vld [vmem:[%s1 + $0x90] sm:$0xff]
  %v46 = vld [vmem:[%s1 + $0x98] sm:$0xff]
  %v47 = vld [vmem:[%s1 + $0xa0] sm:$0xff]
  %v48 = vld [vmem:[%s1 + $0xa8] sm:$0xff]
  %v49 = vld [vmem:[%s1 + $0xb0] sm:$0xff]
  %v50 = vld [vmem:[%s1 + $0xb8] sm:$0xff]
  %v51 = vld [vmem:[%s1 + $0xc0] sm:$0xff]
  %v52 = vld [vmem:[%s1 + $0xc8] sm:$0xff]
  %v53 = vld [vmem:[%s1 + $0xd0] sm:$0xff]
  %v54 = vld [vmem:[%s1 + $0xd8] sm:$0xff]
  %v55 = vld [vmem:[%s1 + $0xe0] sm:$0xff]
  %v56 = vld [vmem:[%s1 + $0xe8] sm:$0xff]
  %v57 = vld [vmem:[%s1 + $0xf0] sm:$0xff]
  %v58 = vld [vmem:[%s1 + $0xf8] sm:$0xff]
  %v59 = vld [vmem:[%s1 + $0x100] sm:$0xff]
  %v60 = vld [vmem:[%s1 + $0x108] sm:$0xff]
  %v61 = vld [vmem:[%s1 + $0x110] sm:$0xff]
  %v62 = vld [vmem:[%s1 + $0x118] sm:$0xff]
  %v63 = vld [vmem:[%s1 + $0x120] sm:$0xff]
  %v64 = vld [vmem:[%s1 + $0x128] sm:$0xff]
  %v65 = vld [vmem:[%s1 + $0x130] sm:$0xff]
  %v66 = vld [vmem:[%s1 + $0x138] sm:$0xff]
  %v67 = vld [vmem:[%s1 + $0x140] sm:$0xff]
  %v68 = vld [vmem:[%s1 + $0x148] sm:$0xff]
  %v69 = vld [vmem:[%s1 + $0x150] sm:$0xff]
  %v70 = vld [vmem:[%s1 + $0x158] sm:$0xff]
  %v71 = vld [vmem:[%s1 + $0x160] sm:$0xff]
  %v72 = vld [vmem:[%s1 + $0x168] sm:$0xff]
  %v73 = vld [vmem:[%s1 + $0x170] sm:$0xff]
  %v74 = vld [vmem:[%s1 + $0x178] sm:$0xff]
  %v75 = vld [vmem:[%s1 + $0x180] sm:$0xff]
  %v76 = vld [vmem:[%s1 + $0x188] sm:$0xff]
  %v77 = vld [vmem:[%s1 + $0x190] sm:$0xff]
  %v78 = vld [vmem:[%s1 + $0x198] sm:$0xff]
  %v79 = vld [vmem:[%s1 + $0x1a0] sm:$0xff]
  %v80 = vld [vmem:[%s1 + $0x1a8] sm:$0xff]
  %v81 = vld [vmem:[%s1 + $0x1b0] sm:$0xff]
  %v82 = vld [vmem:[%s1 + $0x1b8] sm:$0xff]
  %v83 = vld [vmem:[%s1 + $0x1c0] sm:$0xff]
  %v84 = vld [vmem:[%s1 + $0x1c8] sm:$0xff]
  %v85 = vld [vmem:[%s1 + $0x1d0] sm:$0xff]
  %v86 = vld [vmem:[%s1 + $0x1d8] sm:$0xff]
  %v87 = vld [vmem:[%s1 + $0x1e0] sm:$0xff]
  %v88 = vld [vmem:[%s1 + $0x1e8] sm:$0xff]
  %v89 = vld [vmem:[%s1 + $0x1f0] sm:$0xff]
  %v90 = vld [vmem:[%s1 + $0x1f8] sm:$0xff]
  %v91 = vld [vmem:[%s1 + $0x200] sm:$0xff]
  %v92 = vld [vmem:[%s1 + $0x208] sm:$0xff]
  %v93 = vld [vmem:[%s1 + $0x210] sm:$0xff]
  %v94 = vld [vmem:[%s1 + $0x218] sm:$0xff]
  %v95 = vld [vmem:[%s1 + $0x220] sm:$0xff]
  %v96 = vld [vmem:[%s1 + $0x228] sm:$0xff]
  %v97 = vld [vmem:[%s1 + $0x230] sm:$0xff]
  %v98 = vld [vmem:[%s1 + $0x238] sm:$0xff]
  %v99 = vld [vmem:[%s1 + $0x240] sm:$0xff]
  %v100 = vld [vmem:[%s1 + $0x248] sm:$0xff]
  %v101 = vld [vmem:[%s1 + $0x250] sm:$0xff]
  %v102 = vld [vmem:[%s1 + $0x258] sm:$0xff]
  %v103 = vld [vmem:[%s1 + $0x260] sm:$0xff]
  %v104 = vld [vmem:[%s1 + $0x268] sm:$0xff]
  %v105 = vld [vmem:[%s1 + $0x270] sm:$0xff]
  %v106 = vld [vmem:[%s1 + $0x278] sm:$0xff]
  %v107 = vld [vmem:[%s1 + $0x280] sm:$0xff]
  %v108 = vld [vmem:[%s1 + $0x288] sm:$0xff]
  %v109 = vld [vmem:[%s1 + $0x290] sm:$0xff]
  %v110 = vld [vmem:[%s1 + $0x298] sm:$0xff]
  %v111 = vld [vmem:[%s1 + $0x2a0] sm:$0xff]
  %v112 = vld [vmem:[%s1 + $0x2a8] sm:$0xff]
  %v113 = vld [vmem:[%s1 + $0x2b0] sm:$0xff]
  %v114 = vld [vmem:[%s1 + $0x2b8] sm:$0xff]
  %v115 = vld [vmem:[%s1 + $0x2c0] sm:$0xff]
  %v116 = vld [vmem:[%s1 + $0x2c8] sm:$0xff]
  %v117 = vld [vmem:[%s1 + $0x2d0] sm:$0xff]
  %v118 = vld [vmem:[%s1 + $0x2d8] sm:$0xff]
  %v119 = vld [vmem:[%s1 + $0x2e0] sm:$0xff]
  %v120 = vld [vmem:[%s1 + $0x2e8] sm:$0xff]
  %v121 = vld [vmem:[%s1 + $0x2f0] sm:$0xff]
  %v122 = vld [vmem:[%s1 + $0x2f8] sm:$0xff]
  %v123 = vld [vmem:[%s1 + $0x300] sm:$0xff]
  %v124 = vld [vmem:[%s1 + $0x308] sm:$0xff]
  %v125 = vld [vmem:[%s1 + $0x310] sm:$0xff]
  %v126 = vld [vmem:[%s1 + $0x318] sm:$0xff]
  %v127 = vld [vmem:[%s1 + $0x320] sm:$0xff]
  %v128 = vld [vmem:[%s1 + $0x328] sm:$0xff]
  %v129 = vld [vmem:[%s1 + $0x330] sm:$0xff]
  %v130 = vld [vmem:[%s1 + $0x338] sm:$0xff]
  %v131 = vld [vmem:[%s1 + $0x340] sm:$0xff]
  %v132 = vld [vmem:[%s1 + $0x348] sm:$0xff]
  %v133 = vld [vmem:[%s1 + $0x350] sm:$0xff]
  %v134 = vld [vmem:[%s1 + $0x358] sm:$0xff]
  %v135 = vld [vmem:[%s1 + $0x360] sm:$0xff]
  %v136 = vld [vmem:[%s1 + $0x368] sm:$0xff]
  %v137 = vld [vmem:[%s1 + $0x370] sm:$0xff]
  %v138 = vld [vmem:[%s1 + $0x378] sm:$0xff]
  %v139 = vld [vmem:[%s1 + $0x380] sm:$0xff]
  %v140 = vld [vmem:[%s1 + $0x388] sm:$0xff]
  %v141 = vld [vmem:[%s1 + $0x390] sm:$0xff]
  %v142 = vld [vmem:[%s1 + $0x398] sm:$0xff]
  %v143 = vld [vmem:[%s1 + $0x3a0] sm:$0xff]
  %v144 = vld [vmem:[%s1 + $0x3a8] sm:$0xff]
  %v145 = vld [vmem:[%s1 + $0x3b0] sm:$0xff]
  %v146 = vld [vmem:[%s1 + $0x3b8] sm:$0xff]
  %v147 = vld [vmem:[%s1 + $0x3c0] sm:$0xff]
  %v148 = vld [vmem:[%s1 + $0x3c8] sm:$0xff]
  %v149 = vld [vmem:[%s1 + $0x3d0] sm:$0xff]
  %v150 = vld [vmem:[%s1 + $0x3d8] sm:$0xff]
  %v151 = vld [vmem:[%s1 + $0x3e0] sm:$0xff]
  %v152 = vld [vmem:[%s1 + $0x3e8] sm:$0xff]
  %v153 = vld [vmem:[%s1 + $0x3f0] sm:$0xff]
  %v154 = vld [vmem:[%s1 + $0x3f8] sm:$0xff]
  %vm155 = vsmask.f32 3328
  %vm156 = vsmask.f32 7440
  %vm157 = vmor %vm155, %vm156
  %v159 = vshrl.u32 %v15, 16
  %v161 = vrot.slane %v159, 4
  %v162 = vshll.u32 %v15, 16
  %v164 = vrot.slane %v162, 5
  %v165 = vor.u32 %v161, %v164
  %v166 = vrot.slane %v165, 4
  %v168 = vshll.u32 %v17, 16
  %v170 = vrot.slane %v168, 5
  %v171 = vsel %vm157, %v166, %v170
  %v173 = vshrl.u32 %v16, 16
  %v175 = vrot.slane %v173, 4
  %v176 = vshll.u32 %v16, 16
  %v178 = vrot.slane %v176, 5
  %v179 = vor.u32 %v175, %v178
  %v180 = vrot.slane %v179, 4
  %v182 = vshll.u32 %v18, 16
  %v184 = vrot.slane %v182, 5
  %v185 = vsel %vm157, %v180, %v184
  %v186 = vshrl.u32 %v17, 16
  %v188 = vrot.slane %v186, 4
  %v189 = vor.u32 %v188, %v170
  %v190 = vrot.slane %v189, 4
  %v192 = vshll.u32 %v19, 16
  %v194 = vrot.slane %v192, 5
  %v195 = vsel %vm157, %v190, %v194
  %v196 = vshrl.u32 %v18, 16
  %v198 = vrot.slane %v196, 4
  %v199 = vor.u32 %v198, %v184
  %v200 = vrot.slane %v199, 4
  %v202 = vshll.u32 %v20, 16
  %v204 = vrot.slane %v202, 5
  %v205 = vsel %vm157, %v200, %v204
  %v207 = vshrl.u32 %v21, 16
  %v209 = vrot.slane %v207, 4
  %v210 = vshll.u32 %v21, 16
  %v212 = vrot.slane %v210, 5
  %v213 = vor.u32 %v209, %v212
  %v214 = vrot.slane %v213, 4
  %v216 = vshll.u32 %v23, 16
  %v218 = vrot.slane %v216, 5
  %v219 = vsel %vm157, %v214, %v218
  %v221 = vshrl.u32 %v22, 16
  %v223 = vrot.slane %v221, 4
  %v224 = vshll.u32 %v22, 16
  %v226 = vrot.slane %v224, 5
  %v227 = vor.u32 %v223, %v226
  %v228 = vrot.slane %v227, 4
  %v230 = vshll.u32 %v24, 16
  %v232 = vrot.slane %v230, 5
  %v233 = vsel %vm157, %v228, %v232
  %v234 = vshrl.u32 %v23, 16
  %v236 = vrot.slane %v234, 4
  %v237 = vor.u32 %v236, %v218
  %v238 = vrot.slane %v237, 4
  %v240 = vshll.u32 %v25, 16
  %v242 = vrot.slane %v240, 5
  %v243 = vsel %vm157, %v238, %v242
  %v244 = vshrl.u32 %v24, 16
  %v246 = vrot.slane %v244, 4
  %v247 = vor.u32 %v246, %v232
  %v248 = vrot.slane %v247, 4
  %v250 = vshll.u32 %v26, 16
  %v252 = vrot.slane %v250, 5
  %v253 = vsel %vm157, %v248, %v252
  %s254 = scalar_lea.vmem %s1, 1024
  %v255 = vld [vmem:[%s254] sm:$0xff]
  %v256 = vld [vmem:[%s254 + $0x8] sm:$0xff]
  %v257 = vld [vmem:[%s254 + $0x10] sm:$0xff]
  %v258 = vld [vmem:[%s254 + $0x18] sm:$0xff]
  %v259 = vld [vmem:[%s254 + $0x20] sm:$0xff]
  %v260 = vld [vmem:[%s254 + $0x28] sm:$0xff]
  %v261 = vld [vmem:[%s254 + $0x30] sm:$0xff]
  %v262 = vld [vmem:[%s254 + $0x38] sm:$0xff]
  %v263 = vld [vmem:[%s254 + $0x40] sm:$0xff]
  %v264 = vld [vmem:[%s254 + $0x48] sm:$0xff]
  %v265 = vld [vmem:[%s254 + $0x50] sm:$0xff]
  %v266 = vld [vmem:[%s254 + $0x58] sm:$0xff]
  %v267 = vld [vmem:[%s254 + $0x60] sm:$0xff]
  %v268 = vld [vmem:[%s254 + $0x68] sm:$0xff]
  %v269 = vld [vmem:[%s254 + $0x70] sm:$0xff]
  %v270 = vld [vmem:[%s254 + $0x78] sm:$0xff]
  %v271 = vld [vmem:[%s254 + $0x80] sm:$0xff]
  %v272 = vld [vmem:[%s254 + $0x88] sm:$0xff]
  %v273 = vld [vmem:[%s254 + $0x90] sm:$0xff]
  %v274 = vld [vmem:[%s254 + $0x98] sm:$0xff]
  %v275 = vld [vmem:[%s254 + $0xa0] sm:$0xff]
  %v276 = vld [vmem:[%s254 + $0xa8] sm:$0xff]
  %v277 = vld [vmem:[%s254 + $0xb0] sm:$0xff]
  %v278 = vld [vmem:[%s254 + $0xb8] sm:$0xff]
  %v279 = vld [vmem:[%s254 + $0xc0] sm:$0xff]
  %v280 = vld [vmem:[%s254 + $0xc8] sm:$0xff]
  %v281 = vld [vmem:[%s254 + $0xd0] sm:$0xff]
  %v282 = vld [vmem:[%s254 + $0xd8] sm:$0xff]
  %v283 = vld [vmem:[%s254 + $0xe0] sm:$0xff]
  %v284 = vld [vmem:[%s254 + $0xe8] sm:$0xff]
  %v285 = vld [vmem:[%s254 + $0xf0] sm:$0xff]
  %v286 = vld [vmem:[%s254 + $0xf8] sm:$0xff]
  %v287 = vld [vmem:[%s254 + $0x100] sm:$0xff]
  %v288 = vld [vmem:[%s254 + $0x108] sm:$0xff]
  %v289 = vld [vmem:[%s254 + $0x110] sm:$0xff]
  %v290 = vld [vmem:[%s254 + $0x118] sm:$0xff]
  %v291 = vld [vmem:[%s254 + $0x120] sm:$0xff]
  %v292 = vld [vmem:[%s254 + $0x128] sm:$0xff]
  %v293 = vld [vmem:[%s254 + $0x130] sm:$0xff]
  %v294 = vld [vmem:[%s254 + $0x138] sm:$0xff]
  %v295 = vld [vmem:[%s254 + $0x140] sm:$0xff]
  %v296 = vld [vmem:[%s254 + $0x148] sm:$0xff]
  %v297 = vld [vmem:[%s254 + $0x150] sm:$0xff]
  %v298 = vld [vmem:[%s254 + $0x158] sm:$0xff]
  %v299 = vld [vmem:[%s254 + $0x160] sm:$0xff]
  %v300 = vld [vmem:[%s254 + $0x168] sm:$0xff]
  %v301 = vld [vmem:[%s254 + $0x170] sm:$0xff]
  %v302 = vld [vmem:[%s254 + $0x178] sm:$0xff]
  %v303 = vld [vmem:[%s254 + $0x180] sm:$0xff]
  %v304 = vld [vmem:[%s254 + $0x188] sm:$0xff]
  %v305 = vld [vmem:[%s254 + $0x190] sm:$0xff]
  %v306 = vld [vmem:[%s254 + $0x198] sm:$0xff]
  %v307 = vld [vmem:[%s254 + $0x1a0] sm:$0xff]
  %v308 = vld [vmem:[%s254 + $0x1a8] sm:$0xff]
  %v309 = vld [vmem:[%s254 + $0x1b0] sm:$0xff]
  %v310 = vld [vmem:[%s254 + $0x1b8] sm:$0xff]
  %v311 = vld [vmem:[%s254 + $0x1c0] sm:$0xff]
  %v312 = vld [vmem:[%s254 + $0x1c8] sm:$0xff]
  %v313 = vld [vmem:[%s254 + $0x1d0] sm:$0xff]
  %v314 = vld [vmem:[%s254 + $0x1d8] sm:$0xff]
  %v315 = vld [vmem:[%s254 + $0x1e0] sm:$0xff]
  %v316 = vld [vmem:[%s254 + $0x1e8] sm:$0xff]
  %v317 = vld [vmem:[%s254 + $0x1f0] sm:$0xff]
  %v318 = vld [vmem:[%s254 + $0x1f8] sm:$0xff]
  %v319 = vld [vmem:[%s254 + $0x200] sm:$0xff]
  %v320 = vld [vmem:[%s254 + $0x208] sm:$0xff]
  %v321 = vld [vmem:[%s254 + $0x210] sm:$0xff]
  %v322 = vld [vmem:[%s254 + $0x218] sm:$0xff]
  %v323 = vld [vmem:[%s254 + $0x220] sm:$0xff]
  %v324 = vld [vmem:[%s254 + $0x228] sm:$0xff]
  %v325 = vld [vmem:[%s254 + $0x230] sm:$0xff]
  %v326 = vld [vmem:[%s254 + $0x238] sm:$0xff]
  %v327 = vld [vmem:[%s254 + $0x240] sm:$0xff]
  %v328 = vld [vmem:[%s254 + $0x248] sm:$0xff]
  %v329 = vld [vmem:[%s254 + $0x250] sm:$0xff]
  %v330 = vld [vmem:[%s254 + $0x258] sm:$0xff]
  %v331 = vld [vmem:[%s254 + $0x260] sm:$0xff]
  %v332 = vld [vmem:[%s254 + $0x268] sm:$0xff]
  %v333 = vld [vmem:[%s254 + $0x270] sm:$0xff]
  %v334 = vld [vmem:[%s254 + $0x278] sm:$0xff]
  %v335 = vld [vmem:[%s254 + $0x280] sm:$0xff]
  %v336 = vld [vmem:[%s254 + $0x288] sm:$0xff]
  %v337 = vld [vmem:[%s254 + $0x290] sm:$0xff]
  %v338 = vld [vmem:[%s254 + $0x298] sm:$0xff]
  %v339 = vld [vmem:[%s254 + $0x2a0] sm:$0xff]
  %v340 = vld [vmem:[%s254 + $0x2a8] sm:$0xff]
  %v341 = vld [vmem:[%s254 + $0x2b0] sm:$0xff]
  %v342 = vld [vmem:[%s254 + $0x2b8] sm:$0xff]
  %v343 = vld [vmem:[%s254 + $0x2c0] sm:$0xff]
  %v344 = vld [vmem:[%s254 + $0x2c8] sm:$0xff]
  %v345 = vld [vmem:[%s254 + $0x2d0] sm:$0xff]
  %v346 = vld [vmem:[%s254 + $0x2d8] sm:$0xff]
  %v347 = vld [vmem:[%s254 + $0x2e0] sm:$0xff]
  %v348 = vld [vmem:[%s254 + $0x2e8] sm:$0xff]
  %v349 = vld [vmem:[%s254 + $0x2f0] sm:$0xff]
  %v350 = vld [vmem:[%s254 + $0x2f8] sm:$0xff]
  %v351 = vld [vmem:[%s254 + $0x300] sm:$0xff]
  %v352 = vld [vmem:[%s254 + $0x308] sm:$0xff]
  %v353 = vld [vmem:[%s254 + $0x310] sm:$0xff]
  %v354 = vld [vmem:[%s254 + $0x318] sm:$0xff]
  %v355 = vld [vmem:[%s254 + $0x320] sm:$0xff]
  %v356 = vld [vmem:[%s254 + $0x328] sm:$0xff]
  %v357 = vld [vmem:[%s254 + $0x330] sm:$0xff]
  %v358 = vld [vmem:[%s254 + $0x338] sm:$0xff]
  %v359 = vld [vmem:[%s254 + $0x340] sm:$0xff]
  %v360 = vld [vmem:[%s254 + $0x348] sm:$0xff]
  %v361 = vld [vmem:[%s254 + $0x350] sm:$0xff]
  %v362 = vld [vmem:[%s254 + $0x358] sm:$0xff]
  %v363 = vld [vmem:[%s254 + $0x360] sm:$0xff]
  %v364 = vld [vmem:[%s254 + $0x368] sm:$0xff]
  %v365 = vld [vmem:[%s254 + $0x370] sm:$0xff]
  %v366 = vld [vmem:[%s254 + $0x378] sm:$0xff]
  %v367 = vld [vmem:[%s254 + $0x380] sm:$0xff]
  %v368 = vld [vmem:[%s254 + $0x388] sm:$0xff]
  %v369 = vld [vmem:[%s254 + $0x390] sm:$0xff]
  %v370 = vld [vmem:[%s254 + $0x398] sm:$0xff]
  %v371 = vld [vmem:[%s254 + $0x3a0] sm:$0xff]
  %v372 = vld [vmem:[%s254 + $0x3a8] sm:$0xff]
  %v373 = vld [vmem:[%s254 + $0x3b0] sm:$0xff]
  %v374 = vld [vmem:[%s254 + $0x3b8] sm:$0xff]
  %v375 = vld [vmem:[%s254 + $0x3c0] sm:$0xff]
  %v376 = vld [vmem:[%s254 + $0x3c8] sm:$0xff]
  %v377 = vld [vmem:[%s254 + $0x3d0] sm:$0xff]
  %v378 = vld [vmem:[%s254 + $0x3d8] sm:$0xff]
  %v379 = vld [vmem:[%s254 + $0x3e0] sm:$0xff]
  %v380 = vld [vmem:[%s254 + $0x3e8] sm:$0xff]
  %v381 = vld [vmem:[%s254 + $0x3f0] sm:$0xff]
  %v382 = vld [vmem:[%s254 + $0x3f8] sm:$0xff]
  %v383 = vunpack.c.l.b16 %v171
  %v384 = vunpack.c.h.b16 %v171
  %v385 = vunpack.c.l.b16 %v185
  %v386 = vunpack.c.h.b16 %v185
  %v387 = vunpack.c.l.b16 %v195
  %v388 = vunpack.c.h.b16 %v195
  %v389 = vunpack.c.l.b16 %v205
  %v390 = vunpack.c.h.b16 %v205
  %v391 = vunpack.c.l.b16 %v219
  %v392 = vunpack.c.h.b16 %v219
  %v393 = vunpack.c.l.b16 %v233
  %v394 = vunpack.c.h.b16 %v233
  %v395 = vunpack.c.l.b16 %v243
  %v396 = vunpack.c.h.b16 %v243
  %v397 = vunpack.c.l.b16 %v253
  %v398 = vunpack.c.h.b16 %v253
  %v399 = vpack.c.b16 %v387, %v383
  %v400 = vpack.c.b16 %v388, %v384
  %v401 = vpack.c.b16 %v389, %v385
  %v402 = vpack.c.b16 %v390, %v386
  %v403 = vpack.c.b16 %v395, %v391
  %v404 = vpack.c.b16 %v396, %v392
  %v405 = vpack.c.b16 %v397, %v393
  %v406 = vpack.c.b16 %v398, %v394
  %v543 = vunpack.c.l.b16 %v255
  %v544 = vunpack.c.h.b16 %v255
  %v545 = vunpack.c.l.b16 %v256
  %v546 = vunpack.c.h.b16 %v256
  %v547 = vunpack.c.l.b16 %v257
  %v548 = vunpack.c.h.b16 %v257
  %v549 = vunpack.c.l.b16 %v258
  %v550 = vunpack.c.h.b16 %v258
  %v551 = vunpack.c.l.b16 %v259
  %v552 = vunpack.c.h.b16 %v259
  %v553 = vunpack.c.l.b16 %v260
  %v554 = vunpack.c.h.b16 %v260
  %v555 = vunpack.c.l.b16 %v261
  %v556 = vunpack.c.h.b16 %v261
  %v557 = vunpack.c.l.b16 %v262
  %v558 = vunpack.c.h.b16 %v262
  %v559 = vunpack.c.l.b16 %v263
  %v560 = vunpack.c.h.b16 %v263
  %v561 = vunpack.c.l.b16 %v264
  %v562 = vunpack.c.h.b16 %v264
  %v563 = vunpack.c.l.b16 %v265
  %v564 = vunpack.c.h.b16 %v265
  %v565 = vunpack.c.l.b16 %v266
  %v566 = vunpack.c.h.b16 %v266
  %v567 = vunpack.c.l.b16 %v267
  %v568 = vunpack.c.h.b16 %v267
  %v569 = vunpack.c.l.b16 %v268
  %v570 = vunpack.c.h.b16 %v268
  %v571 = vunpack.c.l.b16 %v269
  %v572 = vunpack.c.h.b16 %v269
  %v573 = vunpack.c.l.b16 %v270
  %v574 = vunpack.c.h.b16 %v270
  %v575 = vunpack.c.l.b16 %v271
  %v576 = vunpack.c.h.b16 %v271
  %v577 = vunpack.c.l.b16 %v272
  %v578 = vunpack.c.h.b16 %v272
  %v579 = vunpack.c.l.b16 %v273
  %v580 = vunpack.c.h.b16 %v273
  %v581 = vunpack.c.l.b16 %v274
  %v582 = vunpack.c.h.b16 %v274
  %v583 = vunpack.c.l.b16 %v275
  %v584 = vunpack.c.h.b16 %v275
  %v585 = vunpack.c.l.b16 %v276
  %v586 = vunpack.c.h.b16 %v276
  %v587 = vunpack.c.l.b16 %v277
  %v588 = vunpack.c.h.b16 %v277
  %v589 = vunpack.c.l.b16 %v278
  %v590 = vunpack.c.h.b16 %v278
  %v591 = vunpack.c.l.b16 %v279
  %v592 = vunpack.c.h.b16 %v279
  %v593 = vunpack.c.l.b16 %v280
  %v594 = vunpack.c.h.b16 %v280
  %v595 = vunpack.c.l.b16 %v281
  %v596 = vunpack.c.h.b16 %v281
  %v597 = vunpack.c.l.b16 %v282
  %v598 = vunpack.c.h.b16 %v282
  %v599 = vunpack.c.l.b16 %v283
  %v600 = vunpack.c.h.b16 %v283
  %v601 = vunpack.c.l.b16 %v284
  %v602 = vunpack.c.h.b16 %v284
  %v603 = vunpack.c.l.b16 %v285
  %v604 = vunpack.c.h.b16 %v285
  %v605 = vunpack.c.l.b16 %v286
  %v606 = vunpack.c.h.b16 %v286
  %v607 = vunpack.c.l.b16 %v287
  %v608 = vunpack.c.h.b16 %v287
  %v609 = vunpack.c.l.b16 %v288
  %v610 = vunpack.c.h.b16 %v288
  %v611 = vunpack.c.l.b16 %v289
  %v612 = vunpack.c.h.b16 %v289
  %v613 = vunpack.c.l.b16 %v290
  %v614 = vunpack.c.h.b16 %v290
  %v615 = vunpack.c.l.b16 %v291
  %v616 = vunpack.c.h.b16 %v291
  %v617 = vunpack.c.l.b16 %v292
  %v618 = vunpack.c.h.b16 %v292
  %v619 = vunpack.c.l.b16 %v293
  %v620 = vunpack.c.h.b16 %v293
  %v621 = vunpack.c.l.b16 %v294
  %v622 = vunpack.c.h.b16 %v294
  %v623 = vunpack.c.l.b16 %v295
  %v624 = vunpack.c.h.b16 %v295
  %v625 = vunpack.c.l.b16 %v296
  %v626 = vunpack.c.h.b16 %v296
  %v627 = vunpack.c.l.b16 %v297
  %v628 = vunpack.c.h.b16 %v297
  %v629 = vunpack.c.l.b16 %v298
  %v630 = vunpack.c.h.b16 %v298
  %v631 = vunpack.c.l.b16 %v299
  %v632 = vunpack.c.h.b16 %v299
  %v633 = vunpack.c.l.b16 %v300
  %v634 = vunpack.c.h.b16 %v300
  %v635 = vunpack.c.l.b16 %v301
  %v636 = vunpack.c.h.b16 %v301
  %v637 = vunpack.c.l.b16 %v302
  %v638 = vunpack.c.h.b16 %v302
  %v639 = vunpack.c.l.b16 %v303
  %v640 = vunpack.c.h.b16 %v303
  %v641 = vunpack.c.l.b16 %v304
  %v642 = vunpack.c.h.b16 %v304
  %v643 = vunpack.c.l.b16 %v305
  %v644 = vunpack.c.h.b16 %v305
  %v645 = vunpack.c.l.b16 %v306
  %v646 = vunpack.c.h.b16 %v306
  %v647 = vunpack.c.l.b16 %v307
  %v648 = vunpack.c.h.b16 %v307
  %v649 = vunpack.c.l.b16 %v308
  %v650 = vunpack.c.h.b16 %v308
  %v651 = vunpack.c.l.b16 %v309
  %v652 = vunpack.c.h.b16 %v309
  %v653 = vunpack.c.l.b16 %v310
  %v654 = vunpack.c.h.b16 %v310
  %v655 = vunpack.c.l.b16 %v311
  %v656 = vunpack.c.h.b16 %v311
  %v657 = vunpack.c.l.b16 %v312
  %v658 = vunpack.c.h.b16 %v312
  %v659 = vunpack.c.l.b16 %v313
  %v660 = vunpack.c.h.b16 %v313
  %v661 = vunpack.c.l.b16 %v314
  %v662 = vunpack.c.h.b16 %v314
  %v663 = vunpack.c.l.b16 %v315
  %v664 = vunpack.c.h.b16 %v315
  %v665 = vunpack.c.l.b16 %v316
  %v666 = vunpack.c.h.b16 %v316
  %v667 = vunpack.c.l.b16 %v317
  %v668 = vunpack.c.h.b16 %v317
  %v669 = vunpack.c.l.b16 %v318
  %v670 = vunpack.c.h.b16 %v318
  %v671 = vunpack.c.l.b16 %v319
  %v672 = vunpack.c.h.b16 %v319
  %v673 = vunpack.c.l.b16 %v320
  %v674 = vunpack.c.h.b16 %v320
  %v675 = vunpack.c.l.b16 %v321
  %v676 = vunpack.c.h.b16 %v321
  %v677 = vunpack.c.l.b16 %v322
  %v678 = vunpack.c.h.b16 %v322
  %v679 = vunpack.c.l.b16 %v323
  %v680 = vunpack.c.h.b16 %v323
  %v681 = vunpack.c.l.b16 %v324
  %v682 = vunpack.c.h.b16 %v324
  %v683 = vunpack.c.l.b16 %v325
  %v684 = vunpack.c.h.b16 %v325
  %v685 = vunpack.c.l.b16 %v326
  %v686 = vunpack.c.h.b16 %v326
  %v687 = vunpack.c.l.b16 %v327
  %v688 = vunpack.c.h.b16 %v327
  %v689 = vunpack.c.l.b16 %v328
  %v690 = vunpack.c.h.b16 %v328
  %v691 = vunpack.c.l.b16 %v329
  %v692 = vunpack.c.h.b16 %v329
  %v693 = vunpack.c.l.b16 %v330
  %v694 = vunpack.c.h.b16 %v330
  %v695 = vunpack.c.l.b16 %v331
  %v696 = vunpack.c.h.b16 %v331
  %v697 = vunpack.c.l.b16 %v332
  %v698 = vunpack.c.h.b16 %v332
  %v699 = vunpack.c.l.b16 %v333
  %v700 = vunpack.c.h.b16 %v333
  %v701 = vunpack.c.l.b16 %v334
  %v702 = vunpack.c.h.b16 %v334
  %v703 = vunpack.c.l.b16 %v335
  %v704 = vunpack.c.h.b16 %v335
  %v705 = vunpack.c.l.b16 %v336
  %v706 = vunpack.c.h.b16 %v336
  %v707 = vunpack.c.l.b16 %v337
  %v708 = vunpack.c.h.b16 %v337
  %v709 = vunpack.c.l.b16 %v338
  %v710 = vunpack.c.h.b16 %v338
  %v711 = vunpack.c.l.b16 %v339
  %v712 = vunpack.c.h.b16 %v339
  %v713 = vunpack.c.l.b16 %v340
  %v714 = vunpack.c.h.b16 %v340
  %v715 = vunpack.c.l.b16 %v341
  %v716 = vunpack.c.h.b16 %v341
  %v717 = vunpack.c.l.b16 %v342
  %v718 = vunpack.c.h.b16 %v342
  %v719 = vunpack.c.l.b16 %v343
  %v720 = vunpack.c.h.b16 %v343
  %v721 = vunpack.c.l.b16 %v344
  %v722 = vunpack.c.h.b16 %v344
  %v723 = vunpack.c.l.b16 %v345
  %v724 = vunpack.c.h.b16 %v345
  %v725 = vunpack.c.l.b16 %v346
  %v726 = vunpack.c.h.b16 %v346
  %v727 = vunpack.c.l.b16 %v347
  %v728 = vunpack.c.h.b16 %v347
  %v729 = vunpack.c.l.b16 %v348
  %v730 = vunpack.c.h.b16 %v348
  %v731 = vunpack.c.l.b16 %v349
  %v732 = vunpack.c.h.b16 %v349
  %v733 = vunpack.c.l.b16 %v350
  %v734 = vunpack.c.h.b16 %v350
  %v735 = vunpack.c.l.b16 %v351
  %v736 = vunpack.c.h.b16 %v351
  %v737 = vunpack.c.l.b16 %v352
  %v738 = vunpack.c.h.b16 %v352
  %v739 = vunpack.c.l.b16 %v353
  %v740 = vunpack.c.h.b16 %v353
  %v741 = vunpack.c.l.b16 %v354
  %v742 = vunpack.c.h.b16 %v354
  %v743 = vunpack.c.l.b16 %v355
  %v744 = vunpack.c.h.b16 %v355
  %v745 = vunpack.c.l.b16 %v356
  %v746 = vunpack.c.h.b16 %v356
  %v747 = vunpack.c.l.b16 %v357
  %v748 = vunpack.c.h.b16 %v357
  %v749 = vunpack.c.l.b16 %v358
  %v750 = vunpack.c.h.b16 %v358
  %v751 = vunpack.c.l.b16 %v359
  %v752 = vunpack.c.h.b16 %v359
  %v753 = vunpack.c.l.b16 %v360
  %v754 = vunpack.c.h.b16 %v360
  %v755 = vunpack.c.l.b16 %v361
  %v756 = vunpack.c.h.b16 %v361
  %v757 = vunpack.c.l.b16 %v362
  %v758 = vunpack.c.h.b16 %v362
  %v759 = vunpack.c.l.b16 %v363
  %v760 = vunpack.c.h.b16 %v363
  %v761 = vunpack.c.l.b16 %v364
  %v762 = vunpack.c.h.b16 %v364
  %v763 = vunpack.c.l.b16 %v365
  %v764 = vunpack.c.h.b16 %v365
  %v765 = vunpack.c.l.b16 %v366
  %v766 = vunpack.c.h.b16 %v366
  %v767 = vunpack.c.l.b16 %v367
  %v768 = vunpack.c.h.b16 %v367
  %v769 = vunpack.c.l.b16 %v368
  %v770 = vunpack.c.h.b16 %v368
  %v771 = vunpack.c.l.b16 %v369
  %v772 = vunpack.c.h.b16 %v369
  %v773 = vunpack.c.l.b16 %v370
  %v774 = vunpack.c.h.b16 %v370
  %v775 = vunpack.c.l.b16 %v371
  %v776 = vunpack.c.h.b16 %v371
  %v777 = vunpack.c.l.b16 %v372
  %v778 = vunpack.c.h.b16 %v372
  %v779 = vunpack.c.l.b16 %v373
  %v780 = vunpack.c.h.b16 %v373
  %v781 = vunpack.c.l.b16 %v374
  %v782 = vunpack.c.h.b16 %v374
  %v783 = vunpack.c.l.b16 %v375
  %v784 = vunpack.c.h.b16 %v375
  %v785 = vunpack.c.l.b16 %v376
  %v786 = vunpack.c.h.b16 %v376
  %v787 = vunpack.c.l.b16 %v377
  %v788 = vunpack.c.h.b16 %v377
  %v789 = vunpack.c.l.b16 %v378
  %v790 = vunpack.c.h.b16 %v378
  %v791 = vunpack.c.l.b16 %v379
  %v792 = vunpack.c.h.b16 %v379
  %v793 = vunpack.c.l.b16 %v380
  %v794 = vunpack.c.h.b16 %v380
  %v795 = vunpack.c.l.b16 %v381
  %v796 = vunpack.c.h.b16 %v381
  %v797 = vunpack.c.l.b16 %v382
  %v798 = vunpack.c.h.b16 %v382
  %v799 = vpack.c.b16 %v547, %v543
  %v800 = vpack.c.b16 %v548, %v544
  %v801 = vpack.c.b16 %v549, %v545
  %v802 = vpack.c.b16 %v550, %v546
  %v803 = vpack.c.b16 %v555, %v551
  %v804 = vpack.c.b16 %v556, %v552
  %v805 = vpack.c.b16 %v557, %v553
  %v806 = vpack.c.b16 %v558, %v554
  %v807 = vpack.c.b16 %v563, %v559
  %v808 = vpack.c.b16 %v564, %v560
  %v809 = vpack.c.b16 %v565, %v561
  %v810 = vpack.c.b16 %v566, %v562
  %v811 = vpack.c.b16 %v571, %v567
  %v812 = vpack.c.b16 %v572, %v568
  %v813 = vpack.c.b16 %v573, %v569
  %v814 = vpack.c.b16 %v574, %v570
  %v815 = vpack.c.b16 %v579, %v575
  %v816 = vpack.c.b16 %v580, %v576
  %v817 = vpack.c.b16 %v581, %v577
  %v818 = vpack.c.b16 %v582, %v578
  %v819 = vpack.c.b16 %v587, %v583
  %v820 = vpack.c.b16 %v588, %v584
  %v821 = vpack.c.b16 %v589, %v585
  %v822 = vpack.c.b16 %v590, %v586
  %v823 = vpack.c.b16 %v595, %v591
  %v824 = vpack.c.b16 %v596, %v592
  %v825 = vpack.c.b16 %v597, %v593
  %v826 = vpack.c.b16 %v598, %v594
  %v827 = vpack.c.b16 %v603, %v599
  %v828 = vpack.c.b16 %v604, %v600
  %v829 = vpack.c.b16 %v605, %v601
  %v830 = vpack.c.b16 %v606, %v602
  %v831 = vpack.c.b16 %v611, %v607
  %v832 = vpack.c.b16 %v612, %v608
  %v833 = vpack.c.b16 %v613, %v609
  %v834 = vpack.c.b16 %v614, %v610
  %v835 = vpack.c.b16 %v619, %v615
  %v836 = vpack.c.b16 %v620, %v616
  %v837 = vpack.c.b16 %v621, %v617
  %v838 = vpack.c.b16 %v622, %v618
  %v839 = vpack.c.b16 %v627, %v623
  %v840 = vpack.c.b16 %v628, %v624
  %v841 = vpack.c.b16 %v629, %v625
  %v842 = vpack.c.b16 %v630, %v626
  %v843 = vpack.c.b16 %v635, %v631
  %v844 = vpack.c.b16 %v636, %v632
  %v845 = vpack.c.b16 %v637, %v633
  %v846 = vpack.c.b16 %v638, %v634
  %v847 = vpack.c.b16 %v643, %v639
  %v848 = vpack.c.b16 %v644, %v640
  %v849 = vpack.c.b16 %v645, %v641
  %v850 = vpack.c.b16 %v646, %v642
  %v851 = vpack.c.b16 %v651, %v647
  %v852 = vpack.c.b16 %v652, %v648
  %v853 = vpack.c.b16 %v653, %v649
  %v854 = vpack.c.b16 %v654, %v650
  %v855 = vpack.c.b16 %v659, %v655
  %v856 = vpack.c.b16 %v660, %v656
  %v857 = vpack.c.b16 %v661, %v657
  %v858 = vpack.c.b16 %v662, %v658
  %v859 = vpack.c.b16 %v667, %v663
  %v860 = vpack.c.b16 %v668, %v664
  %v861 = vpack.c.b16 %v669, %v665
  %v862 = vpack.c.b16 %v670, %v666
  %v863 = vpack.c.b16 %v675, %v671
  %v864 = vpack.c.b16 %v676, %v672
  %v865 = vpack.c.b16 %v677, %v673
  %v866 = vpack.c.b16 %v678, %v674
  %v867 = vpack.c.b16 %v683, %v679
  %v868 = vpack.c.b16 %v684, %v680
  %v869 = vpack.c.b16 %v685, %v681
  %v870 = vpack.c.b16 %v686, %v682
  %v871 = vpack.c.b16 %v691, %v687
  %v872 = vpack.c.b16 %v692, %v688
  %v873 = vpack.c.b16 %v693, %v689
  %v874 = vpack.c.b16 %v694, %v690
  %v875 = vpack.c.b16 %v699, %v695
  %v876 = vpack.c.b16 %v700, %v696
  %v877 = vpack.c.b16 %v701, %v697
  %v878 = vpack.c.b16 %v702, %v698
  %v879 = vpack.c.b16 %v707, %v703
  %v880 = vpack.c.b16 %v708, %v704
  %v881 = vpack.c.b16 %v709, %v705
  %v882 = vpack.c.b16 %v710, %v706
  %v883 = vpack.c.b16 %v715, %v711
  %v884 = vpack.c.b16 %v716, %v712
  %v885 = vpack.c.b16 %v717, %v713
  %v886 = vpack.c.b16 %v718, %v714
  %v887 = vpack.c.b16 %v723, %v719
  %v888 = vpack.c.b16 %v724, %v720
  %v889 = vpack.c.b16 %v725, %v721
  %v890 = vpack.c.b16 %v726, %v722
  %v891 = vpack.c.b16 %v731, %v727
  %v892 = vpack.c.b16 %v732, %v728
  %v893 = vpack.c.b16 %v733, %v729
  %v894 = vpack.c.b16 %v734, %v730
  %v895 = vpack.c.b16 %v739, %v735
  %v896 = vpack.c.b16 %v740, %v736
  %v897 = vpack.c.b16 %v741, %v737
  %v898 = vpack.c.b16 %v742, %v738
  %v899 = vpack.c.b16 %v747, %v743
  %v900 = vpack.c.b16 %v748, %v744
  %v901 = vpack.c.b16 %v749, %v745
  %v902 = vpack.c.b16 %v750, %v746
  %v903 = vpack.c.b16 %v755, %v751
  %v904 = vpack.c.b16 %v756, %v752
  %v905 = vpack.c.b16 %v757, %v753
  %v906 = vpack.c.b16 %v758, %v754
  %v907 = vpack.c.b16 %v763, %v759
  %v908 = vpack.c.b16 %v764, %v760
  %v909 = vpack.c.b16 %v765, %v761
  %v910 = vpack.c.b16 %v766, %v762
  %v911 = vpack.c.b16 %v771, %v767
  %v912 = vpack.c.b16 %v772, %v768
  %v913 = vpack.c.b16 %v773, %v769
  %v914 = vpack.c.b16 %v774, %v770
  %v915 = vpack.c.b16 %v779, %v775
  %v916 = vpack.c.b16 %v780, %v776
  %v917 = vpack.c.b16 %v781, %v777
  %v918 = vpack.c.b16 %v782, %v778
  %v919 = vpack.c.b16 %v787, %v783
  %v920 = vpack.c.b16 %v788, %v784
  %v921 = vpack.c.b16 %v789, %v785
  %v922 = vpack.c.b16 %v790, %v786
  %v923 = vpack.c.b16 %v795, %v791
  %v924 = vpack.c.b16 %v796, %v792
  %v925 = vpack.c.b16 %v797, %v793
  %v926 = vpack.c.b16 %v798, %v794
  %1055 = vmatprep.subr.bf16.mxu0 %v800
  %1056 = vmatpush1.bf16.msra.mxu0 %v799
  %1057 = vmatprep.subr.bf16.mxu0 %v804
  %1058 = vmatpush1.bf16.msra.mxu0 %v803
  %1059 = vmatprep.subr.bf16.mxu0 %v808
  %1060 = vmatpush1.bf16.msra.mxu0 %v807
  %1061 = vmatprep.subr.bf16.mxu0 %v812
  %1062 = vmatpush1.bf16.msra.mxu0 %v811
  %1063 = vmatprep.subr.bf16.mxu0 %v816
  %1064 = vmatpush1.bf16.msra.mxu0 %v815
  %1065 = vmatprep.subr.bf16.mxu0 %v820
  %1066 = vmatpush1.bf16.msra.mxu0 %v819
  %1067 = vmatprep.subr.bf16.mxu0 %v824
  %1068 = vmatpush1.bf16.msra.mxu0 %v823
  %1069 = vmatprep.subr.bf16.mxu0 %v828
  %1070 = vmatpush1.bf16.msra.mxu0 %v827
  %1071 = vmatprep.subr.bf16.mxu0 %v832
  %1072 = vmatpush1.bf16.msra.mxu0 %v831
  %1073 = vmatprep.subr.bf16.mxu0 %v836
  %1074 = vmatpush1.bf16.msra.mxu0 %v835
  %1075 = vmatprep.subr.bf16.mxu0 %v840
  %1076 = vmatpush1.bf16.msra.mxu0 %v839
  %1077 = vmatprep.subr.bf16.mxu0 %v844
  %1078 = vmatpush1.bf16.msra.mxu0 %v843
  %1079 = vmatprep.subr.bf16.mxu0 %v848
  %1080 = vmatpush1.bf16.msra.mxu0 %v847
  %1081 = vmatprep.subr.bf16.mxu0 %v852
  %1082 = vmatpush1.bf16.msra.mxu0 %v851
  %1083 = vmatprep.subr.bf16.mxu0 %v856
  %1084 = vmatpush1.bf16.msra.mxu0 %v855
  %1085 = vmatprep.subr.bf16.mxu0 %v860
  %1086 = vmatpush1.bf16.msra.mxu0 %v859
  %1087 = vmatprep.mubr.bf16.mxu0 %v400
  %1088 = vmatmul.mubr.bf16.gmra.mrb[0].mxu0 %v399
  %v1089 = vpop.f32.mrb[0].mxu0
  %v1090 = vadd.f32 0.0, %v1089
  %v1091 = vpop.f32.mrb[0].mxu0
  %v1092 = vadd.f32 0.0, %v1091
  %v1093 = vpop.f32.mrb[0].mxu0
  %v1094 = vadd.f32 0.0, %v1093
  %v1095 = vpop.f32.mrb[0].mxu0
  %v1096 = vadd.f32 0.0, %v1095
  %1097 = vmatprep.mubr.bf16.mxu0 %v404
  %1098 = vmatmul.mubr.bf16.gmra.mrb[0].mxu0 %v403
  %v1099 = vpop.f32.mrb[0].mxu0
  %v1100 = vadd.f32 0.0, %v1099
  %v1101 = vpop.f32.mrb[0].mxu0
  %v1102 = vadd.f32 0.0, %v1101
  %v1103 = vpop.f32.mrb[0].mxu0
  %v1104 = vadd.f32 0.0, %v1103
  %v1105 = vpop.f32.mrb[0].mxu0
  %v1106 = vadd.f32 0.0, %v1105
  %1107 = vdwg.mxu0
  %1108 = vmatprep.subr.bf16.mxu0 %v864
  %1109 = vmatpush1.bf16.msra.mxu0 %v863
  %1110 = vmatprep.subr.bf16.mxu0 %v868
  %1111 = vmatpush1.bf16.msra.mxu0 %v867
  %1112 = vmatprep.subr.bf16.mxu0 %v872
  %1113 = vmatpush1.bf16.msra.mxu0 %v871
  %1114 = vmatprep.subr.bf16.mxu0 %v876
  %1115 = vmatpush1.bf16.msra.mxu0 %v875
  %1116 = vmatprep.subr.bf16.mxu0 %v880
  %1117 = vmatpush1.bf16.msra.mxu0 %v879
  %1118 = vmatprep.subr.bf16.mxu0 %v884
  %1119 = vmatpush1.bf16.msra.mxu0 %v883
  %1120 = vmatprep.subr.bf16.mxu0 %v888
  %1121 = vmatpush1.bf16.msra.mxu0 %v887
  %1122 = vmatprep.subr.bf16.mxu0 %v892
  %1123 = vmatpush1.bf16.msra.mxu0 %v891
  %1124 = vmatprep.subr.bf16.mxu0 %v896
  %1125 = vmatpush1.bf16.msra.mxu0 %v895
  %1126 = vmatprep.subr.bf16.mxu0 %v900
  %1127 = vmatpush1.bf16.msra.mxu0 %v899
  %1128 = vmatprep.subr.bf16.mxu0 %v904
  %1129 = vmatpush1.bf16.msra.mxu0 %v903
  %1130 = vmatprep.subr.bf16.mxu0 %v908
  %1131 = vmatpush1.bf16.msra.mxu0 %v907
  %1132 = vmatprep.subr.bf16.mxu0 %v912
  %1133 = vmatpush1.bf16.msra.mxu0 %v911
  %1134 = vmatprep.subr.bf16.mxu0 %v916
  %1135 = vmatpush1.bf16.msra.mxu0 %v915
  %1136 = vmatprep.subr.bf16.mxu0 %v920
  %1137 = vmatpush1.bf16.msra.mxu0 %v919
  %1138 = vmatprep.subr.bf16.mxu0 %v924
  %1139 = vmatpush1.bf16.msra.mxu0 %v923
  %1140 = vmatprep.mubr.bf16.mxu0 %v402
  %1141 = vmatmul.mubr.bf16.gmra.mrb[0].mxu0 %v401
  %v1142 = vpop.f32.mrb[0].mxu0
  %v1143 = vadd.f32 %v1090, %v1142
  %v1144 = vpop.f32.mrb[0].mxu0
  %v1145 = vadd.f32 %v1092, %v1144
  %v1146 = vpop.f32.mrb[0].mxu0
  %v1147 = vadd.f32 %v1094, %v1146
  %v1148 = vpop.f32.mrb[0].mxu0
  %v1149 = vadd.f32 %v1096, %v1148
  %1150 = vmatprep.mubr.bf16.mxu0 %v406
  %1151 = vmatmul.mubr.bf16.gmra.mrb[0].mxu0 %v405
  %v1152 = vpop.f32.mrb[0].mxu0
  %v1153 = vadd.f32 %v1100, %v1152
  %v1154 = vpop.f32.mrb[0].mxu0
  %v1155 = vadd.f32 %v1102, %v1154
  %v1156 = vpop.f32.mrb[0].mxu0
  %v1157 = vadd.f32 %v1104, %v1156
  %v1158 = vpop.f32.mrb[0].mxu0
  %v1159 = vadd.f32 %v1106, %v1158
  %1160 = vdwg.mxu0
  %1161 = vmatprep.subr.bf16.mxu0 %v802
  %1162 = vmatpush1.bf16.msra.mxu0 %v801
  %1163 = vmatprep.subr.bf16.mxu0 %v806
  %1164 = vmatpush1.bf16.msra.mxu0 %v805
  %1165 = vmatprep.subr.bf16.mxu0 %v810
  %1166 = vmatpush1.bf16.msra.mxu0 %v809
  %1167 = vmatprep.subr.bf16.mxu0 %v814
  %1168 = vmatpush1.bf16.msra.mxu0 %v813
  %1169 = vmatprep.subr.bf16.mxu0 %v818
  %1170 = vmatpush1.bf16.msra.mxu0 %v817
  %1171 = vmatprep.subr.bf16.mxu0 %v822
  %1172 = vmatpush1.bf16.msra.mxu0 %v821
  %1173 = vmatprep.subr.bf16.mxu0 %v826
  %1174 = vmatpush1.bf16.msra.mxu0 %v825
  %1175 = vmatprep.subr.bf16.mxu0 %v830
  %1176 = vmatpush1.bf16.msra.mxu0 %v829
  %1177 = vmatprep.subr.bf16.mxu0 %v834
  %1178 = vmatpush1.bf16.msra.mxu0 %v833
  %1179 = vmatprep.subr.bf16.mxu0 %v838
  %1180 = vmatpush1.bf16.msra.mxu0 %v837
  %1181 = vmatprep.subr.bf16.mxu0 %v842
  %1182 = vmatpush1.bf16.msra.mxu0 %v841
  %1183 = vmatprep.subr.bf16.mxu0 %v846
  %1184 = vmatpush1.bf16.msra.mxu0 %v845
  %1185 = vmatprep.subr.bf16.mxu0 %v850
  %1186 = vmatpush1.bf16.msra.mxu0 %v849
  %1187 = vmatprep.subr.bf16.mxu0 %v854
  %1188 = vmatpush1.bf16.msra.mxu0 %v853
  %1189 = vmatprep.subr.bf16.mxu0 %v858
  %1190 = vmatpush1.bf16.msra.mxu0 %v857
  %1191 = vmatprep.subr.bf16.mxu0 %v862
  %1192 = vmatpush1.bf16.msra.mxu0 %v861
  %1193 = vmatprep.mubr.bf16.mxu0 %v400
  %1194 = vmatmul.mubr.bf16.gmra.mrb[0].mxu0 %v399
  %v1195 = vpop.f32.mrb[0].mxu0
  %v1196 = vadd.f32 0.0, %v1195
  %v1197 = vpop.f32.mrb[0].mxu0
  %v1198 = vadd.f32 0.0, %v1197
  %v1199 = vpop.f32.mrb[0].mxu0
  %v1200 = vadd.f32 0.0, %v1199
  %v1201 = vpop.f32.mrb[0].mxu0
  %v1202 = vadd.f32 0.0, %v1201
  %1203 = vmatprep.mubr.bf16.mxu0 %v404
  %1204 = vmatmul.mubr.bf16.gmra.mrb[0].mxu0 %v403
  %v1205 = vpop.f32.mrb[0].mxu0
  %v1206 = vadd.f32 0.0, %v1205
  %v1207 = vpop.f32.mrb[0].mxu0
  %v1208 = vadd.f32 0.0, %v1207
  %v1209 = vpop.f32.mrb[0].mxu0
  %v1210 = vadd.f32 0.0, %v1209
  %v1211 = vpop.f32.mrb[0].mxu0
  %v1212 = vadd.f32 0.0, %v1211
  %1213 = vdwg.mxu0
  %1214 = vmatprep.subr.bf16.mxu0 %v866
  %1215 = vmatpush1.bf16.msra.mxu0 %v865
  %1216 = vmatprep.subr.bf16.mxu0 %v870
  %1217 = vmatpush1.bf16.msra.mxu0 %v869
  %1218 = vmatprep.subr.bf16.mxu0 %v874
  %1219 = vmatpush1.bf16.msra.mxu0 %v873
  %1220 = vmatprep.subr.bf16.mxu0 %v878
  %1221 = vmatpush1.bf16.msra.mxu0 %v877
  %1222 = vmatprep.subr.bf16.mxu0 %v882
  %1223 = vmatpush1.bf16.msra.mxu0 %v881
  %1224 = vmatprep.subr.bf16.mxu0 %v886
  %1225 = vmatpush1.bf16.msra.mxu0 %v885
  %1226 = vmatprep.subr.bf16.mxu0 %v890
  %1227 = vmatpush1.bf16.msra.mxu0 %v889
  %1228 = vmatprep.subr.bf16.mxu0 %v894
  %1229 = vmatpush1.bf16.msra.mxu0 %v893
  %1230 = vmatprep.subr.bf16.mxu0 %v898
  %1231 = vmatpush1.bf16.msra.mxu0 %v897
  %1232 = vmatprep.subr.bf16.mxu0 %v902
  %1233 = vmatpush1.bf16.msra.mxu0 %v901
  %1234 = vmatprep.subr.bf16.mxu0 %v906
  %1235 = vmatpush1.bf16.msra.mxu0 %v905
  %1236 = vmatprep.subr.bf16.mxu0 %v910
  %1237 = vmatpush1.bf16.msra.mxu0 %v909
  %1238 = vmatprep.subr.bf16.mxu0 %v914
  %1239 = vmatpush1.bf16.msra.mxu0 %v913
  %1240 = vmatprep.subr.bf16.mxu0 %v918
  %1241 = vmatpush1.bf16.msra.mxu0 %v917
  %1242 = vmatprep.subr.bf16.mxu0 %v922
  %1243 = vmatpush1.bf16.msra.mxu0 %v921
  %1244 = vmatprep.subr.bf16.mxu0 %v926
  %1245 = vmatpush1.bf16.msra.mxu0 %v925
  %1246 = vmatprep.mubr.bf16.mxu0 %v402
  %1247 = vmatmul.mubr.bf16.gmra.mrb[0].mxu0 %v401
  %v1248 = vpop.f32.mrb[0].mxu0
  %v1249 = vadd.f32 %v1196, %v1248
  %v1250 = vpop.f32.mrb[0].mxu0
  %v1251 = vadd.f32 %v1198, %v1250
  %v1252 = vpop.f32.mrb[0].mxu0
  %v1253 = vadd.f32 %v1200, %v1252
  %v1254 = vpop.f32.mrb[0].mxu0
  %v1255 = vadd.f32 %v1202, %v1254
  %1256 = vmatprep.mubr.bf16.mxu0 %v406
  %1257 = vmatmul.mubr.bf16.gmra.mrb[0].mxu0 %v405
  %v1258 = vpop.f32.mrb[0].mxu0
  %v1259 = vadd.f32 %v1206, %v1258
  %v1260 = vpop.f32.mrb[0].mxu0
  %v1261 = vadd.f32 %v1208, %v1260
  %v1262 = vpop.f32.mrb[0].mxu0
  %v1263 = vadd.f32 %v1210, %v1262
  %v1264 = vpop.f32.mrb[0].mxu0
  %v1265 = vadd.f32 %v1212, %v1264
  %1266 = vdwg.mxu0
  %v1275 = vunpack.c.l.b16 %v15
  %v1276 = vunpack.c.h.b16 %v15
  %v1277 = vunpack.c.l.b16 %v16
  %v1278 = vunpack.c.h.b16 %v16
  %v1279 = vunpack.c.l.b16 %v17
  %v1280 = vunpack.c.h.b16 %v17
  %v1281 = vunpack.c.l.b16 %v18
  %v1282 = vunpack.c.h.b16 %v18
  %v1283 = vunpack.c.l.b16 %v21
  %v1284 = vunpack.c.h.b16 %v21
  %v1285 = vunpack.c.l.b16 %v22
  %v1286 = vunpack.c.h.b16 %v22
  %v1287 = vunpack.c.l.b16 %v23
  %v1288 = vunpack.c.h.b16 %v23
  %v1289 = vunpack.c.l.b16 %v24
  %v1290 = vunpack.c.h.b16 %v24
  %v1291 = vpack.c.b16 %v1279, %v1275
  %v1292 = vpack.c.b16 %v1280, %v1276
  %v1293 = vpack.c.b16 %v1281, %v1277
  %v1294 = vpack.c.b16 %v1282, %v1278
  %v1295 = vpack.c.b16 %v1287, %v1283
  %v1296 = vpack.c.b16 %v1288, %v1284
  %v1297 = vpack.c.b16 %v1289, %v1285
  %v1298 = vpack.c.b16 %v1290, %v1286
  %v1435 = vunpack.c.l.b16 %v27
  %v1436 = vunpack.c.h.b16 %v27
  %v1437 = vunpack.c.l.b16 %v28
  %v1438 = vunpack.c.h.b16 %v28
  %v1439 = vunpack.c.l.b16 %v29
  %v1440 = vunpack.c.h.b16 %v29
  %v1441 = vunpack.c.l.b16 %v30
  %v1442 = vunpack.c.h.b16 %v30
  %v1443 = vunpack.c.l.b16 %v31
  %v1444 = vunpack.c.h.b16 %v31
  %v1445 = vunpack.c.l.b16 %v32
  %v1446 = vunpack.c.h.b16 %v32
  %v1447 = vunpack.c.l.b16 %v33
  %v1448 = vunpack.c.h.b16 %v33
  %v1449 = vunpack.c.l.b16 %v34
  %v1450 = vunpack.c.h.b16 %v34
  %v1451 = vunpack.c.l.b16 %v35
  %v1452 = vunpack.c.h.b16 %v35
  %v1453 = vunpack.c.l.b16 %v36
  %v1454 = vunpack.c.h.b16 %v36
  %v1455 = vunpack.c.l.b16 %v37
  %v1456 = vunpack.c.h.b16 %v37
  %v1457 = vunpack.c.l.b16 %v38
  %v1458 = vunpack.c.h.b16 %v38
  %v1459 = vunpack.c.l.b16 %v39
  %v1460 = vunpack.c.h.b16 %v39
  %v1461 = vunpack.c.l.b16 %v40
  %v1462 = vunpack.c.h.b16 %v40
  %v1463 = vunpack.c.l.b16 %v41
  %v1464 = vunpack.c.h.b16 %v41
  %v1465 = vunpack.c.l.b16 %v42
  %v1466 = vunpack.c.h.b16 %v42
  %v1467 = vunpack.c.l.b16 %v43
  %v1468 = vunpack.c.h.b16 %v43
  %v1469 = vunpack.c.l.b16 %v44
  %v1470 = vunpack.c.h.b16 %v44
  %v1471 = vunpack.c.l.b16 %v45
  %v1472 = vunpack.c.h.b16 %v45
  %v1473 = vunpack.c.l.b16 %v46
  %v1474 = vunpack.c.h.b16 %v46
  %v1475 = vunpack.c.l.b16 %v47
  %v1476 = vunpack.c.h.b16 %v47
  %v1477 = vunpack.c.l.b16 %v48
  %v1478 = vunpack.c.h.b16 %v48
  %v1479 = vunpack.c.l.b16 %v49
  %v1480 = vunpack.c.h.b16 %v49
  %v1481 = vunpack.c.l.b16 %v50
  %v1482 = vunpack.c.h.b16 %v50
  %v1483 = vunpack.c.l.b16 %v51
  %v1484 = vunpack.c.h.b16 %v51
  %v1485 = vunpack.c.l.b16 %v52
  %v1486 = vunpack.c.h.b16 %v52
  %v1487 = vunpack.c.l.b16 %v53
  %v1488 = vunpack.c.h.b16 %v53
  %v1489 = vunpack.c.l.b16 %v54
  %v1490 = vunpack.c.h.b16 %v54
  %v1491 = vunpack.c.l.b16 %v55
  %v1492 = vunpack.c.h.b16 %v55
  %v1493 = vunpack.c.l.b16 %v56
  %v1494 = vunpack.c.h.b16 %v56
  %v1495 = vunpack.c.l.b16 %v57
  %v1496 = vunpack.c.h.b16 %v57
  %v1497 = vunpack.c.l.b16 %v58
  %v1498 = vunpack.c.h.b16 %v58
  %v1499 = vunpack.c.l.b16 %v59
  %v1500 = vunpack.c.h.b16 %v59
  %v1501 = vunpack.c.l.b16 %v60
  %v1502 = vunpack.c.h.b16 %v60
  %v1503 = vunpack.c.l.b16 %v61
  %v1504 = vunpack.c.h.b16 %v61
  %v1505 = vunpack.c.l.b16 %v62
  %v1506 = vunpack.c.h.b16 %v62
  %v1507 = vunpack.c.l.b16 %v63
  %v1508 = vunpack.c.h.b16 %v63
  %v1509 = vunpack.c.l.b16 %v64
  %v1510 = vunpack.c.h.b16 %v64
  %v1511 = vunpack.c.l.b16 %v65
  %v1512 = vunpack.c.h.b16 %v65
  %v1513 = vunpack.c.l.b16 %v66
  %v1514 = vunpack.c.h.b16 %v66
  %v1515 = vunpack.c.l.b16 %v67
  %v1516 = vunpack.c.h.b16 %v67
  %v1517 = vunpack.c.l.b16 %v68
  %v1518 = vunpack.c.h.b16 %v68
  %v1519 = vunpack.c.l.b16 %v69
  %v1520 = vunpack.c.h.b16 %v69
  %v1521 = vunpack.c.l.b16 %v70
  %v1522 = vunpack.c.h.b16 %v70
  %v1523 = vunpack.c.l.b16 %v71
  %v1524 = vunpack.c.h.b16 %v71
  %v1525 = vunpack.c.l.b16 %v72
  %v1526 = vunpack.c.h.b16 %v72
  %v1527 = vunpack.c.l.b16 %v73
  %v1528 = vunpack.c.h.b16 %v73
  %v1529 = vunpack.c.l.b16 %v74
  %v1530 = vunpack.c.h.b16 %v74
  %v1531 = vunpack.c.l.b16 %v75
  %v1532 = vunpack.c.h.b16 %v75
  %v1533 = vunpack.c.l.b16 %v76
  %v1534 = vunpack.c.h.b16 %v76
  %v1535 = vunpack.c.l.b16 %v77
  %v1536 = vunpack.c.h.b16 %v77
  %v1537 = vunpack.c.l.b16 %v78
  %v1538 = vunpack.c.h.b16 %v78
  %v1539 = vunpack.c.l.b16 %v79
  %v1540 = vunpack.c.h.b16 %v79
  %v1541 = vunpack.c.l.b16 %v80
  %v1542 = vunpack.c.h.b16 %v80
  %v1543 = vunpack.c.l.b16 %v81
  %v1544 = vunpack.c.h.b16 %v81
  %v1545 = vunpack.c.l.b16 %v82
  %v1546 = vunpack.c.h.b16 %v82
  %v1547 = vunpack.c.l.b16 %v83
  %v1548 = vunpack.c.h.b16 %v83
  %v1549 = vunpack.c.l.b16 %v84
  %v1550 = vunpack.c.h.b16 %v84
  %v1551 = vunpack.c.l.b16 %v85
  %v1552 = vunpack.c.h.b16 %v85
  %v1553 = vunpack.c.l.b16 %v86
  %v1554 = vunpack.c.h.b16 %v86
  %v1555 = vunpack.c.l.b16 %v87
  %v1556 = vunpack.c.h.b16 %v87
  %v1557 = vunpack.c.l.b16 %v88
  %v1558 = vunpack.c.h.b16 %v88
  %v1559 = vunpack.c.l.b16 %v89
  %v1560 = vunpack.c.h.b16 %v89
  %v1561 = vunpack.c.l.b16 %v90
  %v1562 = vunpack.c.h.b16 %v90
  %v1563 = vunpack.c.l.b16 %v91
  %v1564 = vunpack.c.h.b16 %v91
  %v1565 = vunpack.c.l.b16 %v92
  %v1566 = vunpack.c.h.b16 %v92
  %v1567 = vunpack.c.l.b16 %v93
  %v1568 = vunpack.c.h.b16 %v93
  %v1569 = vunpack.c.l.b16 %v94
  %v1570 = vunpack.c.h.b16 %v94
  %v1571 = vunpack.c.l.b16 %v95
  %v1572 = vunpack.c.h.b16 %v95
  %v1573 = vunpack.c.l.b16 %v96
  %v1574 = vunpack.c.h.b16 %v96
  %v1575 = vunpack.c.l.b16 %v97
  %v1576 = vunpack.c.h.b16 %v97
  %v1577 = vunpack.c.l.b16 %v98
  %v1578 = vunpack.c.h.b16 %v98
  %v1579 = vunpack.c.l.b16 %v99
  %v1580 = vunpack.c.h.b16 %v99
  %v1581 = vunpack.c.l.b16 %v100
  %v1582 = vunpack.c.h.b16 %v100
  %v1583 = vunpack.c.l.b16 %v101
  %v1584 = vunpack.c.h.b16 %v101
  %v1585 = vunpack.c.l.b16 %v102
  %v1586 = vunpack.c.h.b16 %v102
  %v1587 = vunpack.c.l.b16 %v103
  %v1588 = vunpack.c.h.b16 %v103
  %v1589 = vunpack.c.l.b16 %v104
  %v1590 = vunpack.c.h.b16 %v104
  %v1591 = vunpack.c.l.b16 %v105
  %v1592 = vunpack.c.h.b16 %v105
  %v1593 = vunpack.c.l.b16 %v106
  %v1594 = vunpack.c.h.b16 %v106
  %v1595 = vunpack.c.l.b16 %v107
  %v1596 = vunpack.c.h.b16 %v107
  %v1597 = vunpack.c.l.b16 %v108
  %v1598 = vunpack.c.h.b16 %v108
  %v1599 = vunpack.c.l.b16 %v109
  %v1600 = vunpack.c.h.b16 %v109
  %v1601 = vunpack.c.l.b16 %v110
  %v1602 = vunpack.c.h.b16 %v110
  %v1603 = vunpack.c.l.b16 %v111
  %v1604 = vunpack.c.h.b16 %v111
  %v1605 = vunpack.c.l.b16 %v112
  %v1606 = vunpack.c.h.b16 %v112
  %v1607 = vunpack.c.l.b16 %v113
  %v1608 = vunpack.c.h.b16 %v113
  %v1609 = vunpack.c.l.b16 %v114
  %v1610 = vunpack.c.h.b16 %v114
  %v1611 = vunpack.c.l.b16 %v115
  %v1612 = vunpack.c.h.b16 %v115
  %v1613 = vunpack.c.l.b16 %v116
  %v1614 = vunpack.c.h.b16 %v116
  %v1615 = vunpack.c.l.b16 %v117
  %v1616 = vunpack.c.h.b16 %v117
  %v1617 = vunpack.c.l.b16 %v118
  %v1618 = vunpack.c.h.b16 %v118
  %v1619 = vunpack.c.l.b16 %v119
  %v1620 = vunpack.c.h.b16 %v119
  %v1621 = vunpack.c.l.b16 %v120
  %v1622 = vunpack.c.h.b16 %v120
  %v1623 = vunpack.c.l.b16 %v121
  %v1624 = vunpack.c.h.b16 %v121
  %v1625 = vunpack.c.l.b16 %v122
  %v1626 = vunpack.c.h.b16 %v122
  %v1627 = vunpack.c.l.b16 %v123
  %v1628 = vunpack.c.h.b16 %v123
  %v1629 = vunpack.c.l.b16 %v124
  %v1630 = vunpack.c.h.b16 %v124
  %v1631 = vunpack.c.l.b16 %v125
  %v1632 = vunpack.c.h.b16 %v125
  %v1633 = vunpack.c.l.b16 %v126
  %v1634 = vunpack.c.h.b16 %v126
  %v1635 = vunpack.c.l.b16 %v127
  %v1636 = vunpack.c.h.b16 %v127
  %v1637 = vunpack.c.l.b16 %v128
  %v1638 = vunpack.c.h.b16 %v128
  %v1639 = vunpack.c.l.b16 %v129
  %v1640 = vunpack.c.h.b16 %v129
  %v1641 = vunpack.c.l.b16 %v130
  %v1642 = vunpack.c.h.b16 %v130
  %v1643 = vunpack.c.l.b16 %v131
  %v1644 = vunpack.c.h.b16 %v131
  %v1645 = vunpack.c.l.b16 %v132
  %v1646 = vunpack.c.h.b16 %v132
  %v1647 = vunpack.c.l.b16 %v133
  %v1648 = vunpack.c.h.b16 %v133
  %v1649 = vunpack.c.l.b16 %v134
  %v1650 = vunpack.c.h.b16 %v134
  %v1651 = vunpack.c.l.b16 %v135
  %v1652 = vunpack.c.h.b16 %v135
  %v1653 = vunpack.c.l.b16 %v136
  %v1654 = vunpack.c.h.b16 %v136
  %v1655 = vunpack.c.l.b16 %v137
  %v1656 = vunpack.c.h.b16 %v137
  %v1657 = vunpack.c.l.b16 %v138
  %v1658 = vunpack.c.h.b16 %v138
  %v1659 = vunpack.c.l.b16 %v139
  %v1660 = vunpack.c.h.b16 %v139
  %v1661 = vunpack.c.l.b16 %v140
  %v1662 = vunpack.c.h.b16 %v140
  %v1663 = vunpack.c.l.b16 %v141
  %v1664 = vunpack.c.h.b16 %v141
  %v1665 = vunpack.c.l.b16 %v142
  %v1666 = vunpack.c.h.b16 %v142
  %v1667 = vunpack.c.l.b16 %v143
  %v1668 = vunpack.c.h.b16 %v143
  %v1669 = vunpack.c.l.b16 %v144
  %v1670 = vunpack.c.h.b16 %v144
  %v1671 = vunpack.c.l.b16 %v145
  %v1672 = vunpack.c.h.b16 %v145
  %v1673 = vunpack.c.l.b16 %v146
  %v1674 = vunpack.c.h.b16 %v146
  %v1675 = vunpack.c.l.b16 %v147
  %v1676 = vunpack.c.h.b16 %v147
  %v1677 = vunpack.c.l.b16 %v148
  %v1678 = vunpack.c.h.b16 %v148
  %v1679 = vunpack.c.l.b16 %v149
  %v1680 = vunpack.c.h.b16 %v149
  %v1681 = vunpack.c.l.b16 %v150
  %v1682 = vunpack.c.h.b16 %v150
  %v1683 = vunpack.c.l.b16 %v151
  %v1684 = vunpack.c.h.b16 %v151
  %v1685 = vunpack.c.l.b16 %v152
  %v1686 = vunpack.c.h.b16 %v152
  %v1687 = vunpack.c.l.b16 %v153
  %v1688 = vunpack.c.h.b16 %v153
  %v1689 = vunpack.c.l.b16 %v154
  %v1690 = vunpack.c.h.b16 %v154
  %v1691 = vpack.c.b16 %v1439, %v1435
  %v1692 = vpack.c.b16 %v1440, %v1436
  %v1693 = vpack.c.b16 %v1441, %v1437
  %v1694 = vpack.c.b16 %v1442, %v1438
  %v1695 = vpack.c.b16 %v1447, %v1443
  %v1696 = vpack.c.b16 %v1448, %v1444
  %v1697 = vpack.c.b16 %v1449, %v1445
  %v1698 = vpack.c.b16 %v1450, %v1446
  %v1699 = vpack.c.b16 %v1455, %v1451
  %v1700 = vpack.c.b16 %v1456, %v1452
  %v1701 = vpack.c.b16 %v1457, %v1453
  %v1702 = vpack.c.b16 %v1458, %v1454
  %v1703 = vpack.c.b16 %v1463, %v1459
  %v1704 = vpack.c.b16 %v1464, %v1460
  %v1705 = vpack.c.b16 %v1465, %v1461
  %v1706 = vpack.c.b16 %v1466, %v1462
  %v1707 = vpack.c.b16 %v1471, %v1467
  %v1708 = vpack.c.b16 %v1472, %v1468
  %v1709 = vpack.c.b16 %v1473, %v1469
  %v1710 = vpack.c.b16 %v1474, %v1470
  %v1711 = vpack.c.b16 %v1479, %v1475
  %v1712 = vpack.c.b16 %v1480, %v1476
  %v1713 = vpack.c.b16 %v1481, %v1477
  %v1714 = vpack.c.b16 %v1482, %v1478
  %v1715 = vpack.c.b16 %v1487, %v1483
  %v1716 = vpack.c.b16 %v1488, %v1484
  %v1717 = vpack.c.b16 %v1489, %v1485
  %v1718 = vpack.c.b16 %v1490, %v1486
  %v1719 = vpack.c.b16 %v1495, %v1491
  %v1720 = vpack.c.b16 %v1496, %v1492
  %v1721 = vpack.c.b16 %v1497, %v1493
  %v1722 = vpack.c.b16 %v1498, %v1494
  %v1723 = vpack.c.b16 %v1503, %v1499
  %v1724 = vpack.c.b16 %v1504, %v1500
  %v1725 = vpack.c.b16 %v1505, %v1501
  %v1726 = vpack.c.b16 %v1506, %v1502
  %v1727 = vpack.c.b16 %v1511, %v1507
  %v1728 = vpack.c.b16 %v1512, %v1508
  %v1729 = vpack.c.b16 %v1513, %v1509
  %v1730 = vpack.c.b16 %v1514, %v1510
  %v1731 = vpack.c.b16 %v1519, %v1515
  %v1732 = vpack.c.b16 %v1520, %v1516
  %v1733 = vpack.c.b16 %v1521, %v1517
  %v1734 = vpack.c.b16 %v1522, %v1518
  %v1735 = vpack.c.b16 %v1527, %v1523
  %v1736 = vpack.c.b16 %v1528, %v1524
  %v1737 = vpack.c.b16 %v1529, %v1525
  %v1738 = vpack.c.b16 %v1530, %v1526
  %v1739 = vpack.c.b16 %v1535, %v1531
  %v1740 = vpack.c.b16 %v1536, %v1532
  %v1741 = vpack.c.b16 %v1537, %v1533
  %v1742 = vpack.c.b16 %v1538, %v1534
  %v1743 = vpack.c.b16 %v1543, %v1539
  %v1744 = vpack.c.b16 %v1544, %v1540
  %v1745 = vpack.c.b16 %v1545, %v1541
  %v1746 = vpack.c.b16 %v1546, %v1542
  %v1747 = vpack.c.b16 %v1551, %v1547
  %v1748 = vpack.c.b16 %v1552, %v1548
  %v1749 = vpack.c.b16 %v1553, %v1549
  %v1750 = vpack.c.b16 %v1554, %v1550
  %v1751 = vpack.c.b16 %v1559, %v1555
  %v1752 = vpack.c.b16 %v1560, %v1556
  %v1753 = vpack.c.b16 %v1561, %v1557
  %v1754 = vpack.c.b16 %v1562, %v1558
  %v1755 = vpack.c.b16 %v1567, %v1563
  %v1756 = vpack.c.b16 %v1568, %v1564
  %v1757 = vpack.c.b16 %v1569, %v1565
  %v1758 = vpack.c.b16 %v1570, %v1566
  %v1759 = vpack.c.b16 %v1575, %v1571
  %v1760 = vpack.c.b16 %v1576, %v1572
  %v1761 = vpack.c.b16 %v1577, %v1573
  %v1762 = vpack.c.b16 %v1578, %v1574
  %v1763 = vpack.c.b16 %v1583, %v1579
  %v1764 = vpack.c.b16 %v1584, %v1580
  %v1765 = vpack.c.b16 %v1585, %v1581
  %v1766 = vpack.c.b16 %v1586, %v1582
  %v1767 = vpack.c.b16 %v1591, %v1587
  %v1768 = vpack.c.b16 %v1592, %v1588
  %v1769 = vpack.c.b16 %v1593, %v1589
  %v1770 = vpack.c.b16 %v1594, %v1590
  %v1771 = vpack.c.b16 %v1599, %v1595
  %v1772 = vpack.c.b16 %v1600, %v1596
  %v1773 = vpack.c.b16 %v1601, %v1597
  %v1774 = vpack.c.b16 %v1602, %v1598
  %v1775 = vpack.c.b16 %v1607, %v1603
  %v1776 = vpack.c.b16 %v1608, %v1604
  %v1777 = vpack.c.b16 %v1609, %v1605
  %v1778 = vpack.c.b16 %v1610, %v1606
  %v1779 = vpack.c.b16 %v1615, %v1611
  %v1780 = vpack.c.b16 %v1616, %v1612
  %v1781 = vpack.c.b16 %v1617, %v1613
  %v1782 = vpack.c.b16 %v1618, %v1614
  %v1783 = vpack.c.b16 %v1623, %v1619
  %v1784 = vpack.c.b16 %v1624, %v1620
  %v1785 = vpack.c.b16 %v1625, %v1621
  %v1786 = vpack.c.b16 %v1626, %v1622
  %v1787 = vpack.c.b16 %v1631, %v1627
  %v1788 = vpack.c.b16 %v1632, %v1628
  %v1789 = vpack.c.b16 %v1633, %v1629
  %v1790 = vpack.c.b16 %v1634, %v1630
  %v1791 = vpack.c.b16 %v1639, %v1635
  %v1792 = vpack.c.b16 %v1640, %v1636
  %v1793 = vpack.c.b16 %v1641, %v1637
  %v1794 = vpack.c.b16 %v1642, %v1638
  %v1795 = vpack.c.b16 %v1647, %v1643
  %v1796 = vpack.c.b16 %v1648, %v1644
  %v1797 = vpack.c.b16 %v1649, %v1645
  %v1798 = vpack.c.b16 %v1650, %v1646
  %v1799 = vpack.c.b16 %v1655, %v1651
  %v1800 = vpack.c.b16 %v1656, %v1652
  %v1801 = vpack.c.b16 %v1657, %v1653
  %v1802 = vpack.c.b16 %v1658, %v1654
  %v1803 = vpack.c.b16 %v1663, %v1659
  %v1804 = vpack.c.b16 %v1664, %v1660
  %v1805 = vpack.c.b16 %v1665, %v1661
  %v1806 = vpack.c.b16 %v1666, %v1662
  %v1807 = vpack.c.b16 %v1671, %v1667
  %v1808 = vpack.c.b16 %v1672, %v1668
  %v1809 = vpack.c.b16 %v1673, %v1669
  %v1810 = vpack.c.b16 %v1674, %v1670
  %v1811 = vpack.c.b16 %v1679, %v1675
  %v1812 = vpack.c.b16 %v1680, %v1676
  %v1813 = vpack.c.b16 %v1681, %v1677
  %v1814 = vpack.c.b16 %v1682, %v1678
  %v1815 = vpack.c.b16 %v1687, %v1683
  %v1816 = vpack.c.b16 %v1688, %v1684
  %v1817 = vpack.c.b16 %v1689, %v1685
  %v1818 = vpack.c.b16 %v1690, %v1686
  %1947 = vmatprep.subr.bf16.mxu0 %v1692
  %1948 = vmatpush1.bf16.msra.mxu0 %v1691
  %1949 = vmatprep.subr.bf16.mxu0 %v1696
  %1950 = vmatpush1.bf16.msra.mxu0 %v1695
  %1951 = vmatprep.subr.bf16.mxu0 %v1700
  %1952 = vmatpush1.bf16.msra.mxu0 %v1699
  %1953 = vmatprep.subr.bf16.mxu0 %v1704
  %1954 = vmatpush1.bf16.msra.mxu0 %v1703
  %1955 = vmatprep.subr.bf16.mxu0 %v1708
  %1956 = vmatpush1.bf16.msra.mxu0 %v1707
  %1957 = vmatprep.subr.bf16.mxu0 %v1712
  %1958 = vmatpush1.bf16.msra.mxu0 %v1711
  %1959 = vmatprep.subr.bf16.mxu0 %v1716
  %1960 = vmatpush1.bf16.msra.mxu0 %v1715
  %1961 = vmatprep.subr.bf16.mxu0 %v1720
  %1962 = vmatpush1.bf16.msra.mxu0 %v1719
  %1963 = vmatprep.subr.bf16.mxu0 %v1724
  %1964 = vmatpush1.bf16.msra.mxu0 %v1723
  %1965 = vmatprep.subr.bf16.mxu0 %v1728
  %1966 = vmatpush1.bf16.msra.mxu0 %v1727
  %1967 = vmatprep.subr.bf16.mxu0 %v1732
  %1968 = vmatpush1.bf16.msra.mxu0 %v1731
  %1969 = vmatprep.subr.bf16.mxu0 %v1736
  %1970 = vmatpush1.bf16.msra.mxu0 %v1735
  %1971 = vmatprep.subr.bf16.mxu0 %v1740
  %1972 = vmatpush1.bf16.msra.mxu0 %v1739
  %1973 = vmatprep.subr.bf16.mxu0 %v1744
  %1974 = vmatpush1.bf16.msra.mxu0 %v1743
  %1975 = vmatprep.subr.bf16.mxu0 %v1748
  %1976 = vmatpush1.bf16.msra.mxu0 %v1747
  %1977 = vmatprep.subr.bf16.mxu0 %v1752
  %1978 = vmatpush1.bf16.msra.mxu0 %v1751
  %1979 = vmatprep.mubr.bf16.mxu0 %v1292
  %1980 = vmatmul.mubr.bf16.gmra.mrb[0].mxu0 %v1291
  %v1981 = vpop.f32.mrb[0].mxu0
  %v1982 = vadd.f32 %v1143, %v1981
  %v1983 = vpop.f32.mrb[0].mxu0
  %v1984 = vadd.f32 %v1145, %v1983
  %v1985 = vpop.f32.mrb[0].mxu0
  %v1986 = vadd.f32 %v1147, %v1985
  %v1987 = vpop.f32.mrb[0].mxu0
  %v1988 = vadd.f32 %v1149, %v1987
  %1989 = vmatprep.mubr.bf16.mxu0 %v1296
  %1990 = vmatmul.mubr.bf16.gmra.mrb[0].mxu0 %v1295
  %v1991 = vpop.f32.mrb[0].mxu0
  %v1992 = vadd.f32 %v1153, %v1991
  %v1993 = vpop.f32.mrb[0].mxu0
  %v1994 = vadd.f32 %v1155, %v1993
  %v1995 = vpop.f32.mrb[0].mxu0
  %v1996 = vadd.f32 %v1157, %v1995
  %v1997 = vpop.f32.mrb[0].mxu0
  %v1998 = vadd.f32 %v1159, %v1997
  %1999 = vdwg.mxu0
  %2000 = vmatprep.subr.bf16.mxu0 %v1756
  %2001 = vmatpush1.bf16.msra.mxu0 %v1755
  %2002 = vmatprep.subr.bf16.mxu0 %v1760
  %2003 = vmatpush1.bf16.msra.mxu0 %v1759
  %2004 = vmatprep.subr.bf16.mxu0 %v1764
  %2005 = vmatpush1.bf16.msra.mxu0 %v1763
  %2006 = vmatprep.subr.bf16.mxu0 %v1768
  %2007 = vmatpush1.bf16.msra.mxu0 %v1767
  %2008 = vmatprep.subr.bf16.mxu0 %v1772
  %2009 = vmatpush1.bf16.msra.mxu0 %v1771
  %2010 = vmatprep.subr.bf16.mxu0 %v1776
  %2011 = vmatpush1.bf16.msra.mxu0 %v1775
  %2012 = vmatprep.subr.bf16.mxu0 %v1780
  %2013 = vmatpush1.bf16.msra.mxu0 %v1779
  %2014 = vmatprep.subr.bf16.mxu0 %v1784
  %2015 = vmatpush1.bf16.msra.mxu0 %v1783
  %2016 = vmatprep.subr.bf16.mxu0 %v1788
  %2017 = vmatpush1.bf16.msra.mxu0 %v1787
  %2018 = vmatprep.subr.bf16.mxu0 %v1792
  %2019 = vmatpush1.bf16.msra.mxu0 %v1791
  %2020 = vmatprep.subr.bf16.mxu0 %v1796
  %2021 = vmatpush1.bf16.msra.mxu0 %v1795
  %2022 = vmatprep.subr.bf16.mxu0 %v1800
  %2023 = vmatpush1.bf16.msra.mxu0 %v1799
  %2024 = vmatprep.subr.bf16.mxu0 %v1804
  %2025 = vmatpush1.bf16.msra.mxu0 %v1803
  %2026 = vmatprep.subr.bf16.mxu0 %v1808
  %2027 = vmatpush1.bf16.msra.mxu0 %v1807
  %2028 = vmatprep.subr.bf16.mxu0 %v1812
  %2029 = vmatpush1.bf16.msra.mxu0 %v1811
  %2030 = vmatprep.subr.bf16.mxu0 %v1816
  %2031 = vmatpush1.bf16.msra.mxu0 %v1815
  %2032 = vmatprep.mubr.bf16.mxu0 %v1294
  %2033 = vmatmul.mubr.bf16.gmra.mrb[0].mxu0 %v1293
  %v2034 = vpop.f32.mrb[0].mxu0
  %v2035 = vadd.f32 %v1982, %v2034
  %v2036 = vpop.f32.mrb[0].mxu0
  %v2037 = vadd.f32 %v1984, %v2036
  %v2038 = vpop.f32.mrb[0].mxu0
  %v2039 = vadd.f32 %v1986, %v2038
  %v2040 = vpop.f32.mrb[0].mxu0
  %v2041 = vadd.f32 %v1988, %v2040
  %2042 = vmatprep.mubr.bf16.mxu0 %v1298
  %2043 = vmatmul.mubr.bf16.gmra.mrb[0].mxu0 %v1297
  %v2044 = vpop.f32.mrb[0].mxu0
  %v2045 = vadd.f32 %v1992, %v2044
  %v2046 = vpop.f32.mrb[0].mxu0
  %v2047 = vadd.f32 %v1994, %v2046
  %v2048 = vpop.f32.mrb[0].mxu0
  %v2049 = vadd.f32 %v1996, %v2048
  %v2050 = vpop.f32.mrb[0].mxu0
  %v2051 = vadd.f32 %v1998, %v2050
  %2052 = vdwg.mxu0
  %2053 = vmatprep.subr.bf16.mxu0 %v1694
  %2054 = vmatpush1.bf16.msra.mxu0 %v1693
  %2055 = vmatprep.subr.bf16.mxu0 %v1698
  %2056 = vmatpush1.bf16.msra.mxu0 %v1697
  %2057 = vmatprep.subr.bf16.mxu0 %v1702
  %2058 = vmatpush1.bf16.msra.mxu0 %v1701
  %2059 = vmatprep.subr.bf16.mxu0 %v1706
  %2060 = vmatpush1.bf16.msra.mxu0 %v1705
  %2061 = vmatprep.subr.bf16.mxu0 %v1710
  %2062 = vmatpush1.bf16.msra.mxu0 %v1709
  %2063 = vmatprep.subr.bf16.mxu0 %v1714
  %2064 = vmatpush1.bf16.msra.mxu0 %v1713
  %2065 = vmatprep.subr.bf16.mxu0 %v1718
  %2066 = vmatpush1.bf16.msra.mxu0 %v1717
  %2067 = vmatprep.subr.bf16.mxu0 %v1722
  %2068 = vmatpush1.bf16.msra.mxu0 %v1721
  %2069 = vmatprep.subr.bf16.mxu0 %v1726
  %2070 = vmatpush1.bf16.msra.mxu0 %v1725
  %2071 = vmatprep.subr.bf16.mxu0 %v1730
  %2072 = vmatpush1.bf16.msra.mxu0 %v1729
  %2073 = vmatprep.subr.bf16.mxu0 %v1734
  %2074 = vmatpush1.bf16.msra.mxu0 %v1733
  %2075 = vmatprep.subr.bf16.mxu0 %v1738
  %2076 = vmatpush1.bf16.msra.mxu0 %v1737
  %2077 = vmatprep.subr.bf16.mxu0 %v1742
  %2078 = vmatpush1.bf16.msra.mxu0 %v1741
  %2079 = vmatprep.subr.bf16.mxu0 %v1746
  %2080 = vmatpush1.bf16.msra.mxu0 %v1745
  %2081 = vmatprep.subr.bf16.mxu0 %v1750
  %2082 = vmatpush1.bf16.msra.mxu0 %v1749
  %2083 = vmatprep.subr.bf16.mxu0 %v1754
  %2084 = vmatpush1.bf16.msra.mxu0 %v1753
  %2085 = vmatprep.mubr.bf16.mxu0 %v1292
  %2086 = vmatmul.mubr.bf16.gmra.mrb[0].mxu0 %v1291
  %v2087 = vpop.f32.mrb[0].mxu0
  %v2088 = vadd.f32 %v1249, %v2087
  %v2089 = vpop.f32.mrb[0].mxu0
  %v2090 = vadd.f32 %v1251, %v2089
  %v2091 = vpop.f32.mrb[0].mxu0
  %v2092 = vadd.f32 %v1253, %v2091
  %v2093 = vpop.f32.mrb[0].mxu0
  %v2094 = vadd.f32 %v1255, %v2093
  %2095 = vmatprep.mubr.bf16.mxu0 %v1296
  %2096 = vmatmul.mubr.bf16.gmra.mrb[0].mxu0 %v1295
  %v2097 = vpop.f32.mrb[0].mxu0
  %v2098 = vadd.f32 %v1259, %v2097
  %v2099 = vpop.f32.mrb[0].mxu0
  %v2100 = vadd.f32 %v1261, %v2099
  %v2101 = vpop.f32.mrb[0].mxu0
  %v2102 = vadd.f32 %v1263, %v2101
  %v2103 = vpop.f32.mrb[0].mxu0
  %v2104 = vadd.f32 %v1265, %v2103
  %2105 = vdwg.mxu0
  %2106 = vmatprep.subr.bf16.mxu0 %v1758
  %2107 = vmatpush1.bf16.msra.mxu0 %v1757
  %2108 = vmatprep.subr.bf16.mxu0 %v1762
  %2109 = vmatpush1.bf16.msra.mxu0 %v1761
  %2110 = vmatprep.subr.bf16.mxu0 %v1766
  %2111 = vmatpush1.bf16.msra.mxu0 %v1765
  %2112 = vmatprep.subr.bf16.mxu0 %v1770
  %2113 = vmatpush1.bf16.msra.mxu0 %v1769
  %2114 = vmatprep.subr.bf16.mxu0 %v1774
  %2115 = vmatpush1.bf16.msra.mxu0 %v1773
  %2116 = vmatprep.subr.bf16.mxu0 %v1778
  %2117 = vmatpush1.bf16.msra.mxu0 %v1777
  %2118 = vmatprep.subr.bf16.mxu0 %v1782
  %2119 = vmatpush1.bf16.msra.mxu0 %v1781
  %2120 = vmatprep.subr.bf16.mxu0 %v1786
  %2121 = vmatpush1.bf16.msra.mxu0 %v1785
  %2122 = vmatprep.subr.bf16.mxu0 %v1790
  %2123 = vmatpush1.bf16.msra.mxu0 %v1789
  %2124 = vmatprep.subr.bf16.mxu0 %v1794
  %2125 = vmatpush1.bf16.msra.mxu0 %v1793
  %2126 = vmatprep.subr.bf16.mxu0 %v1798
  %2127 = vmatpush1.bf16.msra.mxu0 %v1797
  %2128 = vmatprep.subr.bf16.mxu0 %v1802
  %2129 = vmatpush1.bf16.msra.mxu0 %v1801
  %2130 = vmatprep.subr.bf16.mxu0 %v1806
  %2131 = vmatpush1.bf16.msra.mxu0 %v1805
  %2132 = vmatprep.subr.bf16.mxu0 %v1810
  %2133 = vmatpush1.bf16.msra.mxu0 %v1809
  %2134 = vmatprep.subr.bf16.mxu0 %v1814
  %2135 = vmatpush1.bf16.msra.mxu0 %v1813
  %2136 = vmatprep.subr.bf16.mxu0 %v1818
  %2137 = vmatpush1.bf16.msra.mxu0 %v1817
  %2138 = vmatprep.mubr.bf16.mxu0 %v1294
  %2139 = vmatmul.mubr.bf16.gmra.mrb[0].mxu0 %v1293
  %v2140 = vpop.f32.mrb[0].mxu0
  %v2141 = vadd.f32 %v2088, %v2140
  %v2142 = vpop.f32.mrb[0].mxu0
  %v2143 = vadd.f32 %v2090, %v2142
  %v2144 = vpop.f32.mrb[0].mxu0
  %v2145 = vadd.f32 %v2092, %v2144
  %v2146 = vpop.f32.mrb[0].mxu0
  %v2147 = vadd.f32 %v2094, %v2146
  %2148 = vmatprep.mubr.bf16.mxu0 %v1298
  %2149 = vmatmul.mubr.bf16.gmra.mrb[0].mxu0 %v1297
  %v2150 = vpop.f32.mrb[0].mxu0
  %v2151 = vadd.f32 %v2098, %v2150
  %v2152 = vpop.f32.mrb[0].mxu0
  %v2153 = vadd.f32 %v2100, %v2152
  %v2154 = vpop.f32.mrb[0].mxu0
  %v2155 = vadd.f32 %v2102, %v2154
  %v2156 = vpop.f32.mrb[0].mxu0
  %v2157 = vadd.f32 %v2104, %v2156
  %2158 = vdwg.mxu0
  %vm2163 = vcmask 1042432
  %vm2164 = vcmask 1046532
  %vm2165 = vmor %vm2163, %vm2164
  %v2166 = vrot.slane %v15, 5
  %v2167 = vrot.slane %v2166, 4
  %v2168 = vrot.slane %v17, 5
  %v2169 = vsel %vm2165, %v2167, %v2168
  %v2170 = vrot.slane %v16, 5
  %v2171 = vrot.slane %v2170, 4
  %v2172 = vrot.slane %v18, 5
  %v2173 = vsel %vm2165, %v2171, %v2172
  %v2174 = vrot.slane %v2168, 4
  %v2175 = vrot.slane %v19, 5
  %v2176 = vsel %vm2165, %v2174, %v2175
  %v2177 = vrot.slane %v2172, 4
  %v2178 = vrot.slane %v20, 5
  %v2179 = vsel %vm2165, %v2177, %v2178
  %v2180 = vrot.slane %v21, 5
  %v2181 = vrot.slane %v2180, 4
  %v2182 = vrot.slane %v23, 5
  %v2183 = vsel %vm2165, %v2181, %v2182
  %v2184 = vrot.slane %v22, 5
  %v2185 = vrot.slane %v2184, 4
  %v2186 = vrot.slane %v24, 5
  %v2187 = vsel %vm2165, %v2185, %v2186
  %v2188 = vrot.slane %v2182, 4
  %v2189 = vrot.slane %v25, 5
  %v2190 = vsel %vm2165, %v2188, %v2189
  %v2191 = vrot.slane %v2186, 4
  %v2192 = vrot.slane %v26, 5
  %v2193 = vsel %vm2165, %v2191, %v2192
  %s2194 = scalar_lea.vmem %s1, 2048
  %v2195 = vld [vmem:[%s2194] sm:$0xff]
  %v2196 = vld [vmem:[%s2194 + $0x8] sm:$0xff]
  %v2197 = vld [vmem:[%s2194 + $0x10] sm:$0xff]
  %v2198 = vld [vmem:[%s2194 + $0x18] sm:$0xff]
  %v2199 = vld [vmem:[%s2194 + $0x20] sm:$0xff]
  %v2200 = vld [vmem:[%s2194 + $0x28] sm:$0xff]
  %v2201 = vld [vmem:[%s2194 + $0x30] sm:$0xff]
  %v2202 = vld [vmem:[%s2194 + $0x38] sm:$0xff]
  %v2203 = vld [vmem:[%s2194 + $0x40] sm:$0xff]
  %v2204 = vld [vmem:[%s2194 + $0x48] sm:$0xff]
  %v2205 = vld [vmem:[%s2194 + $0x50] sm:$0xff]
  %v2206 = vld [vmem:[%s2194 + $0x58] sm:$0xff]
  %v2207 = vld [vmem:[%s2194 + $0x60] sm:$0xff]
  %v2208 = vld [vmem:[%s2194 + $0x68] sm:$0xff]
  %v2209 = vld [vmem:[%s2194 + $0x70] sm:$0xff]
  %v2210 = vld [vmem:[%s2194 + $0x78] sm:$0xff]
  %v2211 = vld [vmem:[%s2194 + $0x80] sm:$0xff]
  %v2212 = vld [vmem:[%s2194 + $0x88] sm:$0xff]
  %v2213 = vld [vmem:[%s2194 + $0x90] sm:$0xff]
  %v2214 = vld [vmem:[%s2194 + $0x98] sm:$0xff]
  %v2215 = vld [vmem:[%s2194 + $0xa0] sm:$0xff]
  %v2216 = vld [vmem:[%s2194 + $0xa8] sm:$0xff]
  %v2217 = vld [vmem:[%s2194 + $0xb0] sm:$0xff]
  %v2218 = vld [vmem:[%s2194 + $0xb8] sm:$0xff]
  %v2219 = vld [vmem:[%s2194 + $0xc0] sm:$0xff]
  %v2220 = vld [vmem:[%s2194 + $0xc8] sm:$0xff]
  %v2221 = vld [vmem:[%s2194 + $0xd0] sm:$0xff]
  %v2222 = vld [vmem:[%s2194 + $0xd8] sm:$0xff]
  %v2223 = vld [vmem:[%s2194 + $0xe0] sm:$0xff]
  %v2224 = vld [vmem:[%s2194 + $0xe8] sm:$0xff]
  %v2225 = vld [vmem:[%s2194 + $0xf0] sm:$0xff]
  %v2226 = vld [vmem:[%s2194 + $0xf8] sm:$0xff]
  %v2227 = vld [vmem:[%s2194 + $0x100] sm:$0xff]
  %v2228 = vld [vmem:[%s2194 + $0x108] sm:$0xff]
  %v2229 = vld [vmem:[%s2194 + $0x110] sm:$0xff]
  %v2230 = vld [vmem:[%s2194 + $0x118] sm:$0xff]
  %v2231 = vld [vmem:[%s2194 + $0x120] sm:$0xff]
  %v2232 = vld [vmem:[%s2194 + $0x128] sm:$0xff]
  %v2233 = vld [vmem:[%s2194 + $0x130] sm:$0xff]
  %v2234 = vld [vmem:[%s2194 + $0x138] sm:$0xff]
  %v2235 = vld [vmem:[%s2194 + $0x140] sm:$0xff]
  %v2236 = vld [vmem:[%s2194 + $0x148] sm:$0xff]
  %v2237 = vld [vmem:[%s2194 + $0x150] sm:$0xff]
  %v2238 = vld [vmem:[%s2194 + $0x158] sm:$0xff]
  %v2239 = vld [vmem:[%s2194 + $0x160] sm:$0xff]
  %v2240 = vld [vmem:[%s2194 + $0x168] sm:$0xff]
  %v2241 = vld [vmem:[%s2194 + $0x170] sm:$0xff]
  %v2242 = vld [vmem:[%s2194 + $0x178] sm:$0xff]
  %v2243 = vld [vmem:[%s2194 + $0x180] sm:$0xff]
  %v2244 = vld [vmem:[%s2194 + $0x188] sm:$0xff]
  %v2245 = vld [vmem:[%s2194 + $0x190] sm:$0xff]
  %v2246 = vld [vmem:[%s2194 + $0x198] sm:$0xff]
  %v2247 = vld [vmem:[%s2194 + $0x1a0] sm:$0xff]
  %v2248 = vld [vmem:[%s2194 + $0x1a8] sm:$0xff]
  %v2249 = vld [vmem:[%s2194 + $0x1b0] sm:$0xff]
  %v2250 = vld [vmem:[%s2194 + $0x1b8] sm:$0xff]
  %v2251 = vld [vmem:[%s2194 + $0x1c0] sm:$0xff]
  %v2252 = vld [vmem:[%s2194 + $0x1c8] sm:$0xff]
  %v2253 = vld [vmem:[%s2194 + $0x1d0] sm:$0xff]
  %v2254 = vld [vmem:[%s2194 + $0x1d8] sm:$0xff]
  %v2255 = vld [vmem:[%s2194 + $0x1e0] sm:$0xff]
  %v2256 = vld [vmem:[%s2194 + $0x1e8] sm:$0xff]
  %v2257 = vld [vmem:[%s2194 + $0x1f0] sm:$0xff]
  %v2258 = vld [vmem:[%s2194 + $0x1f8] sm:$0xff]
  %v2259 = vld [vmem:[%s2194 + $0x200] sm:$0xff]
  %v2260 = vld [vmem:[%s2194 + $0x208] sm:$0xff]
  %v2261 = vld [vmem:[%s2194 + $0x210] sm:$0xff]
  %v2262 = vld [vmem:[%s2194 + $0x218] sm:$0xff]
  %v2263 = vld [vmem:[%s2194 + $0x220] sm:$0xff]
  %v2264 = vld [vmem:[%s2194 + $0x228] sm:$0xff]
  %v2265 = vld [vmem:[%s2194 + $0x230] sm:$0xff]
  %v2266 = vld [vmem:[%s2194 + $0x238] sm:$0xff]
  %v2267 = vld [vmem:[%s2194 + $0x240] sm:$0xff]
  %v2268 = vld [vmem:[%s2194 + $0x248] sm:$0xff]
  %v2269 = vld [vmem:[%s2194 + $0x250] sm:$0xff]
  %v2270 = vld [vmem:[%s2194 + $0x258] sm:$0xff]
  %v2271 = vld [vmem:[%s2194 + $0x260] sm:$0xff]
  %v2272 = vld [vmem:[%s2194 + $0x268] sm:$0xff]
  %v2273 = vld [vmem:[%s2194 + $0x270] sm:$0xff]
  %v2274 = vld [vmem:[%s2194 + $0x278] sm:$0xff]
  %v2275 = vld [vmem:[%s2194 + $0x280] sm:$0xff]
  %v2276 = vld [vmem:[%s2194 + $0x288] sm:$0xff]
  %v2277 = vld [vmem:[%s2194 + $0x290] sm:$0xff]
  %v2278 = vld [vmem:[%s2194 + $0x298] sm:$0xff]
  %v2279 = vld [vmem:[%s2194 + $0x2a0] sm:$0xff]
  %v2280 = vld [vmem:[%s2194 + $0x2a8] sm:$0xff]
  %v2281 = vld [vmem:[%s2194 + $0x2b0] sm:$0xff]
  %v2282 = vld [vmem:[%s2194 + $0x2b8] sm:$0xff]
  %v2283 = vld [vmem:[%s2194 + $0x2c0] sm:$0xff]
  %v2284 = vld [vmem:[%s2194 + $0x2c8] sm:$0xff]
  %v2285 = vld [vmem:[%s2194 + $0x2d0] sm:$0xff]
  %v2286 = vld [vmem:[%s2194 + $0x2d8] sm:$0xff]
  %v2287 = vld [vmem:[%s2194 + $0x2e0] sm:$0xff]
  %v2288 = vld [vmem:[%s2194 + $0x2e8] sm:$0xff]
  %v2289 = vld [vmem:[%s2194 + $0x2f0] sm:$0xff]
  %v2290 = vld [vmem:[%s2194 + $0x2f8] sm:$0xff]
  %v2291 = vld [vmem:[%s2194 + $0x300] sm:$0xff]
  %v2292 = vld [vmem:[%s2194 + $0x308] sm:$0xff]
  %v2293 = vld [vmem:[%s2194 + $0x310] sm:$0xff]
  %v2294 = vld [vmem:[%s2194 + $0x318] sm:$0xff]
  %v2295 = vld [vmem:[%s2194 + $0x320] sm:$0xff]
  %v2296 = vld [vmem:[%s2194 + $0x328] sm:$0xff]
  %v2297 = vld [vmem:[%s2194 + $0x330] sm:$0xff]
  %v2298 = vld [vmem:[%s2194 + $0x338] sm:$0xff]
  %v2299 = vld [vmem:[%s2194 + $0x340] sm:$0xff]
  %v2300 = vld [vmem:[%s2194 + $0x348] sm:$0xff]
  %v2301 = vld [vmem:[%s2194 + $0x350] sm:$0xff]
  %v2302 = vld [vmem:[%s2194 + $0x358] sm:$0xff]
  %v2303 = vld [vmem:[%s2194 + $0x360] sm:$0xff]
  %v2304 = vld [vmem:[%s2194 + $0x368] sm:$0xff]
  %v2305 = vld [vmem:[%s2194 + $0x370] sm:$0xff]
  %v2306 = vld [vmem:[%s2194 + $0x378] sm:$0xff]
  %v2307 = vld [vmem:[%s2194 + $0x380] sm:$0xff]
  %v2308 = vld [vmem:[%s2194 + $0x388] sm:$0xff]
  %v2309 = vld [vmem:[%s2194 + $0x390] sm:$0xff]
  %v2310 = vld [vmem:[%s2194 + $0x398] sm:$0xff]
  %v2311 = vld [vmem:[%s2194 + $0x3a0] sm:$0xff]
  %v2312 = vld [vmem:[%s2194 + $0x3a8] sm:$0xff]
  %v2313 = vld [vmem:[%s2194 + $0x3b0] sm:$0xff]
  %v2314 = vld [vmem:[%s2194 + $0x3b8] sm:$0xff]
  %v2315 = vld [vmem:[%s2194 + $0x3c0] sm:$0xff]
  %v2316 = vld [vmem:[%s2194 + $0x3c8] sm:$0xff]
  %v2317 = vld [vmem:[%s2194 + $0x3d0] sm:$0xff]
  %v2318 = vld [vmem:[%s2194 + $0x3d8] sm:$0xff]
  %v2319 = vld [vmem:[%s2194 + $0x3e0] sm:$0xff]
  %v2320 = vld [vmem:[%s2194 + $0x3e8] sm:$0xff]
  %v2321 = vld [vmem:[%s2194 + $0x3f0] sm:$0xff]
  %v2322 = vld [vmem:[%s2194 + $0x3f8] sm:$0xff]
  %v2323 = vunpack.c.l.b16 %v2169
  %v2324 = vunpack.c.h.b16 %v2169
  %v2325 = vunpack.c.l.b16 %v2173
  %v2326 = vunpack.c.h.b16 %v2173
  %v2327 = vunpack.c.l.b16 %v2176
  %v2328 = vunpack.c.h.b16 %v2176
  %v2329 = vunpack.c.l.b16 %v2179
  %v2330 = vunpack.c.h.b16 %v2179
  %v2331 = vunpack.c.l.b16 %v2183
  %v2332 = vunpack.c.h.b16 %v2183
  %v2333 = vunpack.c.l.b16 %v2187
  %v2334 = vunpack.c.h.b16 %v2187
  %v2335 = vunpack.c.l.b16 %v2190
  %v2336 = vunpack.c.h.b16 %v2190
  %v2337 = vunpack.c.l.b16 %v2193
  %v2338 = vunpack.c.h.b16 %v2193
  %v2339 = vpack.c.b16 %v2327, %v2323
  %v2340 = vpack.c.b16 %v2328, %v2324
  %v2341 = vpack.c.b16 %v2329, %v2325
  %v2342 = vpack.c.b16 %v2330, %v2326
  %v2343 = vpack.c.b16 %v2335, %v2331
  %v2344 = vpack.c.b16 %v2336, %v2332
  %v2345 = vpack.c.b16 %v2337, %v2333
  %v2346 = vpack.c.b16 %v2338, %v2334
  %v2483 = vunpack.c.l.b16 %v2195
  %v2484 = vunpack.c.h.b16 %v2195
  %v2485 = vunpack.c.l.b16 %v2196
  %v2486 = vunpack.c.h.b16 %v2196
  %v2487 = vunpack.c.l.b16 %v2197
  %v2488 = vunpack.c.h.b16 %v2197
  %v2489 = vunpack.c.l.b16 %v2198
  %v2490 = vunpack.c.h.b16 %v2198
  %v2491 = vunpack.c.l.b16 %v2199
  %v2492 = vunpack.c.h.b16 %v2199
  %v2493 = vunpack.c.l.b16 %v2200
  %v2494 = vunpack.c.h.b16 %v2200
  %v2495 = vunpack.c.l.b16 %v2201
  %v2496 = vunpack.c.h.b16 %v2201
  %v2497 = vunpack.c.l.b16 %v2202
  %v2498 = vunpack.c.h.b16 %v2202
  %v2499 = vunpack.c.l.b16 %v2203
  %v2500 = vunpack.c.h.b16 %v2203
  %v2501 = vunpack.c.l.b16 %v2204
  %v2502 = vunpack.c.h.b16 %v2204
  %v2503 = vunpack.c.l.b16 %v2205
  %v2504 = vunpack.c.h.b16 %v2205
  %v2505 = vunpack.c.l.b16 %v2206
  %v2506 = vunpack.c.h.b16 %v2206
  %v2507 = vunpack.c.l.b16 %v2207
  %v2508 = vunpack.c.h.b16 %v2207
  %v2509 = vunpack.c.l.b16 %v2208
  %v2510 = vunpack.c.h.b16 %v2208
  %v2511 = vunpack.c.l.b16 %v2209
  %v2512 = vunpack.c.h.b16 %v2209
  %v2513 = vunpack.c.l.b16 %v2210
  %v2514 = vunpack.c.h.b16 %v2210
  %v2515 = vunpack.c.l.b16 %v2211
  %v2516 = vunpack.c.h.b16 %v2211
  %v2517 = vunpack.c.l.b16 %v2212
  %v2518 = vunpack.c.h.b16 %v2212
  %v2519 = vunpack.c.l.b16 %v2213
  %v2520 = vunpack.c.h.b16 %v2213
  %v2521 = vunpack.c.l.b16 %v2214
  %v2522 = vunpack.c.h.b16 %v2214
  %v2523 = vunpack.c.l.b16 %v2215
  %v2524 = vunpack.c.h.b16 %v2215
  %v2525 = vunpack.c.l.b16 %v2216
  %v2526 = vunpack.c.h.b16 %v2216
  %v2527 = vunpack.c.l.b16 %v2217
  %v2528 = vunpack.c.h.b16 %v2217
  %v2529 = vunpack.c.l.b16 %v2218
  %v2530 = vunpack.c.h.b16 %v2218
  %v2531 = vunpack.c.l.b16 %v2219
  %v2532 = vunpack.c.h.b16 %v2219
  %v2533 = vunpack.c.l.b16 %v2220
  %v2534 = vunpack.c.h.b16 %v2220
  %v2535 = vunpack.c.l.b16 %v2221
  %v2536 = vunpack.c.h.b16 %v2221
  %v2537 = vunpack.c.l.b16 %v2222
  %v2538 = vunpack.c.h.b16 %v2222
  %v2539 = vunpack.c.l.b16 %v2223
  %v2540 = vunpack.c.h.b16 %v2223
  %v2541 = vunpack.c.l.b16 %v2224
  %v2542 = vunpack.c.h.b16 %v2224
  %v2543 = vunpack.c.l.b16 %v2225
  %v2544 = vunpack.c.h.b16 %v2225
  %v2545 = vunpack.c.l.b16 %v2226
  %v2546 = vunpack.c.h.b16 %v2226
  %v2547 = vunpack.c.l.b16 %v2227
  %v2548 = vunpack.c.h.b16 %v2227
  %v2549 = vunpack.c.l.b16 %v2228
  %v2550 = vunpack.c.h.b16 %v2228
  %v2551 = vunpack.c.l.b16 %v2229
  %v2552 = vunpack.c.h.b16 %v2229
  %v2553 = vunpack.c.l.b16 %v2230
  %v2554 = vunpack.c.h.b16 %v2230
  %v2555 = vunpack.c.l.b16 %v2231
  %v2556 = vunpack.c.h.b16 %v2231
  %v2557 = vunpack.c.l.b16 %v2232
  %v2558 = vunpack.c.h.b16 %v2232
  %v2559 = vunpack.c.l.b16 %v2233
  %v2560 = vunpack.c.h.b16 %v2233
  %v2561 = vunpack.c.l.b16 %v2234
  %v2562 = vunpack.c.h.b16 %v2234
  %v2563 = vunpack.c.l.b16 %v2235
  %v2564 = vunpack.c.h.b16 %v2235
  %v2565 = vunpack.c.l.b16 %v2236
  %v2566 = vunpack.c.h.b16 %v2236
  %v2567 = vunpack.c.l.b16 %v2237
  %v2568 = vunpack.c.h.b16 %v2237
  %v2569 = vunpack.c.l.b16 %v2238
  %v2570 = vunpack.c.h.b16 %v2238
  %v2571 = vunpack.c.l.b16 %v2239
  %v2572 = vunpack.c.h.b16 %v2239
  %v2573 = vunpack.c.l.b16 %v2240
  %v2574 = vunpack.c.h.b16 %v2240
  %v2575 = vunpack.c.l.b16 %v2241
  %v2576 = vunpack.c.h.b16 %v2241
  %v2577 = vunpack.c.l.b16 %v2242
  %v2578 = vunpack.c.h.b16 %v2242
  %v2579 = vunpack.c.l.b16 %v2243
  %v2580 = vunpack.c.h.b16 %v2243
  %v2581 = vunpack.c.l.b16 %v2244
  %v2582 = vunpack.c.h.b16 %v2244
  %v2583 = vunpack.c.l.b16 %v2245
  %v2584 = vunpack.c.h.b16 %v2245
  %v2585 = vunpack.c.l.b16 %v2246
  %v2586 = vunpack.c.h.b16 %v2246
  %v2587 = vunpack.c.l.b16 %v2247
  %v2588 = vunpack.c.h.b16 %v2247
  %v2589 = vunpack.c.l.b16 %v2248
  %v2590 = vunpack.c.h.b16 %v2248
  %v2591 = vunpack.c.l.b16 %v2249
  %v2592 = vunpack.c.h.b16 %v2249
  %v2593 = vunpack.c.l.b16 %v2250
  %v2594 = vunpack.c.h.b16 %v2250
  %v2595 = vunpack.c.l.b16 %v2251
  %v2596 = vunpack.c.h.b16 %v2251
  %v2597 = vunpack.c.l.b16 %v2252
  %v2598 = vunpack.c.h.b16 %v2252
  %v2599 = vunpack.c.l.b16 %v2253
  %v2600 = vunpack.c.h.b16 %v2253
  %v2601 = vunpack.c.l.b16 %v2254
  %v2602 = vunpack.c.h.b16 %v2254
  %v2603 = vunpack.c.l.b16 %v2255
  %v2604 = vunpack.c.h.b16 %v2255
  %v2605 = vunpack.c.l.b16 %v2256
  %v2606 = vunpack.c.h.b16 %v2256
  %v2607 = vunpack.c.l.b16 %v2257
  %v2608 = vunpack.c.h.b16 %v2257
  %v2609 = vunpack.c.l.b16 %v2258
  %v2610 = vunpack.c.h.b16 %v2258
  %v2611 = vunpack.c.l.b16 %v2259
  %v2612 = vunpack.c.h.b16 %v2259
  %v2613 = vunpack.c.l.b16 %v2260
  %v2614 = vunpack.c.h.b16 %v2260
  %v2615 = vunpack.c.l.b16 %v2261
  %v2616 = vunpack.c.h.b16 %v2261
  %v2617 = vunpack.c.l.b16 %v2262
  %v2618 = vunpack.c.h.b16 %v2262
  %v2619 = vunpack.c.l.b16 %v2263
  %v2620 = vunpack.c.h.b16 %v2263
  %v2621 = vunpack.c.l.b16 %v2264
  %v2622 = vunpack.c.h.b16 %v2264
  %v2623 = vunpack.c.l.b16 %v2265
  %v2624 = vunpack.c.h.b16 %v2265
  %v2625 = vunpack.c.l.b16 %v2266
  %v2626 = vunpack.c.h.b16 %v2266
  %v2627 = vunpack.c.l.b16 %v2267
  %v2628 = vunpack.c.h.b16 %v2267
  %v2629 = vunpack.c.l.b16 %v2268
  %v2630 = vunpack.c.h.b16 %v2268
  %v2631 = vunpack.c.l.b16 %v2269
  %v2632 = vunpack.c.h.b16 %v2269
  %v2633 = vunpack.c.l.b16 %v2270
  %v2634 = vunpack.c.h.b16 %v2270
  %v2635 = vunpack.c.l.b16 %v2271
  %v2636 = vunpack.c.h.b16 %v2271
  %v2637 = vunpack.c.l.b16 %v2272
  %v2638 = vunpack.c.h.b16 %v2272
  %v2639 = vunpack.c.l.b16 %v2273
  %v2640 = vunpack.c.h.b16 %v2273
  %v2641 = vunpack.c.l.b16 %v2274
  %v2642 = vunpack.c.h.b16 %v2274
  %v2643 = vunpack.c.l.b16 %v2275
  %v2644 = vunpack.c.h.b16 %v2275
  %v2645 = vunpack.c.l.b16 %v2276
  %v2646 = vunpack.c.h.b16 %v2276
  %v2647 = vunpack.c.l.b16 %v2277
  %v2648 = vunpack.c.h.b16 %v2277
  %v2649 = vunpack.c.l.b16 %v2278
  %v2650 = vunpack.c.h.b16 %v2278
  %v2651 = vunpack.c.l.b16 %v2279
  %v2652 = vunpack.c.h.b16 %v2279
  %v2653 = vunpack.c.l.b16 %v2280
  %v2654 = vunpack.c.h.b16 %v2280
  %v2655 = vunpack.c.l.b16 %v2281
  %v2656 = vunpack.c.h.b16 %v2281
  %v2657 = vunpack.c.l.b16 %v2282
  %v2658 = vunpack.c.h.b16 %v2282
  %v2659 = vunpack.c.l.b16 %v2283
  %v2660 = vunpack.c.h.b16 %v2283
  %v2661 = vunpack.c.l.b16 %v2284
  %v2662 = vunpack.c.h.b16 %v2284
  %v2663 = vunpack.c.l.b16 %v2285
  %v2664 = vunpack.c.h.b16 %v2285
  %v2665 = vunpack.c.l.b16 %v2286
  %v2666 = vunpack.c.h.b16 %v2286
  %v2667 = vunpack.c.l.b16 %v2287
  %v2668 = vunpack.c.h.b16 %v2287
  %v2669 = vunpack.c.l.b16 %v2288
  %v2670 = vunpack.c.h.b16 %v2288
  %v2671 = vunpack.c.l.b16 %v2289
  %v2672 = vunpack.c.h.b16 %v2289
  %v2673 = vunpack.c.l.b16 %v2290
  %v2674 = vunpack.c.h.b16 %v2290
  %v2675 = vunpack.c.l.b16 %v2291
  %v2676 = vunpack.c.h.b16 %v2291
  %v2677 = vunpack.c.l.b16 %v2292
  %v2678 = vunpack.c.h.b16 %v2292
  %v2679 = vunpack.c.l.b16 %v2293
  %v2680 = vunpack.c.h.b16 %v2293
  %v2681 = vunpack.c.l.b16 %v2294
  %v2682 = vunpack.c.h.b16 %v2294
  %v2683 = vunpack.c.l.b16 %v2295
  %v2684 = vunpack.c.h.b16 %v2295
  %v2685 = vunpack.c.l.b16 %v2296
  %v2686 = vunpack.c.h.b16 %v2296
  %v2687 = vunpack.c.l.b16 %v2297
  %v2688 = vunpack.c.h.b16 %v2297
  %v2689 = vunpack.c.l.b16 %v2298
  %v2690 = vunpack.c.h.b16 %v2298
  %v2691 = vunpack.c.l.b16 %v2299
  %v2692 = vunpack.c.h.b16 %v2299
  %v2693 = vunpack.c.l.b16 %v2300
  %v2694 = vunpack.c.h.b16 %v2300
  %v2695 = vunpack.c.l.b16 %v2301
  %v2696 = vunpack.c.h.b16 %v2301
  %v2697 = vunpack.c.l.b16 %v2302
  %v2698 = vunpack.c.h.b16 %v2302
  %v2699 = vunpack.c.l.b16 %v2303
  %v2700 = vunpack.c.h.b16 %v2303
  %v2701 = vunpack.c.l.b16 %v2304
  %v2702 = vunpack.c.h.b16 %v2304
  %v2703 = vunpack.c.l.b16 %v2305
  %v2704 = vunpack.c.h.b16 %v2305
  %v2705 = vunpack.c.l.b16 %v2306
  %v2706 = vunpack.c.h.b16 %v2306
  %v2707 = vunpack.c.l.b16 %v2307
  %v2708 = vunpack.c.h.b16 %v2307
  %v2709 = vunpack.c.l.b16 %v2308
  %v2710 = vunpack.c.h.b16 %v2308
  %v2711 = vunpack.c.l.b16 %v2309
  %v2712 = vunpack.c.h.b16 %v2309
  %v2713 = vunpack.c.l.b16 %v2310
  %v2714 = vunpack.c.h.b16 %v2310
  %v2715 = vunpack.c.l.b16 %v2311
  %v2716 = vunpack.c.h.b16 %v2311
  %v2717 = vunpack.c.l.b16 %v2312
  %v2718 = vunpack.c.h.b16 %v2312
  %v2719 = vunpack.c.l.b16 %v2313
  %v2720 = vunpack.c.h.b16 %v2313
  %v2721 = vunpack.c.l.b16 %v2314
  %v2722 = vunpack.c.h.b16 %v2314
  %v2723 = vunpack.c.l.b16 %v2315
  %v2724 = vunpack.c.h.b16 %v2315
  %v2725 = vunpack.c.l.b16 %v2316
  %v2726 = vunpack.c.h.b16 %v2316
  %v2727 = vunpack.c.l.b16 %v2317
  %v2728 = vunpack.c.h.b16 %v2317
  %v2729 = vunpack.c.l.b16 %v2318
  %v2730 = vunpack.c.h.b16 %v2318
  %v2731 = vunpack.c.l.b16 %v2319
  %v2732 = vunpack.c.h.b16 %v2319
  %v2733 = vunpack.c.l.b16 %v2320
  %v2734 = vunpack.c.h.b16 %v2320
  %v2735 = vunpack.c.l.b16 %v2321
  %v2736 = vunpack.c.h.b16 %v2321
  %v2737 = vunpack.c.l.b16 %v2322
  %v2738 = vunpack.c.h.b16 %v2322
  %v2739 = vpack.c.b16 %v2487, %v2483
  %v2740 = vpack.c.b16 %v2488, %v2484
  %v2741 = vpack.c.b16 %v2489, %v2485
  %v2742 = vpack.c.b16 %v2490, %v2486
  %v2743 = vpack.c.b16 %v2495, %v2491
  %v2744 = vpack.c.b16 %v2496, %v2492
  %v2745 = vpack.c.b16 %v2497, %v2493
  %v2746 = vpack.c.b16 %v2498, %v2494
  %v2747 = vpack.c.b16 %v2503, %v2499
  %v2748 = vpack.c.b16 %v2504, %v2500
  %v2749 = vpack.c.b16 %v2505, %v2501
  %v2750 = vpack.c.b16 %v2506, %v2502
  %v2751 = vpack.c.b16 %v2511, %v2507
  %v2752 = vpack.c.b16 %v2512, %v2508
  %v2753 = vpack.c.b16 %v2513, %v2509
  %v2754 = vpack.c.b16 %v2514, %v2510
  %v2755 = vpack.c.b16 %v2519, %v2515
  %v2756 = vpack.c.b16 %v2520, %v2516
  %v2757 = vpack.c.b16 %v2521, %v2517
  %v2758 = vpack.c.b16 %v2522, %v2518
  %v2759 = vpack.c.b16 %v2527, %v2523
  %v2760 = vpack.c.b16 %v2528, %v2524
  %v2761 = vpack.c.b16 %v2529, %v2525
  %v2762 = vpack.c.b16 %v2530, %v2526
  %v2763 = vpack.c.b16 %v2535, %v2531
  %v2764 = vpack.c.b16 %v2536, %v2532
  %v2765 = vpack.c.b16 %v2537, %v2533
  %v2766 = vpack.c.b16 %v2538, %v2534
  %v2767 = vpack.c.b16 %v2543, %v2539
  %v2768 = vpack.c.b16 %v2544, %v2540
  %v2769 = vpack.c.b16 %v2545, %v2541
  %v2770 = vpack.c.b16 %v2546, %v2542
  %v2771 = vpack.c.b16 %v2551, %v2547
  %v2772 = vpack.c.b16 %v2552, %v2548
  %v2773 = vpack.c.b16 %v2553, %v2549
  %v2774 = vpack.c.b16 %v2554, %v2550
  %v2775 = vpack.c.b16 %v2559, %v2555
  %v2776 = vpack.c.b16 %v2560, %v2556
  %v2777 = vpack.c.b16 %v2561, %v2557
  %v2778 = vpack.c.b16 %v2562, %v2558
  %v2779 = vpack.c.b16 %v2567, %v2563
  %v2780 = vpack.c.b16 %v2568, %v2564
  %v2781 = vpack.c.b16 %v2569, %v2565
  %v2782 = vpack.c.b16 %v2570, %v2566
  %v2783 = vpack.c.b16 %v2575, %v2571
  %v2784 = vpack.c.b16 %v2576, %v2572
  %v2785 = vpack.c.b16 %v2577, %v2573
  %v2786 = vpack.c.b16 %v2578, %v2574
  %v2787 = vpack.c.b16 %v2583, %v2579
  %v2788 = vpack.c.b16 %v2584, %v2580
  %v2789 = vpack.c.b16 %v2585, %v2581
  %v2790 = vpack.c.b16 %v2586, %v2582
  %v2791 = vpack.c.b16 %v2591, %v2587
  %v2792 = vpack.c.b16 %v2592, %v2588
  %v2793 = vpack.c.b16 %v2593, %v2589
  %v2794 = vpack.c.b16 %v2594, %v2590
  %v2795 = vpack.c.b16 %v2599, %v2595
  %v2796 = vpack.c.b16 %v2600, %v2596
  %v2797 = vpack.c.b16 %v2601, %v2597
  %v2798 = vpack.c.b16 %v2602, %v2598
  %v2799 = vpack.c.b16 %v2607, %v2603
  %v2800 = vpack.c.b16 %v2608, %v2604
  %v2801 = vpack.c.b16 %v2609, %v2605
  %v2802 = vpack.c.b16 %v2610, %v2606
  %v2803 = vpack.c.b16 %v2615, %v2611
  %v2804 = vpack.c.b16 %v2616, %v2612
  %v2805 = vpack.c.b16 %v2617, %v2613
  %v2806 = vpack.c.b16 %v2618, %v2614
  %v2807 = vpack.c.b16 %v2623, %v2619
  %v2808 = vpack.c.b16 %v2624, %v2620
  %v2809 = vpack.c.b16 %v2625, %v2621
  %v2810 = vpack.c.b16 %v2626, %v2622
  %v2811 = vpack.c.b16 %v2631, %v2627
  %v2812 = vpack.c.b16 %v2632, %v2628
  %v2813 = vpack.c.b16 %v2633, %v2629
  %v2814 = vpack.c.b16 %v2634, %v2630
  %v2815 = vpack.c.b16 %v2639, %v2635
  %v2816 = vpack.c.b16 %v2640, %v2636
  %v2817 = vpack.c.b16 %v2641, %v2637
  %v2818 = vpack.c.b16 %v2642, %v2638
  %v2819 = vpack.c.b16 %v2647, %v2643
  %v2820 = vpack.c.b16 %v2648, %v2644
  %v2821 = vpack.c.b16 %v2649, %v2645
  %v2822 = vpack.c.b16 %v2650, %v2646
  %v2823 = vpack.c.b16 %v2655, %v2651
  %v2824 = vpack.c.b16 %v2656, %v2652
  %v2825 = vpack.c.b16 %v2657, %v2653
  %v2826 = vpack.c.b16 %v2658, %v2654
  %v2827 = vpack.c.b16 %v2663, %v2659
  %v2828 = vpack.c.b16 %v2664, %v2660
  %v2829 = vpack.c.b16 %v2665, %v2661
  %v2830 = vpack.c.b16 %v2666, %v2662
  %v2831 = vpack.c.b16 %v2671, %v2667
  %v2832 = vpack.c.b16 %v2672, %v2668
  %v2833 = vpack.c.b16 %v2673, %v2669
  %v2834 = vpack.c.b16 %v2674, %v2670
  %v2835 = vpack.c.b16 %v2679, %v2675
  %v2836 = vpack.c.b16 %v2680, %v2676
  %v2837 = vpack.c.b16 %v2681, %v2677
  %v2838 = vpack.c.b16 %v2682, %v2678
  %v2839 = vpack.c.b16 %v2687, %v2683
  %v2840 = vpack.c.b16 %v2688, %v2684
  %v2841 = vpack.c.b16 %v2689, %v2685
  %v2842 = vpack.c.b16 %v2690, %v2686
  %v2843 = vpack.c.b16 %v2695, %v2691
  %v2844 = vpack.c.b16 %v2696, %v2692
  %v2845 = vpack.c.b16 %v2697, %v2693
  %v2846 = vpack.c.b16 %v2698, %v2694
  %v2847 = vpack.c.b16 %v2703, %v2699
  %v2848 = vpack.c.b16 %v2704, %v2700
  %v2849 = vpack.c.b16 %v2705, %v2701
  %v2850 = vpack.c.b16 %v2706, %v2702
  %v2851 = vpack.c.b16 %v2711, %v2707
  %v2852 = vpack.c.b16 %v2712, %v2708
  %v2853 = vpack.c.b16 %v2713, %v2709
  %v2854 = vpack.c.b16 %v2714, %v2710
  %v2855 = vpack.c.b16 %v2719, %v2715
  %v2856 = vpack.c.b16 %v2720, %v2716
  %v2857 = vpack.c.b16 %v2721, %v2717
  %v2858 = vpack.c.b16 %v2722, %v2718
  %v2859 = vpack.c.b16 %v2727, %v2723
  %v2860 = vpack.c.b16 %v2728, %v2724
  %v2861 = vpack.c.b16 %v2729, %v2725
  %v2862 = vpack.c.b16 %v2730, %v2726
  %v2863 = vpack.c.b16 %v2735, %v2731
  %v2864 = vpack.c.b16 %v2736, %v2732
  %v2865 = vpack.c.b16 %v2737, %v2733
  %v2866 = vpack.c.b16 %v2738, %v2734
  %2995 = vmatprep.subr.bf16.mxu0 %v2740
  %2996 = vmatpush1.bf16.msra.mxu0 %v2739
  %2997 = vmatprep.subr.bf16.mxu0 %v2744
  %2998 = vmatpush1.bf16.msra.mxu0 %v2743
  %2999 = vmatprep.subr.bf16.mxu0 %v2748
  %3000 = vmatpush1.bf16.msra.mxu0 %v2747
  %3001 = vmatprep.subr.bf16.mxu0 %v2752
  %3002 = vmatpush1.bf16.msra.mxu0 %v2751
  %3003 = vmatprep.subr.bf16.mxu0 %v2756
  %3004 = vmatpush1.bf16.msra.mxu0 %v2755
  %3005 = vmatprep.subr.bf16.mxu0 %v2760
  %3006 = vmatpush1.bf16.msra.mxu0 %v2759
  %3007 = vmatprep.subr.bf16.mxu0 %v2764
  %3008 = vmatpush1.bf16.msra.mxu0 %v2763
  %3009 = vmatprep.subr.bf16.mxu0 %v2768
  %3010 = vmatpush1.bf16.msra.mxu0 %v2767
  %3011 = vmatprep.subr.bf16.mxu0 %v2772
  %3012 = vmatpush1.bf16.msra.mxu0 %v2771
  %3013 = vmatprep.subr.bf16.mxu0 %v2776
  %3014 = vmatpush1.bf16.msra.mxu0 %v2775
  %3015 = vmatprep.subr.bf16.mxu0 %v2780
  %3016 = vmatpush1.bf16.msra.mxu0 %v2779
  %3017 = vmatprep.subr.bf16.mxu0 %v2784
  %3018 = vmatpush1.bf16.msra.mxu0 %v2783
  %3019 = vmatprep.subr.bf16.mxu0 %v2788
  %3020 = vmatpush1.bf16.msra.mxu0 %v2787
  %3021 = vmatprep.subr.bf16.mxu0 %v2792
  %3022 = vmatpush1.bf16.msra.mxu0 %v2791
  %3023 = vmatprep.subr.bf16.mxu0 %v2796
  %3024 = vmatpush1.bf16.msra.mxu0 %v2795
  %3025 = vmatprep.subr.bf16.mxu0 %v2800
  %3026 = vmatpush1.bf16.msra.mxu0 %v2799
  %3027 = vmatprep.mubr.bf16.mxu0 %v2340
  %3028 = vmatmul.mubr.bf16.gmra.mrb[0].mxu0 %v2339
  %v3029 = vpop.f32.mrb[0].mxu0
  %v3030 = vadd.f32 0.0, %v3029
  %v3031 = vpop.f32.mrb[0].mxu0
  %v3032 = vadd.f32 0.0, %v3031
  %v3033 = vpop.f32.mrb[0].mxu0
  %v3034 = vadd.f32 0.0, %v3033
  %v3035 = vpop.f32.mrb[0].mxu0
  %v3036 = vadd.f32 0.0, %v3035
  %3037 = vmatprep.mubr.bf16.mxu0 %v2344
  %3038 = vmatmul.mubr.bf16.gmra.mrb[0].mxu0 %v2343
  %v3039 = vpop.f32.mrb[0].mxu0
  %v3040 = vadd.f32 0.0, %v3039
  %v3041 = vpop.f32.mrb[0].mxu0
  %v3042 = vadd.f32 0.0, %v3041
  %v3043 = vpop.f32.mrb[0].mxu0
  %v3044 = vadd.f32 0.0, %v3043
  %v3045 = vpop.f32.mrb[0].mxu0
  %v3046 = vadd.f32 0.0, %v3045
  %3047 = vdwg.mxu0
  %3048 = vmatprep.subr.bf16.mxu0 %v2804
  %3049 = vmatpush1.bf16.msra.mxu0 %v2803
  %3050 = vmatprep.subr.bf16.mxu0 %v2808
  %3051 = vmatpush1.bf16.msra.mxu0 %v2807
  %3052 = vmatprep.subr.bf16.mxu0 %v2812
  %3053 = vmatpush1.bf16.msra.mxu0 %v2811
  %3054 = vmatprep.subr.bf16.mxu0 %v2816
  %3055 = vmatpush1.bf16.msra.mxu0 %v2815
  %3056 = vmatprep.subr.bf16.mxu0 %v2820
  %3057 = vmatpush1.bf16.msra.mxu0 %v2819
  %3058 = vmatprep.subr.bf16.mxu0 %v2824
  %3059 = vmatpush1.bf16.msra.mxu0 %v2823
  %3060 = vmatprep.subr.bf16.mxu0 %v2828
  %3061 = vmatpush1.bf16.msra.mxu0 %v2827
  %3062 = vmatprep.subr.bf16.mxu0 %v2832
  %3063 = vmatpush1.bf16.msra.mxu0 %v2831
  %3064 = vmatprep.subr.bf16.mxu0 %v2836
  %3065 = vmatpush1.bf16.msra.mxu0 %v2835
  %3066 = vmatprep.subr.bf16.mxu0 %v2840
  %3067 = vmatpush1.bf16.msra.mxu0 %v2839
  %3068 = vmatprep.subr.bf16.mxu0 %v2844
  %3069 = vmatpush1.bf16.msra.mxu0 %v2843
  %3070 = vmatprep.subr.bf16.mxu0 %v2848
  %3071 = vmatpush1.bf16.msra.mxu0 %v2847
  %3072 = vmatprep.subr.bf16.mxu0 %v2852
  %3073 = vmatpush1.bf16.msra.mxu0 %v2851
  %3074 = vmatprep.subr.bf16.mxu0 %v2856
  %3075 = vmatpush1.bf16.msra.mxu0 %v2855
  %3076 = vmatprep.subr.bf16.mxu0 %v2860
  %3077 = vmatpush1.bf16.msra.mxu0 %v2859
  %3078 = vmatprep.subr.bf16.mxu0 %v2864
  %3079 = vmatpush1.bf16.msra.mxu0 %v2863
  %3080 = vmatprep.mubr.bf16.mxu0 %v2342
  %3081 = vmatmul.mubr.bf16.gmra.mrb[0].mxu0 %v2341
  %v3082 = vpop.f32.mrb[0].mxu0
  %v3083 = vadd.f32 %v3030, %v3082
  %v3084 = vpop.f32.mrb[0].mxu0
  %v3085 = vadd.f32 %v3032, %v3084
  %v3086 = vpop.f32.mrb[0].mxu0
  %v3087 = vadd.f32 %v3034, %v3086
  %v3088 = vpop.f32.mrb[0].mxu0
  %v3089 = vadd.f32 %v3036, %v3088
  %3090 = vmatprep.mubr.bf16.mxu0 %v2346
  %3091 = vmatmul.mubr.bf16.gmra.mrb[0].mxu0 %v2345
  %v3092 = vpop.f32.mrb[0].mxu0
  %v3093 = vadd.f32 %v3040, %v3092
  %v3094 = vpop.f32.mrb[0].mxu0
  %v3095 = vadd.f32 %v3042, %v3094
  %v3096 = vpop.f32.mrb[0].mxu0
  %v3097 = vadd.f32 %v3044, %v3096
  %v3098 = vpop.f32.mrb[0].mxu0
  %v3099 = vadd.f32 %v3046, %v3098
  %3100 = vdwg.mxu0
  %3101 = vmatprep.subr.bf16.mxu0 %v2742
  %3102 = vmatpush1.bf16.msra.mxu0 %v2741
  %3103 = vmatprep.subr.bf16.mxu0 %v2746
  %3104 = vmatpush1.bf16.msra.mxu0 %v2745
  %3105 = vmatprep.subr.bf16.mxu0 %v2750
  %3106 = vmatpush1.bf16.msra.mxu0 %v2749
  %3107 = vmatprep.subr.bf16.mxu0 %v2754
  %3108 = vmatpush1.bf16.msra.mxu0 %v2753
  %3109 = vmatprep.subr.bf16.mxu0 %v2758
  %3110 = vmatpush1.bf16.msra.mxu0 %v2757
  %3111 = vmatprep.subr.bf16.mxu0 %v2762
  %3112 = vmatpush1.bf16.msra.mxu0 %v2761
  %3113 = vmatprep.subr.bf16.mxu0 %v2766
  %3114 = vmatpush1.bf16.msra.mxu0 %v2765
  %3115 = vmatprep.subr.bf16.mxu0 %v2770
  %3116 = vmatpush1.bf16.msra.mxu0 %v2769
  %3117 = vmatprep.subr.bf16.mxu0 %v2774
  %3118 = vmatpush1.bf16.msra.mxu0 %v2773
  %3119 = vmatprep.subr.bf16.mxu0 %v2778
  %3120 = vmatpush1.bf16.msra.mxu0 %v2777
  %3121 = vmatprep.subr.bf16.mxu0 %v2782
  %3122 = vmatpush1.bf16.msra.mxu0 %v2781
  %3123 = vmatprep.subr.bf16.mxu0 %v2786
  %3124 = vmatpush1.bf16.msra.mxu0 %v2785
  %3125 = vmatprep.subr.bf16.mxu0 %v2790
  %3126 = vmatpush1.bf16.msra.mxu0 %v2789
  %3127 = vmatprep.subr.bf16.mxu0 %v2794
  %3128 = vmatpush1.bf16.msra.mxu0 %v2793
  %3129 = vmatprep.subr.bf16.mxu0 %v2798
  %3130 = vmatpush1.bf16.msra.mxu0 %v2797
  %3131 = vmatprep.subr.bf16.mxu0 %v2802
  %3132 = vmatpush1.bf16.msra.mxu0 %v2801
  %3133 = vmatprep.mubr.bf16.mxu0 %v2340
  %3134 = vmatmul.mubr.bf16.gmra.mrb[0].mxu0 %v2339
  %v3135 = vpop.f32.mrb[0].mxu0
  %v3136 = vadd.f32 0.0, %v3135
  %v3137 = vpop.f32.mrb[0].mxu0
  %v3138 = vadd.f32 0.0, %v3137
  %v3139 = vpop.f32.mrb[0].mxu0
  %v3140 = vadd.f32 0.0, %v3139
  %v3141 = vpop.f32.mrb[0].mxu0
  %v3142 = vadd.f32 0.0, %v3141
  %3143 = vmatprep.mubr.bf16.mxu0 %v2344
  %3144 = vmatmul.mubr.bf16.gmra.mrb[0].mxu0 %v2343
  %v3145 = vpop.f32.mrb[0].mxu0
  %v3146 = vadd.f32 0.0, %v3145
  %v3147 = vpop.f32.mrb[0].mxu0
  %v3148 = vadd.f32 0.0, %v3147
  %v3149 = vpop.f32.mrb[0].mxu0
  %v3150 = vadd.f32 0.0, %v3149
  %v3151 = vpop.f32.mrb[0].mxu0
  %v3152 = vadd.f32 0.0, %v3151
  %3153 = vdwg.mxu0
  %3154 = vmatprep.subr.bf16.mxu0 %v2806
  %3155 = vmatpush1.bf16.msra.mxu0 %v2805
  %3156 = vmatprep.subr.bf16.mxu0 %v2810
  %3157 = vmatpush1.bf16.msra.mxu0 %v2809
  %3158 = vmatprep.subr.bf16.mxu0 %v2814
  %3159 = vmatpush1.bf16.msra.mxu0 %v2813
  %3160 = vmatprep.subr.bf16.mxu0 %v2818
  %3161 = vmatpush1.bf16.msra.mxu0 %v2817
  %3162 = vmatprep.subr.bf16.mxu0 %v2822
  %3163 = vmatpush1.bf16.msra.mxu0 %v2821
  %3164 = vmatprep.subr.bf16.mxu0 %v2826
  %3165 = vmatpush1.bf16.msra.mxu0 %v2825
  %3166 = vmatprep.subr.bf16.mxu0 %v2830
  %3167 = vmatpush1.bf16.msra.mxu0 %v2829
  %3168 = vmatprep.subr.bf16.mxu0 %v2834
  %3169 = vmatpush1.bf16.msra.mxu0 %v2833
  %3170 = vmatprep.subr.bf16.mxu0 %v2838
  %3171 = vmatpush1.bf16.msra.mxu0 %v2837
  %3172 = vmatprep.subr.bf16.mxu0 %v2842
  %3173 = vmatpush1.bf16.msra.mxu0 %v2841
  %3174 = vmatprep.subr.bf16.mxu0 %v2846
  %3175 = vmatpush1.bf16.msra.mxu0 %v2845
  %3176 = vmatprep.subr.bf16.mxu0 %v2850
  %3177 = vmatpush1.bf16.msra.mxu0 %v2849
  %3178 = vmatprep.subr.bf16.mxu0 %v2854
  %3179 = vmatpush1.bf16.msra.mxu0 %v2853
  %3180 = vmatprep.subr.bf16.mxu0 %v2858
  %3181 = vmatpush1.bf16.msra.mxu0 %v2857
  %3182 = vmatprep.subr.bf16.mxu0 %v2862
  %3183 = vmatpush1.bf16.msra.mxu0 %v2861
  %3184 = vmatprep.subr.bf16.mxu0 %v2866
  %3185 = vmatpush1.bf16.msra.mxu0 %v2865
  %3186 = vmatprep.mubr.bf16.mxu0 %v2342
  %3187 = vmatmul.mubr.bf16.gmra.mrb[0].mxu0 %v2341
  %v3188 = vpop.f32.mrb[0].mxu0
  %v3189 = vadd.f32 %v3136, %v3188
  %v3190 = vpop.f32.mrb[0].mxu0
  %v3191 = vadd.f32 %v3138, %v3190
  %v3192 = vpop.f32.mrb[0].mxu0
  %v3193 = vadd.f32 %v3140, %v3192
  %v3194 = vpop.f32.mrb[0].mxu0
  %v3195 = vadd.f32 %v3142, %v3194
  %3196 = vmatprep.mubr.bf16.mxu0 %v2346
  %3197 = vmatmul.mubr.bf16.gmra.mrb[0].mxu0 %v2345
  %v3198 = vpop.f32.mrb[0].mxu0
  %v3199 = vadd.f32 %v3146, %v3198
  %v3200 = vpop.f32.mrb[0].mxu0
  %v3201 = vadd.f32 %v3148, %v3200
  %v3202 = vpop.f32.mrb[0].mxu0
  %v3203 = vadd.f32 %v3150, %v3202
  %v3204 = vpop.f32.mrb[0].mxu0
  %v3205 = vadd.f32 %v3152, %v3204
  %3206 = vdwg.mxu0
  %v3207 = vadd.f32 %v2035, %v3083
  %v3208 = vadd.f32 %v2037, %v3085
  %v3209 = vadd.f32 %v2141, %v3189
  %v3210 = vadd.f32 %v2143, %v3191
  %v3211 = vadd.f32 %v2039, %v3087
  %v3212 = vadd.f32 %v2041, %v3089
  %v3213 = vadd.f32 %v2145, %v3193
  %v3214 = vadd.f32 %v2147, %v3195
  %v3215 = vadd.f32 %v2045, %v3093
  %v3216 = vadd.f32 %v2047, %v3095
  %v3217 = vadd.f32 %v2151, %v3199
  %v3218 = vadd.f32 %v2153, %v3201
  %v3219 = vadd.f32 %v2049, %v3097
  %v3220 = vadd.f32 %v2051, %v3099
  %v3221 = vadd.f32 %v2155, %v3203
  %v3222 = vadd.f32 %v2157, %v3205
  %v3223 = vld [vmem:[%s2] sm:$0xf]
  %v3225 = vlaneseq
  %v3226 = vshrl.u32 %v3225, 7
  %v3227 = vsub.s32 0, %v3226
  %v3228 = vrot.slane %v3223, %v3227
  %v3229 = vlaneseq
  %v3230 = vshrl.u32 %v3229, 7
  %v3231 = vsub.s32 1, %v3230
  %v3232 = vrot.slane %v3223, %v3231
  %v3233 = vlaneseq
  %v3234 = vshrl.u32 %v3233, 7
  %v3235 = vsub.s32 2, %v3234
  %v3236 = vrot.slane %v3223, %v3235
  %v3237 = vlaneseq
  %v3238 = vshrl.u32 %v3237, 7
  %v3239 = vsub.s32 3, %v3238
  %v3240 = vrot.slane %v3223, %v3239
  %v3245 = vadd.f32 %v3207, %v3228
  %v3246 = vadd.f32 %v3208, %v3232
  %v3247 = vadd.f32 %v3209, %v3236
  %v3248 = vadd.f32 %v3210, %v3240
  %v3249 = vadd.f32 %v3211, %v3228
  %v3250 = vadd.f32 %v3212, %v3232
  %v3251 = vadd.f32 %v3213, %v3236
  %v3252 = vadd.f32 %v3214, %v3240
  %v3253 = vadd.f32 %v3215, %v3228
  %v3254 = vadd.f32 %v3216, %v3232
  %v3255 = vadd.f32 %v3217, %v3236
  %v3256 = vadd.f32 %v3218, %v3240
  %v3257 = vadd.f32 %v3219, %v3228
  %v3258 = vadd.f32 %v3220, %v3232
  %v3259 = vadd.f32 %v3221, %v3236
  %v3260 = vadd.f32 %v3222, %v3240
  %v3261 = vmax.f32 %v3245, 0.0
  %v3262 = vmax.f32 %v3246, 0.0
  %v3263 = vmax.f32 %v3247, 0.0
  %v3264 = vmax.f32 %v3248, 0.0
  %v3265 = vmax.f32 %v3249, 0.0
  %v3266 = vmax.f32 %v3250, 0.0
  %v3267 = vmax.f32 %v3251, 0.0
  %v3268 = vmax.f32 %v3252, 0.0
  %v3269 = vmax.f32 %v3253, 0.0
  %v3270 = vmax.f32 %v3254, 0.0
  %v3271 = vmax.f32 %v3255, 0.0
  %v3272 = vmax.f32 %v3256, 0.0
  %v3273 = vmax.f32 %v3257, 0.0
  %v3274 = vmax.f32 %v3258, 0.0
  %v3275 = vmax.f32 %v3259, 0.0
  %v3276 = vmax.f32 %v3260, 0.0
  %v3277 = vpack.c.bf16 %v3265, %v3261
  %v3278 = vpack.c.bf16 %v3266, %v3262
  %v3279 = vpack.c.bf16 %v3267, %v3263
  %v3280 = vpack.c.bf16 %v3268, %v3264
  %v3281 = vpack.c.bf16 %v3273, %v3269
  %v3282 = vpack.c.bf16 %v3274, %v3270
  %v3283 = vpack.c.bf16 %v3275, %v3271
  %v3284 = vpack.c.bf16 %v3276, %v3272
  %v3293 = vunpack.c.l.b16 %v3277
  %v3294 = vunpack.c.l.b16 %v3278
  %v3295 = vunpack.c.l.b16 %v3279
  %v3296 = vunpack.c.l.b16 %v3280
  %v3297 = vunpack.c.h.b16 %v3277
  %v3298 = vunpack.c.h.b16 %v3278
  %v3299 = vunpack.c.h.b16 %v3279
  %v3300 = vunpack.c.h.b16 %v3280
  %v3301 = vunpack.c.l.b16 %v3281
  %v3302 = vunpack.c.l.b16 %v3282
  %v3303 = vunpack.c.l.b16 %v3283
  %v3304 = vunpack.c.l.b16 %v3284
  %v3305 = vunpack.c.h.b16 %v3281
  %v3306 = vunpack.c.h.b16 %v3282
  %v3307 = vunpack.c.h.b16 %v3283
  %v3308 = vunpack.c.h.b16 %v3284
  %v3309 = vpack.c.b16 %v3294, %v3293
  %v3310 = vpack.c.b16 %v3296, %v3295
  %v3311 = vpack.c.b16 %v3298, %v3297
  %v3312 = vpack.c.b16 %v3300, %v3299
  %v3313 = vpack.c.b16 %v3302, %v3301
  %v3314 = vpack.c.b16 %v3304, %v3303
  %v3315 = vpack.c.b16 %v3306, %v3305
  %v3316 = vpack.c.b16 %v3308, %v3307
  %vm3317 = vsmask.f32 256
  %vm3318 = vsmask.f32 4368
  %vm3319 = vmor %vm3317, %vm3318
  %v3321 = vshrl.u32 %v3309, 16
  %v3323 = vrot.slane %v3321, 7
  %v3324 = vshll.u32 %v3309, 16
  %v3326 = vor.u32 %v3323, %v3324
  %v3328 = vshrl.u32 %v3310, 16
  %v3330 = vrot.slane %v3328, 7
  %v3331 = vshll.u32 %v3310, 16
  %v3333 = vor.u32 %v3330, %v3331
  %v3334 = vrot.slane %v3323, 4
  %v3336 = vshrl.u32 %v3311, 16
  %v3338 = vrot.slane %v3336, 7
  %v3339 = vshll.u32 %v3311, 16
  %v3341 = vor.u32 %v3338, %v3339
  %v3342 = vsel %vm3319, %v3334, %v3341
  %v3343 = vrot.slane %v3330, 4
  %v3345 = vshrl.u32 %v3312, 16
  %v3347 = vrot.slane %v3345, 7
  %v3348 = vshll.u32 %v3312, 16
  %v3350 = vor.u32 %v3347, %v3348
  %v3351 = vsel %vm3319, %v3343, %v3350
  %v3352 = vrot.slane %v3338, 4
  %v3353 = vrot.slane %v3347, 4
  %v3355 = vshrl.u32 %v3313, 16
  %v3357 = vrot.slane %v3355, 7
  %v3358 = vshll.u32 %v3313, 16
  %v3360 = vor.u32 %v3357, %v3358
  %v3362 = vshrl.u32 %v3314, 16
  %v3364 = vrot.slane %v3362, 7
  %v3365 = vshll.u32 %v3314, 16
  %v3367 = vor.u32 %v3364, %v3365
  %v3368 = vrot.slane %v3357, 4
  %v3370 = vshrl.u32 %v3315, 16
  %v3372 = vrot.slane %v3370, 7
  %v3373 = vshll.u32 %v3315, 16
  %v3375 = vor.u32 %v3372, %v3373
  %v3376 = vsel %vm3319, %v3368, %v3375
  %v3377 = vrot.slane %v3364, 4
  %v3379 = vshrl.u32 %v3316, 16
  %v3381 = vrot.slane %v3379, 7
  %v3382 = vshll.u32 %v3316, 16
  %v3384 = vor.u32 %v3381, %v3382
  %v3385 = vsel %vm3319, %v3377, %v3384
  %v3386 = vrot.slane %v3372, 4
  %v3387 = vrot.slane %v3381, 4
  %vm3400 = vcmask 1043456
  %vm3401 = vsmask.f32 7938
  %vm3402 = vmand %vm3400, %vm3401
  %vm3403 = vcmask 1047556
  %vm3404 = vsmask.f32 7954
  %vm3405 = vmand %vm3403, %vm3404
  %vm3406 = vmor %vm3405, %vm3402
  %v3407 = vld [vmem:[%s3] sm:$0xff]
  %v3408 = vsel %vm3406, %v3326, %v3407
  %3409 = vst [vmem:[%s3] sm:$0xff] %v3408
  %v3410 = vld [vmem:[%s3 + $0x8] sm:$0xff]
  %v3411 = vsel %vm3406, %v3333, %v3410
  %3412 = vst [vmem:[%s3 + $0x8] sm:$0xff] %v3411
  %3413 = vst [vmem:[%s3 + $0x10] sm:$0xff] %v3342
  %3414 = vst [vmem:[%s3 + $0x18] sm:$0xff] %v3351
  %vm3415 = vcmask 1040384
  %vm3416 = vmand %vm3415, %vm3317
  %vm3417 = vcmask 1044484
  %vm3418 = vsmask.f32 4352
  %vm3419 = vmand %vm3417, %vm3418
  %vm3420 = vmor %vm3419, %vm3416
  %v3421 = vld [vmem:[%s3 + $0x20] sm:$0x11]
  %v3422 = vsel %vm3420, %v3352, %v3421
  %3423 = vst [vmem:[%s3 + $0x20] sm:$0x11] %v3422
  %v3424 = vld [vmem:[%s3 + $0x28] sm:$0x11]
  %v3425 = vsel %vm3420, %v3353, %v3424
  %3426 = vst [vmem:[%s3 + $0x28] sm:$0x11] %v3425
  %v3427 = vld [vmem:[%s3 + $0x30] sm:$0xff]
  %v3428 = vsel %vm3406, %v3360, %v3427
  %3429 = vst [vmem:[%s3 + $0x30] sm:$0xff] %v3428
  %v3430 = vld [vmem:[%s3 + $0x38] sm:$0xff]
  %v3431 = vsel %vm3406, %v3367, %v3430
  %3432 = vst [vmem:[%s3 + $0x38] sm:$0xff] %v3431
  %3433 = vst [vmem:[%s3 + $0x40] sm:$0xff] %v3376
  %3434 = vst [vmem:[%s3 + $0x48] sm:$0xff] %v3385
  %v3435 = vld [vmem:[%s3 + $0x50] sm:$0x11]
  %v3436 = vsel %vm3420, %v3386, %v3435
  %3437 = vst [vmem:[%s3 + $0x50] sm:$0x11] %v3436
  %v3438 = vld [vmem:[%s3 + $0x58] sm:$0x11]
  %v3439 = vsel %vm3420, %v3387, %v3438
  %3440 = vst [vmem:[%s3 + $0x58] sm:$0x11] %v3439
  %v3441 = vld [vmem:[%s3] sm:$0x11]
  %v3442 = vsel %vm3420, 0, %v3441
  %3443 = vst [vmem:[%s3] sm:$0x11] %v3442
  %v3444 = vld [vmem:[%s3 + $0x8] sm:$0x11]
  %v3445 = vsel %vm3420, 0, %v3444
  %3446 = vst [vmem:[%s3 + $0x8] sm:$0x11] %v3445
  %v3447 = vld [vmem:[%s3 + $0x30] sm:$0x11]
  %v3448 = vsel %vm3420, 0, %v3447
  %3449 = vst [vmem:[%s3 + $0x30] sm:$0x11] %v3448
  %v3450 = vld [vmem:[%s3 + $0x38] sm:$0x11]
  %v3451 = vsel %vm3420, 0, %v3450
  %3452 = vst [vmem:[%s3 + $0x38] sm:$0x11] %v3451
  %vm3453 = vmand %vm3415, %vm3401
  %vm3454 = vmand %vm3417, %vm3404
  %vm3455 = vmor %vm3454, %vm3453
  %v3456 = vld [vmem:[%s3 + $0x20] sm:$0x11]
  %v3457 = vsel %vm3455, 0, %v3456
  %3458 = vst [vmem:[%s3 + $0x20] sm:$0x11] %v3457
  %v3459 = vld [vmem:[%s3 + $0x28] sm:$0x11]
  %v3460 = vsel %vm3455, 0, %v3459
  %3461 = vst [vmem:[%s3 + $0x28] sm:$0x11] %v3460
  %v3462 = vld [vmem:[%s3 + $0x50] sm:$0x11]
  %v3463 = vsel %vm3455, 0, %v3462
  %3464 = vst [vmem:[%s3 + $0x50] sm:$0x11] %v3463
  %v3465 = vld [vmem:[%s3 + $0x58] sm:$0x11]
  %v3466 = vsel %vm3455, 0, %v3465
  %3467 = vst [vmem:[%s3 + $0x58] sm:$0x11] %v3466
  // Predicated region
  $region14: #{seresnet_forward.5} parent=0 // pred_check
    _
  $region15: #{seresnet_forward.5} parent=0 // pred_check_branch
    %3469 = sbr.rel (0) target = $region17
  $region16: #{seresnet_forward.5} parent=0 // pred_region
    _
  $region17: #{seresnet_forward.5} parent=0 // pred_fallthru
    _
  // Predicated region
  $region18: #{seresnet_forward.5} parent=0 // pred_check
    _
  $region19: #{seresnet_forward.5} parent=0 // pred_check_branch
    %3471 = sbr.rel (0) target = $region21
  $region20: #{seresnet_forward.5} parent=0 // pred_region
    _
  $region21: #{seresnet_forward.5} parent=0 // pred_fallthru
    _

// kernel: seresnet_forward.7
$region0: #{seresnet_forward.7}
  #allocation0 [shape = 'u32[]', space=smem, size = 0x4, offset = 0x4, fixed_abs, tag = 'smem constant byte address 0x4 - core index']
  #allocation1 [shape = 'u32[144,128]{1,0:T(1,128)}', space=vmem, size = 0x12000, scoped, tag = 'internal scratch']
  #allocation2 [shape = 'f32[1]{0:T(128)S(6)}', space=smem, size = 0x200, scoped, tag = 'scoped memory for seresnet_forward.7']
  #allocation3 [shape = 'f32[1,1]{1,0:T(1,128)S(1)}', space=vmem, size = 0x200, scoped, tag = 'scoped memory for seresnet_forward.7']
  %s0 = inlined_call_operand.vmem [shape: f32[2,32], index: 0, kind: input, shape index: {}]
  %s1 = inlined_call_operand.vmem [shape: f32[32,16], index: 1, kind: input, shape index: {}]
  %s2 = inlined_call_operand.vmem [shape: f32[1,16], index: 2, kind: input, shape index: {}]
  %s3 = inlined_call_operand.<no memory space> [shape: f32[1], index: 3, kind: input, shape index: {}]
  %s4 = inlined_call_operand.vmem [shape: f32[16,1], index: 4, kind: input, shape index: {}]
  %s5 = inlined_call_operand.<no memory space> [shape: f32[1,1], index: 5, kind: input, shape index: {}]
  %s6 = inlined_call_operand.vmem [shape: f32[2,1], index: 6, kind: output, shape index: {}]
  %s7 = sld [smem:[#allocation0]]
  $region34: #{seresnet_forward.7} parent=0
    _
  %s9 = ssub.s32 1, %s7
  %s10 = scalar_select 0, %s9, %s7
  %11 = sst [smem:[#allocation2]] %s3
  %v12 = vstv %s5
  %13 = vst [vmem:[#allocation3] sm:$0x1] %v12
  // Predicated region
  $region2: #{seresnet_forward.7} parent=0 // pred_check
    _
  $region3: #{seresnet_forward.7} parent=0 // pred_check_branch
    %15 = sbr.rel (0) target = $region5
  $region4: #{seresnet_forward.7} parent=0 // pred_region
    _
  $region5: #{seresnet_forward.7} parent=0 // pred_fallthru
    _
  // Predicated region
  $region6: #{seresnet_forward.7} parent=0 // pred_check
    _
  $region7: #{seresnet_forward.7} parent=0 // pred_check_branch
    %17 = sbr.rel (0) target = $region9
  $region8: #{seresnet_forward.7} parent=0 // pred_region
    _
  $region9: #{seresnet_forward.7} parent=0 // pred_fallthru
    _
  // Predicated region
  $region10: #{seresnet_forward.7} parent=0 // pred_check
    _
  $region11: #{seresnet_forward.7} parent=0 // pred_check_branch
    %19 = sbr.rel (0) target = $region13
  $region12: #{seresnet_forward.7} parent=0 // pred_region
    _
  $region13: #{seresnet_forward.7} parent=0 // pred_fallthru
    _
  // Predicated region
  $region14: #{seresnet_forward.7} parent=0 // pred_check
    _
  $region15: #{seresnet_forward.7} parent=0 // pred_check_branch
    %21 = sbr.rel (0) target = $region17
  $region16: #{seresnet_forward.7} parent=0 // pred_region
    _
  $region17: #{seresnet_forward.7} parent=0 // pred_fallthru
    _
  // Predicated region
  $region18: #{seresnet_forward.7} parent=0 // pred_check
    _
  $region19: #{seresnet_forward.7} parent=0 // pred_check_branch
    %23 = sbr.rel (0) target = $region21
  $region20: #{seresnet_forward.7} parent=0 // pred_region
    _
  $region21: #{seresnet_forward.7} parent=0 // pred_fallthru
    _
  // Predicated region
  $region22: #{seresnet_forward.7} parent=0 // pred_check
    _
  $region23: #{seresnet_forward.7} parent=0 // pred_check_branch
    %25 = sbr.rel (0) target = $region25
  $region24: #{seresnet_forward.7} parent=0 // pred_region
    _
  $region25: #{seresnet_forward.7} parent=0 // pred_fallthru
    _
  %v26 = vld [vmem:[%s0] sm:$0x3]
  %v27 = vld [vmem:[%s1] sm:$0xff]
  %v28 = vld [vmem:[%s1 + $0x8] sm:$0xff]
  %v29 = vld [vmem:[%s1 + $0x10] sm:$0xff]
  %v30 = vld [vmem:[%s1 + $0x18] sm:$0xff]
  %v31 = vld [vmem:[%s2] sm:$0x1]
  %v33 = vlaneseq
  %v34 = vshrl.u32 %v33, 7
  %v35 = vsub.s32 0, %v34
  %v36 = vrot.slane %v31, %v35
  %vm38 = vcmask 261120
  %v40 = vsel %vm38, %v26, 0
  %42 = vmatprep.subr.mxu0 0.0
  %43 = vmatpush1.msra.mxu0 %v27
  %44 = vmatprep.subr.mxu0 0.0
  %45 = vmatpush1.msra.mxu0 %v28
  %46 = vmatprep.subr.mxu0 0.0
  %47 = vmatpush1.msra.mxu0 %v29
  %48 = vmatprep.subr.mxu0 0.0
  %49 = vmatpush1.msra.mxu0 %v30
  %50 = vmatprep.subr.mxu0 0.0
  %51 = vmatpush1.msra.mxu0 0.0
  %52 = vmatprep.subr.mxu0 0.0
  %53 = vmatpush1.msra.mxu0 0.0
  %54 = vmatprep.subr.mxu0 0.0
  %55 = vmatpush1.msra.mxu0 0.0
  %56 = vmatprep.subr.mxu0 0.0
  %57 = vmatpush1.msra.mxu0 0.0
  %58 = vmatprep.subr.mxu0 0.0
  %59 = vmatpush1.msra.mxu0 0.0
  %60 = vmatprep.subr.mxu0 0.0
  %61 = vmatpush1.msra.mxu0 0.0
  %62 = vmatprep.subr.mxu0 0.0
  %63 = vmatpush1.msra.mxu0 0.0
  %64 = vmatprep.subr.mxu0 0.0
  %65 = vmatpush1.msra.mxu0 0.0
  %66 = vmatprep.subr.mxu0 0.0
  %67 = vmatpush1.msra.mxu0 0.0
  %68 = vmatprep.subr.mxu0 0.0
  %69 = vmatpush1.msra.mxu0 0.0
  %70 = vmatprep.subr.mxu0 0.0
  %71 = vmatpush1.msra.mxu0 0.0
  %72 = vmatprep.subr.mxu0 0.0
  %73 = vmatpush1.msra.mxu0 0.0
  %74 = vmatprep.subr.mxu0 0.0
  %75 = vmatpush1.msra.mxu0 0.0
  %76 = vmatprep.subr.mxu0 0.0
  %77 = vmatpush1.msra.mxu0 0.0
  %78 = vmatprep.subr.mxu0 0.0
  %79 = vmatpush1.msra.mxu0 0.0
  %80 = vmatprep.subr.mxu0 0.0
  %81 = vmatpush1.msra.mxu0 0.0
  %82 = vmatprep.subr.mxu0 0.0
  %83 = vmatpush1.msra.mxu0 0.0
  %84 = vmatprep.subr.mxu0 0.0
  %85 = vmatpush1.msra.mxu0 0.0
  %86 = vmatprep.subr.mxu0 0.0
  %87 = vmatpush1.msra.mxu0 0.0
  %88 = vmatprep.subr.mxu0 0.0
  %89 = vmatpush1.msra.mxu0 0.0
  %90 = vmatprep.subr.mxu0 0.0
  %91 = vmatpush1.msra.mxu0 0.0
  %92 = vmatprep.subr.mxu0 0.0
  %93 = vmatpush1.msra.mxu0 0.0
  %94 = vmatprep.subr.mxu0 0.0
  %95 = vmatpush1.msra.mxu0 0.0
  %96 = vmatprep.subr.mxu0 0.0
  %97 = vmatpush1.msra.mxu0 0.0
  %98 = vmatprep.subr.mxu0 0.0
  %99 = vmatpush1.msra.mxu0 0.0
  %100 = vmatprep.subr.mxu0 0.0
  %101 = vmatpush1.msra.mxu0 0.0
  %102 = vmatprep.subr.mxu0 0.0
  %103 = vmatpush1.msra.mxu0 0.0
  %104 = vmatprep.subr.mxu0 0.0
  %105 = vmatpush1.msra.mxu0 0.0
  %106 = vmatprep.mubr.f32.mxu0 0.0
  %107 = vmatmul.mubr.f32.gmra.mrb[0].mxu0 %v40
  %v108 = vpop.f32.mrb[0].mxu0
  %v109 = vadd.f32 %v36, %v108
  %v110 = vpop.f32.mrb[0].mxu0
  %111 = vdwg.mxu0
  %s112 = sld [smem:[#allocation2]]
  %v113 = vmax.f32 %v109, 0.0
  %v114 = vmin.f32 %v109, 0.0
  %v115 = vstv %s112
  %v116 = vmul.f32 %v115, %v114
  %v117 = vadd.f32 %v113, %v116
  %v118 = vld [vmem:[%s4] sm:$0xff]
  %v119 = vld [vmem:[%s4 + $0x8] sm:$0xff]
  %v120 = vld [vmem:[#allocation3] sm:$0x1]
  %v122 = vlaneseq
  %v123 = vshrl.u32 %v122, 7
  %v124 = vsub.s32 0, %v123
  %v125 = vrot.slane %v120, %v124
  %vm127 = vcmask 130048
  %v129 = vsel %vm127, %v117, 0
  %131 = vmatprep.subr.mxu0 0.0
  %132 = vmatpush1.msra.mxu0 %v118
  %133 = vmatprep.subr.mxu0 0.0
  %134 = vmatpush1.msra.mxu0 %v119
  %135 = vmatprep.subr.mxu0 0.0
  %136 = vmatpush1.msra.mxu0 0.0
  %137 = vmatprep.subr.mxu0 0.0
  %138 = vmatpush1.msra.mxu0 0.0
  %139 = vmatprep.subr.mxu0 0.0
  %140 = vmatpush1.msra.mxu0 0.0
  %141 = vmatprep.subr.mxu0 0.0
  %142 = vmatpush1.msra.mxu0 0.0
  %143 = vmatprep.subr.mxu0 0.0
  %144 = vmatpush1.msra.mxu0 0.0
  %145 = vmatprep.subr.mxu0 0.0
  %146 = vmatpush1.msra.mxu0 0.0
  %147 = vmatprep.subr.mxu0 0.0
  %148 = vmatpush1.msra.mxu0 0.0
  %149 = vmatprep.subr.mxu0 0.0
  %150 = vmatpush1.msra.mxu0 0.0
  %151 = vmatprep.subr.mxu0 0.0
  %152 = vmatpush1.msra.mxu0 0.0
  %153 = vmatprep.subr.mxu0 0.0
  %154 = vmatpush1.msra.mxu0 0.0
  %155 = vmatprep.subr.mxu0 0.0
  %156 = vmatpush1.msra.mxu0 0.0
  %157 = vmatprep.subr.mxu0 0.0
  %158 = vmatpush1.msra.mxu0 0.0
  %159 = vmatprep.subr.mxu0 0.0
  %160 = vmatpush1.msra.mxu0 0.0
  %161 = vmatprep.subr.mxu0 0.0
  %162 = vmatpush1.msra.mxu0 0.0
  %163 = vmatprep.subr.mxu0 0.0
  %164 = vmatpush1.msra.mxu0 0.0
  %165 = vmatprep.subr.mxu0 0.0
  %166 = vmatpush1.msra.mxu0 0.0
  %167 = vmatprep.subr.mxu0 0.0
  %168 = vmatpush1.msra.mxu0 0.0
  %169 = vmatprep.subr.mxu0 0.0
  %170 = vmatpush1.msra.mxu0 0.0
  %171 = vmatprep.subr.mxu0 0.0
  %172 = vmatpush1.msra.mxu0 0.0
  %173 = vmatprep.subr.mxu0 0.0
  %174 = vmatpush1.msra.mxu0 0.0
  %175 = vmatprep.subr.mxu0 0.0
  %176 = vmatpush1.msra.mxu0 0.0
  %177 = vmatprep.subr.mxu0 0.0
  %178 = vmatpush1.msra.mxu0 0.0
  %179 = vmatprep.subr.mxu0 0.0
  %180 = vmatpush1.msra.mxu0 0.0
  %181 = vmatprep.subr.mxu0 0.0
  %182 = vmatpush1.msra.mxu0 0.0
  %183 = vmatprep.subr.mxu0 0.0
  %184 = vmatpush1.msra.mxu0 0.0
  %185 = vmatprep.subr.mxu0 0.0
  %186 = vmatpush1.msra.mxu0 0.0
  %187 = vmatprep.subr.mxu0 0.0
  %188 = vmatpush1.msra.mxu0 0.0
  %189 = vmatprep.subr.mxu0 0.0
  %190 = vmatpush1.msra.mxu0 0.0
  %191 = vmatprep.subr.mxu0 0.0
  %192 = vmatpush1.msra.mxu0 0.0
  %193 = vmatprep.subr.mxu0 0.0
  %194 = vmatpush1.msra.mxu0 0.0
  %195 = vmatprep.mubr.f32.mxu0 0.0
  %196 = vmatmul.mubr.f32.gmra.mrb[0].mxu0 %v129
  %v197 = vpop.f32.mrb[0].mxu0
  %v198 = vadd.f32 %v125, %v197
  %v199 = vpop.f32.mrb[0].mxu0
  %200 = vdwg.mxu0
  %vm201 = vcmask 1024
  %202 = vst.msk [vmem:[%s6] sm:$0x3] %vm201, %v198
  // Predicated region
  $region26: #{seresnet_forward.7} parent=0 // pred_check
    _
  $region27: #{seresnet_forward.7} parent=0 // pred_check_branch
    %204 = sbr.rel (0) target = $region29
  $region28: #{seresnet_forward.7} parent=0 // pred_region
    _
  $region29: #{seresnet_forward.7} parent=0 // pred_fallthru
    _
  // Predicated region
  $region30: #{seresnet_forward.7} parent=0 // pred_check
    _
  $region31: #{seresnet_forward.7} parent=0 // pred_check_branch
    %206 = sbr.rel (0) target = $region33
  $region32: #{seresnet_forward.7} parent=0 // pred_region
    _
  $region33: #{seresnet_forward.7} parent=0 // pred_fallthru
    _

// kernel: seresnet_forward.6
$region0: #{seresnet_forward.6}
  #allocation0 [shape = 'u32[]', space=smem, size = 0x4, offset = 0x4, fixed_abs, tag = 'smem constant byte address 0x4 - core index']
  #allocation1 [shape = 'u32[144,128]{1,0:T(1,128)}', space=vmem, size = 0x12000, scoped, tag = 'internal scratch']
  %s0 = inlined_call_operand.vmem [shape: bf16[2,18,512], index: 0, kind: input, shape index: {}]
  %s1 = inlined_call_operand.vmem [shape: bf16[2,18,512], index: 1, kind: input, shape index: {}]
  %s2 = inlined_call_operand.vmem [shape: bf16[3,512,512], index: 2, kind: input, shape index: {}]
  %s3 = inlined_call_operand.vmem [shape: f32[1,512], index: 3, kind: input, shape index: {}]
  %s4 = inlined_call_operand.vmem [shape: f32[32,4], index: 4, kind: input, shape index: {}]
  %s5 = inlined_call_operand.vmem [shape: f32[1,4], index: 5, kind: input, shape index: {}]
  %s6 = inlined_call_operand.vmem [shape: f32[4,32], index: 6, kind: input, shape index: {}]
  %s7 = inlined_call_operand.vmem [shape: f32[1,32], index: 7, kind: input, shape index: {}]
  %s8 = inlined_call_operand.vmem [shape: f32[2,32], index: 8, kind: output, shape index: {}]
  %s9 = sld [smem:[#allocation0]]
  $region42: #{seresnet_forward.6} parent=0
    _
  %s11 = ssub.s32 1, %s9
  %s12 = scalar_select 0, %s11, %s9
  // Predicated region
  $region2: #{seresnet_forward.6} parent=0 // pred_check
    _
  $region3: #{seresnet_forward.6} parent=0 // pred_check_branch
    %14 = sbr.rel (0) target = $region5
  $region4: #{seresnet_forward.6} parent=0 // pred_region
    _
  $region5: #{seresnet_forward.6} parent=0 // pred_fallthru
    _
  // Predicated region
  $region6: #{seresnet_forward.6} parent=0 // pred_check
    _
  $region7: #{seresnet_forward.6} parent=0 // pred_check_branch
    %16 = sbr.rel (0) target = $region9
  $region8: #{seresnet_forward.6} parent=0 // pred_region
    _
  $region9: #{seresnet_forward.6} parent=0 // pred_fallthru
    _
  // Predicated region
  $region10: #{seresnet_forward.6} parent=0 // pred_check
    _
  $region11: #{seresnet_forward.6} parent=0 // pred_check_branch
    %18 = sbr.rel (0) target = $region13
  $region12: #{seresnet_forward.6} parent=0 // pred_region
    _
  $region13: #{seresnet_forward.6} parent=0 // pred_fallthru
    _
  // Predicated region
  $region14: #{seresnet_forward.6} parent=0 // pred_check
    _
  $region15: #{seresnet_forward.6} parent=0 // pred_check_branch
    %20 = sbr.rel (0) target = $region17
  $region16: #{seresnet_forward.6} parent=0 // pred_region
    _
  $region17: #{seresnet_forward.6} parent=0 // pred_fallthru
    _
  // Predicated region
  $region18: #{seresnet_forward.6} parent=0 // pred_check
    _
  $region19: #{seresnet_forward.6} parent=0 // pred_check_branch
    %22 = sbr.rel (0) target = $region21
  $region20: #{seresnet_forward.6} parent=0 // pred_region
    _
  $region21: #{seresnet_forward.6} parent=0 // pred_fallthru
    _
  // Predicated region
  $region22: #{seresnet_forward.6} parent=0 // pred_check
    _
  $region23: #{seresnet_forward.6} parent=0 // pred_check_branch
    %24 = sbr.rel (0) target = $region25
  $region24: #{seresnet_forward.6} parent=0 // pred_region
    _
  $region25: #{seresnet_forward.6} parent=0 // pred_fallthru
    _
  // Predicated region
  $region26: #{seresnet_forward.6} parent=0 // pred_check
    _
  $region27: #{seresnet_forward.6} parent=0 // pred_check_branch
    %26 = sbr.rel (0) target = $region29
  $region28: #{seresnet_forward.6} parent=0 // pred_region
    _
  $region29: #{seresnet_forward.6} parent=0 // pred_fallthru
    _
  // Predicated region
  $region30: #{seresnet_forward.6} parent=0 // pred_check
    _
  $region31: #{seresnet_forward.6} parent=0 // pred_check_branch
    %28 = sbr.rel (0) target = $region33
  $region32: #{seresnet_forward.6} parent=0 // pred_region
    _
  $region33: #{seresnet_forward.6} parent=0 // pred_fallthru
    _
  %v29 = vld [vmem:[%s0] sm:$0xff]
  %v30 = vld [vmem:[%s0 + $0x8] sm:$0xff]
  %v31 = vld [vmem:[%s0 + $0x10] sm:$0xff]
  %v32 = vld [vmem:[%s0 + $0x18] sm:$0xff]
  %v33 = vld [vmem:[%s0 + $0x20] sm:$0x11]
  %v34 = vld [vmem:[%s0 + $0x28] sm:$0x11]
  %v35 = vld [vmem:[%s0 + $0x30] sm:$0xff]
  %v36 = vld [vmem:[%s0 + $0x38] sm:$0xff]
  %v37 = vld [vmem:[%s0 + $0x40] sm:$0xff]
  %v38 = vld [vmem:[%s0 + $0x48] sm:$0xff]
  %v39 = vld [vmem:[%s0 + $0x50] sm:$0x11]
  %v40 = vld [vmem:[%s0 + $0x58] sm:$0x11]
  %v41 = vld [vmem:[%s2] sm:$0xff]
  %v42 = vld [vmem:[%s2 + $0x8] sm:$0xff]
  %v43 = vld [vmem:[%s2 + $0x10] sm:$0xff]
  %v44 = vld [vmem:[%s2 + $0x18] sm:$0xff]
  %v45 = vld [vmem:[%s2 + $0x20] sm:$0xff]
  %v46 = vld [vmem:[%s2 + $0x28] sm:$0xff]
  %v47 = vld [vmem:[%s2 + $0x30] sm:$0xff]
  %v48 = vld [vmem:[%s2 + $0x38] sm:$0xff]
  %v49 = vld [vmem:[%s2 + $0x40] sm:$0xff]
  %v50 = vld [vmem:[%s2 + $0x48] sm:$0xff]
  %v51 = vld [vmem:[%s2 + $0x50] sm:$0xff]
  %v52 = vld [vmem:[%s2 + $0x58] sm:$0xff]
  %v53 = vld [vmem:[%s2 + $0x60] sm:$0xff]
  %v54 = vld [vmem:[%s2 + $0x68] sm:$0xff]
  %v55 = vld [vmem:[%s2 + $0x70] sm:$0xff]
  %v56 = vld [vmem:[%s2 + $0x78] sm:$0xff]
  %v57 = vld [vmem:[%s2 + $0x80] sm:$0xff]
  %v58 = vld [vmem:[%s2 + $0x88] sm:$0xff]
  %v59 = vld [vmem:[%s2 + $0x90] sm:$0xff]
  %v60 = vld [vmem:[%s2 + $0x98] sm:$0xff]
  %v61 = vld [vmem:[%s2 + $0xa0] sm:$0xff]
  %v62 = vld [vmem:[%s2 + $0xa8] sm:$0xff]
  %v63 = vld [vmem:[%s2 + $0xb0] sm:$0xff]
  %v64 = vld [vmem:[%s2 + $0xb8] sm:$0xff]
  %v65 = vld [vmem:[%s2 + $0xc0] sm:$0xff]
  %v66 = vld [vmem:[%s2 + $0xc8] sm:$0xff]
  %v67 = vld [vmem:[%s2 + $0xd0] sm:$0xff]
  %v68 = vld [vmem:[%s2 + $0xd8] sm:$0xff]
  %v69 = vld [vmem:[%s2 + $0xe0] sm:$0xff]
  %v70 = vld [vmem:[%s2 + $0xe8] sm:$0xff]
  %v71 = vld [vmem:[%s2 + $0xf0] sm:$0xff]
  %v72 = vld [vmem:[%s2 + $0xf8] sm:$0xff]
  %v73 = vld [vmem:[%s2 + $0x100] sm:$0xff]
  %v74 = vld [vmem:[%s2 + $0x108] sm:$0xff]
  %v75 = vld [vmem:[%s2 + $0x110] sm:$0xff]
  %v76 = vld [vmem:[%s2 + $0x118] sm:$0xff]
  %v77 = vld [vmem:[%s2 + $0x120] sm:$0xff]
  %v78 = vld [vmem:[%s2 + $0x128] sm:$0xff]
  %v79 = vld [vmem:[%s2 + $0x130] sm:$0xff]
  %v80 = vld [vmem:[%s2 + $0x138] sm:$0xff]
  %v81 = vld [vmem:[%s2 + $0x140] sm:$0xff]
  %v82 = vld [vmem:[%s2 + $0x148] sm:$0xff]
  %v83 = vld [vmem:[%s2 + $0x150] sm:$0xff]
  %v84 = vld [vmem:[%s2 + $0x158] sm:$0xff]
  %v85 = vld [vmem:[%s2 + $0x160] sm:$0xff]
  %v86 = vld [vmem:[%s2 + $0x168] sm:$0xff]
  %v87 = vld [vmem:[%s2 + $0x170] sm:$0xff]
  %v88 = vld [vmem:[%s2 + $0x178] sm:$0xff]
  %v89 = vld [vmem:[%s2 + $0x180] sm:$0xff]
  %v90 = vld [vmem:[%s2 + $0x188] sm:$0xff]
  %v91 = vld [vmem:[%s2 + $0x190] sm:$0xff]
  %v92 = vld [vmem:[%s2 + $0x198] sm:$0xff]
  %v93 = vld [vmem:[%s2 + $0x1a0] sm:$0xff]
  %v94 = vld [vmem:[%s2 + $0x1a8] sm:$0xff]
  %v95 = vld [vmem:[%s2 + $0x1b0] sm:$0xff]
  %v96 = vld [vmem:[%s2 + $0x1b8] sm:$0xff]
  %v97 = vld [vmem:[%s2 + $0x1c0] sm:$0xff]
  %v98 = vld [vmem:[%s2 + $0x1c8] sm:$0xff]
  %v99 = vld [vmem:[%s2 + $0x1d0] sm:$0xff]
  %v100 = vld [vmem:[%s2 + $0x1d8] sm:$0xff]
  %v101 = vld [vmem:[%s2 + $0x1e0] sm:$0xff]
  %v102 = vld [vmem:[%s2 + $0x1e8] sm:$0xff]
  %v103 = vld [vmem:[%s2 + $0x1f0] sm:$0xff]
  %v104 = vld [vmem:[%s2 + $0x1f8] sm:$0xff]
  %v105 = vld [vmem:[%s2 + $0x200] sm:$0xff]
  %v106 = vld [vmem:[%s2 + $0x208] sm:$0xff]
  %v107 = vld [vmem:[%s2 + $0x210] sm:$0xff]
  %v108 = vld [vmem:[%s2 + $0x218] sm:$0xff]
  %v109 = vld [vmem:[%s2 + $0x220] sm:$0xff]
  %v110 = vld [vmem:[%s2 + $0x228] sm:$0xff]
  %v111 = vld [vmem:[%s2 + $0x230] sm:$0xff]
  %v112 = vld [vmem:[%s2 + $0x238] sm:$0xff]
  %v113 = vld [vmem:[%s2 + $0x240] sm:$0xff]
  %v114 = vld [vmem:[%s2 + $0x248] sm:$0xff]
  %v115 = vld [vmem:[%s2 + $0x250] sm:$0xff]
  %v116 = vld [vmem:[%s2 + $0x258] sm:$0xff]
  %v117 = vld [vmem:[%s2 + $0x260] sm:$0xff]
  %v118 = vld [vmem:[%s2 + $0x268] sm:$0xff]
  %v119 = vld [vmem:[%s2 + $0x270] sm:$0xff]
  %v120 = vld [vmem:[%s2 + $0x278] sm:$0xff]
  %v121 = vld [vmem:[%s2 + $0x280] sm:$0xff]
  %v122 = vld [vmem:[%s2 + $0x288] sm:$0xff]
  %v123 = vld [vmem:[%s2 + $0x290] sm:$0xff]
  %v124 = vld [vmem:[%s2 + $0x298] sm:$0xff]
  %v125 = vld [vmem:[%s2 + $0x2a0] sm:$0xff]
  %v126 = vld [vmem:[%s2 + $0x2a8] sm:$0xff]
  %v127 = vld [vmem:[%s2 + $0x2b0] sm:$0xff]
  %v128 = vld [vmem:[%s2 + $0x2b8] sm:$0xff]
  %v129 = vld [vmem:[%s2 + $0x2c0] sm:$0xff]
  %v130 = vld [vmem:[%s2 + $0x2c8] sm:$0xff]
  %v131 = vld [vmem:[%s2 + $0x2d0] sm:$0xff]
  %v132 = vld [vmem:[%s2 + $0x2d8] sm:$0xff]
  %v133 = vld [vmem:[%s2 + $0x2e0] sm:$0xff]
  %v134 = vld [vmem:[%s2 + $0x2e8] sm:$0xff]
  %v135 = vld [vmem:[%s2 + $0x2f0] sm:$0xff]
  %v136 = vld [vmem:[%s2 + $0x2f8] sm:$0xff]
  %v137 = vld [vmem:[%s2 + $0x300] sm:$0xff]
  %v138 = vld [vmem:[%s2 + $0x308] sm:$0xff]
  %v139 = vld [vmem:[%s2 + $0x310] sm:$0xff]
  %v140 = vld [vmem:[%s2 + $0x318] sm:$0xff]
  %v141 = vld [vmem:[%s2 + $0x320] sm:$0xff]
  %v142 = vld [vmem:[%s2 + $0x328] sm:$0xff]
  %v143 = vld [vmem:[%s2 + $0x330] sm:$0xff]
  %v144 = vld [vmem:[%s2 + $0x338] sm:$0xff]
  %v145 = vld [vmem:[%s2 + $0x340] sm:$0xff]
  %v146 = vld [vmem:[%s2 + $0x348] sm:$0xff]
  %v147 = vld [vmem:[%s2 + $0x350] sm:$0xff]
  %v148 = vld [vmem:[%s2 + $0x358] sm:$0xff]
  %v149 = vld [vmem:[%s2 + $0x360] sm:$0xff]
  %v150 = vld [vmem:[%s2 + $0x368] sm:$0xff]
  %v151 = vld [vmem:[%s2 + $0x370] sm:$0xff]
  %v152 = vld [vmem:[%s2 + $0x378] sm:$0xff]
  %v153 = vld [vmem:[%s2 + $0x380] sm:$0xff]
  %v154 = vld [vmem:[%s2 + $0x388] sm:$0xff]
  %v155 = vld [vmem:[%s2 + $0x390] sm:$0xff]
  %v156 = vld [vmem:[%s2 + $0x398] sm:$0xff]
  %v157 = vld [vmem:[%s2 + $0x3a0] sm:$0xff]
  %v158 = vld [vmem:[%s2 + $0x3a8] sm:$0xff]
  %v159 = vld [vmem:[%s2 + $0x3b0] sm:$0xff]
  %v160 = vld [vmem:[%s2 + $0x3b8] sm:$0xff]
  %v161 = vld [vmem:[%s2 + $0x3c0] sm:$0xff]
  %v162 = vld [vmem:[%s2 + $0x3c8] sm:$0xff]
  %v163 = vld [vmem:[%s2 + $0x3d0] sm:$0xff]
  %v164 = vld [vmem:[%s2 + $0x3d8] sm:$0xff]
  %v165 = vld [vmem:[%s2 + $0x3e0] sm:$0xff]
  %v166 = vld [vmem:[%s2 + $0x3e8] sm:$0xff]
  %v167 = vld [vmem:[%s2 + $0x3f0] sm:$0xff]
  %v168 = vld [vmem:[%s2 + $0x3f8] sm:$0xff]
  %vm169 = vsmask.f32 3328
  %vm170 = vsmask.f32 7440
  %vm171 = vmor %vm169, %vm170
  %v173 = vshrl.u32 %v29, 16
  %v175 = vrot.slane %v173, 4
  %v176 = vshll.u32 %v29, 16
  %v178 = vrot.slane %v176, 5
  %v179 = vor.u32 %v175, %v178
  %v180 = vrot.slane %v179, 4
  %v182 = vshll.u32 %v31, 16
  %v184 = vrot.slane %v182, 5
  %v185 = vsel %vm171, %v180, %v184
  %v187 = vshrl.u32 %v30, 16
  %v189 = vrot.slane %v187, 4
  %v190 = vshll.u32 %v30, 16
  %v192 = vrot.slane %v190, 5
  %v193 = vor.u32 %v189, %v192
  %v194 = vrot.slane %v193, 4
  %v196 = vshll.u32 %v32, 16
  %v198 = vrot.slane %v196, 5
  %v199 = vsel %vm171, %v194, %v198
  %v200 = vshrl.u32 %v31, 16
  %v202 = vrot.slane %v200, 4
  %v203 = vor.u32 %v202, %v184
  %v204 = vrot.slane %v203, 4
  %v206 = vshll.u32 %v33, 16
  %v208 = vrot.slane %v206, 5
  %v209 = vsel %vm171, %v204, %v208
  %v210 = vshrl.u32 %v32, 16
  %v212 = vrot.slane %v210, 4
  %v213 = vor.u32 %v212, %v198
  %v214 = vrot.slane %v213, 4
  %v216 = vshll.u32 %v34, 16
  %v218 = vrot.slane %v216, 5
  %v219 = vsel %vm171, %v214, %v218
  %v221 = vshrl.u32 %v35, 16
  %v223 = vrot.slane %v221, 4
  %v224 = vshll.u32 %v35, 16
  %v226 = vrot.slane %v224, 5
  %v227 = vor.u32 %v223, %v226
  %v228 = vrot.slane %v227, 4
  %v230 = vshll.u32 %v37, 16
  %v232 = vrot.slane %v230, 5
  %v233 = vsel %vm171, %v228, %v232
  %v235 = vshrl.u32 %v36, 16
  %v237 = vrot.slane %v235, 4
  %v238 = vshll.u32 %v36, 16
  %v240 = vrot.slane %v238, 5
  %v241 = vor.u32 %v237, %v240
  %v242 = vrot.slane %v241, 4
  %v244 = vshll.u32 %v38, 16
  %v246 = vrot.slane %v244, 5
  %v247 = vsel %vm171, %v242, %v246
  %v248 = vshrl.u32 %v37, 16
  %v250 = vrot.slane %v248, 4
  %v251 = vor.u32 %v250, %v232
  %v252 = vrot.slane %v251, 4
  %v254 = vshll.u32 %v39, 16
  %v256 = vrot.slane %v254, 5
  %v257 = vsel %vm171, %v252, %v256
  %v258 = vshrl.u32 %v38, 16
  %v260 = vrot.slane %v258, 4
  %v261 = vor.u32 %v260, %v246
  %v262 = vrot.slane %v261, 4
  %v264 = vshll.u32 %v40, 16
  %v266 = vrot.slane %v264, 5
  %v267 = vsel %vm171, %v262, %v266
  %s268 = scalar_lea.vmem %s2, 1024
  %v269 = vld [vmem:[%s268] sm:$0xff]
  %v270 = vld [vmem:[%s268 + $0x8] sm:$0xff]
  %v271 = vld [vmem:[%s268 + $0x10] sm:$0xff]
  %v272 = vld [vmem:[%s268 + $0x18] sm:$0xff]
  %v273 = vld [vmem:[%s268 + $0x20] sm:$0xff]
  %v274 = vld [vmem:[%s268 + $0x28] sm:$0xff]
  %v275 = vld [vmem:[%s268 + $0x30] sm:$0xff]
  %v276 = vld [vmem:[%s268 + $0x38] sm:$0xff]
  %v277 = vld [vmem:[%s268 + $0x40] sm:$0xff]
  %v278 = vld [vmem:[%s268 + $0x48] sm:$0xff]
  %v279 = vld [vmem:[%s268 + $0x50] sm:$0xff]
  %v280 = vld [vmem:[%s268 + $0x58] sm:$0xff]
  %v281 = vld [vmem:[%s268 + $0x60] sm:$0xff]
  %v282 = vld [vmem:[%s268 + $0x68] sm:$0xff]
  %v283 = vld [vmem:[%s268 + $0x70] sm:$0xff]
  %v284 = vld [vmem:[%s268 + $0x78] sm:$0xff]
  %v285 = vld [vmem:[%s268 + $0x80] sm:$0xff]
  %v286 = vld [vmem:[%s268 + $0x88] sm:$0xff]
  %v287 = vld [vmem:[%s268 + $0x90] sm:$0xff]
  %v288 = vld [vmem:[%s268 + $0x98] sm:$0xff]
  %v289 = vld [vmem:[%s268 + $0xa0] sm:$0xff]
  %v290 = vld [vmem:[%s268 + $0xa8] sm:$0xff]
  %v291 = vld [vmem:[%s268 + $0xb0] sm:$0xff]
  %v292 = vld [vmem:[%s268 + $0xb8] sm:$0xff]
  %v293 = vld [vmem:[%s268 + $0xc0] sm:$0xff]
  %v294 = vld [vmem:[%s268 + $0xc8] sm:$0xff]
  %v295 = vld [vmem:[%s268 + $0xd0] sm:$0xff]
  %v296 = vld [vmem:[%s268 + $0xd8] sm:$0xff]
  %v297 = vld [vmem:[%s268 + $0xe0] sm:$0xff]
  %v298 = vld [vmem:[%s268 + $0xe8] sm:$0xff]
  %v299 = vld [vmem:[%s268 + $0xf0] sm:$0xff]
  %v300 = vld [vmem:[%s268 + $0xf8] sm:$0xff]
  %v301 = vld [vmem:[%s268 + $0x100] sm:$0xff]
  %v302 = vld [vmem:[%s268 + $0x108] sm:$0xff]
  %v303 = vld [vmem:[%s268 + $0x110] sm:$0xff]
  %v304 = vld [vmem:[%s268 + $0x118] sm:$0xff]
  %v305 = vld [vmem:[%s268 + $0x120] sm:$0xff]
  %v306 = vld [vmem:[%s268 + $0x128] sm:$0xff]
  %v307 = vld [vmem:[%s268 + $0x130] sm:$0xff]
  %v308 = vld [vmem:[%s268 + $0x138] sm:$0xff]
  %v309 = vld [vmem:[%s268 + $0x140] sm:$0xff]
  %v310 = vld [vmem:[%s268 + $0x148] sm:$0xff]
  %v311 = vld [vmem:[%s268 + $0x150] sm:$0xff]
  %v312 = vld [vmem:[%s268 + $0x158] sm:$0xff]
  %v313 = vld [vmem:[%s268 + $0x160] sm:$0xff]
  %v314 = vld [vmem:[%s268 + $0x168] sm:$0xff]
  %v315 = vld [vmem:[%s268 + $0x170] sm:$0xff]
  %v316 = vld [vmem:[%s268 + $0x178] sm:$0xff]
  %v317 = vld [vmem:[%s268 + $0x180] sm:$0xff]
  %v318 = vld [vmem:[%s268 + $0x188] sm:$0xff]
  %v319 = vld [vmem:[%s268 + $0x190] sm:$0xff]
  %v320 = vld [vmem:[%s268 + $0x198] sm:$0xff]
  %v321 = vld [vmem:[%s268 + $0x1a0] sm:$0xff]
  %v322 = vld [vmem:[%s268 + $0x1a8] sm:$0xff]
  %v323 = vld [vmem:[%s268 + $0x1b0] sm:$0xff]
  %v324 = vld [vmem:[%s268 + $0x1b8] sm:$0xff]
  %v325 = vld [vmem:[%s268 + $0x1c0] sm:$0xff]
  %v326 = vld [vmem:[%s268 + $0x1c8] sm:$0xff]
  %v327 = vld [vmem:[%s268 + $0x1d0] sm:$0xff]
  %v328 = vld [vmem:[%s268 + $0x1d8] sm:$0xff]
  %v329 = vld [vmem:[%s268 + $0x1e0] sm:$0xff]
  %v330 = vld [vmem:[%s268 + $0x1e8] sm:$0xff]
  %v331 = vld [vmem:[%s268 + $0x1f0] sm:$0xff]
  %v332 = vld [vmem:[%s268 + $0x1f8] sm:$0xff]
  %v333 = vld [vmem:[%s268 + $0x200] sm:$0xff]
  %v334 = vld [vmem:[%s268 + $0x208] sm:$0xff]
  %v335 = vld [vmem:[%s268 + $0x210] sm:$0xff]
  %v336 = vld [vmem:[%s268 + $0x218] sm:$0xff]
  %v337 = vld [vmem:[%s268 + $0x220] sm:$0xff]
  %v338 = vld [vmem:[%s268 + $0x228] sm:$0xff]
  %v339 = vld [vmem:[%s268 + $0x230] sm:$0xff]
  %v340 = vld [vmem:[%s268 + $0x238] sm:$0xff]
  %v341 = vld [vmem:[%s268 + $0x240] sm:$0xff]
  %v342 = vld [vmem:[%s268 + $0x248] sm:$0xff]
  %v343 = vld [vmem:[%s268 + $0x250] sm:$0xff]
  %v344 = vld [vmem:[%s268 + $0x258] sm:$0xff]
  %v345 = vld [vmem:[%s268 + $0x260] sm:$0xff]
  %v346 = vld [vmem:[%s268 + $0x268] sm:$0xff]
  %v347 = vld [vmem:[%s268 + $0x270] sm:$0xff]
  %v348 = vld [vmem:[%s268 + $0x278] sm:$0xff]
  %v349 = vld [vmem:[%s268 + $0x280] sm:$0xff]
  %v350 = vld [vmem:[%s268 + $0x288] sm:$0xff]
  %v351 = vld [vmem:[%s268 + $0x290] sm:$0xff]
  %v352 = vld [vmem:[%s268 + $0x298] sm:$0xff]
  %v353 = vld [vmem:[%s268 + $0x2a0] sm:$0xff]
  %v354 = vld [vmem:[%s268 + $0x2a8] sm:$0xff]
  %v355 = vld [vmem:[%s268 + $0x2b0] sm:$0xff]
  %v356 = vld [vmem:[%s268 + $0x2b8] sm:$0xff]
  %v357 = vld [vmem:[%s268 + $0x2c0] sm:$0xff]
  %v358 = vld [vmem:[%s268 + $0x2c8] sm:$0xff]
  %v359 = vld [vmem:[%s268 + $0x2d0] sm:$0xff]
  %v360 = vld [vmem:[%s268 + $0x2d8] sm:$0xff]
  %v361 = vld [vmem:[%s268 + $0x2e0] sm:$0xff]
  %v362 = vld [vmem:[%s268 + $0x2e8] sm:$0xff]
  %v363 = vld [vmem:[%s268 + $0x2f0] sm:$0xff]
  %v364 = vld [vmem:[%s268 + $0x2f8] sm:$0xff]
  %v365 = vld [vmem:[%s268 + $0x300] sm:$0xff]
  %v366 = vld [vmem:[%s268 + $0x308] sm:$0xff]
  %v367 = vld [vmem:[%s268 + $0x310] sm:$0xff]
  %v368 = vld [vmem:[%s268 + $0x318] sm:$0xff]
  %v369 = vld [vmem:[%s268 + $0x320] sm:$0xff]
  %v370 = vld [vmem:[%s268 + $0x328] sm:$0xff]
  %v371 = vld [vmem:[%s268 + $0x330] sm:$0xff]
  %v372 = vld [vmem:[%s268 + $0x338] sm:$0xff]
  %v373 = vld [vmem:[%s268 + $0x340] sm:$0xff]
  %v374 = vld [vmem:[%s268 + $0x348] sm:$0xff]
  %v375 = vld [vmem:[%s268 + $0x350] sm:$0xff]
  %v376 = vld [vmem:[%s268 + $0x358] sm:$0xff]
  %v377 = vld [vmem:[%s268 + $0x360] sm:$0xff]
  %v378 = vld [vmem:[%s268 + $0x368] sm:$0xff]
  %v379 = vld [vmem:[%s268 + $0x370] sm:$0xff]
  %v380 = vld [vmem:[%s268 + $0x378] sm:$0xff]
  %v381 = vld [vmem:[%s268 + $0x380] sm:$0xff]
  %v382 = vld [vmem:[%s268 + $0x388] sm:$0xff]
  %v383 = vld [vmem:[%s268 + $0x390] sm:$0xff]
  %v384 = vld [vmem:[%s268 + $0x398] sm:$0xff]
  %v385 = vld [vmem:[%s268 + $0x3a0] sm:$0xff]
  %v386 = vld [vmem:[%s268 + $0x3a8] sm:$0xff]
  %v387 = vld [vmem:[%s268 + $0x3b0] sm:$0xff]
  %v388 = vld [vmem:[%s268 + $0x3b8] sm:$0xff]
  %v389 = vld [vmem:[%s268 + $0x3c0] sm:$0xff]
  %v390 = vld [vmem:[%s268 + $0x3c8] sm:$0xff]
  %v391 = vld [vmem:[%s268 + $0x3d0] sm:$0xff]
  %v392 = vld [vmem:[%s268 + $0x3d8] sm:$0xff]
  %v393 = vld [vmem:[%s268 + $0x3e0] sm:$0xff]
  %v394 = vld [vmem:[%s268 + $0x3e8] sm:$0xff]
  %v395 = vld [vmem:[%s268 + $0x3f0] sm:$0xff]
  %v396 = vld [vmem:[%s268 + $0x3f8] sm:$0xff]
  %v397 = vunpack.c.l.b16 %v185
  %v398 = vunpack.c.h.b16 %v185
  %v399 = vunpack.c.l.b16 %v199
  %v400 = vunpack.c.h.b16 %v199
  %v401 = vunpack.c.l.b16 %v209
  %v402 = vunpack.c.h.b16 %v209
  %v403 = vunpack.c.l.b16 %v219
  %v404 = vunpack.c.h.b16 %v219
  %v405 = vunpack.c.l.b16 %v233
  %v406 = vunpack.c.h.b16 %v233
  %v407 = vunpack.c.l.b16 %v247
  %v408 = vunpack.c.h.b16 %v247
  %v409 = vunpack.c.l.b16 %v257
  %v410 = vunpack.c.h.b16 %v257
  %v411 = vunpack.c.l.b16 %v267
  %v412 = vunpack.c.h.b16 %v267
  %v413 = vpack.c.b16 %v401, %v397
  %v414 = vpack.c.b16 %v402, %v398
  %v415 = vpack.c.b16 %v403, %v399
  %v416 = vpack.c.b16 %v404, %v400
  %v417 = vpack.c.b16 %v409, %v405
  %v418 = vpack.c.b16 %v410, %v406
  %v419 = vpack.c.b16 %v411, %v407
  %v420 = vpack.c.b16 %v412, %v408
  %v557 = vunpack.c.l.b16 %v269
  %v558 = vunpack.c.h.b16 %v269
  %v559 = vunpack.c.l.b16 %v270
  %v560 = vunpack.c.h.b16 %v270
  %v561 = vunpack.c.l.b16 %v271
  %v562 = vunpack.c.h.b16 %v271
  %v563 = vunpack.c.l.b16 %v272
  %v564 = vunpack.c.h.b16 %v272
  %v565 = vunpack.c.l.b16 %v273
  %v566 = vunpack.c.h.b16 %v273
  %v567 = vunpack.c.l.b16 %v274
  %v568 = vunpack.c.h.b16 %v274
  %v569 = vunpack.c.l.b16 %v275
  %v570 = vunpack.c.h.b16 %v275
  %v571 = vunpack.c.l.b16 %v276
  %v572 = vunpack.c.h.b16 %v276
  %v573 = vunpack.c.l.b16 %v277
  %v574 = vunpack.c.h.b16 %v277
  %v575 = vunpack.c.l.b16 %v278
  %v576 = vunpack.c.h.b16 %v278
  %v577 = vunpack.c.l.b16 %v279
  %v578 = vunpack.c.h.b16 %v279
  %v579 = vunpack.c.l.b16 %v280
  %v580 = vunpack.c.h.b16 %v280
  %v581 = vunpack.c.l.b16 %v281
  %v582 = vunpack.c.h.b16 %v281
  %v583 = vunpack.c.l.b16 %v282
  %v584 = vunpack.c.h.b16 %v282
  %v585 = vunpack.c.l.b16 %v283
  %v586 = vunpack.c.h.b16 %v283
  %v587 = vunpack.c.l.b16 %v284
  %v588 = vunpack.c.h.b16 %v284
  %v589 = vunpack.c.l.b16 %v285
  %v590 = vunpack.c.h.b16 %v285
  %v591 = vunpack.c.l.b16 %v286
  %v592 = vunpack.c.h.b16 %v286
  %v593 = vunpack.c.l.b16 %v287
  %v594 = vunpack.c.h.b16 %v287
  %v595 = vunpack.c.l.b16 %v288
  %v596 = vunpack.c.h.b16 %v288
  %v597 = vunpack.c.l.b16 %v289
  %v598 = vunpack.c.h.b16 %v289
  %v599 = vunpack.c.l.b16 %v290
  %v600 = vunpack.c.h.b16 %v290
  %v601 = vunpack.c.l.b16 %v291
  %v602 = vunpack.c.h.b16 %v291
  %v603 = vunpack.c.l.b16 %v292
  %v604 = vunpack.c.h.b16 %v292
  %v605 = vunpack.c.l.b16 %v293
  %v606 = vunpack.c.h.b16 %v293
  %v607 = vunpack.c.l.b16 %v294
  %v608 = vunpack.c.h.b16 %v294
  %v609 = vunpack.c.l.b16 %v295
  %v610 = vunpack.c.h.b16 %v295
  %v611 = vunpack.c.l.b16 %v296
  %v612 = vunpack.c.h.b16 %v296
  %v613 = vunpack.c.l.b16 %v297
  %v614 = vunpack.c.h.b16 %v297
  %v615 = vunpack.c.l.b16 %v298
  %v616 = vunpack.c.h.b16 %v298
  %v617 = vunpack.c.l.b16 %v299
  %v618 = vunpack.c.h.b16 %v299
  %v619 = vunpack.c.l.b16 %v300
  %v620 = vunpack.c.h.b16 %v300
  %v621 = vunpack.c.l.b16 %v301
  %v622 = vunpack.c.h.b16 %v301
  %v623 = vunpack.c.l.b16 %v302
  %v624 = vunpack.c.h.b16 %v302
  %v625 = vunpack.c.l.b16 %v303
  %v626 = vunpack.c.h.b16 %v303
  %v627 = vunpack.c.l.b16 %v304
  %v628 = vunpack.c.h.b16 %v304
  %v629 = vunpack.c.l.b16 %v305
  %v630 = vunpack.c.h.b16 %v305
  %v631 = vunpack.c.l.b16 %v306
  %v632 = vunpack.c.h.b16 %v306
  %v633 = vunpack.c.l.b16 %v307
  %v634 = vunpack.c.h.b16 %v307
  %v635 = vunpack.c.l.b16 %v308
  %v636 = vunpack.c.h.b16 %v308
  %v637 = vunpack.c.l.b16 %v309
  %v638 = vunpack.c.h.b16 %v309
  %v639 = vunpack.c.l.b16 %v310
  %v640 = vunpack.c.h.b16 %v310
  %v641 = vunpack.c.l.b16 %v311
  %v642 = vunpack.c.h.b16 %v311
  %v643 = vunpack.c.l.b16 %v312
  %v644 = vunpack.c.h.b16 %v312
  %v645 = vunpack.c.l.b16 %v313
  %v646 = vunpack.c.h.b16 %v313
  %v647 = vunpack.c.l.b16 %v314
  %v648 = vunpack.c.h.b16 %v314
  %v649 = vunpack.c.l.b16 %v315
  %v650 = vunpack.c.h.b16 %v315
  %v651 = vunpack.c.l.b16 %v316
  %v652 = vunpack.c.h.b16 %v316
  %v653 = vunpack.c.l.b16 %v317
  %v654 = vunpack.c.h.b16 %v317
  %v655 = vunpack.c.l.b16 %v318
  %v656 = vunpack.c.h.b16 %v318
  %v657 = vunpack.c.l.b16 %v319
  %v658 = vunpack.c.h.b16 %v319
  %v659 = vunpack.c.l.b16 %v320
  %v660 = vunpack.c.h.b16 %v320
  %v661 = vunpack.c.l.b16 %v321
  %v662 = vunpack.c.h.b16 %v321
  %v663 = vunpack.c.l.b16 %v322
  %v664 = vunpack.c.h.b16 %v322
  %v665 = vunpack.c.l.b16 %v323
  %v666 = vunpack.c.h.b16 %v323
  %v667 = vunpack.c.l.b16 %v324
  %v668 = vunpack.c.h.b16 %v324
  %v669 = vunpack.c.l.b16 %v325
  %v670 = vunpack.c.h.b16 %v325
  %v671 = vunpack.c.l.b16 %v326
  %v672 = vunpack.c.h.b16 %v326
  %v673 = vunpack.c.l.b16 %v327
  %v674 = vunpack.c.h.b16 %v327
  %v675 = vunpack.c.l.b16 %v328
  %v676 = vunpack.c.h.b16 %v328
  %v677 = vunpack.c.l.b16 %v329
  %v678 = vunpack.c.h.b16 %v329
  %v679 = vunpack.c.l.b16 %v330
  %v680 = vunpack.c.h.b16 %v330
  %v681 = vunpack.c.l.b16 %v331
  %v682 = vunpack.c.h.b16 %v331
  %v683 = vunpack.c.l.b16 %v332
  %v684 = vunpack.c.h.b16 %v332
  %v685 = vunpack.c.l.b16 %v333
  %v686 = vunpack.c.h.b16 %v333
  %v687 = vunpack.c.l.b16 %v334
  %v688 = vunpack.c.h.b16 %v334
  %v689 = vunpack.c.l.b16 %v335
  %v690 = vunpack.c.h.b16 %v335
  %v691 = vunpack.c.l.b16 %v336
  %v692 = vunpack.c.h.b16 %v336
  %v693 = vunpack.c.l.b16 %v337
  %v694 = vunpack.c.h.b16 %v337
  %v695 = vunpack.c.l.b16 %v338
  %v696 = vunpack.c.h.b16 %v338
  %v697 = vunpack.c.l.b16 %v339
  %v698 = vunpack.c.h.b16 %v339
  %v699 = vunpack.c.l.b16 %v340
  %v700 = vunpack.c.h.b16 %v340
  %v701 = vunpack.c.l.b16 %v341
  %v702 = vunpack.c.h.b16 %v341
  %v703 = vunpack.c.l.b16 %v342
  %v704 = vunpack.c.h.b16 %v342
  %v705 = vunpack.c.l.b16 %v343
  %v706 = vunpack.c.h.b16 %v343
  %v707 = vunpack.c.l.b16 %v344
  %v708 = vunpack.c.h.b16 %v344
  %v709 = vunpack.c.l.b16 %v345
  %v710 = vunpack.c.h.b16 %v345
  %v711 = vunpack.c.l.b16 %v346
  %v712 = vunpack.c.h.b16 %v346
  %v713 = vunpack.c.l.b16 %v347
  %v714 = vunpack.c.h.b16 %v347
  %v715 = vunpack.c.l.b16 %v348
  %v716 = vunpack.c.h.b16 %v348
  %v717 = vunpack.c.l.b16 %v349
  %v718 = vunpack.c.h.b16 %v349
  %v719 = vunpack.c.l.b16 %v350
  %v720 = vunpack.c.h.b16 %v350
  %v721 = vunpack.c.l.b16 %v351
  %v722 = vunpack.c.h.b16 %v351
  %v723 = vunpack.c.l.b16 %v352
  %v724 = vunpack.c.h.b16 %v352
  %v725 = vunpack.c.l.b16 %v353
  %v726 = vunpack.c.h.b16 %v353
  %v727 = vunpack.c.l.b16 %v354
  %v728 = vunpack.c.h.b16 %v354
  %v729 = vunpack.c.l.b16 %v355
  %v730 = vunpack.c.h.b16 %v355
  %v731 = vunpack.c.l.b16 %v356
  %v732 = vunpack.c.h.b16 %v356
  %v733 = vunpack.c.l.b16 %v357
  %v734 = vunpack.c.h.b16 %v357
  %v735 = vunpack.c.l.b16 %v358
  %v736 = vunpack.c.h.b16 %v358
  %v737 = vunpack.c.l.b16 %v359
  %v738 = vunpack.c.h.b16 %v359
  %v739 = vunpack.c.l.b16 %v360
  %v740 = vunpack.c.h.b16 %v360
  %v741 = vunpack.c.l.b16 %v361
  %v742 = vunpack.c.h.b16 %v361
  %v743 = vunpack.c.l.b16 %v362
  %v744 = vunpack.c.h.b16 %v362
  %v745 = vunpack.c.l.b16 %v363
  %v746 = vunpack.c.h.b16 %v363
  %v747 = vunpack.c.l.b16 %v364
  %v748 = vunpack.c.h.b16 %v364
  %v749 = vunpack.c.l.b16 %v365
  %v750 = vunpack.c.h.b16 %v365
  %v751 = vunpack.c.l.b16 %v366
  %v752 = vunpack.c.h.b16 %v366
  %v753 = vunpack.c.l.b16 %v367
  %v754 = vunpack.c.h.b16 %v367
  %v755 = vunpack.c.l.b16 %v368
  %v756 = vunpack.c.h.b16 %v368
  %v757 = vunpack.c.l.b16 %v369
  %v758 = vunpack.c.h.b16 %v369
  %v759 = vunpack.c.l.b16 %v370
  %v760 = vunpack.c.h.b16 %v370
  %v761 = vunpack.c.l.b16 %v371
  %v762 = vunpack.c.h.b16 %v371
  %v763 = vunpack.c.l.b16 %v372
  %v764 = vunpack.c.h.b16 %v372
  %v765 = vunpack.c.l.b16 %v373
  %v766 = vunpack.c.h.b16 %v373
  %v767 = vunpack.c.l.b16 %v374
  %v768 = vunpack.c.h.b16 %v374
  %v769 = vunpack.c.l.b16 %v375
  %v770 = vunpack.c.h.b16 %v375
  %v771 = vunpack.c.l.b16 %v376
  %v772 = vunpack.c.h.b16 %v376
  %v773 = vunpack.c.l.b16 %v377
  %v774 = vunpack.c.h.b16 %v377
  %v775 = vunpack.c.l.b16 %v378
  %v776 = vunpack.c.h.b16 %v378
  %v777 = vunpack.c.l.b16 %v379
  %v778 = vunpack.c.h.b16 %v379
  %v779 = vunpack.c.l.b16 %v380
  %v780 = vunpack.c.h.b16 %v380
  %v781 = vunpack.c.l.b16 %v381
  %v782 = vunpack.c.h.b16 %v381
  %v783 = vunpack.c.l.b16 %v382
  %v784 = vunpack.c.h.b16 %v382
  %v785 = vunpack.c.l.b16 %v383
  %v786 = vunpack.c.h.b16 %v383
  %v787 = vunpack.c.l.b16 %v384
  %v788 = vunpack.c.h.b16 %v384
  %v789 = vunpack.c.l.b16 %v385
  %v790 = vunpack.c.h.b16 %v385
  %v791 = vunpack.c.l.b16 %v386
  %v792 = vunpack.c.h.b16 %v386
  %v793 = vunpack.c.l.b16 %v387
  %v794 = vunpack.c.h.b16 %v387
  %v795 = vunpack.c.l.b16 %v388
  %v796 = vunpack.c.h.b16 %v388
  %v797 = vunpack.c.l.b16 %v389
  %v798 = vunpack.c.h.b16 %v389
  %v799 = vunpack.c.l.b16 %v390
  %v800 = vunpack.c.h.b16 %v390
  %v801 = vunpack.c.l.b16 %v391
  %v802 = vunpack.c.h.b16 %v391
  %v803 = vunpack.c.l.b16 %v392
  %v804 = vunpack.c.h.b16 %v392
  %v805 = vunpack.c.l.b16 %v393
  %v806 = vunpack.c.h.b16 %v393
  %v807 = vunpack.c.l.b16 %v394
  %v808 = vunpack.c.h.b16 %v394
  %v809 = vunpack.c.l.b16 %v395
  %v810 = vunpack.c.h.b16 %v395
  %v811 = vunpack.c.l.b16 %v396
  %v812 = vunpack.c.h.b16 %v396
  %v813 = vpack.c.b16 %v561, %v557
  %v814 = vpack.c.b16 %v562, %v558
  %v815 = vpack.c.b16 %v563, %v559
  %v816 = vpack.c.b16 %v564, %v560
  %v817 = vpack.c.b16 %v569, %v565
  %v818 = vpack.c.b16 %v570, %v566
  %v819 = vpack.c.b16 %v571, %v567
  %v820 = vpack.c.b16 %v572, %v568
  %v821 = vpack.c.b16 %v577, %v573
  %v822 = vpack.c.b16 %v578, %v574
  %v823 = vpack.c.b16 %v579, %v575
  %v824 = vpack.c.b16 %v580, %v576
  %v825 = vpack.c.b16 %v585, %v581
  %v826 = vpack.c.b16 %v586, %v582
  %v827 = vpack.c.b16 %v587, %v583
  %v828 = vpack.c.b16 %v588, %v584
  %v829 = vpack.c.b16 %v593, %v589
  %v830 = vpack.c.b16 %v594, %v590
  %v831 = vpack.c.b16 %v595, %v591
  %v832 = vpack.c.b16 %v596, %v592
  %v833 = vpack.c.b16 %v601, %v597
  %v834 = vpack.c.b16 %v602, %v598
  %v835 = vpack.c.b16 %v603, %v599
  %v836 = vpack.c.b16 %v604, %v600
  %v837 = vpack.c.b16 %v609, %v605
  %v838 = vpack.c.b16 %v610, %v606
  %v839 = vpack.c.b16 %v611, %v607
  %v840 = vpack.c.b16 %v612, %v608
  %v841 = vpack.c.b16 %v617, %v613
  %v842 = vpack.c.b16 %v618, %v614
  %v843 = vpack.c.b16 %v619, %v615
  %v844 = vpack.c.b16 %v620, %v616
  %v845 = vpack.c.b16 %v625, %v621
  %v846 = vpack.c.b16 %v626, %v622
  %v847 = vpack.c.b16 %v627, %v623
  %v848 = vpack.c.b16 %v628, %v624
  %v849 = vpack.c.b16 %v633, %v629
  %v850 = vpack.c.b16 %v634, %v630
  %v851 = vpack.c.b16 %v635, %v631
  %v852 = vpack.c.b16 %v636, %v632
  %v853 = vpack.c.b16 %v641, %v637
  %v854 = vpack.c.b16 %v642, %v638
  %v855 = vpack.c.b16 %v643, %v639
  %v856 = vpack.c.b16 %v644, %v640
  %v857 = vpack.c.b16 %v649, %v645
  %v858 = vpack.c.b16 %v650, %v646
  %v859 = vpack.c.b16 %v651, %v647
  %v860 = vpack.c.b16 %v652, %v648
  %v861 = vpack.c.b16 %v657, %v653
  %v862 = vpack.c.b16 %v658, %v654
  %v863 = vpack.c.b16 %v659, %v655
  %v864 = vpack.c.b16 %v660, %v656
  %v865 = vpack.c.b16 %v665, %v661
  %v866 = vpack.c.b16 %v666, %v662
  %v867 = vpack.c.b16 %v667, %v663
  %v868 = vpack.c.b16 %v668, %v664
  %v869 = vpack.c.b16 %v673, %v669
  %v870 = vpack.c.b16 %v674, %v670
  %v871 = vpack.c.b16 %v675, %v671
  %v872 = vpack.c.b16 %v676, %v672
  %v873 = vpack.c.b16 %v681, %v677
  %v874 = vpack.c.b16 %v682, %v678
  %v875 = vpack.c.b16 %v683, %v679
  %v876 = vpack.c.b16 %v684, %v680
  %v877 = vpack.c.b16 %v689, %v685
  %v878 = vpack.c.b16 %v690, %v686
  %v879 = vpack.c.b16 %v691, %v687
  %v880 = vpack.c.b16 %v692, %v688
  %v881 = vpack.c.b16 %v697, %v693
  %v882 = vpack.c.b16 %v698, %v694
  %v883 = vpack.c.b16 %v699, %v695
  %v884 = vpack.c.b16 %v700, %v696
  %v885 = vpack.c.b16 %v705, %v701
  %v886 = vpack.c.b16 %v706, %v702
  %v887 = vpack.c.b16 %v707, %v703
  %v888 = vpack.c.b16 %v708, %v704
  %v889 = vpack.c.b16 %v713, %v709
  %v890 = vpack.c.b16 %v714, %v710
  %v891 = vpack.c.b16 %v715, %v711
  %v892 = vpack.c.b16 %v716, %v712
  %v893 = vpack.c.b16 %v721, %v717
  %v894 = vpack.c.b16 %v722, %v718
  %v895 = vpack.c.b16 %v723, %v719
  %v896 = vpack.c.b16 %v724, %v720
  %v897 = vpack.c.b16 %v729, %v725
  %v898 = vpack.c.b16 %v730, %v726
  %v899 = vpack.c.b16 %v731, %v727
  %v900 = vpack.c.b16 %v732, %v728
  %v901 = vpack.c.b16 %v737, %v733
  %v902 = vpack.c.b16 %v738, %v734
  %v903 = vpack.c.b16 %v739, %v735
  %v904 = vpack.c.b16 %v740, %v736
  %v905 = vpack.c.b16 %v745, %v741
  %v906 = vpack.c.b16 %v746, %v742
  %v907 = vpack.c.b16 %v747, %v743
  %v908 = vpack.c.b16 %v748, %v744
  %v909 = vpack.c.b16 %v753, %v749
  %v910 = vpack.c.b16 %v754, %v750
  %v911 = vpack.c.b16 %v755, %v751
  %v912 = vpack.c.b16 %v756, %v752
  %v913 = vpack.c.b16 %v761, %v757
  %v914 = vpack.c.b16 %v762, %v758
  %v915 = vpack.c.b16 %v763, %v759
  %v916 = vpack.c.b16 %v764, %v760
  %v917 = vpack.c.b16 %v769, %v765
  %v918 = vpack.c.b16 %v770, %v766
  %v919 = vpack.c.b16 %v771, %v767
  %v920 = vpack.c.b16 %v772, %v768
  %v921 = vpack.c.b16 %v777, %v773
  %v922 = vpack.c.b16 %v778, %v774
  %v923 = vpack.c.b16 %v779, %v775
  %v924 = vpack.c.b16 %v780, %v776
  %v925 = vpack.c.b16 %v785, %v781
  %v926 = vpack.c.b16 %v786, %v782
  %v927 = vpack.c.b16 %v787, %v783
  %v928 = vpack.c.b16 %v788, %v784
  %v929 = vpack.c.b16 %v793, %v789
  %v930 = vpack.c.b16 %v794, %v790
  %v931 = vpack.c.b16 %v795, %v791
  %v932 = vpack.c.b16 %v796, %v792
  %v933 = vpack.c.b16 %v801, %v797
  %v934 = vpack.c.b16 %v802, %v798
  %v935 = vpack.c.b16 %v803, %v799
  %v936 = vpack.c.b16 %v804, %v800
  %v937 = vpack.c.b16 %v809, %v805
  %v938 = vpack.c.b16 %v810, %v806
  %v939 = vpack.c.b16 %v811, %v807
  %v940 = vpack.c.b16 %v812, %v808
  %1069 = vmatprep.subr.bf16.mxu0 %v814
  %1070 = vmatpush1.bf16.msra.mxu0 %v813
  %1071 = vmatprep.subr.bf16.mxu0 %v818
  %1072 = vmatpush1.bf16.msra.mxu0 %v817
  %1073 = vmatprep.subr.bf16.mxu0 %v822
  %1074 = vmatpush1.bf16.msra.mxu0 %v821
  %1075 = vmatprep.subr.bf16.mxu0 %v826
  %1076 = vmatpush1.bf16.msra.mxu0 %v825
  %1077 = vmatprep.subr.bf16.mxu0 %v830
  %1078 = vmatpush1.bf16.msra.mxu0 %v829
  %1079 = vmatprep.subr.bf16.mxu0 %v834
  %1080 = vmatpush1.bf16.msra.mxu0 %v833
  %1081 = vmatprep.subr.bf16.mxu0 %v838
  %1082 = vmatpush1.bf16.msra.mxu0 %v837
  %1083 = vmatprep.subr.bf16.mxu0 %v842
  %1084 = vmatpush1.bf16.msra.mxu0 %v841
  %1085 = vmatprep.subr.bf16.mxu0 %v846
  %1086 = vmatpush1.bf16.msra.mxu0 %v845
  %1087 = vmatprep.subr.bf16.mxu0 %v850
  %1088 = vmatpush1.bf16.msra.mxu0 %v849
  %1089 = vmatprep.subr.bf16.mxu0 %v854
  %1090 = vmatpush1.bf16.msra.mxu0 %v853
  %1091 = vmatprep.subr.bf16.mxu0 %v858
  %1092 = vmatpush1.bf16.msra.mxu0 %v857
  %1093 = vmatprep.subr.bf16.mxu0 %v862
  %1094 = vmatpush1.bf16.msra.mxu0 %v861
  %1095 = vmatprep.subr.bf16.mxu0 %v866
  %1096 = vmatpush1.bf16.msra.mxu0 %v865
  %1097 = vmatprep.subr.bf16.mxu0 %v870
  %1098 = vmatpush1.bf16.msra.mxu0 %v869
  %1099 = vmatprep.subr.bf16.mxu0 %v874
  %1100 = vmatpush1.bf16.msra.mxu0 %v873
  %1101 = vmatprep.mubr.bf16.mxu0 %v414
  %1102 = vmatmul.mubr.bf16.gmra.mrb[0].mxu0 %v413
  %v1103 = vpop.f32.mrb[0].mxu0
  %v1104 = vadd.f32 0.0, %v1103
  %v1105 = vpop.f32.mrb[0].mxu0
  %v1106 = vadd.f32 0.0, %v1105
  %v1107 = vpop.f32.mrb[0].mxu0
  %v1108 = vadd.f32 0.0, %v1107
  %v1109 = vpop.f32.mrb[0].mxu0
  %v1110 = vadd.f32 0.0, %v1109
  %1111 = vmatprep.mubr.bf16.mxu0 %v418
  %1112 = vmatmul.mubr.bf16.gmra.mrb[0].mxu0 %v417
  %v1113 = vpop.f32.mrb[0].mxu0
  %v1114 = vadd.f32 0.0, %v1113
  %v1115 = vpop.f32.mrb[0].mxu0
  %v1116 = vadd.f32 0.0, %v1115
  %v1117 = vpop.f32.mrb[0].mxu0
  %v1118 = vadd.f32 0.0, %v1117
  %v1119 = vpop.f32.mrb[0].mxu0
  %v1120 = vadd.f32 0.0, %v1119
  %1121 = vdwg.mxu0
  %1122 = vmatprep.subr.bf16.mxu0 %v878
  %1123 = vmatpush1.bf16.msra.mxu0 %v877
  %1124 = vmatprep.subr.bf16.mxu0 %v882
  %1125 = vmatpush1.bf16.msra.mxu0 %v881
  %1126 = vmatprep.subr.bf16.mxu0 %v886
  %1127 = vmatpush1.bf16.msra.mxu0 %v885
  %1128 = vmatprep.subr.bf16.mxu0 %v890
  %1129 = vmatpush1.bf16.msra.mxu0 %v889
  %1130 = vmatprep.subr.bf16.mxu0 %v894
  %1131 = vmatpush1.bf16.msra.mxu0 %v893
  %1132 = vmatprep.subr.bf16.mxu0 %v898
  %1133 = vmatpush1.bf16.msra.mxu0 %v897
  %1134 = vmatprep.subr.bf16.mxu0 %v902
  %1135 = vmatpush1.bf16.msra.mxu0 %v901
  %1136 = vmatprep.subr.bf16.mxu0 %v906
  %1137 = vmatpush1.bf16.msra.mxu0 %v905
  %1138 = vmatprep.subr.bf16.mxu0 %v910
  %1139 = vmatpush1.bf16.msra.mxu0 %v909
  %1140 = vmatprep.subr.bf16.mxu0 %v914
  %1141 = vmatpush1.bf16.msra.mxu0 %v913
  %1142 = vmatprep.subr.bf16.mxu0 %v918
  %1143 = vmatpush1.bf16.msra.mxu0 %v917
  %1144 = vmatprep.subr.bf16.mxu0 %v922
  %1145 = vmatpush1.bf16.msra.mxu0 %v921
  %1146 = vmatprep.subr.bf16.mxu0 %v926
  %1147 = vmatpush1.bf16.msra.mxu0 %v925
  %1148 = vmatprep.subr.bf16.mxu0 %v930
  %1149 = vmatpush1.bf16.msra.mxu0 %v929
  %1150 = vmatprep.subr.bf16.mxu0 %v934
  %1151 = vmatpush1.bf16.msra.mxu0 %v933
  %1152 = vmatprep.subr.bf16.mxu0 %v938
  %1153 = vmatpush1.bf16.msra.mxu0 %v937
  %1154 = vmatprep.mubr.bf16.mxu0 %v416
  %1155 = vmatmul.mubr.bf16.gmra.mrb[0].mxu0 %v415
  %v1156 = vpop.f32.mrb[0].mxu0
  %v1157 = vadd.f32 %v1104, %v1156
  %v1158 = vpop.f32.mrb[0].mxu0
  %v1159 = vadd.f32 %v1106, %v1158
  %v1160 = vpop.f32.mrb[0].mxu0
  %v1161 = vadd.f32 %v1108, %v1160
  %v1162 = vpop.f32.mrb[0].mxu0
  %v1163 = vadd.f32 %v1110, %v1162
  %1164 = vmatprep.mubr.bf16.mxu0 %v420
  %1165 = vmatmul.mubr.bf16.gmra.mrb[0].mxu0 %v419
  %v1166 = vpop.f32.mrb[0].mxu0
  %v1167 = vadd.f32 %v1114, %v1166
  %v1168 = vpop.f32.mrb[0].mxu0
  %v1169 = vadd.f32 %v1116, %v1168
  %v1170 = vpop.f32.mrb[0].mxu0
  %v1171 = vadd.f32 %v1118, %v1170
  %v1172 = vpop.f32.mrb[0].mxu0
  %v1173 = vadd.f32 %v1120, %v1172
  %1174 = vdwg.mxu0
  %1175 = vmatprep.subr.bf16.mxu0 %v816
  %1176 = vmatpush1.bf16.msra.mxu0 %v815
  %1177 = vmatprep.subr.bf16.mxu0 %v820
  %1178 = vmatpush1.bf16.msra.mxu0 %v819
  %1179 = vmatprep.subr.bf16.mxu0 %v824
  %1180 = vmatpush1.bf16.msra.mxu0 %v823
  %1181 = vmatprep.subr.bf16.mxu0 %v828
  %1182 = vmatpush1.bf16.msra.mxu0 %v827
  %1183 = vmatprep.subr.bf16.mxu0 %v832
  %1184 = vmatpush1.bf16.msra.mxu0 %v831
  %1185 = vmatprep.subr.bf16.mxu0 %v836
  %1186 = vmatpush1.bf16.msra.mxu0 %v835
  %1187 = vmatprep.subr.bf16.mxu0 %v840
  %1188 = vmatpush1.bf16.msra.mxu0 %v839
  %1189 = vmatprep.subr.bf16.mxu0 %v844
  %1190 = vmatpush1.bf16.msra.mxu0 %v843
  %1191 = vmatprep.subr.bf16.mxu0 %v848
  %1192 = vmatpush1.bf16.msra.mxu0 %v847
  %1193 = vmatprep.subr.bf16.mxu0 %v852
  %1194 = vmatpush1.bf16.msra.mxu0 %v851
  %1195 = vmatprep.subr.bf16.mxu0 %v856
  %1196 = vmatpush1.bf16.msra.mxu0 %v855
  %1197 = vmatprep.subr.bf16.mxu0 %v860
  %1198 = vmatpush1.bf16.msra.mxu0 %v859
  %1199 = vmatprep.subr.bf16.mxu0 %v864
  %1200 = vmatpush1.bf16.msra.mxu0 %v863
  %1201 = vmatprep.subr.bf16.mxu0 %v868
  %1202 = vmatpush1.bf16.msra.mxu0 %v867
  %1203 = vmatprep.subr.bf16.mxu0 %v872
  %1204 = vmatpush1.bf16.msra.mxu0 %v871
  %1205 = vmatprep.subr.bf16.mxu0 %v876
  %1206 = vmatpush1.bf16.msra.mxu0 %v875
  %1207 = vmatprep.mubr.bf16.mxu0 %v414
  %1208 = vmatmul.mubr.bf16.gmra.mrb[0].mxu0 %v413
  %v1209 = vpop.f32.mrb[0].mxu0
  %v1210 = vadd.f32 0.0, %v1209
  %v1211 = vpop.f32.mrb[0].mxu0
  %v1212 = vadd.f32 0.0, %v1211
  %v1213 = vpop.f32.mrb[0].mxu0
  %v1214 = vadd.f32 0.0, %v1213
  %v1215 = vpop.f32.mrb[0].mxu0
  %v1216 = vadd.f32 0.0, %v1215
  %1217 = vmatprep.mubr.bf16.mxu0 %v418
  %1218 = vmatmul.mubr.bf16.gmra.mrb[0].mxu0 %v417
  %v1219 = vpop.f32.mrb[0].mxu0
  %v1220 = vadd.f32 0.0, %v1219
  %v1221 = vpop.f32.mrb[0].mxu0
  %v1222 = vadd.f32 0.0, %v1221
  %v1223 = vpop.f32.mrb[0].mxu0
  %v1224 = vadd.f32 0.0, %v1223
  %v1225 = vpop.f32.mrb[0].mxu0
  %v1226 = vadd.f32 0.0, %v1225
  %1227 = vdwg.mxu0
  %1228 = vmatprep.subr.bf16.mxu0 %v880
  %1229 = vmatpush1.bf16.msra.mxu0 %v879
  %1230 = vmatprep.subr.bf16.mxu0 %v884
  %1231 = vmatpush1.bf16.msra.mxu0 %v883
  %1232 = vmatprep.subr.bf16.mxu0 %v888
  %1233 = vmatpush1.bf16.msra.mxu0 %v887
  %1234 = vmatprep.subr.bf16.mxu0 %v892
  %1235 = vmatpush1.bf16.msra.mxu0 %v891
  %1236 = vmatprep.subr.bf16.mxu0 %v896
  %1237 = vmatpush1.bf16.msra.mxu0 %v895
  %1238 = vmatprep.subr.bf16.mxu0 %v900
  %1239 = vmatpush1.bf16.msra.mxu0 %v899
  %1240 = vmatprep.subr.bf16.mxu0 %v904
  %1241 = vmatpush1.bf16.msra.mxu0 %v903
  %1242 = vmatprep.subr.bf16.mxu0 %v908
  %1243 = vmatpush1.bf16.msra.mxu0 %v907
  %1244 = vmatprep.subr.bf16.mxu0 %v912
  %1245 = vmatpush1.bf16.msra.mxu0 %v911
  %1246 = vmatprep.subr.bf16.mxu0 %v916
  %1247 = vmatpush1.bf16.msra.mxu0 %v915
  %1248 = vmatprep.subr.bf16.mxu0 %v920
  %1249 = vmatpush1.bf16.msra.mxu0 %v919
  %1250 = vmatprep.subr.bf16.mxu0 %v924
  %1251 = vmatpush1.bf16.msra.mxu0 %v923
  %1252 = vmatprep.subr.bf16.mxu0 %v928
  %1253 = vmatpush1.bf16.msra.mxu0 %v927
  %1254 = vmatprep.subr.bf16.mxu0 %v932
  %1255 = vmatpush1.bf16.msra.mxu0 %v931
  %1256 = vmatprep.subr.bf16.mxu0 %v936
  %1257 = vmatpush1.bf16.msra.mxu0 %v935
  %1258 = vmatprep.subr.bf16.mxu0 %v940
  %1259 = vmatpush1.bf16.msra.mxu0 %v939
  %1260 = vmatprep.mubr.bf16.mxu0 %v416
  %1261 = vmatmul.mubr.bf16.gmra.mrb[0].mxu0 %v415
  %v1262 = vpop.f32.mrb[0].mxu0
  %v1263 = vadd.f32 %v1210, %v1262
  %v1264 = vpop.f32.mrb[0].mxu0
  %v1265 = vadd.f32 %v1212, %v1264
  %v1266 = vpop.f32.mrb[0].mxu0
  %v1267 = vadd.f32 %v1214, %v1266
  %v1268 = vpop.f32.mrb[0].mxu0
  %v1269 = vadd.f32 %v1216, %v1268
  %1270 = vmatprep.mubr.bf16.mxu0 %v420
  %1271 = vmatmul.mubr.bf16.gmra.mrb[0].mxu0 %v419
  %v1272 = vpop.f32.mrb[0].mxu0
  %v1273 = vadd.f32 %v1220, %v1272
  %v1274 = vpop.f32.mrb[0].mxu0
  %v1275 = vadd.f32 %v1222, %v1274
  %v1276 = vpop.f32.mrb[0].mxu0
  %v1277 = vadd.f32 %v1224, %v1276
  %v1278 = vpop.f32.mrb[0].mxu0
  %v1279 = vadd.f32 %v1226, %v1278
  %1280 = vdwg.mxu0
  %v1289 = vunpack.c.l.b16 %v29
  %v1290 = vunpack.c.h.b16 %v29
  %v1291 = vunpack.c.l.b16 %v30
  %v1292 = vunpack.c.h.b16 %v30
  %v1293 = vunpack.c.l.b16 %v31
  %v1294 = vunpack.c.h.b16 %v31
  %v1295 = vunpack.c.l.b16 %v32
  %v1296 = vunpack.c.h.b16 %v32
  %v1297 = vunpack.c.l.b16 %v35
  %v1298 = vunpack.c.h.b16 %v35
  %v1299 = vunpack.c.l.b16 %v36
  %v1300 = vunpack.c.h.b16 %v36
  %v1301 = vunpack.c.l.b16 %v37
  %v1302 = vunpack.c.h.b16 %v37
  %v1303 = vunpack.c.l.b16 %v38
  %v1304 = vunpack.c.h.b16 %v38
  %v1305 = vpack.c.b16 %v1293, %v1289
  %v1306 = vpack.c.b16 %v1294, %v1290
  %v1307 = vpack.c.b16 %v1295, %v1291
  %v1308 = vpack.c.b16 %v1296, %v1292
  %v1309 = vpack.c.b16 %v1301, %v1297
  %v1310 = vpack.c.b16 %v1302, %v1298
  %v1311 = vpack.c.b16 %v1303, %v1299
  %v1312 = vpack.c.b16 %v1304, %v1300
  %v1449 = vunpack.c.l.b16 %v41
  %v1450 = vunpack.c.h.b16 %v41
  %v1451 = vunpack.c.l.b16 %v42
  %v1452 = vunpack.c.h.b16 %v42
  %v1453 = vunpack.c.l.b16 %v43
  %v1454 = vunpack.c.h.b16 %v43
  %v1455 = vunpack.c.l.b16 %v44
  %v1456 = vunpack.c.h.b16 %v44
  %v1457 = vunpack.c.l.b16 %v45
  %v1458 = vunpack.c.h.b16 %v45
  %v1459 = vunpack.c.l.b16 %v46
  %v1460 = vunpack.c.h.b16 %v46
  %v1461 = vunpack.c.l.b16 %v47
  %v1462 = vunpack.c.h.b16 %v47
  %v1463 = vunpack.c.l.b16 %v48
  %v1464 = vunpack.c.h.b16 %v48
  %v1465 = vunpack.c.l.b16 %v49
  %v1466 = vunpack.c.h.b16 %v49
  %v1467 = vunpack.c.l.b16 %v50
  %v1468 = vunpack.c.h.b16 %v50
  %v1469 = vunpack.c.l.b16 %v51
  %v1470 = vunpack.c.h.b16 %v51
  %v1471 = vunpack.c.l.b16 %v52
  %v1472 = vunpack.c.h.b16 %v52
  %v1473 = vunpack.c.l.b16 %v53
  %v1474 = vunpack.c.h.b16 %v53
  %v1475 = vunpack.c.l.b16 %v54
  %v1476 = vunpack.c.h.b16 %v54
  %v1477 = vunpack.c.l.b16 %v55
  %v1478 = vunpack.c.h.b16 %v55
  %v1479 = vunpack.c.l.b16 %v56
  %v1480 = vunpack.c.h.b16 %v56
  %v1481 = vunpack.c.l.b16 %v57
  %v1482 = vunpack.c.h.b16 %v57
  %v1483 = vunpack.c.l.b16 %v58
  %v1484 = vunpack.c.h.b16 %v58
  %v1485 = vunpack.c.l.b16 %v59
  %v1486 = vunpack.c.h.b16 %v59
  %v1487 = vunpack.c.l.b16 %v60
  %v1488 = vunpack.c.h.b16 %v60
  %v1489 = vunpack.c.l.b16 %v61
  %v1490 = vunpack.c.h.b16 %v61
  %v1491 = vunpack.c.l.b16 %v62
  %v1492 = vunpack.c.h.b16 %v62
  %v1493 = vunpack.c.l.b16 %v63
  %v1494 = vunpack.c.h.b16 %v63
  %v1495 = vunpack.c.l.b16 %v64
  %v1496 = vunpack.c.h.b16 %v64
  %v1497 = vunpack.c.l.b16 %v65
  %v1498 = vunpack.c.h.b16 %v65
  %v1499 = vunpack.c.l.b16 %v66
  %v1500 = vunpack.c.h.b16 %v66
  %v1501 = vunpack.c.l.b16 %v67
  %v1502 = vunpack.c.h.b16 %v67
  %v1503 = vunpack.c.l.b16 %v68
  %v1504 = vunpack.c.h.b16 %v68
  %v1505 = vunpack.c.l.b16 %v69
  %v1506 = vunpack.c.h.b16 %v69
  %v1507 = vunpack.c.l.b16 %v70
  %v1508 = vunpack.c.h.b16 %v70
  %v1509 = vunpack.c.l.b16 %v71
  %v1510 = vunpack.c.h.b16 %v71
  %v1511 = vunpack.c.l.b16 %v72
  %v1512 = vunpack.c.h.b16 %v72
  %v1513 = vunpack.c.l.b16 %v73
  %v1514 = vunpack.c.h.b16 %v73
  %v1515 = vunpack.c.l.b16 %v74
  %v1516 = vunpack.c.h.b16 %v74
  %v1517 = vunpack.c.l.b16 %v75
  %v1518 = vunpack.c.h.b16 %v75
  %v1519 = vunpack.c.l.b16 %v76
  %v1520 = vunpack.c.h.b16 %v76
  %v1521 = vunpack.c.l.b16 %v77
  %v1522 = vunpack.c.h.b16 %v77
  %v1523 = vunpack.c.l.b16 %v78
  %v1524 = vunpack.c.h.b16 %v78
  %v1525 = vunpack.c.l.b16 %v79
  %v1526 = vunpack.c.h.b16 %v79
  %v1527 = vunpack.c.l.b16 %v80
  %v1528 = vunpack.c.h.b16 %v80
  %v1529 = vunpack.c.l.b16 %v81
  %v1530 = vunpack.c.h.b16 %v81
  %v1531 = vunpack.c.l.b16 %v82
  %v1532 = vunpack.c.h.b16 %v82
  %v1533 = vunpack.c.l.b16 %v83
  %v1534 = vunpack.c.h.b16 %v83
  %v1535 = vunpack.c.l.b16 %v84
  %v1536 = vunpack.c.h.b16 %v84
  %v1537 = vunpack.c.l.b16 %v85
  %v1538 = vunpack.c.h.b16 %v85
  %v1539 = vunpack.c.l.b16 %v86
  %v1540 = vunpack.c.h.b16 %v86
  %v1541 = vunpack.c.l.b16 %v87
  %v1542 = vunpack.c.h.b16 %v87
  %v1543 = vunpack.c.l.b16 %v88
  %v1544 = vunpack.c.h.b16 %v88
  %v1545 = vunpack.c.l.b16 %v89
  %v1546 = vunpack.c.h.b16 %v89
  %v1547 = vunpack.c.l.b16 %v90
  %v1548 = vunpack.c.h.b16 %v90
  %v1549 = vunpack.c.l.b16 %v91
  %v1550 = vunpack.c.h.b16 %v91
  %v1551 = vunpack.c.l.b16 %v92
  %v1552 = vunpack.c.h.b16 %v92
  %v1553 = vunpack.c.l.b16 %v93
  %v1554 = vunpack.c.h.b16 %v93
  %v1555 = vunpack.c.l.b16 %v94
  %v1556 = vunpack.c.h.b16 %v94
  %v1557 = vunpack.c.l.b16 %v95
  %v1558 = vunpack.c.h.b16 %v95
  %v1559 = vunpack.c.l.b16 %v96
  %v1560 = vunpack.c.h.b16 %v96
  %v1561 = vunpack.c.l.b16 %v97
  %v1562 = vunpack.c.h.b16 %v97
  %v1563 = vunpack.c.l.b16 %v98
  %v1564 = vunpack.c.h.b16 %v98
  %v1565 = vunpack.c.l.b16 %v99
  %v1566 = vunpack.c.h.b16 %v99
  %v1567 = vunpack.c.l.b16 %v100
  %v1568 = vunpack.c.h.b16 %v100
  %v1569 = vunpack.c.l.b16 %v101
  %v1570 = vunpack.c.h.b16 %v101
  %v1571 = vunpack.c.l.b16 %v102
  %v1572 = vunpack.c.h.b16 %v102
  %v1573 = vunpack.c.l.b16 %v103
  %v1574 = vunpack.c.h.b16 %v103
  %v1575 = vunpack.c.l.b16 %v104
  %v1576 = vunpack.c.h.b16 %v104
  %v1577 = vunpack.c.l.b16 %v105
  %v1578 = vunpack.c.h.b16 %v105
  %v1579 = vunpack.c.l.b16 %v106
  %v1580 = vunpack.c.h.b16 %v106
  %v1581 = vunpack.c.l.b16 %v107
  %v1582 = vunpack.c.h.b16 %v107
  %v1583 = vunpack.c.l.b16 %v108
  %v1584 = vunpack.c.h.b16 %v108
  %v1585 = vunpack.c.l.b16 %v109
  %v1586 = vunpack.c.h.b16 %v109
  %v1587 = vunpack.c.l.b16 %v110
  %v1588 = vunpack.c.h.b16 %v110
  %v1589 = vunpack.c.l.b16 %v111
  %v1590 = vunpack.c.h.b16 %v111
  %v1591 = vunpack.c.l.b16 %v112
  %v1592 = vunpack.c.h.b16 %v112
  %v1593 = vunpack.c.l.b16 %v113
  %v1594 = vunpack.c.h.b16 %v113
  %v1595 = vunpack.c.l.b16 %v114
  %v1596 = vunpack.c.h.b16 %v114
  %v1597 = vunpack.c.l.b16 %v115
  %v1598 = vunpack.c.h.b16 %v115
  %v1599 = vunpack.c.l.b16 %v116
  %v1600 = vunpack.c.h.b16 %v116
  %v1601 = vunpack.c.l.b16 %v117
  %v1602 = vunpack.c.h.b16 %v117
  %v1603 = vunpack.c.l.b16 %v118
  %v1604 = vunpack.c.h.b16 %v118
  %v1605 = vunpack.c.l.b16 %v119
  %v1606 = vunpack.c.h.b16 %v119
  %v1607 = vunpack.c.l.b16 %v120
  %v1608 = vunpack.c.h.b16 %v120
  %v1609 = vunpack.c.l.b16 %v121
  %v1610 = vunpack.c.h.b16 %v121
  %v1611 = vunpack.c.l.b16 %v122
  %v1612 = vunpack.c.h.b16 %v122
  %v1613 = vunpack.c.l.b16 %v123
  %v1614 = vunpack.c.h.b16 %v123
  %v1615 = vunpack.c.l.b16 %v124
  %v1616 = vunpack.c.h.b16 %v124
  %v1617 = vunpack.c.l.b16 %v125
  %v1618 = vunpack.c.h.b16 %v125
  %v1619 = vunpack.c.l.b16 %v126
  %v1620 = vunpack.c.h.b16 %v126
  %v1621 = vunpack.c.l.b16 %v127
  %v1622 = vunpack.c.h.b16 %v127
  %v1623 = vunpack.c.l.b16 %v128
  %v1624 = vunpack.c.h.b16 %v128
  %v1625 = vunpack.c.l.b16 %v129
  %v1626 = vunpack.c.h.b16 %v129
  %v1627 = vunpack.c.l.b16 %v130
  %v1628 = vunpack.c.h.b16 %v130
  %v1629 = vunpack.c.l.b16 %v131
  %v1630 = vunpack.c.h.b16 %v131
  %v1631 = vunpack.c.l.b16 %v132
  %v1632 = vunpack.c.h.b16 %v132
  %v1633 = vunpack.c.l.b16 %v133
  %v1634 = vunpack.c.h.b16 %v133
  %v1635 = vunpack.c.l.b16 %v134
  %v1636 = vunpack.c.h.b16 %v134
  %v1637 = vunpack.c.l.b16 %v135
  %v1638 = vunpack.c.h.b16 %v135
  %v1639 = vunpack.c.l.b16 %v136
  %v1640 = vunpack.c.h.b16 %v136
  %v1641 = vunpack.c.l.b16 %v137
  %v1642 = vunpack.c.h.b16 %v137
  %v1643 = vunpack.c.l.b16 %v138
  %v1644 = vunpack.c.h.b16 %v138
  %v1645 = vunpack.c.l.b16 %v139
  %v1646 = vunpack.c.h.b16 %v139
  %v1647 = vunpack.c.l.b16 %v140
  %v1648 = vunpack.c.h.b16 %v140
  %v1649 = vunpack.c.l.b16 %v141
  %v1650 = vunpack.c.h.b16 %v141
  %v1651 = vunpack.c.l.b16 %v142
  %v1652 = vunpack.c.h.b16 %v142
  %v1653 = vunpack.c.l.b16 %v143
  %v1654 = vunpack.c.h.b16 %v143
  %v1655 = vunpack.c.l.b16 %v144
  %v1656 = vunpack.c.h.b16 %v144
  %v1657 = vunpack.c.l.b16 %v145
  %v1658 = vunpack.c.h.b16 %v145
  %v1659 = vunpack.c.l.b16 %v146
  %v1660 = vunpack.c.h.b16 %v146
  %v1661 = vunpack.c.l.b16 %v147
  %v1662 = vunpack.c.h.b16 %v147
  %v1663 = vunpack.c.l.b16 %v148
  %v1664 = vunpack.c.h.b16 %v148
  %v1665 = vunpack.c.l.b16 %v149
  %v1666 = vunpack.c.h.b16 %v149
  %v1667 = vunpack.c.l.b16 %v150
  %v1668 = vunpack.c.h.b16 %v150
  %v1669 = vunpack.c.l.b16 %v151
  %v1670 = vunpack.c.h.b16 %v151
  %v1671 = vunpack.c.l.b16 %v152
  %v1672 = vunpack.c.h.b16 %v152
  %v1673 = vunpack.c.l.b16 %v153
  %v1674 = vunpack.c.h.b16 %v153
  %v1675 = vunpack.c.l.b16 %v154
  %v1676 = vunpack.c.h.b16 %v154
  %v1677 = vunpack.c.l.b16 %v155
  %v1678 = vunpack.c.h.b16 %v155
  %v1679 = vunpack.c.l.b16 %v156
  %v1680 = vunpack.c.h.b16 %v156
  %v1681 = vunpack.c.l.b16 %v157
  %v1682 = vunpack.c.h.b16 %v157
  %v1683 = vunpack.c.l.b16 %v158
  %v1684 = vunpack.c.h.b16 %v158
  %v1685 = vunpack.c.l.b16 %v159
  %v1686 = vunpack.c.h.b16 %v159
  %v1687 = vunpack.c.l.b16 %v160
  %v1688 = vunpack.c.h.b16 %v160
  %v1689 = vunpack.c.l.b16 %v161
  %v1690 = vunpack.c.h.b16 %v161
  %v1691 = vunpack.c.l.b16 %v162
  %v1692 = vunpack.c.h.b16 %v162
  %v1693 = vunpack.c.l.b16 %v163
  %v1694 = vunpack.c.h.b16 %v163
  %v1695 = vunpack.c.l.b16 %v164
  %v1696 = vunpack.c.h.b16 %v164
  %v1697 = vunpack.c.l.b16 %v165
  %v1698 = vunpack.c.h.b16 %v165
  %v1699 = vunpack.c.l.b16 %v166
  %v1700 = vunpack.c.h.b16 %v166
  %v1701 = vunpack.c.l.b16 %v167
  %v1702 = vunpack.c.h.b16 %v167
  %v1703 = vunpack.c.l.b16 %v168
  %v1704 = vunpack.c.h.b16 %v168
  %v1705 = vpack.c.b16 %v1453, %v1449
  %v1706 = vpack.c.b16 %v1454, %v1450
  %v1707 = vpack.c.b16 %v1455, %v1451
  %v1708 = vpack.c.b16 %v1456, %v1452
  %v1709 = vpack.c.b16 %v1461, %v1457
  %v1710 = vpack.c.b16 %v1462, %v1458
  %v1711 = vpack.c.b16 %v1463, %v1459
  %v1712 = vpack.c.b16 %v1464, %v1460
  %v1713 = vpack.c.b16 %v1469, %v1465
  %v1714 = vpack.c.b16 %v1470, %v1466
  %v1715 = vpack.c.b16 %v1471, %v1467
  %v1716 = vpack.c.b16 %v1472, %v1468
  %v1717 = vpack.c.b16 %v1477, %v1473
  %v1718 = vpack.c.b16 %v1478, %v1474
  %v1719 = vpack.c.b16 %v1479, %v1475
  %v1720 = vpack.c.b16 %v1480, %v1476
  %v1721 = vpack.c.b16 %v1485, %v1481
  %v1722 = vpack.c.b16 %v1486, %v1482
  %v1723 = vpack.c.b16 %v1487, %v1483
  %v1724 = vpack.c.b16 %v1488, %v1484
  %v1725 = vpack.c.b16 %v1493, %v1489
  %v1726 = vpack.c.b16 %v1494, %v1490
  %v1727 = vpack.c.b16 %v1495, %v1491
  %v1728 = vpack.c.b16 %v1496, %v1492
  %v1729 = vpack.c.b16 %v1501, %v1497
  %v1730 = vpack.c.b16 %v1502, %v1498
  %v1731 = vpack.c.b16 %v1503, %v1499
  %v1732 = vpack.c.b16 %v1504, %v1500
  %v1733 = vpack.c.b16 %v1509, %v1505
  %v1734 = vpack.c.b16 %v1510, %v1506
  %v1735 = vpack.c.b16 %v1511, %v1507
  %v1736 = vpack.c.b16 %v1512, %v1508
  %v1737 = vpack.c.b16 %v1517, %v1513
  %v1738 = vpack.c.b16 %v1518, %v1514
  %v1739 = vpack.c.b16 %v1519, %v1515
  %v1740 = vpack.c.b16 %v1520, %v1516
  %v1741 = vpack.c.b16 %v1525, %v1521
  %v1742 = vpack.c.b16 %v1526, %v1522
  %v1743 = vpack.c.b16 %v1527, %v1523
  %v1744 = vpack.c.b16 %v1528, %v1524
  %v1745 = vpack.c.b16 %v1533, %v1529
  %v1746 = vpack.c.b16 %v1534, %v1530
  %v1747 = vpack.c.b16 %v1535, %v1531
  %v1748 = vpack.c.b16 %v1536, %v1532
  %v1749 = vpack.c.b16 %v1541, %v1537
  %v1750 = vpack.c.b16 %v1542, %v1538
  %v1751 = vpack.c.b16 %v1543, %v1539
  %v1752 = vpack.c.b16 %v1544, %v1540
  %v1753 = vpack.c.b16 %v1549, %v1545
  %v1754 = vpack.c.b16 %v1550, %v1546
  %v1755 = vpack.c.b16 %v1551, %v1547
  %v1756 = vpack.c.b16 %v1552, %v1548
  %v1757 = vpack.c.b16 %v1557, %v1553
  %v1758 = vpack.c.b16 %v1558, %v1554
  %v1759 = vpack.c.b16 %v1559, %v1555
  %v1760 = vpack.c.b16 %v1560, %v1556
  %v1761 = vpack.c.b16 %v1565, %v1561
  %v1762 = vpack.c.b16 %v1566, %v1562
  %v1763 = vpack.c.b16 %v1567, %v1563
  %v1764 = vpack.c.b16 %v1568, %v1564
  %v1765 = vpack.c.b16 %v1573, %v1569
  %v1766 = vpack.c.b16 %v1574, %v1570
  %v1767 = vpack.c.b16 %v1575, %v1571
  %v1768 = vpack.c.b16 %v1576, %v1572
  %v1769 = vpack.c.b16 %v1581, %v1577
  %v1770 = vpack.c.b16 %v1582, %v1578
  %v1771 = vpack.c.b16 %v1583, %v1579
  %v1772 = vpack.c.b16 %v1584, %v1580
  %v1773 = vpack.c.b16 %v1589, %v1585
  %v1774 = vpack.c.b16 %v1590, %v1586
  %v1775 = vpack.c.b16 %v1591, %v1587
  %v1776 = vpack.c.b16 %v1592, %v1588
  %v1777 = vpack.c.b16 %v1597, %v1593
  %v1778 = vpack.c.b16 %v1598, %v1594
  %v1779 = vpack.c.b16 %v1599, %v1595
  %v1780 = vpack.c.b16 %v1600, %v1596
  %v1781 = vpack.c.b16 %v1605, %v1601
  %v1782 = vpack.c.b16 %v1606, %v1602
  %v1783 = vpack.c.b16 %v1607, %v1603
  %v1784 = vpack.c.b16 %v1608, %v1604
  %v1785 = vpack.c.b16 %v1613, %v1609
  %v1786 = vpack.c.b16 %v1614, %v1610
  %v1787 = vpack.c.b16 %v1615, %v1611
  %v1788 = vpack.c.b16 %v1616, %v1612
  %v1789 = vpack.c.b16 %v1621, %v1617
  %v1790 = vpack.c.b16 %v1622, %v1618
  %v1791 = vpack.c.b16 %v1623, %v1619
  %v1792 = vpack.c.b16 %v1624, %v1620
  %v1793 = vpack.c.b16 %v1629, %v1625
  %v1794 = vpack.c.b16 %v1630, %v1626
  %v1795 = vpack.c.b16 %v1631, %v1627
  %v1796 = vpack.c.b16 %v1632, %v1628
  %v1797 = vpack.c.b16 %v1637, %v1633
  %v1798 = vpack.c.b16 %v1638, %v1634
  %v1799 = vpack.c.b16 %v1639, %v1635
  %v1800 = vpack.c.b16 %v1640, %v1636
  %v1801 = vpack.c.b16 %v1645, %v1641
  %v1802 = vpack.c.b16 %v1646, %v1642
  %v1803 = vpack.c.b16 %v1647, %v1643
  %v1804 = vpack.c.b16 %v1648, %v1644
  %v1805 = vpack.c.b16 %v1653, %v1649
  %v1806 = vpack.c.b16 %v1654, %v1650
  %v1807 = vpack.c.b16 %v1655, %v1651
  %v1808 = vpack.c.b16 %v1656, %v1652
  %v1809 = vpack.c.b16 %v1661, %v1657
  %v1810 = vpack.c.b16 %v1662, %v1658
  %v1811 = vpack.c.b16 %v1663, %v1659
  %v1812 = vpack.c.b16 %v1664, %v1660
  %v1813 = vpack.c.b16 %v1669, %v1665
  %v1814 = vpack.c.b16 %v1670, %v1666
  %v1815 = vpack.c.b16 %v1671, %v1667
  %v1816 = vpack.c.b16 %v1672, %v1668
  %v1817 = vpack.c.b16 %v1677, %v1673
  %v1818 = vpack.c.b16 %v1678, %v1674
  %v1819 = vpack.c.b16 %v1679, %v1675
  %v1820 = vpack.c.b16 %v1680, %v1676
  %v1821 = vpack.c.b16 %v1685, %v1681
  %v1822 = vpack.c.b16 %v1686, %v1682
  %v1823 = vpack.c.b16 %v1687, %v1683
  %v1824 = vpack.c.b16 %v1688, %v1684
  %v1825 = vpack.c.b16 %v1693, %v1689
  %v1826 = vpack.c.b16 %v1694, %v1690
  %v1827 = vpack.c.b16 %v1695, %v1691
  %v1828 = vpack.c.b16 %v1696, %v1692
  %v1829 = vpack.c.b16 %v1701, %v1697
  %v1830 = vpack.c.b16 %v1702, %v1698
  %v1831 = vpack.c.b16 %v1703, %v1699
  %v1832 = vpack.c.b16 %v1704, %v1700
  %1961 = vmatprep.subr.bf16.mxu0 %v1706
  %1962 = vmatpush1.bf16.msra.mxu0 %v1705
  %1963 = vmatprep.subr.bf16.mxu0 %v1710
  %1964 = vmatpush1.bf16.msra.mxu0 %v1709
  %1965 = vmatprep.subr.bf16.mxu0 %v1714
  %1966 = vmatpush1.bf16.msra.mxu0 %v1713
  %1967 = vmatprep.subr.bf16.mxu0 %v1718
  %1968 = vmatpush1.bf16.msra.mxu0 %v1717
  %1969 = vmatprep.subr.bf16.mxu0 %v1722
  %1970 = vmatpush1.bf16.msra.mxu0 %v1721
  %1971 = vmatprep.subr.bf16.mxu0 %v1726
  %1972 = vmatpush1.bf16.msra.mxu0 %v1725
  %1973 = vmatprep.subr.bf16.mxu0 %v1730
  %1974 = vmatpush1.bf16.msra.mxu0 %v1729
  %1975 = vmatprep.subr.bf16.mxu0 %v1734
  %1976 = vmatpush1.bf16.msra.mxu0 %v1733
  %1977 = vmatprep.subr.bf16.mxu0 %v1738
  %1978 = vmatpush1.bf16.msra.mxu0 %v1737
  %1979 = vmatprep.subr.bf16.mxu0 %v1742
  %1980 = vmatpush1.bf16.msra.mxu0 %v1741
  %1981 = vmatprep.subr.bf16.mxu0 %v1746
  %1982 = vmatpush1.bf16.msra.mxu0 %v1745
  %1983 = vmatprep.subr.bf16.mxu0 %v1750
  %1984 = vmatpush1.bf16.msra.mxu0 %v1749
  %1985 = vmatprep.subr.bf16.mxu0 %v1754
  %1986 = vmatpush1.bf16.msra.mxu0 %v1753
  %1987 = vmatprep.subr.bf16.mxu0 %v1758
  %1988 = vmatpush1.bf16.msra.mxu0 %v1757
  %1989 = vmatprep.subr.bf16.mxu0 %v1762
  %1990 = vmatpush1.bf16.msra.mxu0 %v1761
  %1991 = vmatprep.subr.bf16.mxu0 %v1766
  %1992 = vmatpush1.bf16.msra.mxu0 %v1765
  %1993 = vmatprep.mubr.bf16.mxu0 %v1306
  %1994 = vmatmul.mubr.bf16.gmra.mrb[0].mxu0 %v1305
  %v1995 = vpop.f32.mrb[0].mxu0
  %v1996 = vadd.f32 %v1157, %v1995
  %v1997 = vpop.f32.mrb[0].mxu0
  %v1998 = vadd.f32 %v1159, %v1997
  %v1999 = vpop.f32.mrb[0].mxu0
  %v2000 = vadd.f32 %v1161, %v1999
  %v2001 = vpop.f32.mrb[0].mxu0
  %v2002 = vadd.f32 %v1163, %v2001
  %2003 = vmatprep.mubr.bf16.mxu0 %v1310
  %2004 = vmatmul.mubr.bf16.gmra.mrb[0].mxu0 %v1309
  %v2005 = vpop.f32.mrb[0].mxu0
  %v2006 = vadd.f32 %v1167, %v2005
  %v2007 = vpop.f32.mrb[0].mxu0
  %v2008 = vadd.f32 %v1169, %v2007
  %v2009 = vpop.f32.mrb[0].mxu0
  %v2010 = vadd.f32 %v1171, %v2009
  %v2011 = vpop.f32.mrb[0].mxu0
  %v2012 = vadd.f32 %v1173, %v2011
  %2013 = vdwg.mxu0
  %2014 = vmatprep.subr.bf16.mxu0 %v1770
  %2015 = vmatpush1.bf16.msra.mxu0 %v1769
  %2016 = vmatprep.subr.bf16.mxu0 %v1774
  %2017 = vmatpush1.bf16.msra.mxu0 %v1773
  %2018 = vmatprep.subr.bf16.mxu0 %v1778
  %2019 = vmatpush1.bf16.msra.mxu0 %v1777
  %2020 = vmatprep.subr.bf16.mxu0 %v1782
  %2021 = vmatpush1.bf16.msra.mxu0 %v1781
  %2022 = vmatprep.subr.bf16.mxu0 %v1786
  %2023 = vmatpush1.bf16.msra.mxu0 %v1785
  %2024 = vmatprep.subr.bf16.mxu0 %v1790
  %2025 = vmatpush1.bf16.msra.mxu0 %v1789
  %2026 = vmatprep.subr.bf16.mxu0 %v1794
  %2027 = vmatpush1.bf16.msra.mxu0 %v1793
  %2028 = vmatprep.subr.bf16.mxu0 %v1798
  %2029 = vmatpush1.bf16.msra.mxu0 %v1797
  %2030 = vmatprep.subr.bf16.mxu0 %v1802
  %2031 = vmatpush1.bf16.msra.mxu0 %v1801
  %2032 = vmatprep.subr.bf16.mxu0 %v1806
  %2033 = vmatpush1.bf16.msra.mxu0 %v1805
  %2034 = vmatprep.subr.bf16.mxu0 %v1810
  %2035 = vmatpush1.bf16.msra.mxu0 %v1809
  %2036 = vmatprep.subr.bf16.mxu0 %v1814
  %2037 = vmatpush1.bf16.msra.mxu0 %v1813
  %2038 = vmatprep.subr.bf16.mxu0 %v1818
  %2039 = vmatpush1.bf16.msra.mxu0 %v1817
  %2040 = vmatprep.subr.bf16.mxu0 %v1822
  %2041 = vmatpush1.bf16.msra.mxu0 %v1821
  %2042 = vmatprep.subr.bf16.mxu0 %v1826
  %2043 = vmatpush1.bf16.msra.mxu0 %v1825
  %2044 = vmatprep.subr.bf16.mxu0 %v1830
  %2045 = vmatpush1.bf16.msra.mxu0 %v1829
  %2046 = vmatprep.mubr.bf16.mxu0 %v1308
  %2047 = vmatmul.mubr.bf16.gmra.mrb[0].mxu0 %v1307
  %v2048 = vpop.f32.mrb[0].mxu0
  %v2049 = vadd.f32 %v1996, %v2048
  %v2050 = vpop.f32.mrb[0].mxu0
  %v2051 = vadd.f32 %v1998, %v2050
  %v2052 = vpop.f32.mrb[0].mxu0
  %v2053 = vadd.f32 %v2000, %v2052
  %v2054 = vpop.f32.mrb[0].mxu0
  %v2055 = vadd.f32 %v2002, %v2054
  %2056 = vmatprep.mubr.bf16.mxu0 %v1312
  %2057 = vmatmul.mubr.bf16.gmra.mrb[0].mxu0 %v1311
  %v2058 = vpop.f32.mrb[0].mxu0
  %v2059 = vadd.f32 %v2006, %v2058
  %v2060 = vpop.f32.mrb[0].mxu0
  %v2061 = vadd.f32 %v2008, %v2060
  %v2062 = vpop.f32.mrb[0].mxu0
  %v2063 = vadd.f32 %v2010, %v2062
  %v2064 = vpop.f32.mrb[0].mxu0
  %v2065 = vadd.f32 %v2012, %v2064
  %2066 = vdwg.mxu0
  %2067 = vmatprep.subr.bf16.mxu0 %v1708
  %2068 = vmatpush1.bf16.msra.mxu0 %v1707
  %2069 = vmatprep.subr.bf16.mxu0 %v1712
  %2070 = vmatpush1.bf16.msra.mxu0 %v1711
  %2071 = vmatprep.subr.bf16.mxu0 %v1716
  %2072 = vmatpush1.bf16.msra.mxu0 %v1715
  %2073 = vmatprep.subr.bf16.mxu0 %v1720
  %2074 = vmatpush1.bf16.msra.mxu0 %v1719
  %2075 = vmatprep.subr.bf16.mxu0 %v1724
  %2076 = vmatpush1.bf16.msra.mxu0 %v1723
  %2077 = vmatprep.subr.bf16.mxu0 %v1728
  %2078 = vmatpush1.bf16.msra.mxu0 %v1727
  %2079 = vmatprep.subr.bf16.mxu0 %v1732
  %2080 = vmatpush1.bf16.msra.mxu0 %v1731
  %2081 = vmatprep.subr.bf16.mxu0 %v1736
  %2082 = vmatpush1.bf16.msra.mxu0 %v1735
  %2083 = vmatprep.subr.bf16.mxu0 %v1740
  %2084 = vmatpush1.bf16.msra.mxu0 %v1739
  %2085 = vmatprep.subr.bf16.mxu0 %v1744
  %2086 = vmatpush1.bf16.msra.mxu0 %v1743
  %2087 = vmatprep.subr.bf16.mxu0 %v1748
  %2088 = vmatpush1.bf16.msra.mxu0 %v1747
  %2089 = vmatprep.subr.bf16.mxu0 %v1752
  %2090 = vmatpush1.bf16.msra.mxu0 %v1751
  %2091 = vmatprep.subr.bf16.mxu0 %v1756
  %2092 = vmatpush1.bf16.msra.mxu0 %v1755
  %2093 = vmatprep.subr.bf16.mxu0 %v1760
  %2094 = vmatpush1.bf16.msra.mxu0 %v1759
  %2095 = vmatprep.subr.bf16.mxu0 %v1764
  %2096 = vmatpush1.bf16.msra.mxu0 %v1763
  %2097 = vmatprep.subr.bf16.mxu0 %v1768
  %2098 = vmatpush1.bf16.msra.mxu0 %v1767
  %2099 = vmatprep.mubr.bf16.mxu0 %v1306
  %2100 = vmatmul.mubr.bf16.gmra.mrb[0].mxu0 %v1305
  %v2101 = vpop.f32.mrb[0].mxu0
  %v2102 = vadd.f32 %v1263, %v2101
  %v2103 = vpop.f32.mrb[0].mxu0
  %v2104 = vadd.f32 %v1265, %v2103
  %v2105 = vpop.f32.mrb[0].mxu0
  %v2106 = vadd.f32 %v1267, %v2105
  %v2107 = vpop.f32.mrb[0].mxu0
  %v2108 = vadd.f32 %v1269, %v2107
  %2109 = vmatprep.mubr.bf16.mxu0 %v1310
  %2110 = vmatmul.mubr.bf16.gmra.mrb[0].mxu0 %v1309
  %v2111 = vpop.f32.mrb[0].mxu0
  %v2112 = vadd.f32 %v1273, %v2111
  %v2113 = vpop.f32.mrb[0].mxu0
  %v2114 = vadd.f32 %v1275, %v2113
  %v2115 = vpop.f32.mrb[0].mxu0
  %v2116 = vadd.f32 %v1277, %v2115
  %v2117 = vpop.f32.mrb[0].mxu0
  %v2118 = vadd.f32 %v1279, %v2117
  %2119 = vdwg.mxu0
  %2120 = vmatprep.subr.bf16.mxu0 %v1772
  %2121 = vmatpush1.bf16.msra.mxu0 %v1771
  %2122 = vmatprep.subr.bf16.mxu0 %v1776
  %2123 = vmatpush1.bf16.msra.mxu0 %v1775
  %2124 = vmatprep.subr.bf16.mxu0 %v1780
  %2125 = vmatpush1.bf16.msra.mxu0 %v1779
  %2126 = vmatprep.subr.bf16.mxu0 %v1784
  %2127 = vmatpush1.bf16.msra.mxu0 %v1783
  %2128 = vmatprep.subr.bf16.mxu0 %v1788
  %2129 = vmatpush1.bf16.msra.mxu0 %v1787
  %2130 = vmatprep.subr.bf16.mxu0 %v1792
  %2131 = vmatpush1.bf16.msra.mxu0 %v1791
  %2132 = vmatprep.subr.bf16.mxu0 %v1796
  %2133 = vmatpush1.bf16.msra.mxu0 %v1795
  %2134 = vmatprep.subr.bf16.mxu0 %v1800
  %2135 = vmatpush1.bf16.msra.mxu0 %v1799
  %2136 = vmatprep.subr.bf16.mxu0 %v1804
  %2137 = vmatpush1.bf16.msra.mxu0 %v1803
  %2138 = vmatprep.subr.bf16.mxu0 %v1808
  %2139 = vmatpush1.bf16.msra.mxu0 %v1807
  %2140 = vmatprep.subr.bf16.mxu0 %v1812
  %2141 = vmatpush1.bf16.msra.mxu0 %v1811
  %2142 = vmatprep.subr.bf16.mxu0 %v1816
  %2143 = vmatpush1.bf16.msra.mxu0 %v1815
  %2144 = vmatprep.subr.bf16.mxu0 %v1820
  %2145 = vmatpush1.bf16.msra.mxu0 %v1819
  %2146 = vmatprep.subr.bf16.mxu0 %v1824
  %2147 = vmatpush1.bf16.msra.mxu0 %v1823
  %2148 = vmatprep.subr.bf16.mxu0 %v1828
  %2149 = vmatpush1.bf16.msra.mxu0 %v1827
  %2150 = vmatprep.subr.bf16.mxu0 %v1832
  %2151 = vmatpush1.bf16.msra.mxu0 %v1831
  %2152 = vmatprep.mubr.bf16.mxu0 %v1308
  %2153 = vmatmul.mubr.bf16.gmra.mrb[0].mxu0 %v1307
  %v2154 = vpop.f32.mrb[0].mxu0
  %v2155 = vadd.f32 %v2102, %v2154
  %v2156 = vpop.f32.mrb[0].mxu0
  %v2157 = vadd.f32 %v2104, %v2156
  %v2158 = vpop.f32.mrb[0].mxu0
  %v2159 = vadd.f32 %v2106, %v2158
  %v2160 = vpop.f32.mrb[0].mxu0
  %v2161 = vadd.f32 %v2108, %v2160
  %2162 = vmatprep.mubr.bf16.mxu0 %v1312
  %2163 = vmatmul.mubr.bf16.gmra.mrb[0].mxu0 %v1311
  %v2164 = vpop.f32.mrb[0].mxu0
  %v2165 = vadd.f32 %v2112, %v2164
  %v2166 = vpop.f32.mrb[0].mxu0
  %v2167 = vadd.f32 %v2114, %v2166
  %v2168 = vpop.f32.mrb[0].mxu0
  %v2169 = vadd.f32 %v2116, %v2168
  %v2170 = vpop.f32.mrb[0].mxu0
  %v2171 = vadd.f32 %v2118, %v2170
  %2172 = vdwg.mxu0
  %vm2177 = vcmask 1042432
  %vm2178 = vcmask 1046532
  %vm2179 = vmor %vm2177, %vm2178
  %v2180 = vrot.slane %v29, 5
  %v2181 = vrot.slane %v2180, 4
  %v2182 = vrot.slane %v31, 5
  %v2183 = vsel %vm2179, %v2181, %v2182
  %v2184 = vrot.slane %v30, 5
  %v2185 = vrot.slane %v2184, 4
  %v2186 = vrot.slane %v32, 5
  %v2187 = vsel %vm2179, %v2185, %v2186
  %v2188 = vrot.slane %v2182, 4
  %v2189 = vrot.slane %v33, 5
  %v2190 = vsel %vm2179, %v2188, %v2189
  %v2191 = vrot.slane %v2186, 4
  %v2192 = vrot.slane %v34, 5
  %v2193 = vsel %vm2179, %v2191, %v2192
  %v2194 = vrot.slane %v35, 5
  %v2195 = vrot.slane %v2194, 4
  %v2196 = vrot.slane %v37, 5
  %v2197 = vsel %vm2179, %v2195, %v2196
  %v2198 = vrot.slane %v36, 5
  %v2199 = vrot.slane %v2198, 4
  %v2200 = vrot.slane %v38, 5
  %v2201 = vsel %vm2179, %v2199, %v2200
  %v2202 = vrot.slane %v2196, 4
  %v2203 = vrot.slane %v39, 5
  %v2204 = vsel %vm2179, %v2202, %v2203
  %v2205 = vrot.slane %v2200, 4
  %v2206 = vrot.slane %v40, 5
  %v2207 = vsel %vm2179, %v2205, %v2206
  %s2208 = scalar_lea.vmem %s2, 2048
  %v2209 = vld [vmem:[%s2208] sm:$0xff]
  %v2210 = vld [vmem:[%s2208 + $0x8] sm:$0xff]
  %v2211 = vld [vmem:[%s2208 + $0x10] sm:$0xff]
  %v2212 = vld [vmem:[%s2208 + $0x18] sm:$0xff]
  %v2213 = vld [vmem:[%s2208 + $0x20] sm:$0xff]
  %v2214 = vld [vmem:[%s2208 + $0x28] sm:$0xff]
  %v2215 = vld [vmem:[%s2208 + $0x30] sm:$0xff]
  %v2216 = vld [vmem:[%s2208 + $0x38] sm:$0xff]
  %v2217 = vld [vmem:[%s2208 + $0x40] sm:$0xff]
  %v2218 = vld [vmem:[%s2208 + $0x48] sm:$0xff]
  %v2219 = vld [vmem:[%s2208 + $0x50] sm:$0xff]
  %v2220 = vld [vmem:[%s2208 + $0x58] sm:$0xff]
  %v2221 = vld [vmem:[%s2208 + $0x60] sm:$0xff]
  %v2222 = vld [vmem:[%s2208 + $0x68] sm:$0xff]
  %v2223 = vld [vmem:[%s2208 + $0x70] sm:$0xff]
  %v2224 = vld [vmem:[%s2208 + $0x78] sm:$0xff]
  %v2225 = vld [vmem:[%s2208 + $0x80] sm:$0xff]
  %v2226 = vld [vmem:[%s2208 + $0x88] sm:$0xff]
  %v2227 = vld [vmem:[%s2208 + $0x90] sm:$0xff]
  %v2228 = vld [vmem:[%s2208 + $0x98] sm:$0xff]
  %v2229 = vld [vmem:[%s2208 + $0xa0] sm:$0xff]
  %v2230 = vld [vmem:[%s2208 + $0xa8] sm:$0xff]
  %v2231 = vld [vmem:[%s2208 + $0xb0] sm:$0xff]
  %v2232 = vld [vmem:[%s2208 + $0xb8] sm:$0xff]
  %v2233 = vld [vmem:[%s2208 + $0xc0] sm:$0xff]
  %v2234 = vld [vmem:[%s2208 + $0xc8] sm:$0xff]
  %v2235 = vld [vmem:[%s2208 + $0xd0] sm:$0xff]
  %v2236 = vld [vmem:[%s2208 + $0xd8] sm:$0xff]
  %v2237 = vld [vmem:[%s2208 + $0xe0] sm:$0xff]
  %v2238 = vld [vmem:[%s2208 + $0xe8] sm:$0xff]
  %v2239 = vld [vmem:[%s2208 + $0xf0] sm:$0xff]
  %v2240 = vld [vmem:[%s2208 + $0xf8] sm:$0xff]
  %v2241 = vld [vmem:[%s2208 + $0x100] sm:$0xff]
  %v2242 = vld [vmem:[%s2208 + $0x108] sm:$0xff]
  %v2243 = vld [vmem:[%s2208 + $0x110] sm:$0xff]
  %v2244 = vld [vmem:[%s2208 + $0x118] sm:$0xff]
  %v2245 = vld [vmem:[%s2208 + $0x120] sm:$0xff]
  %v2246 = vld [vmem:[%s2208 + $0x128] sm:$0xff]
  %v2247 = vld [vmem:[%s2208 + $0x130] sm:$0xff]
  %v2248 = vld [vmem:[%s2208 + $0x138] sm:$0xff]
  %v2249 = vld [vmem:[%s2208 + $0x140] sm:$0xff]
  %v2250 = vld [vmem:[%s2208 + $0x148] sm:$0xff]
  %v2251 = vld [vmem:[%s2208 + $0x150] sm:$0xff]
  %v2252 = vld [vmem:[%s2208 + $0x158] sm:$0xff]
  %v2253 = vld [vmem:[%s2208 + $0x160] sm:$0xff]
  %v2254 = vld [vmem:[%s2208 + $0x168] sm:$0xff]
  %v2255 = vld [vmem:[%s2208 + $0x170] sm:$0xff]
  %v2256 = vld [vmem:[%s2208 + $0x178] sm:$0xff]
  %v2257 = vld [vmem:[%s2208 + $0x180] sm:$0xff]
  %v2258 = vld [vmem:[%s2208 + $0x188] sm:$0xff]
  %v2259 = vld [vmem:[%s2208 + $0x190] sm:$0xff]
  %v2260 = vld [vmem:[%s2208 + $0x198] sm:$0xff]
  %v2261 = vld [vmem:[%s2208 + $0x1a0] sm:$0xff]
  %v2262 = vld [vmem:[%s2208 + $0x1a8] sm:$0xff]
  %v2263 = vld [vmem:[%s2208 + $0x1b0] sm:$0xff]
  %v2264 = vld [vmem:[%s2208 + $0x1b8] sm:$0xff]
  %v2265 = vld [vmem:[%s2208 + $0x1c0] sm:$0xff]
  %v2266 = vld [vmem:[%s2208 + $0x1c8] sm:$0xff]
  %v2267 = vld [vmem:[%s2208 + $0x1d0] sm:$0xff]
  %v2268 = vld [vmem:[%s2208 + $0x1d8] sm:$0xff]
  %v2269 = vld [vmem:[%s2208 + $0x1e0] sm:$0xff]
  %v2270 = vld [vmem:[%s2208 + $0x1e8] sm:$0xff]
  %v2271 = vld [vmem:[%s2208 + $0x1f0] sm:$0xff]
  %v2272 = vld [vmem:[%s2208 + $0x1f8] sm:$0xff]
  %v2273 = vld [vmem:[%s2208 + $0x200] sm:$0xff]
  %v2274 = vld [vmem:[%s2208 + $0x208] sm:$0xff]
  %v2275 = vld [vmem:[%s2208 + $0x210] sm:$0xff]
  %v2276 = vld [vmem:[%s2208 + $0x218] sm:$0xff]
  %v2277 = vld [vmem:[%s2208 + $0x220] sm:$0xff]
  %v2278 = vld [vmem:[%s2208 + $0x228] sm:$0xff]
  %v2279 = vld [vmem:[%s2208 + $0x230] sm:$0xff]
  %v2280 = vld [vmem:[%s2208 + $0x238] sm:$0xff]
  %v2281 = vld [vmem:[%s2208 + $0x240] sm:$0xff]
  %v2282 = vld [vmem:[%s2208 + $0x248] sm:$0xff]
  %v2283 = vld [vmem:[%s2208 + $0x250] sm:$0xff]
  %v2284 = vld [vmem:[%s2208 + $0x258] sm:$0xff]
  %v2285 = vld [vmem:[%s2208 + $0x260] sm:$0xff]
  %v2286 = vld [vmem:[%s2208 + $0x268] sm:$0xff]
  %v2287 = vld [vmem:[%s2208 + $0x270] sm:$0xff]
  %v2288 = vld [vmem:[%s2208 + $0x278] sm:$0xff]
  %v2289 = vld [vmem:[%s2208 + $0x280] sm:$0xff]
  %v2290 = vld [vmem:[%s2208 + $0x288] sm:$0xff]
  %v2291 = vld [vmem:[%s2208 + $0x290] sm:$0xff]
  %v2292 = vld [vmem:[%s2208 + $0x298] sm:$0xff]
  %v2293 = vld [vmem:[%s2208 + $0x2a0] sm:$0xff]
  %v2294 = vld [vmem:[%s2208 + $0x2a8] sm:$0xff]
  %v2295 = vld [vmem:[%s2208 + $0x2b0] sm:$0xff]
  %v2296 = vld [vmem:[%s2208 + $0x2b8] sm:$0xff]
  %v2297 = vld [vmem:[%s2208 + $0x2c0] sm:$0xff]
  %v2298 = vld [vmem:[%s2208 + $0x2c8] sm:$0xff]
  %v2299 = vld [vmem:[%s2208 + $0x2d0] sm:$0xff]
  %v2300 = vld [vmem:[%s2208 + $0x2d8] sm:$0xff]
  %v2301 = vld [vmem:[%s2208 + $0x2e0] sm:$0xff]
  %v2302 = vld [vmem:[%s2208 + $0x2e8] sm:$0xff]
  %v2303 = vld [vmem:[%s2208 + $0x2f0] sm:$0xff]
  %v2304 = vld [vmem:[%s2208 + $0x2f8] sm:$0xff]
  %v2305 = vld [vmem:[%s2208 + $0x300] sm:$0xff]
  %v2306 = vld [vmem:[%s2208 + $0x308] sm:$0xff]
  %v2307 = vld [vmem:[%s2208 + $0x310] sm:$0xff]
  %v2308 = vld [vmem:[%s2208 + $0x318] sm:$0xff]
  %v2309 = vld [vmem:[%s2208 + $0x320] sm:$0xff]
  %v2310 = vld [vmem:[%s2208 + $0x328] sm:$0xff]
  %v2311 = vld [vmem:[%s2208 + $0x330] sm:$0xff]
  %v2312 = vld [vmem:[%s2208 + $0x338] sm:$0xff]
  %v2313 = vld [vmem:[%s2208 + $0x340] sm:$0xff]
  %v2314 = vld [vmem:[%s2208 + $0x348] sm:$0xff]
  %v2315 = vld [vmem:[%s2208 + $0x350] sm:$0xff]
  %v2316 = vld [vmem:[%s2208 + $0x358] sm:$0xff]
  %v2317 = vld [vmem:[%s2208 + $0x360] sm:$0xff]
  %v2318 = vld [vmem:[%s2208 + $0x368] sm:$0xff]
  %v2319 = vld [vmem:[%s2208 + $0x370] sm:$0xff]
  %v2320 = vld [vmem:[%s2208 + $0x378] sm:$0xff]
  %v2321 = vld [vmem:[%s2208 + $0x380] sm:$0xff]
  %v2322 = vld [vmem:[%s2208 + $0x388] sm:$0xff]
  %v2323 = vld [vmem:[%s2208 + $0x390] sm:$0xff]
  %v2324 = vld [vmem:[%s2208 + $0x398] sm:$0xff]
  %v2325 = vld [vmem:[%s2208 + $0x3a0] sm:$0xff]
  %v2326 = vld [vmem:[%s2208 + $0x3a8] sm:$0xff]
  %v2327 = vld [vmem:[%s2208 + $0x3b0] sm:$0xff]
  %v2328 = vld [vmem:[%s2208 + $0x3b8] sm:$0xff]
  %v2329 = vld [vmem:[%s2208 + $0x3c0] sm:$0xff]
  %v2330 = vld [vmem:[%s2208 + $0x3c8] sm:$0xff]
  %v2331 = vld [vmem:[%s2208 + $0x3d0] sm:$0xff]
  %v2332 = vld [vmem:[%s2208 + $0x3d8] sm:$0xff]
  %v2333 = vld [vmem:[%s2208 + $0x3e0] sm:$0xff]
  %v2334 = vld [vmem:[%s2208 + $0x3e8] sm:$0xff]
  %v2335 = vld [vmem:[%s2208 + $0x3f0] sm:$0xff]
  %v2336 = vld [vmem:[%s2208 + $0x3f8] sm:$0xff]
  %v2337 = vunpack.c.l.b16 %v2183
  %v2338 = vunpack.c.h.b16 %v2183
  %v2339 = vunpack.c.l.b16 %v2187
  %v2340 = vunpack.c.h.b16 %v2187
  %v2341 = vunpack.c.l.b16 %v2190
  %v2342 = vunpack.c.h.b16 %v2190
  %v2343 = vunpack.c.l.b16 %v2193
  %v2344 = vunpack.c.h.b16 %v2193
  %v2345 = vunpack.c.l.b16 %v2197
  %v2346 = vunpack.c.h.b16 %v2197
  %v2347 = vunpack.c.l.b16 %v2201
  %v2348 = vunpack.c.h.b16 %v2201
  %v2349 = vunpack.c.l.b16 %v2204
  %v2350 = vunpack.c.h.b16 %v2204
  %v2351 = vunpack.c.l.b16 %v2207
  %v2352 = vunpack.c.h.b16 %v2207
  %v2353 = vpack.c.b16 %v2341, %v2337
  %v2354 = vpack.c.b16 %v2342, %v2338
  %v2355 = vpack.c.b16 %v2343, %v2339
  %v2356 = vpack.c.b16 %v2344, %v2340
  %v2357 = vpack.c.b16 %v2349, %v2345
  %v2358 = vpack.c.b16 %v2350, %v2346
  %v2359 = vpack.c.b16 %v2351, %v2347
  %v2360 = vpack.c.b16 %v2352, %v2348
  %v2497 = vunpack.c.l.b16 %v2209
  %v2498 = vunpack.c.h.b16 %v2209
  %v2499 = vunpack.c.l.b16 %v2210
  %v2500 = vunpack.c.h.b16 %v2210
  %v2501 = vunpack.c.l.b16 %v2211
  %v2502 = vunpack.c.h.b16 %v2211
  %v2503 = vunpack.c.l.b16 %v2212
  %v2504 = vunpack.c.h.b16 %v2212
  %v2505 = vunpack.c.l.b16 %v2213
  %v2506 = vunpack.c.h.b16 %v2213
  %v2507 = vunpack.c.l.b16 %v2214
  %v2508 = vunpack.c.h.b16 %v2214
  %v2509 = vunpack.c.l.b16 %v2215
  %v2510 = vunpack.c.h.b16 %v2215
  %v2511 = vunpack.c.l.b16 %v2216
  %v2512 = vunpack.c.h.b16 %v2216
  %v2513 = vunpack.c.l.b16 %v2217
  %v2514 = vunpack.c.h.b16 %v2217
  %v2515 = vunpack.c.l.b16 %v2218
  %v2516 = vunpack.c.h.b16 %v2218
  %v2517 = vunpack.c.l.b16 %v2219
  %v2518 = vunpack.c.h.b16 %v2219
  %v2519 = vunpack.c.l.b16 %v2220
  %v2520 = vunpack.c.h.b16 %v2220
  %v2521 = vunpack.c.l.b16 %v2221
  %v2522 = vunpack.c.h.b16 %v2221
  %v2523 = vunpack.c.l.b16 %v2222
  %v2524 = vunpack.c.h.b16 %v2222
  %v2525 = vunpack.c.l.b16 %v2223
  %v2526 = vunpack.c.h.b16 %v2223
  %v2527 = vunpack.c.l.b16 %v2224
  %v2528 = vunpack.c.h.b16 %v2224
  %v2529 = vunpack.c.l.b16 %v2225
  %v2530 = vunpack.c.h.b16 %v2225
  %v2531 = vunpack.c.l.b16 %v2226
  %v2532 = vunpack.c.h.b16 %v2226
  %v2533 = vunpack.c.l.b16 %v2227
  %v2534 = vunpack.c.h.b16 %v2227
  %v2535 = vunpack.c.l.b16 %v2228
  %v2536 = vunpack.c.h.b16 %v2228
  %v2537 = vunpack.c.l.b16 %v2229
  %v2538 = vunpack.c.h.b16 %v2229
  %v2539 = vunpack.c.l.b16 %v2230
  %v2540 = vunpack.c.h.b16 %v2230
  %v2541 = vunpack.c.l.b16 %v2231
  %v2542 = vunpack.c.h.b16 %v2231
  %v2543 = vunpack.c.l.b16 %v2232
  %v2544 = vunpack.c.h.b16 %v2232
  %v2545 = vunpack.c.l.b16 %v2233
  %v2546 = vunpack.c.h.b16 %v2233
  %v2547 = vunpack.c.l.b16 %v2234
  %v2548 = vunpack.c.h.b16 %v2234
  %v2549 = vunpack.c.l.b16 %v2235
  %v2550 = vunpack.c.h.b16 %v2235
  %v2551 = vunpack.c.l.b16 %v2236
  %v2552 = vunpack.c.h.b16 %v2236
  %v2553 = vunpack.c.l.b16 %v2237
  %v2554 = vunpack.c.h.b16 %v2237
  %v2555 = vunpack.c.l.b16 %v2238
  %v2556 = vunpack.c.h.b16 %v2238
  %v2557 = vunpack.c.l.b16 %v2239
  %v2558 = vunpack.c.h.b16 %v2239
  %v2559 = vunpack.c.l.b16 %v2240
  %v2560 = vunpack.c.h.b16 %v2240
  %v2561 = vunpack.c.l.b16 %v2241
  %v2562 = vunpack.c.h.b16 %v2241
  %v2563 = vunpack.c.l.b16 %v2242
  %v2564 = vunpack.c.h.b16 %v2242
  %v2565 = vunpack.c.l.b16 %v2243
  %v2566 = vunpack.c.h.b16 %v2243
  %v2567 = vunpack.c.l.b16 %v2244
  %v2568 = vunpack.c.h.b16 %v2244
  %v2569 = vunpack.c.l.b16 %v2245
  %v2570 = vunpack.c.h.b16 %v2245
  %v2571 = vunpack.c.l.b16 %v2246
  %v2572 = vunpack.c.h.b16 %v2246
  %v2573 = vunpack.c.l.b16 %v2247
  %v2574 = vunpack.c.h.b16 %v2247
  %v2575 = vunpack.c.l.b16 %v2248
  %v2576 = vunpack.c.h.b16 %v2248
  %v2577 = vunpack.c.l.b16 %v2249
  %v2578 = vunpack.c.h.b16 %v2249
  %v2579 = vunpack.c.l.b16 %v2250
  %v2580 = vunpack.c.h.b16 %v2250
  %v2581 = vunpack.c.l.b16 %v2251
  %v2582 = vunpack.c.h.b16 %v2251
  %v2583 = vunpack.c.l.b16 %v2252
  %v2584 = vunpack.c.h.b16 %v2252
  %v2585 = vunpack.c.l.b16 %v2253
  %v2586 = vunpack.c.h.b16 %v2253
  %v2587 = vunpack.c.l.b16 %v2254
  %v2588 = vunpack.c.h.b16 %v2254
  %v2589 = vunpack.c.l.b16 %v2255
  %v2590 = vunpack.c.h.b16 %v2255
  %v2591 = vunpack.c.l.b16 %v2256
  %v2592 = vunpack.c.h.b16 %v2256
  %v2593 = vunpack.c.l.b16 %v2257
  %v2594 = vunpack.c.h.b16 %v2257
  %v2595 = vunpack.c.l.b16 %v2258
  %v2596 = vunpack.c.h.b16 %v2258
  %v2597 = vunpack.c.l.b16 %v2259
  %v2598 = vunpack.c.h.b16 %v2259
  %v2599 = vunpack.c.l.b16 %v2260
  %v2600 = vunpack.c.h.b16 %v2260
  %v2601 = vunpack.c.l.b16 %v2261
  %v2602 = vunpack.c.h.b16 %v2261
  %v2603 = vunpack.c.l.b16 %v2262
  %v2604 = vunpack.c.h.b16 %v2262
  %v2605 = vunpack.c.l.b16 %v2263
  %v2606 = vunpack.c.h.b16 %v2263
  %v2607 = vunpack.c.l.b16 %v2264
  %v2608 = vunpack.c.h.b16 %v2264
  %v2609 = vunpack.c.l.b16 %v2265
  %v2610 = vunpack.c.h.b16 %v2265
  %v2611 = vunpack.c.l.b16 %v2266
  %v2612 = vunpack.c.h.b16 %v2266
  %v2613 = vunpack.c.l.b16 %v2267
  %v2614 = vunpack.c.h.b16 %v2267
  %v2615 = vunpack.c.l.b16 %v2268
  %v2616 = vunpack.c.h.b16 %v2268
  %v2617 = vunpack.c.l.b16 %v2269
  %v2618 = vunpack.c.h.b16 %v2269
  %v2619 = vunpack.c.l.b16 %v2270
  %v2620 = vunpack.c.h.b16 %v2270
  %v2621 = vunpack.c.l.b16 %v2271
  %v2622 = vunpack.c.h.b16 %v2271
  %v2623 = vunpack.c.l.b16 %v2272
  %v2624 = vunpack.c.h.b16 %v2272
  %v2625 = vunpack.c.l.b16 %v2273
  %v2626 = vunpack.c.h.b16 %v2273
  %v2627 = vunpack.c.l.b16 %v2274
  %v2628 = vunpack.c.h.b16 %v2274
  %v2629 = vunpack.c.l.b16 %v2275
  %v2630 = vunpack.c.h.b16 %v2275
  %v2631 = vunpack.c.l.b16 %v2276
  %v2632 = vunpack.c.h.b16 %v2276
  %v2633 = vunpack.c.l.b16 %v2277
  %v2634 = vunpack.c.h.b16 %v2277
  %v2635 = vunpack.c.l.b16 %v2278
  %v2636 = vunpack.c.h.b16 %v2278
  %v2637 = vunpack.c.l.b16 %v2279
  %v2638 = vunpack.c.h.b16 %v2279
  %v2639 = vunpack.c.l.b16 %v2280
  %v2640 = vunpack.c.h.b16 %v2280
  %v2641 = vunpack.c.l.b16 %v2281
  %v2642 = vunpack.c.h.b16 %v2281
  %v2643 = vunpack.c.l.b16 %v2282
  %v2644 = vunpack.c.h.b16 %v2282
  %v2645 = vunpack.c.l.b16 %v2283
  %v2646 = vunpack.c.h.b16 %v2283
  %v2647 = vunpack.c.l.b16 %v2284
  %v2648 = vunpack.c.h.b16 %v2284
  %v2649 = vunpack.c.l.b16 %v2285
  %v2650 = vunpack.c.h.b16 %v2285
  %v2651 = vunpack.c.l.b16 %v2286
  %v2652 = vunpack.c.h.b16 %v2286
  %v2653 = vunpack.c.l.b16 %v2287
  %v2654 = vunpack.c.h.b16 %v2287
  %v2655 = vunpack.c.l.b16 %v2288
  %v2656 = vunpack.c.h.b16 %v2288
  %v2657 = vunpack.c.l.b16 %v2289
  %v2658 = vunpack.c.h.b16 %v2289
  %v2659 = vunpack.c.l.b16 %v2290
  %v2660 = vunpack.c.h.b16 %v2290
  %v2661 = vunpack.c.l.b16 %v2291
  %v2662 = vunpack.c.h.b16 %v2291
  %v2663 = vunpack.c.l.b16 %v2292
  %v2664 = vunpack.c.h.b16 %v2292
  %v2665 = vunpack.c.l.b16 %v2293
  %v2666 = vunpack.c.h.b16 %v2293
  %v2667 = vunpack.c.l.b16 %v2294
  %v2668 = vunpack.c.h.b16 %v2294
  %v2669 = vunpack.c.l.b16 %v2295
  %v2670 = vunpack.c.h.b16 %v2295
  %v2671 = vunpack.c.l.b16 %v2296
  %v2672 = vunpack.c.h.b16 %v2296
  %v2673 = vunpack.c.l.b16 %v2297
  %v2674 = vunpack.c.h.b16 %v2297
  %v2675 = vunpack.c.l.b16 %v2298
  %v2676 = vunpack.c.h.b16 %v2298
  %v2677 = vunpack.c.l.b16 %v2299
  %v2678 = vunpack.c.h.b16 %v2299
  %v2679 = vunpack.c.l.b16 %v2300
  %v2680 = vunpack.c.h.b16 %v2300
  %v2681 = vunpack.c.l.b16 %v2301
  %v2682 = vunpack.c.h.b16 %v2301
  %v2683 = vunpack.c.l.b16 %v2302
  %v2684 = vunpack.c.h.b16 %v2302
  %v2685 = vunpack.c.l.b16 %v2303
  %v2686 = vunpack.c.h.b16 %v2303
  %v2687 = vunpack.c.l.b16 %v2304
  %v2688 = vunpack.c.h.b16 %v2304
  %v2689 = vunpack.c.l.b16 %v2305
  %v2690 = vunpack.c.h.b16 %v2305
  %v2691 = vunpack.c.l.b16 %v2306
  %v2692 = vunpack.c.h.b16 %v2306
  %v2693 = vunpack.c.l.b16 %v2307
  %v2694 = vunpack.c.h.b16 %v2307
  %v2695 = vunpack.c.l.b16 %v2308
  %v2696 = vunpack.c.h.b16 %v2308
  %v2697 = vunpack.c.l.b16 %v2309
  %v2698 = vunpack.c.h.b16 %v2309
  %v2699 = vunpack.c.l.b16 %v2310
  %v2700 = vunpack.c.h.b16 %v2310
  %v2701 = vunpack.c.l.b16 %v2311
  %v2702 = vunpack.c.h.b16 %v2311
  %v2703 = vunpack.c.l.b16 %v2312
  %v2704 = vunpack.c.h.b16 %v2312
  %v2705 = vunpack.c.l.b16 %v2313
  %v2706 = vunpack.c.h.b16 %v2313
  %v2707 = vunpack.c.l.b16 %v2314
  %v2708 = vunpack.c.h.b16 %v2314
  %v2709 = vunpack.c.l.b16 %v2315
  %v2710 = vunpack.c.h.b16 %v2315
  %v2711 = vunpack.c.l.b16 %v2316
  %v2712 = vunpack.c.h.b16 %v2316
  %v2713 = vunpack.c.l.b16 %v2317
  %v2714 = vunpack.c.h.b16 %v2317
  %v2715 = vunpack.c.l.b16 %v2318
  %v2716 = vunpack.c.h.b16 %v2318
  %v2717 = vunpack.c.l.b16 %v2319
  %v2718 = vunpack.c.h.b16 %v2319
  %v2719 = vunpack.c.l.b16 %v2320
  %v2720 = vunpack.c.h.b16 %v2320
  %v2721 = vunpack.c.l.b16 %v2321
  %v2722 = vunpack.c.h.b16 %v2321
  %v2723 = vunpack.c.l.b16 %v2322
  %v2724 = vunpack.c.h.b16 %v2322
  %v2725 = vunpack.c.l.b16 %v2323
  %v2726 = vunpack.c.h.b16 %v2323
  %v2727 = vunpack.c.l.b16 %v2324
  %v2728 = vunpack.c.h.b16 %v2324
  %v2729 = vunpack.c.l.b16 %v2325
  %v2730 = vunpack.c.h.b16 %v2325
  %v2731 = vunpack.c.l.b16 %v2326
  %v2732 = vunpack.c.h.b16 %v2326
  %v2733 = vunpack.c.l.b16 %v2327
  %v2734 = vunpack.c.h.b16 %v2327
  %v2735 = vunpack.c.l.b16 %v2328
  %v2736 = vunpack.c.h.b16 %v2328
  %v2737 = vunpack.c.l.b16 %v2329
  %v2738 = vunpack.c.h.b16 %v2329
  %v2739 = vunpack.c.l.b16 %v2330
  %v2740 = vunpack.c.h.b16 %v2330
  %v2741 = vunpack.c.l.b16 %v2331
  %v2742 = vunpack.c.h.b16 %v2331
  %v2743 = vunpack.c.l.b16 %v2332
  %v2744 = vunpack.c.h.b16 %v2332
  %v2745 = vunpack.c.l.b16 %v2333
  %v2746 = vunpack.c.h.b16 %v2333
  %v2747 = vunpack.c.l.b16 %v2334
  %v2748 = vunpack.c.h.b16 %v2334
  %v2749 = vunpack.c.l.b16 %v2335
  %v2750 = vunpack.c.h.b16 %v2335
  %v2751 = vunpack.c.l.b16 %v2336
  %v2752 = vunpack.c.h.b16 %v2336
  %v2753 = vpack.c.b16 %v2501, %v2497
  %v2754 = vpack.c.b16 %v2502, %v2498
  %v2755 = vpack.c.b16 %v2503, %v2499
  %v2756 = vpack.c.b16 %v2504, %v2500
  %v2757 = vpack.c.b16 %v2509, %v2505
  %v2758 = vpack.c.b16 %v2510, %v2506
  %v2759 = vpack.c.b16 %v2511, %v2507
  %v2760 = vpack.c.b16 %v2512, %v2508
  %v2761 = vpack.c.b16 %v2517, %v2513
  %v2762 = vpack.c.b16 %v2518, %v2514
  %v2763 = vpack.c.b16 %v2519, %v2515
  %v2764 = vpack.c.b16 %v2520, %v2516
  %v2765 = vpack.c.b16 %v2525, %v2521
  %v2766 = vpack.c.b16 %v2526, %v2522
  %v2767 = vpack.c.b16 %v2527, %v2523
  %v2768 = vpack.c.b16 %v2528, %v2524
  %v2769 = vpack.c.b16 %v2533, %v2529
  %v2770 = vpack.c.b16 %v2534, %v2530
  %v2771 = vpack.c.b16 %v2535, %v2531
  %v2772 = vpack.c.b16 %v2536, %v2532
  %v2773 = vpack.c.b16 %v2541, %v2537
  %v2774 = vpack.c.b16 %v2542, %v2538
  %v2775 = vpack.c.b16 %v2543, %v2539
  %v2776 = vpack.c.b16 %v2544, %v2540
  %v2777 = vpack.c.b16 %v2549, %v2545
  %v2778 = vpack.c.b16 %v2550, %v2546
  %v2779 = vpack.c.b16 %v2551, %v2547
  %v2780 = vpack.c.b16 %v2552, %v2548
  %v2781 = vpack.c.b16 %v2557, %v2553
  %v2782 = vpack.c.b16 %v2558, %v2554
  %v2783 = vpack.c.b16 %v2559, %v2555
  %v2784 = vpack.c.b16 %v2560, %v2556
  %v2785 = vpack.c.b16 %v2565, %v2561
  %v2786 = vpack.c.b16 %v2566, %v2562
  %v2787 = vpack.c.b16 %v2567, %v2563
  %v2788 = vpack.c.b16 %v2568, %v2564
  %v2789 = vpack.c.b16 %v2573, %v2569
  %v2790 = vpack.c.b16 %v2574, %v2570
  %v2791 = vpack.c.b16 %v2575, %v2571
  %v2792 = vpack.c.b16 %v2576, %v2572
  %v2793 = vpack.c.b16 %v2581, %v2577
  %v2794 = vpack.c.b16 %v2582, %v2578
  %v2795 = vpack.c.b16 %v2583, %v2579
  %v2796 = vpack.c.b16 %v2584, %v2580
  %v2797 = vpack.c.b16 %v2589, %v2585
  %v2798 = vpack.c.b16 %v2590, %v2586
  %v2799 = vpack.c.b16 %v2591, %v2587
  %v2800 = vpack.c.b16 %v2592, %v2588
  %v2801 = vpack.c.b16 %v2597, %v2593
  %v2802 = vpack.c.b16 %v2598, %v2594
  %v2803 = vpack.c.b16 %v2599, %v2595
  %v2804 = vpack.c.b16 %v2600, %v2596
  %v2805 = vpack.c.b16 %v2605, %v2601
  %v2806 = vpack.c.b16 %v2606, %v2602
  %v2807 = vpack.c.b16 %v2607, %v2603
  %v2808 = vpack.c.b16 %v2608, %v2604
  %v2809 = vpack.c.b16 %v2613, %v2609
  %v2810 = vpack.c.b16 %v2614, %v2610
  %v2811 = vpack.c.b16 %v2615, %v2611
  %v2812 = vpack.c.b16 %v2616, %v2612
  %v2813 = vpack.c.b16 %v2621, %v2617
  %v2814 = vpack.c.b16 %v2622, %v2618
  %v2815 = vpack.c.b16 %v2623, %v2619
  %v2816 = vpack.c.b16 %v2624, %v2620
  %v2817 = vpack.c.b16 %v2629, %v2625
  %v2818 = vpack.c.b16 %v2630, %v2626
  %v2819 = vpack.c.b16 %v2631, %v2627
  %v2820 = vpack.c.b16 %v2632, %v2628
  %v2821 = vpack.c.b16 %v2637, %v2633
  %v2822 = vpack.c.b16 %v2638, %v2634
  %v2823 = vpack.c.b16 %v2639, %v2635
  %v2824 = vpack.c.b16 %v2640, %v2636
  %v2825 = vpack.c.b16 %v2645, %v2641
  %v2826 = vpack.c.b16 %v2646, %v2642
  %v2827 = vpack.c.b16 %v2647, %v2643
  %v2828 = vpack.c.b16 %v2648, %v2644
  %v2829 = vpack.c.b16 %v2653, %v2649
  %v2830 = vpack.c.b16 %v2654, %v2650
  %v2831 = vpack.c.b16 %v2655, %v2651
  %v2832 = vpack.c.b16 %v2656, %v2652
  %v2833 = vpack.c.b16 %v2661, %v2657
  %v2834 = vpack.c.b16 %v2662, %v2658
  %v2835 = vpack.c.b16 %v2663, %v2659
  %v2836 = vpack.c.b16 %v2664, %v2660
  %v2837 = vpack.c.b16 %v2669, %v2665
  %v2838 = vpack.c.b16 %v2670, %v2666
  %v2839 = vpack.c.b16 %v2671, %v2667
  %v2840 = vpack.c.b16 %v2672, %v2668
  %v2841 = vpack.c.b16 %v2677, %v2673
  %v2842 = vpack.c.b16 %v2678, %v2674
  %v2843 = vpack.c.b16 %v2679, %v2675
  %v2844 = vpack.c.b16 %v2680, %v2676
  %v2845 = vpack.c.b16 %v2685, %v2681
  %v2846 = vpack.c.b16 %v2686, %v2682
  %v2847 = vpack.c.b16 %v2687, %v2683
  %v2848 = vpack.c.b16 %v2688, %v2684
  %v2849 = vpack.c.b16 %v2693, %v2689
  %v2850 = vpack.c.b16 %v2694, %v2690
  %v2851 = vpack.c.b16 %v2695, %v2691
  %v2852 = vpack.c.b16 %v2696, %v2692
  %v2853 = vpack.c.b16 %v2701, %v2697
  %v2854 = vpack.c.b16 %v2702, %v2698
  %v2855 = vpack.c.b16 %v2703, %v2699
  %v2856 = vpack.c.b16 %v2704, %v2700
  %v2857 = vpack.c.b16 %v2709, %v2705
  %v2858 = vpack.c.b16 %v2710, %v2706
  %v2859 = vpack.c.b16 %v2711, %v2707
  %v2860 = vpack.c.b16 %v2712, %v2708
  %v2861 = vpack.c.b16 %v2717, %v2713
  %v2862 = vpack.c.b16 %v2718, %v2714
  %v2863 = vpack.c.b16 %v2719, %v2715
  %v2864 = vpack.c.b16 %v2720, %v2716
  %v2865 = vpack.c.b16 %v2725, %v2721
  %v2866 = vpack.c.b16 %v2726, %v2722
  %v2867 = vpack.c.b16 %v2727, %v2723
  %v2868 = vpack.c.b16 %v2728, %v2724
  %v2869 = vpack.c.b16 %v2733, %v2729
  %v2870 = vpack.c.b16 %v2734, %v2730
  %v2871 = vpack.c.b16 %v2735, %v2731
  %v2872 = vpack.c.b16 %v2736, %v2732
  %v2873 = vpack.c.b16 %v2741, %v2737
  %v2874 = vpack.c.b16 %v2742, %v2738
  %v2875 = vpack.c.b16 %v2743, %v2739
  %v2876 = vpack.c.b16 %v2744, %v2740
  %v2877 = vpack.c.b16 %v2749, %v2745
  %v2878 = vpack.c.b16 %v2750, %v2746
  %v2879 = vpack.c.b16 %v2751, %v2747
  %v2880 = vpack.c.b16 %v2752, %v2748
  %3009 = vmatprep.subr.bf16.mxu0 %v2754
  %3010 = vmatpush1.bf16.msra.mxu0 %v2753
  %3011 = vmatprep.subr.bf16.mxu0 %v2758
  %3012 = vmatpush1.bf16.msra.mxu0 %v2757
  %3013 = vmatprep.subr.bf16.mxu0 %v2762
  %3014 = vmatpush1.bf16.msra.mxu0 %v2761
  %3015 = vmatprep.subr.bf16.mxu0 %v2766
  %3016 = vmatpush1.bf16.msra.mxu0 %v2765
  %3017 = vmatprep.subr.bf16.mxu0 %v2770
  %3018 = vmatpush1.bf16.msra.mxu0 %v2769
  %3019 = vmatprep.subr.bf16.mxu0 %v2774
  %3020 = vmatpush1.bf16.msra.mxu0 %v2773
  %3021 = vmatprep.subr.bf16.mxu0 %v2778
  %3022 = vmatpush1.bf16.msra.mxu0 %v2777
  %3023 = vmatprep.subr.bf16.mxu0 %v2782
  %3024 = vmatpush1.bf16.msra.mxu0 %v2781
  %3025 = vmatprep.subr.bf16.mxu0 %v2786
  %3026 = vmatpush1.bf16.msra.mxu0 %v2785
  %3027 = vmatprep.subr.bf16.mxu0 %v2790
  %3028 = vmatpush1.bf16.msra.mxu0 %v2789
  %3029 = vmatprep.subr.bf16.mxu0 %v2794
  %3030 = vmatpush1.bf16.msra.mxu0 %v2793
  %3031 = vmatprep.subr.bf16.mxu0 %v2798
  %3032 = vmatpush1.bf16.msra.mxu0 %v2797
  %3033 = vmatprep.subr.bf16.mxu0 %v2802
  %3034 = vmatpush1.bf16.msra.mxu0 %v2801
  %3035 = vmatprep.subr.bf16.mxu0 %v2806
  %3036 = vmatpush1.bf16.msra.mxu0 %v2805
  %3037 = vmatprep.subr.bf16.mxu0 %v2810
  %3038 = vmatpush1.bf16.msra.mxu0 %v2809
  %3039 = vmatprep.subr.bf16.mxu0 %v2814
  %3040 = vmatpush1.bf16.msra.mxu0 %v2813
  %3041 = vmatprep.mubr.bf16.mxu0 %v2354
  %3042 = vmatmul.mubr.bf16.gmra.mrb[0].mxu0 %v2353
  %v3043 = vpop.f32.mrb[0].mxu0
  %v3044 = vadd.f32 0.0, %v3043
  %v3045 = vpop.f32.mrb[0].mxu0
  %v3046 = vadd.f32 0.0, %v3045
  %v3047 = vpop.f32.mrb[0].mxu0
  %v3048 = vadd.f32 0.0, %v3047
  %v3049 = vpop.f32.mrb[0].mxu0
  %v3050 = vadd.f32 0.0, %v3049
  %3051 = vmatprep.mubr.bf16.mxu0 %v2358
  %3052 = vmatmul.mubr.bf16.gmra.mrb[0].mxu0 %v2357
  %v3053 = vpop.f32.mrb[0].mxu0
  %v3054 = vadd.f32 0.0, %v3053
  %v3055 = vpop.f32.mrb[0].mxu0
  %v3056 = vadd.f32 0.0, %v3055
  %v3057 = vpop.f32.mrb[0].mxu0
  %v3058 = vadd.f32 0.0, %v3057
  %v3059 = vpop.f32.mrb[0].mxu0
  %v3060 = vadd.f32 0.0, %v3059
  %3061 = vdwg.mxu0
  %3062 = vmatprep.subr.bf16.mxu0 %v2818
  %3063 = vmatpush1.bf16.msra.mxu0 %v2817
  %3064 = vmatprep.subr.bf16.mxu0 %v2822
  %3065 = vmatpush1.bf16.msra.mxu0 %v2821
  %3066 = vmatprep.subr.bf16.mxu0 %v2826
  %3067 = vmatpush1.bf16.msra.mxu0 %v2825
  %3068 = vmatprep.subr.bf16.mxu0 %v2830
  %3069 = vmatpush1.bf16.msra.mxu0 %v2829
  %3070 = vmatprep.subr.bf16.mxu0 %v2834
  %3071 = vmatpush1.bf16.msra.mxu0 %v2833
  %3072 = vmatprep.subr.bf16.mxu0 %v2838
  %3073 = vmatpush1.bf16.msra.mxu0 %v2837
  %3074 = vmatprep.subr.bf16.mxu0 %v2842
  %3075 = vmatpush1.bf16.msra.mxu0 %v2841
  %3076 = vmatprep.subr.bf16.mxu0 %v2846
  %3077 = vmatpush1.bf16.msra.mxu0 %v2845
  %3078 = vmatprep.subr.bf16.mxu0 %v2850
  %3079 = vmatpush1.bf16.msra.mxu0 %v2849
  %3080 = vmatprep.subr.bf16.mxu0 %v2854
  %3081 = vmatpush1.bf16.msra.mxu0 %v2853
  %3082 = vmatprep.subr.bf16.mxu0 %v2858
  %3083 = vmatpush1.bf16.msra.mxu0 %v2857
  %3084 = vmatprep.subr.bf16.mxu0 %v2862
  %3085 = vmatpush1.bf16.msra.mxu0 %v2861
  %3086 = vmatprep.subr.bf16.mxu0 %v2866
  %3087 = vmatpush1.bf16.msra.mxu0 %v2865
  %3088 = vmatprep.subr.bf16.mxu0 %v2870
  %3089 = vmatpush1.bf16.msra.mxu0 %v2869
  %3090 = vmatprep.subr.bf16.mxu0 %v2874
  %3091 = vmatpush1.bf16.msra.mxu0 %v2873
  %3092 = vmatprep.subr.bf16.mxu0 %v2878
  %3093 = vmatpush1.bf16.msra.mxu0 %v2877
  %3094 = vmatprep.mubr.bf16.mxu0 %v2356
  %3095 = vmatmul.mubr.bf16.gmra.mrb[0].mxu0 %v2355
  %v3096 = vpop.f32.mrb[0].mxu0
  %v3097 = vadd.f32 %v3044, %v3096
  %v3098 = vpop.f32.mrb[0].mxu0
  %v3099 = vadd.f32 %v3046, %v3098
  %v3100 = vpop.f32.mrb[0].mxu0
  %v3101 = vadd.f32 %v3048, %v3100
  %v3102 = vpop.f32.mrb[0].mxu0
  %v3103 = vadd.f32 %v3050, %v3102
  %3104 = vmatprep.mubr.bf16.mxu0 %v2360
  %3105 = vmatmul.mubr.bf16.gmra.mrb[0].mxu0 %v2359
  %v3106 = vpop.f32.mrb[0].mxu0
  %v3107 = vadd.f32 %v3054, %v3106
  %v3108 = vpop.f32.mrb[0].mxu0
  %v3109 = vadd.f32 %v3056, %v3108
  %v3110 = vpop.f32.mrb[0].mxu0
  %v3111 = vadd.f32 %v3058, %v3110
  %v3112 = vpop.f32.mrb[0].mxu0
  %v3113 = vadd.f32 %v3060, %v3112
  %3114 = vdwg.mxu0
  %3115 = vmatprep.subr.bf16.mxu0 %v2756
  %3116 = vmatpush1.bf16.msra.mxu0 %v2755
  %3117 = vmatprep.subr.bf16.mxu0 %v2760
  %3118 = vmatpush1.bf16.msra.mxu0 %v2759
  %3119 = vmatprep.subr.bf16.mxu0 %v2764
  %3120 = vmatpush1.bf16.msra.mxu0 %v2763
  %3121 = vmatprep.subr.bf16.mxu0 %v2768
  %3122 = vmatpush1.bf16.msra.mxu0 %v2767
  %3123 = vmatprep.subr.bf16.mxu0 %v2772
  %3124 = vmatpush1.bf16.msra.mxu0 %v2771
  %3125 = vmatprep.subr.bf16.mxu0 %v2776
  %3126 = vmatpush1.bf16.msra.mxu0 %v2775
  %3127 = vmatprep.subr.bf16.mxu0 %v2780
  %3128 = vmatpush1.bf16.msra.mxu0 %v2779
  %3129 = vmatprep.subr.bf16.mxu0 %v2784
  %3130 = vmatpush1.bf16.msra.mxu0 %v2783
  %3131 = vmatprep.subr.bf16.mxu0 %v2788
  %3132 = vmatpush1.bf16.msra.mxu0 %v2787
  %3133 = vmatprep.subr.bf16.mxu0 %v2792
  %3134 = vmatpush1.bf16.msra.mxu0 %v2791
  %3135 = vmatprep.subr.bf16.mxu0 %v2796
  %3136 = vmatpush1.bf16.msra.mxu0 %v2795
  %3137 = vmatprep.subr.bf16.mxu0 %v2800
  %3138 = vmatpush1.bf16.msra.mxu0 %v2799
  %3139 = vmatprep.subr.bf16.mxu0 %v2804
  %3140 = vmatpush1.bf16.msra.mxu0 %v2803
  %3141 = vmatprep.subr.bf16.mxu0 %v2808
  %3142 = vmatpush1.bf16.msra.mxu0 %v2807
  %3143 = vmatprep.subr.bf16.mxu0 %v2812
  %3144 = vmatpush1.bf16.msra.mxu0 %v2811
  %3145 = vmatprep.subr.bf16.mxu0 %v2816
  %3146 = vmatpush1.bf16.msra.mxu0 %v2815
  %3147 = vmatprep.mubr.bf16.mxu0 %v2354
  %3148 = vmatmul.mubr.bf16.gmra.mrb[0].mxu0 %v2353
  %v3149 = vpop.f32.mrb[0].mxu0
  %v3150 = vadd.f32 0.0, %v3149
  %v3151 = vpop.f32.mrb[0].mxu0
  %v3152 = vadd.f32 0.0, %v3151
  %v3153 = vpop.f32.mrb[0].mxu0
  %v3154 = vadd.f32 0.0, %v3153
  %v3155 = vpop.f32.mrb[0].mxu0
  %v3156 = vadd.f32 0.0, %v3155
  %3157 = vmatprep.mubr.bf16.mxu0 %v2358
  %3158 = vmatmul.mubr.bf16.gmra.mrb[0].mxu0 %v2357
  %v3159 = vpop.f32.mrb[0].mxu0
  %v3160 = vadd.f32 0.0, %v3159
  %v3161 = vpop.f32.mrb[0].mxu0
  %v3162 = vadd.f32 0.0, %v3161
  %v3163 = vpop.f32.mrb[0].mxu0
  %v3164 = vadd.f32 0.0, %v3163
  %v3165 = vpop.f32.mrb[0].mxu0
  %v3166 = vadd.f32 0.0, %v3165
  %3167 = vdwg.mxu0
  %3168 = vmatprep.subr.bf16.mxu0 %v2820
  %3169 = vmatpush1.bf16.msra.mxu0 %v2819
  %3170 = vmatprep.subr.bf16.mxu0 %v2824
  %3171 = vmatpush1.bf16.msra.mxu0 %v2823
  %3172 = vmatprep.subr.bf16.mxu0 %v2828
  %3173 = vmatpush1.bf16.msra.mxu0 %v2827
  %3174 = vmatprep.subr.bf16.mxu0 %v2832
  %3175 = vmatpush1.bf16.msra.mxu0 %v2831
  %3176 = vmatprep.subr.bf16.mxu0 %v2836
  %3177 = vmatpush1.bf16.msra.mxu0 %v2835
  %3178 = vmatprep.subr.bf16.mxu0 %v2840
  %3179 = vmatpush1.bf16.msra.mxu0 %v2839
  %3180 = vmatprep.subr.bf16.mxu0 %v2844
  %3181 = vmatpush1.bf16.msra.mxu0 %v2843
  %3182 = vmatprep.subr.bf16.mxu0 %v2848
  %3183 = vmatpush1.bf16.msra.mxu0 %v2847
  %3184 = vmatprep.subr.bf16.mxu0 %v2852
  %3185 = vmatpush1.bf16.msra.mxu0 %v2851
  %3186 = vmatprep.subr.bf16.mxu0 %v2856
  %3187 = vmatpush1.bf16.msra.mxu0 %v2855
  %3188 = vmatprep.subr.bf16.mxu0 %v2860
  %3189 = vmatpush1.bf16.msra.mxu0 %v2859
  %3190 = vmatprep.subr.bf16.mxu0 %v2864
  %3191 = vmatpush1.bf16.msra.mxu0 %v2863
  %3192 = vmatprep.subr.bf16.mxu0 %v2868
  %3193 = vmatpush1.bf16.msra.mxu0 %v2867
  %3194 = vmatprep.subr.bf16.mxu0 %v2872
  %3195 = vmatpush1.bf16.msra.mxu0 %v2871
  %3196 = vmatprep.subr.bf16.mxu0 %v2876
  %3197 = vmatpush1.bf16.msra.mxu0 %v2875
  %3198 = vmatprep.subr.bf16.mxu0 %v2880
  %3199 = vmatpush1.bf16.msra.mxu0 %v2879
  %3200 = vmatprep.mubr.bf16.mxu0 %v2356
  %3201 = vmatmul.mubr.bf16.gmra.mrb[0].mxu0 %v2355
  %v3202 = vpop.f32.mrb[0].mxu0
  %v3203 = vadd.f32 %v3150, %v3202
  %v3204 = vpop.f32.mrb[0].mxu0
  %v3205 = vadd.f32 %v3152, %v3204
  %v3206 = vpop.f32.mrb[0].mxu0
  %v3207 = vadd.f32 %v3154, %v3206
  %v3208 = vpop.f32.mrb[0].mxu0
  %v3209 = vadd.f32 %v3156, %v3208
  %3210 = vmatprep.mubr.bf16.mxu0 %v2360
  %3211 = vmatmul.mubr.bf16.gmra.mrb[0].mxu0 %v2359
  %v3212 = vpop.f32.mrb[0].mxu0
  %v3213 = vadd.f32 %v3160, %v3212
  %v3214 = vpop.f32.mrb[0].mxu0
  %v3215 = vadd.f32 %v3162, %v3214
  %v3216 = vpop.f32.mrb[0].mxu0
  %v3217 = vadd.f32 %v3164, %v3216
  %v3218 = vpop.f32.mrb[0].mxu0
  %v3219 = vadd.f32 %v3166, %v3218
  %3220 = vdwg.mxu0
  %v3221 = vadd.f32 %v2049, %v3097
  %v3222 = vadd.f32 %v2051, %v3099
  %v3223 = vadd.f32 %v2155, %v3203
  %v3224 = vadd.f32 %v2157, %v3205
  %v3225 = vadd.f32 %v2053, %v3101
  %v3226 = vadd.f32 %v2055, %v3103
  %v3227 = vadd.f32 %v2159, %v3207
  %v3228 = vadd.f32 %v2161, %v3209
  %v3229 = vadd.f32 %v2059, %v3107
  %v3230 = vadd.f32 %v2061, %v3109
  %v3231 = vadd.f32 %v2165, %v3213
  %v3232 = vadd.f32 %v2167, %v3215
  %v3233 = vadd.f32 %v2063, %v3111
  %v3234 = vadd.f32 %v2065, %v3113
  %v3235 = vadd.f32 %v2169, %v3217
  %v3236 = vadd.f32 %v2171, %v3219
  %v3237 = vld [vmem:[%s3] sm:$0xf]
  %v3239 = vlaneseq
  %v3240 = vshrl.u32 %v3239, 7
  %v3241 = vsub.s32 0, %v3240
  %v3242 = vrot.slane %v3237, %v3241
  %v3243 = vlaneseq
  %v3244 = vshrl.u32 %v3243, 7
  %v3245 = vsub.s32 1, %v3244
  %v3246 = vrot.slane %v3237, %v3245
  %v3247 = vlaneseq
  %v3248 = vshrl.u32 %v3247, 7
  %v3249 = vsub.s32 2, %v3248
  %v3250 = vrot.slane %v3237, %v3249
  %v3251 = vlaneseq
  %v3252 = vshrl.u32 %v3251, 7
  %v3253 = vsub.s32 3, %v3252
  %v3254 = vrot.slane %v3237, %v3253
  %v3259 = vadd.f32 %v3221, %v3242
  %v3260 = vadd.f32 %v3222, %v3246
  %v3261 = vadd.f32 %v3223, %v3250
  %v3262 = vadd.f32 %v3224, %v3254
  %v3263 = vadd.f32 %v3225, %v3242
  %v3264 = vadd.f32 %v3226, %v3246
  %v3265 = vadd.f32 %v3227, %v3250
  %v3266 = vadd.f32 %v3228, %v3254
  %v3267 = vadd.f32 %v3229, %v3242
  %v3268 = vadd.f32 %v3230, %v3246
  %v3269 = vadd.f32 %v3231, %v3250
  %v3270 = vadd.f32 %v3232, %v3254
  %v3271 = vadd.f32 %v3233, %v3242
  %v3272 = vadd.f32 %v3234, %v3246
  %v3273 = vadd.f32 %v3235, %v3250
  %v3274 = vadd.f32 %v3236, %v3254
  %v3275 = vadd.f32 %v3259, %v3263
  %v3276 = vrot.slane %v3275, 4
  %v3277 = vadd.f32 %v3275, %v3276
  %v3278 = vrot.slane %v3277, 2
  %v3279 = vadd.f32 %v3277, %v3278
  %v3280 = vrot.slane %v3279, 1
  %v3281 = vadd.f32 %v3279, %v3280
  %v3282 = vadd.f32 %v3260, %v3264
  %v3283 = vrot.slane %v3282, 4
  %v3284 = vadd.f32 %v3282, %v3283
  %v3285 = vrot.slane %v3284, 2
  %v3286 = vadd.f32 %v3284, %v3285
  %v3287 = vrot.slane %v3286, 1
  %v3288 = vadd.f32 %v3286, %v3287
  %v3289 = vadd.f32 %v3261, %v3265
  %v3290 = vrot.slane %v3289, 4
  %v3291 = vadd.f32 %v3289, %v3290
  %v3292 = vrot.slane %v3291, 2
  %v3293 = vadd.f32 %v3291, %v3292
  %v3294 = vrot.slane %v3293, 1
  %v3295 = vadd.f32 %v3293, %v3294
  %v3296 = vadd.f32 %v3262, %v3266
  %v3297 = vrot.slane %v3296, 4
  %v3298 = vadd.f32 %v3296, %v3297
  %v3299 = vrot.slane %v3298, 2
  %v3300 = vadd.f32 %v3298, %v3299
  %v3301 = vrot.slane %v3300, 1
  %v3302 = vadd.f32 %v3300, %v3301
  %v3303 = vadd.f32 %v3267, %v3271
  %v3304 = vrot.slane %v3303, 4
  %v3305 = vadd.f32 %v3303, %v3304
  %v3306 = vrot.slane %v3305, 2
  %v3307 = vadd.f32 %v3305, %v3306
  %v3308 = vrot.slane %v3307, 1
  %v3309 = vadd.f32 %v3307, %v3308
  %v3310 = vadd.f32 %v3268, %v3272
  %v3311 = vrot.slane %v3310, 4
  %v3312 = vadd.f32 %v3310, %v3311
  %v3313 = vrot.slane %v3312, 2
  %v3314 = vadd.f32 %v3312, %v3313
  %v3315 = vrot.slane %v3314, 1
  %v3316 = vadd.f32 %v3314, %v3315
  %v3317 = vadd.f32 %v3269, %v3273
  %v3318 = vrot.slane %v3317, 4
  %v3319 = vadd.f32 %v3317, %v3318
  %v3320 = vrot.slane %v3319, 2
  %v3321 = vadd.f32 %v3319, %v3320
  %v3322 = vrot.slane %v3321, 1
  %v3323 = vadd.f32 %v3321, %v3322
  %v3324 = vadd.f32 %v3270, %v3274
  %v3325 = vrot.slane %v3324, 4
  %v3326 = vadd.f32 %v3324, %v3325
  %v3327 = vrot.slane %v3326, 2
  %v3328 = vadd.f32 %v3326, %v3327
  %v3329 = vrot.slane %v3328, 1
  %v3330 = vadd.f32 %v3328, %v3329
  %3333 = vrot.lane.b32.xlu0 %v3281, 96
  %v3334 = vpop.permute.xlu0 %3333
  %3335 = vrot.lane.b32.xlu0 %v3309, 96
  %v3336 = vpop.permute.xlu0 %3335
  %3337 = vrot.lane.b32.xlu0 %v3281, 64
  %v3338 = vpop.permute.xlu0 %3337
  %3339 = vrot.lane.b32.xlu0 %v3309, 64
  %v3340 = vpop.permute.xlu0 %3339
  %3341 = vrot.lane.b32.xlu0 %v3281, 32
  %v3342 = vpop.permute.xlu0 %3341
  %3343 = vrot.lane.b32.xlu0 %v3309, 32
  %v3344 = vpop.permute.xlu0 %3343
  %3347 = vrot.lane.b32.xlu0 %v3288, 96
  %v3348 = vpop.permute.xlu0 %3347
  %3349 = vrot.lane.b32.xlu0 %v3316, 96
  %v3350 = vpop.permute.xlu0 %3349
  %3351 = vrot.lane.b32.xlu0 %v3288, 64
  %v3352 = vpop.permute.xlu0 %3351
  %3353 = vrot.lane.b32.xlu0 %v3316, 64
  %v3354 = vpop.permute.xlu0 %3353
  %3355 = vrot.lane.b32.xlu0 %v3288, 32
  %v3356 = vpop.permute.xlu0 %3355
  %3357 = vrot.lane.b32.xlu0 %v3316, 32
  %v3358 = vpop.permute.xlu0 %3357
  %3361 = vrot.lane.b32.xlu0 %v3295, 96
  %v3362 = vpop.permute.xlu0 %3361
  %3363 = vrot.lane.b32.xlu0 %v3323, 96
  %v3364 = vpop.permute.xlu0 %3363
  %3365 = vrot.lane.b32.xlu0 %v3295, 64
  %v3366 = vpop.permute.xlu0 %3365
  %3367 = vrot.lane.b32.xlu0 %v3323, 64
  %v3368 = vpop.permute.xlu0 %3367
  %3369 = vrot.lane.b32.xlu0 %v3295, 32
  %v3370 = vpop.permute.xlu0 %3369
  %3371 = vrot.lane.b32.xlu0 %v3323, 32
  %v3372 = vpop.permute.xlu0 %3371
  %3375 = vrot.lane.b32.xlu0 %v3302, 96
  %v3376 = vpop.permute.xlu0 %3375
  %3377 = vrot.lane.b32.xlu0 %v3330, 96
  %v3378 = vpop.permute.xlu0 %3377
  %3379 = vrot.lane.b32.xlu0 %v3302, 64
  %v3380 = vpop.permute.xlu0 %3379
  %3381 = vrot.lane.b32.xlu0 %v3330, 64
  %v3382 = vpop.permute.xlu0 %3381
  %3383 = vrot.lane.b32.xlu0 %v3302, 32
  %v3384 = vpop.permute.xlu0 %3383
  %3385 = vrot.lane.b32.xlu0 %v3330, 32
  %v3386 = vpop.permute.xlu0 %3385
  %v3387 = vrot.slane %v3309, 7
  %vm3388 = vcmask 1041409
  %v3389 = vsel %vm3388, %v3387, %v3281
  %v3390 = vrot.slane %v3336, 7
  %v3391 = vsel %vm3388, %v3390, %v3334
  %v3392 = vrot.slane %v3340, 7
  %v3393 = vsel %vm3388, %v3392, %v3338
  %v3394 = vrot.slane %v3344, 7
  %v3395 = vsel %vm3388, %v3394, %v3342
  %v3396 = vrot.slane %v3316, 7
  %v3397 = vsel %vm3388, %v3396, %v3288
  %v3398 = vrot.slane %v3350, 7
  %v3399 = vsel %vm3388, %v3398, %v3348
  %v3400 = vrot.slane %v3354, 7
  %v3401 = vsel %vm3388, %v3400, %v3352
  %v3402 = vrot.slane %v3358, 7
  %v3403 = vsel %vm3388, %v3402, %v3356
  %v3404 = vrot.slane %v3323, 7
  %v3405 = vsel %vm3388, %v3404, %v3295
  %v3406 = vrot.slane %v3364, 7
  %v3407 = vsel %vm3388, %v3406, %v3362
  %v3408 = vrot.slane %v3368, 7
  %v3409 = vsel %vm3388, %v3408, %v3366
  %v3410 = vrot.slane %v3372, 7
  %v3411 = vsel %vm3388, %v3410, %v3370
  %v3412 = vrot.slane %v3330, 7
  %v3413 = vsel %vm3388, %v3412, %v3302
  %v3414 = vrot.slane %v3378, 7
  %v3415 = vsel %vm3388, %v3414, %v3376
  %v3416 = vrot.slane %v3382, 7
  %v3417 = vsel %vm3388, %v3416, %v3380
  %v3418 = vrot.slane %v3386, 7
  %v3419 = vsel %vm3388, %v3418, %v3384
  %v3436 = vcombine.low %v3389, %v3393
  %v3438 = vunpack.c.l.s4 1983009808
  %v3439 = vunpack.c.0.s8 %v3438
  %v3440 = vlaneseq
  %v3441 = vshrl.u32 %v3440, 7
  %v3442 = vsub.s32 %v3439, %v3441
  %v3443 = vrot.slane %v3436, %v3442
  %v3444 = vcombine.low %v3391, %v3395
  %v3446 = vunpack.c.l.s4 1983009808
  %v3447 = vunpack.c.0.s8 %v3446
  %v3448 = vlaneseq
  %v3449 = vshrl.u32 %v3448, 7
  %v3450 = vsub.s32 %v3447, %v3449
  %v3451 = vrot.slane %v3444, %v3450
  %v3452 = vcombine.low %v3397, %v3401
  %v3454 = vunpack.c.l.s4 1983009808
  %v3455 = vunpack.c.0.s8 %v3454
  %v3456 = vlaneseq
  %v3457 = vshrl.u32 %v3456, 7
  %v3458 = vsub.s32 %v3455, %v3457
  %v3459 = vrot.slane %v3452, %v3458
  %v3460 = vcombine.low %v3399, %v3403
  %v3462 = vunpack.c.l.s4 1983009808
  %v3463 = vunpack.c.0.s8 %v3462
  %v3464 = vlaneseq
  %v3465 = vshrl.u32 %v3464, 7
  %v3466 = vsub.s32 %v3463, %v3465
  %v3467 = vrot.slane %v3460, %v3466
  %v3468 = vcombine.low %v3443, %v3451
  %v3470 = vunpack.c.l.s4 1934713408
  %v3471 = vunpack.c.0.s8 %v3470
  %v3472 = vlaneseq
  %v3473 = vshrl.u32 %v3472, 7
  %v3474 = vsub.s32 %v3471, %v3473
  %v3475 = vrot.slane %v3468, %v3474
  %v3476 = vcombine.low %v3459, %v3467
  %v3478 = vunpack.c.l.s4 1934713408
  %v3479 = vunpack.c.0.s8 %v3478
  %v3480 = vlaneseq
  %v3481 = vshrl.u32 %v3480, 7
  %v3482 = vsub.s32 %v3479, %v3481
  %v3483 = vrot.slane %v3476, %v3482
  %v3484 = vcombine.low %v3475, %v3483
  %v3485 = vcombine.high %v3475, %v3483
  %v3486 = vcombine.low %v3405, %v3409
  %v3488 = vunpack.c.l.s4 1983009808
  %v3489 = vunpack.c.0.s8 %v3488
  %v3490 = vlaneseq
  %v3491 = vshrl.u32 %v3490, 7
  %v3492 = vsub.s32 %v3489, %v3491
  %v3493 = vrot.slane %v3486, %v3492
  %v3494 = vcombine.low %v3407, %v3411
  %v3496 = vunpack.c.l.s4 1983009808
  %v3497 = vunpack.c.0.s8 %v3496
  %v3498 = vlaneseq
  %v3499 = vshrl.u32 %v3498, 7
  %v3500 = vsub.s32 %v3497, %v3499
  %v3501 = vrot.slane %v3494, %v3500
  %v3502 = vcombine.low %v3413, %v3417
  %v3504 = vunpack.c.l.s4 1983009808
  %v3505 = vunpack.c.0.s8 %v3504
  %v3506 = vlaneseq
  %v3507 = vshrl.u32 %v3506, 7
  %v3508 = vsub.s32 %v3505, %v3507
  %v3509 = vrot.slane %v3502, %v3508
  %v3510 = vcombine.low %v3415, %v3419
  %v3512 = vunpack.c.l.s4 1983009808
  %v3513 = vunpack.c.0.s8 %v3512
  %v3514 = vlaneseq
  %v3515 = vshrl.u32 %v3514, 7
  %v3516 = vsub.s32 %v3513, %v3515
  %v3517 = vrot.slane %v3510, %v3516
  %v3518 = vcombine.low %v3493, %v3501
  %v3520 = vunpack.c.l.s4 1934713408
  %v3521 = vunpack.c.0.s8 %v3520
  %v3522 = vlaneseq
  %v3523 = vshrl.u32 %v3522, 7
  %v3524 = vsub.s32 %v3521, %v3523
  %v3525 = vrot.slane %v3518, %v3524
  %v3526 = vcombine.low %v3509, %v3517
  %v3528 = vunpack.c.l.s4 1934713408
  %v3529 = vunpack.c.0.s8 %v3528
  %v3530 = vlaneseq
  %v3531 = vshrl.u32 %v3530, 7
  %v3532 = vsub.s32 %v3529, %v3531
  %v3533 = vrot.slane %v3526, %v3532
  %v3534 = vcombine.low %v3525, %v3533
  %v3535 = vcombine.high %v3525, %v3533
  %vm3536 = vcmask 261120
  %v3537 = vsel %vm3536, %v3484, 0.0
  %v3538 = vsel %vm3536, %v3534, 0.0
  %v3539 = vadd.f32 %v3537, %v3538
  %v3540 = vrot.slane %v3539, 4
  %v3541 = vadd.f32 %v3539, %v3540
  %v3542 = vrot.slane %v3541, 2
  %v3543 = vadd.f32 %v3541, %v3542
  %v3544 = vrot.slane %v3543, 1
  %v3545 = vadd.f32 %v3543, %v3544
  %v3546 = vsel %vm3536, %v3485, 0.0
  %v3547 = vsel %vm3536, %v3535, 0.0
  %v3548 = vadd.f32 %v3546, %v3547
  %v3549 = vrot.slane %v3548, 4
  %v3550 = vadd.f32 %v3548, %v3549
  %v3551 = vrot.slane %v3550, 2
  %v3552 = vadd.f32 %v3550, %v3551
  %v3553 = vrot.slane %v3552, 1
  %v3554 = vadd.f32 %v3552, %v3553
  %v3555 = vmul.f32 %v3545, 0.00390625
  %v3556 = vmul.f32 %v3554, 0.00390625
  %v3557 = vld [vmem:[%s4] sm:$0xff]
  %v3558 = vld [vmem:[%s4 + $0x8] sm:$0xff]
  %v3559 = vld [vmem:[%s4 + $0x10] sm:$0xff]
  %v3560 = vld [vmem:[%s4 + $0x18] sm:$0xff]
  %v3561 = vld [vmem:[%s5] sm:$0x1]
  %v3563 = vlaneseq
  %v3564 = vshrl.u32 %v3563, 7
  %v3565 = vsub.s32 0, %v3564
  %v3566 = vrot.slane %v3561, %v3565
  %v3570 = vsel %vm3388, %v3556, %v3555
  %v3571 = vsel %vm3536, %v3570, 0
  %3573 = vmatprep.subr.mxu0 0.0
  %3574 = vmatpush1.msra.mxu0 %v3557
  %3575 = vmatprep.subr.mxu0 0.0
  %3576 = vmatpush1.msra.mxu0 %v3558
  %3577 = vmatprep.subr.mxu0 0.0
  %3578 = vmatpush1.msra.mxu0 %v3559
  %3579 = vmatprep.subr.mxu0 0.0
  %3580 = vmatpush1.msra.mxu0 %v3560
  %3581 = vmatprep.subr.mxu0 0.0
  %3582 = vmatpush1.msra.mxu0 0.0
  %3583 = vmatprep.subr.mxu0 0.0
  %3584 = vmatpush1.msra.mxu0 0.0
  %3585 = vmatprep.subr.mxu0 0.0
  %3586 = vmatpush1.msra.mxu0 0.0
  %3587 = vmatprep.subr.mxu0 0.0
  %3588 = vmatpush1.msra.mxu0 0.0
  %3589 = vmatprep.subr.mxu0 0.0
  %3590 = vmatpush1.msra.mxu0 0.0
  %3591 = vmatprep.subr.mxu0 0.0
  %3592 = vmatpush1.msra.mxu0 0.0
  %3593 = vmatprep.subr.mxu0 0.0
  %3594 = vmatpush1.msra.mxu0 0.0
  %3595 = vmatprep.subr.mxu0 0.0
  %3596 = vmatpush1.msra.mxu0 0.0
  %3597 = vmatprep.subr.mxu0 0.0
  %3598 = vmatpush1.msra.mxu0 0.0
  %3599 = vmatprep.subr.mxu0 0.0
  %3600 = vmatpush1.msra.mxu0 0.0
  %3601 = vmatprep.subr.mxu0 0.0
  %3602 = vmatpush1.msra.mxu0 0.0
  %3603 = vmatprep.subr.mxu0 0.0
  %3604 = vmatpush1.msra.mxu0 0.0
  %3605 = vmatprep.subr.mxu0 0.0
  %3606 = vmatpush1.msra.mxu0 0.0
  %3607 = vmatprep.subr.mxu0 0.0
  %3608 = vmatpush1.msra.mxu0 0.0
  %3609 = vmatprep.subr.mxu0 0.0
  %3610 = vmatpush1.msra.mxu0 0.0
  %3611 = vmatprep.subr.mxu0 0.0
  %3612 = vmatpush1.msra.mxu0 0.0
  %3613 = vmatprep.subr.mxu0 0.0
  %3614 = vmatpush1.msra.mxu0 0.0
  %3615 = vmatprep.subr.mxu0 0.0
  %3616 = vmatpush1.msra.mxu0 0.0
  %3617 = vmatprep.subr.mxu0 0.0
  %3618 = vmatpush1.msra.mxu0 0.0
  %3619 = vmatprep.subr.mxu0 0.0
  %3620 = vmatpush1.msra.mxu0 0.0
  %3621 = vmatprep.subr.mxu0 0.0
  %3622 = vmatpush1.msra.mxu0 0.0
  %3623 = vmatprep.subr.mxu0 0.0
  %3624 = vmatpush1.msra.mxu0 0.0
  %3625 = vmatprep.subr.mxu0 0.0
  %3626 = vmatpush1.msra.mxu0 0.0
  %3627 = vmatprep.subr.mxu0 0.0
  %3628 = vmatpush1.msra.mxu0 0.0
  %3629 = vmatprep.subr.mxu0 0.0
  %3630 = vmatpush1.msra.mxu0 0.0
  %3631 = vmatprep.subr.mxu0 0.0
  %3632 = vmatpush1.msra.mxu0 0.0
  %3633 = vmatprep.subr.mxu0 0.0
  %3634 = vmatpush1.msra.mxu0 0.0
  %3635 = vmatprep.subr.mxu0 0.0
  %3636 = vmatpush1.msra.mxu0 0.0
  %3637 = vmatprep.mubr.f32.mxu0 0.0
  %3638 = vmatmul.mubr.f32.gmra.mrb[0].mxu0 %v3571
  %v3639 = vpop.f32.mrb[0].mxu0
  %v3640 = vadd.f32 %v3566, %v3639
  %v3641 = vpop.f32.mrb[0].mxu0
  %3642 = vdwg.mxu0
  %v3643 = vmax.f32 %v3640, 0.0
  %v3644 = vld [vmem:[%s6] sm:$0xf]
  %v3645 = vld [vmem:[%s7] sm:$0x1]
  %v3647 = vlaneseq
  %v3648 = vshrl.u32 %v3647, 7
  %v3649 = vsub.s32 0, %v3648
  %v3650 = vrot.slane %v3645, %v3649
  %vm3652 = vcmask 31744
  %v3654 = vsel %vm3652, %v3643, 0
  %vm3656 = vcmask 1043456
  %v3658 = vsel %vm3656, %v3644, 0
  %3660 = vmatprep.subr.mxu0 0.0
  %3661 = vmatpush1.msra.mxu0 %v3658
  %3662 = vmatprep.subr.mxu0 0.0
  %3663 = vmatpush1.msra.mxu0 0.0
  %3664 = vmatprep.subr.mxu0 0.0
  %3665 = vmatpush1.msra.mxu0 0.0
  %3666 = vmatprep.subr.mxu0 0.0
  %3667 = vmatpush1.msra.mxu0 0.0
  %3668 = vmatprep.subr.mxu0 0.0
  %3669 = vmatpush1.msra.mxu0 0.0
  %3670 = vmatprep.subr.mxu0 0.0
  %3671 = vmatpush1.msra.mxu0 0.0
  %3672 = vmatprep.subr.mxu0 0.0
  %3673 = vmatpush1.msra.mxu0 0.0
  %3674 = vmatprep.subr.mxu0 0.0
  %3675 = vmatpush1.msra.mxu0 0.0
  %3676 = vmatprep.subr.mxu0 0.0
  %3677 = vmatpush1.msra.mxu0 0.0
  %3678 = vmatprep.subr.mxu0 0.0
  %3679 = vmatpush1.msra.mxu0 0.0
  %3680 = vmatprep.subr.mxu0 0.0
  %3681 = vmatpush1.msra.mxu0 0.0
  %3682 = vmatprep.subr.mxu0 0.0
  %3683 = vmatpush1.msra.mxu0 0.0
  %3684 = vmatprep.subr.mxu0 0.0
  %3685 = vmatpush1.msra.mxu0 0.0
  %3686 = vmatprep.subr.mxu0 0.0
  %3687 = vmatpush1.msra.mxu0 0.0
  %3688 = vmatprep.subr.mxu0 0.0
  %3689 = vmatpush1.msra.mxu0 0.0
  %3690 = vmatprep.subr.mxu0 0.0
  %3691 = vmatpush1.msra.mxu0 0.0
  %3692 = vmatprep.subr.mxu0 0.0
  %3693 = vmatpush1.msra.mxu0 0.0
  %3694 = vmatprep.subr.mxu0 0.0
  %3695 = vmatpush1.msra.mxu0 0.0
  %3696 = vmatprep.subr.mxu0 0.0
  %3697 = vmatpush1.msra.mxu0 0.0
  %3698 = vmatprep.subr.mxu0 0.0
  %3699 = vmatpush1.msra.mxu0 0.0
  %3700 = vmatprep.subr.mxu0 0.0
  %3701 = vmatpush1.msra.mxu0 0.0
  %3702 = vmatprep.subr.mxu0 0.0
  %3703 = vmatpush1.msra.mxu0 0.0
  %3704 = vmatprep.subr.mxu0 0.0
  %3705 = vmatpush1.msra.mxu0 0.0
  %3706 = vmatprep.subr.mxu0 0.0
  %3707 = vmatpush1.msra.mxu0 0.0
  %3708 = vmatprep.subr.mxu0 0.0
  %3709 = vmatpush1.msra.mxu0 0.0
  %3710 = vmatprep.subr.mxu0 0.0
  %3711 = vmatpush1.msra.mxu0 0.0
  %3712 = vmatprep.subr.mxu0 0.0
  %3713 = vmatpush1.msra.mxu0 0.0
  %3714 = vmatprep.subr.mxu0 0.0
  %3715 = vmatpush1.msra.mxu0 0.0
  %3716 = vmatprep.subr.mxu0 0.0
  %3717 = vmatpush1.msra.mxu0 0.0
  %3718 = vmatprep.subr.mxu0 0.0
  %3719 = vmatpush1.msra.mxu0 0.0
  %3720 = vmatprep.subr.mxu0 0.0
  %3721 = vmatpush1.msra.mxu0 0.0
  %3722 = vmatprep.subr.mxu0 0.0
  %3723 = vmatpush1.msra.mxu0 0.0
  %3724 = vmatprep.mubr.f32.mxu0 0.0
  %3725 = vmatmul.mubr.f32.gmra.mrb[0].mxu0 %v3654
  %v3726 = vpop.f32.mrb[0].mxu0
  %v3727 = vadd.f32 %v3650, %v3726
  %v3728 = vpop.f32.mrb[0].mxu0
  %3729 = vdwg.mxu0
  %v3730 = vxor.u32 %v3727, 2147483648
  %v3731 = vmul.f32 %v3730, 1.442695
  %v3732 = vpow.pop %v3731
  %v3733 = vadd.f32 %v3732, 1.0
  %v3734 = vrcp.pop %v3733
  %v3735 = vmul.f32 1.0, %v3734
  %3737 = vrot.lane.b32.xlu0 %v3735, 32
  %v3738 = vpop.permute.xlu0 %3737
  %3740 = vrot.lane.b32.xlu0 %v3735, 64
  %v3741 = vpop.permute.xlu0 %3740
  %3743 = vrot.lane.b32.xlu0 %v3735, 96
  %v3744 = vpop.permute.xlu0 %3743
  %v3746 = vsel %vm3536, %v3735, %v3738
  %vm3747 = vcmask 523264
  %v3748 = vsel %vm3747, %v3746, %v3741
  %vm3749 = vcmask 785408
  %v3750 = vsel %vm3749, %v3748, %v3744
  %v3751 = vld [vmem:[%s1] sm:$0xff]
  %v3752 = vld [vmem:[%s1 + $0x8] sm:$0xff]
  %v3753 = vld [vmem:[%s1 + $0x10] sm:$0xff]
  %v3754 = vld [vmem:[%s1 + $0x18] sm:$0xff]
  %v3755 = vld [vmem:[%s1 + $0x20] sm:$0x11]
  %v3756 = vld [vmem:[%s1 + $0x28] sm:$0x11]
  %v3757 = vld [vmem:[%s1 + $0x30] sm:$0xff]
  %v3758 = vld [vmem:[%s1 + $0x38] sm:$0xff]
  %v3759 = vld [vmem:[%s1 + $0x40] sm:$0xff]
  %v3760 = vld [vmem:[%s1 + $0x48] sm:$0xff]
  %v3761 = vld [vmem:[%s1 + $0x50] sm:$0x11]
  %v3762 = vld [vmem:[%s1 + $0x58] sm:$0x11]
  %v3763 = vunpack.c.l.bf16 %v3751
  %v3764 = vunpack.c.h.bf16 %v3751
  %v3765 = vunpack.c.l.bf16 %v3752
  %v3766 = vunpack.c.h.bf16 %v3752
  %v3767 = vunpack.c.l.bf16 %v3753
  %v3768 = vunpack.c.h.bf16 %v3753
  %v3769 = vunpack.c.l.bf16 %v3754
  %v3770 = vunpack.c.h.bf16 %v3754
  %v3771 = vunpack.c.l.bf16 %v3755
  %v3772 = vunpack.c.h.bf16 %v3755
  %v3773 = vunpack.c.l.bf16 %v3756
  %v3774 = vunpack.c.h.bf16 %v3756
  %v3775 = vunpack.c.l.bf16 %v3757
  %v3776 = vunpack.c.h.bf16 %v3757
  %v3777 = vunpack.c.l.bf16 %v3758
  %v3778 = vunpack.c.h.bf16 %v3758
  %v3779 = vunpack.c.l.bf16 %v3759
  %v3780 = vunpack.c.h.bf16 %v3759
  %v3781 = vunpack.c.l.bf16 %v3760
  %v3782 = vunpack.c.h.bf16 %v3760
  %v3783 = vunpack.c.l.bf16 %v3761
  %v3784 = vunpack.c.h.bf16 %v3761
  %v3785 = vunpack.c.l.bf16 %v3762
  %v3786 = vunpack.c.h.bf16 %v3762
  %v3788 = vcombine.low %v3750, %v3750
  %v3790 = vunpack.c.l.s4 1966171168
  %v3791 = vunpack.c.0.s8 %v3790
  %v3792 = vlaneseq
  %v3793 = vshrl.u32 %v3792, 7
  %v3794 = vsub.s32 %v3791, %v3793
  %v3795 = vrot.slane %v3788, %v3794
  %v3796 = vcombine.low %v3795, %v3795
  %v3797 = vcombine.high %v3795, %v3795
  %v3799 = vunpack.c.l.s4 1966171168
  %v3800 = vunpack.c.0.s8 %v3799
  %v3801 = vlaneseq
  %v3802 = vshrl.u32 %v3801, 7
  %v3803 = vsub.s32 %v3800, %v3802
  %v3804 = vrot.slane %v3796, %v3803
  %v3806 = vunpack.c.l.s4 1966171168
  %v3807 = vunpack.c.0.s8 %v3806
  %v3808 = vlaneseq
  %v3809 = vshrl.u32 %v3808, 7
  %v3810 = vsub.s32 %v3807, %v3809
  %v3811 = vrot.slane %v3797, %v3810
  %v3812 = vlaneseq
  %v3813 = vshrl.u32 %v3812, 7
  %v3814 = vsub.s32 0, %v3813
  %v3815 = vrot.slane %v3804, %v3814
  %v3816 = vlaneseq
  %v3817 = vshrl.u32 %v3816, 7
  %v3818 = vsub.s32 1, %v3817
  %v3819 = vrot.slane %v3804, %v3818
  %v3820 = vlaneseq
  %v3821 = vshrl.u32 %v3820, 7
  %v3822 = vsub.s32 2, %v3821
  %v3823 = vrot.slane %v3804, %v3822
  %v3824 = vlaneseq
  %v3825 = vshrl.u32 %v3824, 7
  %v3826 = vsub.s32 3, %v3825
  %v3827 = vrot.slane %v3804, %v3826
  %v3828 = vlaneseq
  %v3829 = vshrl.u32 %v3828, 7
  %v3830 = vsub.s32 0, %v3829
  %v3831 = vrot.slane %v3811, %v3830
  %v3832 = vlaneseq
  %v3833 = vshrl.u32 %v3832, 7
  %v3834 = vsub.s32 1, %v3833
  %v3835 = vrot.slane %v3811, %v3834
  %v3836 = vlaneseq
  %v3837 = vshrl.u32 %v3836, 7
  %v3838 = vsub.s32 2, %v3837
  %v3839 = vrot.slane %v3811, %v3838
  %v3840 = vlaneseq
  %v3841 = vshrl.u32 %v3840, 7
  %v3842 = vsub.s32 3, %v3841
  %v3843 = vrot.slane %v3811, %v3842
  %v3852 = vmul.f32 %v3259, %v3815
  %v3853 = vmul.f32 %v3260, %v3819
  %v3854 = vmul.f32 %v3261, %v3823
  %v3855 = vmul.f32 %v3262, %v3827
  %v3856 = vmul.f32 %v3263, %v3815
  %v3857 = vmul.f32 %v3264, %v3819
  %v3858 = vmul.f32 %v3265, %v3823
  %v3859 = vmul.f32 %v3266, %v3827
  %v3860 = vmul.f32 %v3267, %v3831
  %v3861 = vmul.f32 %v3268, %v3835
  %v3862 = vmul.f32 %v3269, %v3839
  %v3863 = vmul.f32 %v3270, %v3843
  %v3864 = vmul.f32 %v3271, %v3831
  %v3865 = vmul.f32 %v3272, %v3835
  %v3866 = vmul.f32 %v3273, %v3839
  %v3867 = vmul.f32 %v3274, %v3843
  %vm3892 = vcmask 1046528
  %v3893 = vrot.slane %v3763, 1
  %v3894 = vrot.slane %v3767, 1
  %v3895 = vsel %vm3892, %v3893, %v3894
  %v3896 = vrot.slane %v3764, 1
  %v3897 = vrot.slane %v3768, 1
  %v3898 = vsel %vm3892, %v3896, %v3897
  %v3899 = vrot.slane %v3765, 1
  %v3900 = vrot.slane %v3769, 1
  %v3901 = vsel %vm3892, %v3899, %v3900
  %v3902 = vrot.slane %v3766, 1
  %v3903 = vrot.slane %v3770, 1
  %v3904 = vsel %vm3892, %v3902, %v3903
  %v3905 = vrot.slane %v3771, 1
  %v3906 = vsel %vm3892, %v3894, %v3905
  %v3907 = vrot.slane %v3772, 1
  %v3908 = vsel %vm3892, %v3897, %v3907
  %v3909 = vrot.slane %v3773, 1
  %v3910 = vsel %vm3892, %v3900, %v3909
  %v3911 = vrot.slane %v3774, 1
  %v3912 = vsel %vm3892, %v3903, %v3911
  %v3913 = vrot.slane %v3775, 1
  %v3914 = vrot.slane %v3779, 1
  %v3915 = vsel %vm3892, %v3913, %v3914
  %v3916 = vrot.slane %v3776, 1
  %v3917 = vrot.slane %v3780, 1
  %v3918 = vsel %vm3892, %v3916, %v3917
  %v3919 = vrot.slane %v3777, 1
  %v3920 = vrot.slane %v3781, 1
  %v3921 = vsel %vm3892, %v3919, %v3920
  %v3922 = vrot.slane %v3778, 1
  %v3923 = vrot.slane %v3782, 1
  %v3924 = vsel %vm3892, %v3922, %v3923
  %v3925 = vrot.slane %v3783, 1
  %v3926 = vsel %vm3892, %v3914, %v3925
  %v3927 = vrot.slane %v3784, 1
  %v3928 = vsel %vm3892, %v3917, %v3927
  %v3929 = vrot.slane %v3785, 1
  %v3930 = vsel %vm3892, %v3920, %v3929
  %v3931 = vrot.slane %v3786, 1
  %v3932 = vsel %vm3892, %v3923, %v3931
  %v3949 = vadd.f32 %v3852, %v3895
  %v3950 = vadd.f32 %v3853, %v3898
  %v3951 = vadd.f32 %v3854, %v3901
  %v3952 = vadd.f32 %v3855, %v3904
  %v3953 = vadd.f32 %v3856, %v3906
  %v3954 = vadd.f32 %v3857, %v3908
  %v3955 = vadd.f32 %v3858, %v3910
  %v3956 = vadd.f32 %v3859, %v3912
  %v3957 = vadd.f32 %v3860, %v3915
  %v3958 = vadd.f32 %v3861, %v3918
  %v3959 = vadd.f32 %v3862, %v3921
  %v3960 = vadd.f32 %v3863, %v3924
  %v3961 = vadd.f32 %v3864, %v3926
  %v3962 = vadd.f32 %v3865, %v3928
  %v3963 = vadd.f32 %v3866, %v3930
  %v3964 = vadd.f32 %v3867, %v3932
  %v3965 = vmax.f32 %v3949, 0.0
  %v3966 = vmax.f32 %v3950, 0.0
  %v3967 = vmax.f32 %v3951, 0.0
  %v3968 = vmax.f32 %v3952, 0.0
  %v3969 = vmax.f32 %v3953, 0.0
  %v3970 = vmax.f32 %v3954, 0.0
  %v3971 = vmax.f32 %v3955, 0.0
  %v3972 = vmax.f32 %v3956, 0.0
  %v3973 = vmax.f32 %v3957, 0.0
  %v3974 = vmax.f32 %v3958, 0.0
  %v3975 = vmax.f32 %v3959, 0.0
  %v3976 = vmax.f32 %v3960, 0.0
  %v3977 = vmax.f32 %v3961, 0.0
  %v3978 = vmax.f32 %v3962, 0.0
  %v3979 = vmax.f32 %v3963, 0.0
  %v3980 = vmax.f32 %v3964, 0.0
  %v3981 = vadd.f32 %v3965, %v3969
  %v3982 = vrot.slane %v3981, 4
  %v3983 = vadd.f32 %v3981, %v3982
  %v3984 = vrot.slane %v3983, 2
  %v3985 = vadd.f32 %v3983, %v3984
  %v3986 = vrot.slane %v3985, 1
  %v3987 = vadd.f32 %v3985, %v3986
  %v3988 = vadd.f32 %v3966, %v3970
  %v3989 = vrot.slane %v3988, 4
  %v3990 = vadd.f32 %v3988, %v3989
  %v3991 = vrot.slane %v3990, 2
  %v3992 = vadd.f32 %v3990, %v3991
  %v3993 = vrot.slane %v3992, 1
  %v3994 = vadd.f32 %v3992, %v3993
  %v3995 = vadd.f32 %v3967, %v3971
  %v3996 = vrot.slane %v3995, 4
  %v3997 = vadd.f32 %v3995, %v3996
  %v3998 = vrot.slane %v3997, 2
  %v3999 = vadd.f32 %v3997, %v3998
  %v4000 = vrot.slane %v3999, 1
  %v4001 = vadd.f32 %v3999, %v4000
  %v4002 = vadd.f32 %v3968, %v3972
  %v4003 = vrot.slane %v4002, 4
  %v4004 = vadd.f32 %v4002, %v4003
  %v4005 = vrot.slane %v4004, 2
  %v4006 = vadd.f32 %v4004, %v4005
  %v4007 = vrot.slane %v4006, 1
  %v4008 = vadd.f32 %v4006, %v4007
  %v4009 = vadd.f32 %v3973, %v3977
  %v4010 = vrot.slane %v4009, 4
  %v4011 = vadd.f32 %v4009, %v4010
  %v4012 = vrot.slane %v4011, 2
  %v4013 = vadd.f32 %v4011, %v4012
  %v4014 = vrot.slane %v4013, 1
  %v4015 = vadd.f32 %v4013, %v4014
  %v4016 = vadd.f32 %v3974, %v3978
  %v4017 = vrot.slane %v4016, 4
  %v4018 = vadd.f32 %v4016, %v4017
  %v4019 = vrot.slane %v4018, 2
  %v4020 = vadd.f32 %v4018, %v4019
  %v4021 = vrot.slane %v4020, 1
  %v4022 = vadd.f32 %v4020, %v4021
  %v4023 = vadd.f32 %v3975, %v3979
  %v4024 = vrot.slane %v4023, 4
  %v4025 = vadd.f32 %v4023, %v4024
  %v4026 = vrot.slane %v4025, 2
  %v4027 = vadd.f32 %v4025, %v4026
  %v4028 = vrot.slane %v4027, 1
  %v4029 = vadd.f32 %v4027, %v4028
  %v4030 = vadd.f32 %v3976, %v3980
  %v4031 = vrot.slane %v4030, 4
  %v4032 = vadd.f32 %v4030, %v4031
  %v4033 = vrot.slane %v4032, 2
  %v4034 = vadd.f32 %v4032, %v4033
  %v4035 = vrot.slane %v4034, 1
  %v4036 = vadd.f32 %v4034, %v4035
  %4039 = vrot.lane.b32.xlu0 %v3987, 96
  %v4040 = vpop.permute.xlu0 %4039
  %4041 = vrot.lane.b32.xlu0 %v4015, 96
  %v4042 = vpop.permute.xlu0 %4041
  %4043 = vrot.lane.b32.xlu0 %v3987, 64
  %v4044 = vpop.permute.xlu0 %4043
  %4045 = vrot.lane.b32.xlu0 %v4015, 64
  %v4046 = vpop.permute.xlu0 %4045
  %4047 = vrot.lane.b32.xlu0 %v3987, 32
  %v4048 = vpop.permute.xlu0 %4047
  %4049 = vrot.lane.b32.xlu0 %v4015, 32
  %v4050 = vpop.permute.xlu0 %4049
  %4053 = vrot.lane.b32.xlu0 %v3994, 96
  %v4054 = vpop.permute.xlu0 %4053
  %4055 = vrot.lane.b32.xlu0 %v4022, 96
  %v4056 = vpop.permute.xlu0 %4055
  %4057 = vrot.lane.b32.xlu0 %v3994, 64
  %v4058 = vpop.permute.xlu0 %4057
  %4059 = vrot.lane.b32.xlu0 %v4022, 64
  %v4060 = vpop.permute.xlu0 %4059
  %4061 = vrot.lane.b32.xlu0 %v3994, 32
  %v4062 = vpop.permute.xlu0 %4061
  %4063 = vrot.lane.b32.xlu0 %v4022, 32
  %v4064 = vpop.permute.xlu0 %4063
  %4067 = vrot.lane.b32.xlu0 %v4001, 96
  %v4068 = vpop.permute.xlu0 %4067
  %4069 = vrot.lane.b32.xlu0 %v4029, 96
  %v4070 = vpop.permute.xlu0 %4069
  %4071 = vrot.lane.b32.xlu0 %v4001, 64
  %v4072 = vpop.permute.xlu0 %4071
  %4073 = vrot.lane.b32.xlu0 %v4029, 64
  %v4074 = vpop.permute.xlu0 %4073
  %4075 = vrot.lane.b32.xlu0 %v4001, 32
  %v4076 = vpop.permute.xlu0 %4075
  %4077 = vrot.lane.b32.xlu0 %v4029, 32
  %v4078 = vpop.permute.xlu0 %4077
  %4081 = vrot.lane.b32.xlu0 %v4008, 96
  %v4082 = vpop.permute.xlu0 %4081
  %4083 = vrot.lane.b32.xlu0 %v4036, 96
  %v4084 = vpop.permute.xlu0 %4083
  %4085 = vrot.lane.b32.xlu0 %v4008, 64
  %v4086 = vpop.permute.xlu0 %4085
  %4087 = vrot.lane.b32.xlu0 %v4036, 64
  %v4088 = vpop.permute.xlu0 %4087
  %4089 = vrot.lane.b32.xlu0 %v4008, 32
  %v4090 = vpop.permute.xlu0 %4089
  %4091 = vrot.lane.b32.xlu0 %v4036, 32
  %v4092 = vpop.permute.xlu0 %4091
  %v4093 = vrot.slane %v4015, 7
  %v4094 = vsel %vm3388, %v4093, %v3987
  %v4095 = vrot.slane %v4042, 7
  %v4096 = vsel %vm3388, %v4095, %v4040
  %v4097 = vrot.slane %v4046, 7
  %v4098 = vsel %vm3388, %v4097, %v4044
  %v4099 = vrot.slane %v4050, 7
  %v4100 = vsel %vm3388, %v4099, %v4048
  %v4101 = vrot.slane %v4022, 7
  %v4102 = vsel %vm3388, %v4101, %v3994
  %v4103 = vrot.slane %v4056, 7
  %v4104 = vsel %vm3388, %v4103, %v4054
  %v4105 = vrot.slane %v4060, 7
  %v4106 = vsel %vm3388, %v4105, %v4058
  %v4107 = vrot.slane %v4064, 7
  %v4108 = vsel %vm3388, %v4107, %v4062
  %v4109 = vrot.slane %v4029, 7
  %v4110 = vsel %vm3388, %v4109, %v4001
  %v4111 = vrot.slane %v4070, 7
  %v4112 = vsel %vm3388, %v4111, %v4068
  %v4113 = vrot.slane %v4074, 7
  %v4114 = vsel %vm3388, %v4113, %v4072
  %v4115 = vrot.slane %v4078, 7
  %v4116 = vsel %vm3388, %v4115, %v4076
  %v4117 = vrot.slane %v4036, 7
  %v4118 = vsel %vm3388, %v4117, %v4008
  %v4119 = vrot.slane %v4084, 7
  %v4120 = vsel %vm3388, %v4119, %v4082
  %v4121 = vrot.slane %v4088, 7
  %v4122 = vsel %vm3388, %v4121, %v4086
  %v4123 = vrot.slane %v4092, 7
  %v4124 = vsel %vm3388, %v4123, %v4090
  %v4141 = vcombine.low %v4094, %v4098
  %v4143 = vunpack.c.l.s4 1983009808
  %v4144 = vunpack.c.0.s8 %v4143
  %v4145 = vlaneseq
  %v4146 = vshrl.u32 %v4145, 7
  %v4147 = vsub.s32 %v4144, %v4146
  %v4148 = vrot.slane %v4141, %v4147
  %v4149 = vcombine.low %v4096, %v4100
  %v4151 = vunpack.c.l.s4 1983009808
  %v4152 = vunpack.c.0.s8 %v4151
  %v4153 = vlaneseq
  %v4154 = vshrl.u32 %v4153, 7
  %v4155 = vsub.s32 %v4152, %v4154
  %v4156 = vrot.slane %v4149, %v4155
  %v4157 = vcombine.low %v4102, %v4106
  %v4159 = vunpack.c.l.s4 1983009808
  %v4160 = vunpack.c.0.s8 %v4159
  %v4161 = vlaneseq
  %v4162 = vshrl.u32 %v4161, 7
  %v4163 = vsub.s32 %v4160, %v4162
  %v4164 = vrot.slane %v4157, %v4163
  %v4165 = vcombine.low %v4104, %v4108
  %v4167 = vunpack.c.l.s4 1983009808
  %v4168 = vunpack.c.0.s8 %v4167
  %v4169 = vlaneseq
  %v4170 = vshrl.u32 %v4169, 7
  %v4171 = vsub.s32 %v4168, %v4170
  %v4172 = vrot.slane %v4165, %v4171
  %v4173 = vcombine.low %v4148, %v4156
  %v4175 = vunpack.c.l.s4 1934713408
  %v4176 = vunpack.c.0.s8 %v4175
  %v4177 = vlaneseq
  %v4178 = vshrl.u32 %v4177, 7
  %v4179 = vsub.s32 %v4176, %v4178
  %v4180 = vrot.slane %v4173, %v4179
  %v4181 = vcombine.low %v4164, %v4172
  %v4183 = vunpack.c.l.s4 1934713408
  %v4184 = vunpack.c.0.s8 %v4183
  %v4185 = vlaneseq
  %v4186 = vshrl.u32 %v4185, 7
  %v4187 = vsub.s32 %v4184, %v4186
  %v4188 = vrot.slane %v4181, %v4187
  %v4189 = vcombine.low %v4180, %v4188
  %v4190 = vcombine.high %v4180, %v4188
  %v4191 = vcombine.low %v4110, %v4114
  %v4193 = vunpack.c.l.s4 1983009808
  %v4194 = vunpack.c.0.s8 %v4193
  %v4195 = vlaneseq
  %v4196 = vshrl.u32 %v4195, 7
  %v4197 = vsub.s32 %v4194, %v4196
  %v4198 = vrot.slane %v4191, %v4197
  %v4199 = vcombine.low %v4112, %v4116
  %v4201 = vunpack.c.l.s4 1983009808
  %v4202 = vunpack.c.0.s8 %v4201
  %v4203 = vlaneseq
  %v4204 = vshrl.u32 %v4203, 7
  %v4205 = vsub.s32 %v4202, %v4204
  %v4206 = vrot.slane %v4199, %v4205
  %v4207 = vcombine.low %v4118, %v4122
  %v4209 = vunpack.c.l.s4 1983009808
  %v4210 = vunpack.c.0.s8 %v4209
  %v4211 = vlaneseq
  %v4212 = vshrl.u32 %v4211, 7
  %v4213 = vsub.s32 %v4210, %v4212
  %v4214 = vrot.slane %v4207, %v4213
  %v4215 = vcombine.low %v4120, %v4124
  %v4217 = vunpack.c.l.s4 1983009808
  %v4218 = vunpack.c.0.s8 %v4217
  %v4219 = vlaneseq
  %v4220 = vshrl.u32 %v4219, 7
  %v4221 = vsub.s32 %v4218, %v4220
  %v4222 = vrot.slane %v4215, %v4221
  %v4223 = vcombine.low %v4198, %v4206
  %v4225 = vunpack.c.l.s4 1934713408
  %v4226 = vunpack.c.0.s8 %v4225
  %v4227 = vlaneseq
  %v4228 = vshrl.u32 %v4227, 7
  %v4229 = vsub.s32 %v4226, %v4228
  %v4230 = vrot.slane %v4223, %v4229
  %v4231 = vcombine.low %v4214, %v4222
  %v4233 = vunpack.c.l.s4 1934713408
  %v4234 = vunpack.c.0.s8 %v4233
  %v4235 = vlaneseq
  %v4236 = vshrl.u32 %v4235, 7
  %v4237 = vsub.s32 %v4234, %v4236
  %v4238 = vrot.slane %v4231, %v4237
  %v4239 = vcombine.low %v4230, %v4238
  %v4240 = vcombine.high %v4230, %v4238
  %v4241 = vsel %vm3536, %v4189, 0.0
  %v4242 = vsel %vm3536, %v4239, 0.0
  %v4243 = vadd.f32 %v4241, %v4242
  %v4244 = vrot.slane %v4243, 4
  %v4245 = vadd.f32 %v4243, %v4244
  %v4246 = vrot.slane %v4245, 2
  %v4247 = vadd.f32 %v4245, %v4246
  %v4248 = vrot.slane %v4247, 1
  %v4249 = vadd.f32 %v4247, %v4248
  %v4250 = vsel %vm3536, %v4190, 0.0
  %v4251 = vsel %vm3536, %v4240, 0.0
  %v4252 = vadd.f32 %v4250, %v4251
  %v4253 = vrot.slane %v4252, 4
  %v4254 = vadd.f32 %v4252, %v4253
  %v4255 = vrot.slane %v4254, 2
  %v4256 = vadd.f32 %v4254, %v4255
  %v4257 = vrot.slane %v4256, 1
  %v4258 = vadd.f32 %v4256, %v4257
  %v4259 = vmul.f32 %v4249, 0.00390625
  %v4260 = vmul.f32 %v4258, 0.00390625
  %v4263 = vsel %vm3388, %v4260, %v4259
  %vm4265 = vcmask 254976
  %4266 = vst.msk [vmem:[%s8] sm:$0x3] %vm4265, %v4263
  // Predicated region
  $region34: #{seresnet_forward.6} parent=0 // pred_check
    _
  $region35: #{seresnet_forward.6} parent=0 // pred_check_branch
    %4268 = sbr.rel (0) target = $region37
  $region36: #{seresnet_forward.6} parent=0 // pred_region
    _
  $region37: #{seresnet_forward.6} parent=0 // pred_fallthru
    _
  // Predicated region
  $region38: #{seresnet_forward.6} parent=0 // pred_check
    _
  $region39: #{seresnet_forward.6} parent=0 // pred_check_branch
    %4270 = sbr.rel (0) target = $region41
  $region40: #{seresnet_forward.6} parent=0 // pred_region
    _
  $region41: #{seresnet_forward.6} parent=0 // pred_fallthru
    _

</llo_original>
